<compile_context>
chip_gen: v7x
topology: tpu7x:2x2x1
jax: 0.10.0
libtpu: 0.0.40
codegen_flags: <defaults>
</compile_context>

<pallas_src>
import jax
import jax.numpy as jnp
from jax import lax
from jax.experimental import pallas as pl
from jax.experimental.pallas import tpu as pltpu


def _round_up(v, m):
    return (v + m - 1) // m * m


# ----------------------------------------------------------------------------
# Kernel A: fused (1x1 conv -> depthwise 3x3 conv), stride 1, padding 1,
# bias=False.  Input is spatially zero-padded in the wrapper (padding zeros
# commute with the bias-free 1x1 conv), and the padded width is rounded up to
# a multiple of 8 so the in-kernel (hp, wp) <-> (hp*wp) reshapes are
# layout-trivial (lane dim preserved, sublane groups aligned).
# ----------------------------------------------------------------------------
def _fused_pw_dw_kernel(x_ref, wpw_ref, wdw_ref, o_ref):
    # x_ref:   (1, H+2, Wp, Cin)   padded input image (f32)
    # wpw_ref: (Cin, TC)           pointwise weight slice (bf16)
    # wdw_ref: (9, TC)             depthwise 3x3 weight slice (f32), kh*3+kw
    # o_ref:   (1, H, W, TC)
    _, hp, wp, cin = x_ref.shape
    _, hh, ww, tc = o_ref.shape

    # 1x1 conv == matmul over channels; bf16 operands, f32 accumulation (MXU).
    x2 = x_ref[...].reshape(hp * wp, cin).astype(jnp.bfloat16)
    y = jnp.dot(x2, wpw_ref[...], preferred_element_type=jnp.float32)
    y = y.reshape(hp, wp, tc)

    # depthwise 3x3: 9 shifted multiply-accumulates on the VPU, f32 acc.
    acc = jnp.zeros((hh, ww, tc), jnp.float32)
    for kh in range(3):
        for kw in range(3):
            acc = acc + (y[kh:kh + hh, kw:kw + ww, :]
                         * wdw_ref[kh * 3 + kw, :].astype(jnp.float32))
    o_ref[...] = acc.reshape(o_ref.shape).astype(o_ref.dtype)


def fused_pointwise_dwconv(x_nhwc, w_pw_bf16, w_dw):
    """1x1 conv (no bias) followed by depthwise 3x3 conv (no bias), fused."""
    b, h, w, cin = x_nhwc.shape
    cout = w_pw_bf16.shape[1]

    # Pad spatially (conv padding=1) and round padded width up to a multiple
    # of 8 (extra zero columns are never read by the 3x3 taps).
    wp = _round_up(w + 2, 8)
    x_pad = jnp.pad(x_nhwc, ((0, 0), (1, 1), (1, wp - w - 1), (0, 0)))

    # Output-channel tile: keeps the f32 accumulator / output block bounded
    # (re-derive for bigger dims; lane dim stays a multiple of 128 or full).
    tc = cout if (cout <= 128 or cout % 128 != 0) else 128
    grid = (b, cout // tc)

    # TODO(synk): for very large feature maps, row-tile the spatial axis with
    # halo windows (pl.Element / manual DMA) to keep the per-step accumulator
    # within vregs and the input block within v7x's 64 MiB VMEM.
    return pl.pallas_call(
        _fused_pw_dw_kernel,
        out_shape=jax.ShapeDtypeStruct((b, h, w, cout), x_nhwc.dtype),
        grid=grid,
        in_specs=[
            pl.BlockSpec((1, h + 2, wp, cin), lambda i, j: (i, 0, 0, 0)),
            pl.BlockSpec((cin, tc), lambda i, j: (0, j)),
            pl.BlockSpec((9, tc), lambda i, j: (0, j)),
        ],
        out_specs=pl.BlockSpec((1, h, w, tc), lambda i, j: (i, 0, 0, j)),
        compiler_params=pltpu.CompilerParams(
            dimension_semantics=("parallel", "parallel")),
    )(x_pad, w_pw_bf16, w_dw)


# ----------------------------------------------------------------------------
# Kernel B: channel attention (all heads of one batch element per grid step)
# + fused project_out 1x1 conv.  Layout is NHWC-flat: q (HW, C), kv (HW, 2C),
# so the head split is a static lane slice and no HBM transposes are needed.
# ----------------------------------------------------------------------------
def _chan_attn_proj_kernel(temp_ref, q_ref, kv_ref, wproj_ref, o_ref, acc_ref):
    # temp_ref:  (num_heads, 1) in SMEM
    # q_ref:     (1, HW, C) f32
    # kv_ref:    (1, HW, 2C) f32  (k = first C channels, v = last C)
    # wproj_ref: (C, C) bf16
    # o_ref:     (1, HW, C)
    # acc_ref:   (HW, C) f32 VMEM scratch (pre-projection attention output)
    _, hw, c = q_ref.shape
    nh = temp_ref.shape[0]
    ch = c // nh

    q = q_ref[0].astype(jnp.float32)             # (HW, C)
    k = kv_ref[0, :, :c].astype(jnp.float32)     # (HW, C)
    v = kv_ref[0, :, c:].astype(jnp.float32)     # (HW, C)

    # torch.nn.functional.normalize(dim=-1) over the spatial axis, done for
    # all heads/channels at once (lane-dense); rsqrt runs on the EUP.
    eps = 1e-12
    qn = q * lax.rsqrt(jnp.maximum(jnp.sum(q * q, axis=0, keepdims=True),
                                   eps * eps))
    kn = k * lax.rsqrt(jnp.maximum(jnp.sum(k * k, axis=0, keepdims=True),
                                   eps * eps))

    # Per-head (ch x ch) attention; kept f32 (ch is tiny, below bf16 packing).
    for hd in range(nh):
        lo = hd * ch
        qh = qn[:, lo:lo + ch]                   # (HW, ch)
        kh = kn[:, lo:lo + ch]                   # (HW, ch)
        vh = v[:, lo:lo + ch]                    # (HW, ch)

        # attn[c, d] = sum_x q[x, c] * k[x, d]  (contract HW; no lane .T)
        attn = lax.dot_general(qh, kh, (((0,), (0,)), ((), ())),
                               preferred_element_type=jnp.float32)
        attn = attn * temp_ref[hd, 0]
        attn = attn - jnp.max(attn, axis=-1, keepdims=True)
        e = jnp.exp(attn)
        p = e * pl.reciprocal(jnp.sum(e, axis=-1, keepdims=True), approx=True)

        # out[x, c] = sum_d p[c, d] * v[x, d]
        outh = lax.dot_general(vh, p, (((1,), (1,)), ((), ())),
                               preferred_element_type=jnp.float32)  # (HW, ch)
        acc_ref[:, lo:lo + ch] = outh

    # Fused project_out: 1x1 conv == matmul over channels (bf16 -> f32 acc).
    o_ref[0] = jnp.dot(acc_ref[...].astype(jnp.bfloat16), wproj_ref[...],
                       preferred_element_type=jnp.float32).astype(o_ref.dtype)


def channel_attention_project(q2, kv2, w_proj_bf16, temperature):
    b, hw, c = q2.shape
    blk_c = pl.BlockSpec((1, hw, c), lambda i: (i, 0, 0))
    blk_2c = pl.BlockSpec((1, hw, 2 * c), lambda i: (i, 0, 0))
    return pl.pallas_call(
        _chan_attn_proj_kernel,
        out_shape=jax.ShapeDtypeStruct((b, hw, c), q2.dtype),
        grid=(b,),
        in_specs=[
            pl.BlockSpec(memory_space=pltpu.MemorySpace.SMEM),   # temperature
            blk_c,                                               # q
            blk_2c,                                              # kv
            pl.BlockSpec((c, c), lambda i: (0, 0)),              # w_proj
        ],
        out_specs=blk_c,
        scratch_shapes=[pltpu.VMEM((hw, c), jnp.float32)],
        compiler_params=pltpu.CompilerParams(dimension_semantics=("parallel",)),
    )(temperature, q2, kv2, w_proj_bf16)


# ----------------------------------------------------------------------------
# Full forward pass (mirrors Attention.forward).  x, y are NCHW like PyTorch.
# ----------------------------------------------------------------------------
def attention_forward(x_nchw, y_nchw, params, num_heads):
    b, c, h, w = x_nchw.shape
    assert c % num_heads == 0

    x = jnp.transpose(x_nchw, (0, 2, 3, 1))  # NCHW -> NHWC (boundary only)
    y = jnp.transpose(y_nchw, (0, 2, 3, 1))

    # kv = kv_dwconv(kv(y)); q = q_dwconv(q(x))   (fused 1x1 + depthwise 3x3)
    kv = fused_pointwise_dwconv(y, params["w_kv"], params["w_kv_dw"])  # (B,H,W,2C)
    q_nhwc = fused_pointwise_dwconv(x, params["w_q"], params["w_q_dw"])  # (B,H,W,C)

    # 'b (head c) h w -> b head c (h w)' becomes a zero-copy reshape in NHWC:
    # heads are just contiguous channel slices handled inside the kernel.
    hw = h * w
    q2 = q_nhwc.reshape(b, hw, c)
    kv2 = kv.reshape(b, hw, 2 * c)

    out = channel_attention_project(q2, kv2, params["w_proj"],
                                    params["temperature"])       # (B, HW, C)

    # back to NCHW
    return jnp.transpose(out, (0, 2, 1)).reshape(b, c, h, w)


def init_params(key, dim, num_heads):
    k1, k2, k3, k4, k5 = jax.random.split(key, 5)
    s = 0.1
    return {
        # Conv2d(dim, 2*dim, 1, bias=False) -> (Cin, Cout) matmul weight, bf16
        "w_kv": (s * jax.random.normal(k1, (dim, 2 * dim), jnp.float32)
                 ).astype(jnp.bfloat16),
        # depthwise 3x3 (groups=2*dim) -> (9, C) = (kh*3+kw, channel), f32
        "w_kv_dw": s * jax.random.normal(k2, (9, 2 * dim), jnp.float32),
        "w_q": (s * jax.random.normal(k3, (dim, dim), jnp.float32)
                ).astype(jnp.bfloat16),
        "w_q_dw": s * jax.random.normal(k4, (9, dim), jnp.float32),
        "w_proj": (s * jax.random.normal(k5, (dim, dim), jnp.float32)
                   ).astype(jnp.bfloat16),
        # nn.Parameter(torch.ones(num_heads, 1, 1)) -> per-head scalar
        "temperature": jnp.ones((num_heads, 1), jnp.float32),
    }


if __name__ == "__main__":
    dim, num_heads = 32, 4
    B, H, W = 2, 16, 16

    key = jax.random.PRNGKey(0)
    kx, ky, kp = jax.random.split(key, 3)
    x = jax.random.normal(kx, (B, dim, H, W), jnp.float32)
    y = jax.random.normal(ky, (B, dim, H, W), jnp.float32)
    params = init_params(kp, dim, num_heads)

    fwd = jax.jit(attention_forward, static_argnums=(3,))
    out = fwd(x, y, params, num_heads)
    jax.block_until_ready(out)

    assert out.shape == (B, dim, H, W)
    assert bool(jnp.all(jnp.isfinite(out)))
    print("KERNEL_OK")
</pallas_src>

<mosaic_0001>
module attributes {stable_mosaic.version = 11 : i64} {
  func.func @_fused_pw_dw_kernel(%arg0: i32, %arg1: i32, %arg2: memref<1x18x24x32xf32, #tpu.memory_space<vmem>>, %arg3: memref<32x64xbf16, #tpu.memory_space<vmem>>, %arg4: memref<9x64xf32, #tpu.memory_space<vmem>>, %arg5: memref<1x16x16x64xf32, #tpu.memory_space<vmem>>) attributes {dimension_semantics = [#tpu.dimension_semantics<parallel>, #tpu.dimension_semantics<parallel>], iteration_bounds = array<i64: 2, 1>, scalar_prefetch = 0 : i64, scratch_operands = 0 : i64, tpu.core_type = #tpu.core_type<tc>, window_params = [{transform_indices = @transform_0, window_bounds = array<i64: 1, 18, 24, 32>}, {transform_indices = @transform_1, window_bounds = array<i64: 32, 64>}, {transform_indices = @transform_2, window_bounds = array<i64: 9, 64>}, {transform_indices = @transform_3, window_bounds = array<i64: 1, 16, 16, 64>}]} {
    %c0 = arith.constant 0 : index
    %c0_0 = arith.constant 0 : index
    %c0_1 = arith.constant 0 : index
    %c0_2 = arith.constant 0 : index
    %0 = vector.load %arg2[%c0, %c0_0, %c0_1, %c0_2] : memref<1x18x24x32xf32, #tpu.memory_space<vmem>>, vector<1x18x24x32xf32>
    %1 = vector.shape_cast %0 : vector<1x18x24x32xf32> to vector<432x32xf32>
    %2 = arith.truncf %1 : vector<432x32xf32> to vector<432x32xbf16>
    %c0_3 = arith.constant 0 : index
    %c0_4 = arith.constant 0 : index
    %3 = vector.load %arg3[%c0_3, %c0_4] : memref<32x64xbf16, #tpu.memory_space<vmem>>, vector<32x64xbf16>
    %cst = arith.constant dense<0.000000e+00> : vector<432x64xf32>
    %4 = tpu.matmul %2, %3, %cst {dimension_numbers = #tpu.dot_dimension_numbers<[1], [0], [0], [1], [0, 0, 1, 1], [], []>} : vector<432x32xbf16>, vector<32x64xbf16>, vector<432x64xf32> -> vector<432x64xf32>
    %5 = vector.shape_cast %4 : vector<432x64xf32> to vector<18x24x64xf32>
    %cst_5 = arith.constant 0.000000e+00 : f32
    %6 = vector.broadcast %cst_5 : f32 to vector<16x16x64xf32>
    %7 = vector.extract_strided_slice %5 {offsets = [0, 0, 0], sizes = [16, 16, 64], strides = [1, 1, 1]} : vector<18x24x64xf32> to vector<16x16x64xf32>
    %c0_6 = arith.constant 0 : index
    %c0_7 = arith.constant 0 : index
    %8 = vector.load %arg4[%c0_6, %c0_7] : memref<9x64xf32, #tpu.memory_space<vmem>>, vector<1x64xf32>
    %9 = vector.shape_cast %8 : vector<1x64xf32> to vector<64xf32>
    %10 = vector.shape_cast %9 : vector<64xf32> to vector<1x1x64xf32>
    %11 = vector.broadcast %10 : vector<1x1x64xf32> to vector<16x16x64xf32>
    %12 = arith.mulf %7, %11 : vector<16x16x64xf32>
    %13 = arith.addf %6, %12 : vector<16x16x64xf32>
    %14 = vector.extract_strided_slice %5 {offsets = [0, 1, 0], sizes = [16, 16, 64], strides = [1, 1, 1]} : vector<18x24x64xf32> to vector<16x16x64xf32>
    %c1 = arith.constant 1 : index
    %c0_8 = arith.constant 0 : index
    %15 = vector.load %arg4[%c1, %c0_8] : memref<9x64xf32, #tpu.memory_space<vmem>>, vector<1x64xf32>
    %16 = vector.shape_cast %15 : vector<1x64xf32> to vector<64xf32>
    %17 = vector.shape_cast %16 : vector<64xf32> to vector<1x1x64xf32>
    %18 = vector.broadcast %17 : vector<1x1x64xf32> to vector<16x16x64xf32>
    %19 = arith.mulf %14, %18 : vector<16x16x64xf32>
    %20 = arith.addf %13, %19 : vector<16x16x64xf32>
    %21 = vector.extract_strided_slice %5 {offsets = [0, 2, 0], sizes = [16, 16, 64], strides = [1, 1, 1]} : vector<18x24x64xf32> to vector<16x16x64xf32>
    %c2 = arith.constant 2 : index
    %c0_9 = arith.constant 0 : index
    %22 = vector.load %arg4[%c2, %c0_9] : memref<9x64xf32, #tpu.memory_space<vmem>>, vector<1x64xf32>
    %23 = vector.shape_cast %22 : vector<1x64xf32> to vector<64xf32>
    %24 = vector.shape_cast %23 : vector<64xf32> to vector<1x1x64xf32>
    %25 = vector.broadcast %24 : vector<1x1x64xf32> to vector<16x16x64xf32>
    %26 = arith.mulf %21, %25 : vector<16x16x64xf32>
    %27 = arith.addf %20, %26 : vector<16x16x64xf32>
    %28 = vector.extract_strided_slice %5 {offsets = [1, 0, 0], sizes = [16, 16, 64], strides = [1, 1, 1]} : vector<18x24x64xf32> to vector<16x16x64xf32>
    %c3 = arith.constant 3 : index
    %c0_10 = arith.constant 0 : index
    %29 = vector.load %arg4[%c3, %c0_10] : memref<9x64xf32, #tpu.memory_space<vmem>>, vector<1x64xf32>
    %30 = vector.shape_cast %29 : vector<1x64xf32> to vector<64xf32>
    %31 = vector.shape_cast %30 : vector<64xf32> to vector<1x1x64xf32>
    %32 = vector.broadcast %31 : vector<1x1x64xf32> to vector<16x16x64xf32>
    %33 = arith.mulf %28, %32 : vector<16x16x64xf32>
    %34 = arith.addf %27, %33 : vector<16x16x64xf32>
    %35 = vector.extract_strided_slice %5 {offsets = [1, 1, 0], sizes = [16, 16, 64], strides = [1, 1, 1]} : vector<18x24x64xf32> to vector<16x16x64xf32>
    %c4 = arith.constant 4 : index
    %c0_11 = arith.constant 0 : index
    %36 = vector.load %arg4[%c4, %c0_11] : memref<9x64xf32, #tpu.memory_space<vmem>>, vector<1x64xf32>
    %37 = vector.shape_cast %36 : vector<1x64xf32> to vector<64xf32>
    %38 = vector.shape_cast %37 : vector<64xf32> to vector<1x1x64xf32>
    %39 = vector.broadcast %38 : vector<1x1x64xf32> to vector<16x16x64xf32>
    %40 = arith.mulf %35, %39 : vector<16x16x64xf32>
    %41 = arith.addf %34, %40 : vector<16x16x64xf32>
    %42 = vector.extract_strided_slice %5 {offsets = [1, 2, 0], sizes = [16, 16, 64], strides = [1, 1, 1]} : vector<18x24x64xf32> to vector<16x16x64xf32>
    %c5 = arith.constant 5 : index
    %c0_12 = arith.constant 0 : index
    %43 = vector.load %arg4[%c5, %c0_12] : memref<9x64xf32, #tpu.memory_space<vmem>>, vector<1x64xf32>
    %44 = vector.shape_cast %43 : vector<1x64xf32> to vector<64xf32>
    %45 = vector.shape_cast %44 : vector<64xf32> to vector<1x1x64xf32>
    %46 = vector.broadcast %45 : vector<1x1x64xf32> to vector<16x16x64xf32>
    %47 = arith.mulf %42, %46 : vector<16x16x64xf32>
    %48 = arith.addf %41, %47 : vector<16x16x64xf32>
    %49 = vector.extract_strided_slice %5 {offsets = [2, 0, 0], sizes = [16, 16, 64], strides = [1, 1, 1]} : vector<18x24x64xf32> to vector<16x16x64xf32>
    %c6 = arith.constant 6 : index
    %c0_13 = arith.constant 0 : index
    %50 = vector.load %arg4[%c6, %c0_13] : memref<9x64xf32, #tpu.memory_space<vmem>>, vector<1x64xf32>
    %51 = vector.shape_cast %50 : vector<1x64xf32> to vector<64xf32>
    %52 = vector.shape_cast %51 : vector<64xf32> to vector<1x1x64xf32>
    %53 = vector.broadcast %52 : vector<1x1x64xf32> to vector<16x16x64xf32>
    %54 = arith.mulf %49, %53 : vector<16x16x64xf32>
    %55 = arith.addf %48, %54 : vector<16x16x64xf32>
    %56 = vector.extract_strided_slice %5 {offsets = [2, 1, 0], sizes = [16, 16, 64], strides = [1, 1, 1]} : vector<18x24x64xf32> to vector<16x16x64xf32>
    %c7 = arith.constant 7 : index
    %c0_14 = arith.constant 0 : index
    %57 = vector.load %arg4[%c7, %c0_14] : memref<9x64xf32, #tpu.memory_space<vmem>>, vector<1x64xf32>
    %58 = vector.shape_cast %57 : vector<1x64xf32> to vector<64xf32>
    %59 = vector.shape_cast %58 : vector<64xf32> to vector<1x1x64xf32>
    %60 = vector.broadcast %59 : vector<1x1x64xf32> to vector<16x16x64xf32>
    %61 = arith.mulf %56, %60 : vector<16x16x64xf32>
    %62 = arith.addf %55, %61 : vector<16x16x64xf32>
    %63 = vector.extract_strided_slice %5 {offsets = [2, 2, 0], sizes = [16, 16, 64], strides = [1, 1, 1]} : vector<18x24x64xf32> to vector<16x16x64xf32>
    %c8 = arith.constant 8 : index
    %c0_15 = arith.constant 0 : index
    %64 = vector.load %arg4[%c8, %c0_15] : memref<9x64xf32, #tpu.memory_space<vmem>>, vector<1x64xf32>
    %65 = vector.shape_cast %64 : vector<1x64xf32> to vector<64xf32>
    %66 = vector.shape_cast %65 : vector<64xf32> to vector<1x1x64xf32>
    %67 = vector.broadcast %66 : vector<1x1x64xf32> to vector<16x16x64xf32>
    %68 = arith.mulf %63, %67 : vector<16x16x64xf32>
    %69 = arith.addf %62, %68 : vector<16x16x64xf32>
    %70 = vector.shape_cast %69 : vector<16x16x64xf32> to vector<1x16x16x64xf32>
    %c0_16 = arith.constant 0 : index
    %c0_17 = arith.constant 0 : index
    %c0_18 = arith.constant 0 : index
    %c0_19 = arith.constant 0 : index
    %71 = vector.load %arg5[%c0_16, %c0_17, %c0_18, %c0_19] : memref<1x16x16x64xf32, #tpu.memory_space<vmem>>, vector<1x16x16x64xf32>
    tpu.vector_store %arg5[%c0_16, %c0_17, %c0_18, %c0_19], %70 {strides = array<i32>} : memref<1x16x16x64xf32, #tpu.memory_space<vmem>>, vector<1x16x16x64xf32>,
    return
  }
  func.func @transform_0(%arg0: i32, %arg1: i32) -> (i32, i32, i32, i32) {
    %c0_i32 = arith.constant 0 : i32
    %c0_i32_0 = arith.constant 0 : i32
    %c0_i32_1 = arith.constant 0 : i32
    %c0_i32_2 = arith.constant 0 : i32
    return %arg0, %c0_i32, %c0_i32_0, %c0_i32_1 : i32, i32, i32, i32
  }
  func.func @transform_1(%arg0: i32, %arg1: i32) -> (i32, i32) {
    %c0_i32 = arith.constant 0 : i32
    %c0_i32_0 = arith.constant 0 : i32
    return %c0_i32, %arg1 : i32, i32
  }
  func.func @transform_2(%arg0: i32, %arg1: i32) -> (i32, i32) {
    %c0_i32 = arith.constant 0 : i32
    %c0_i32_0 = arith.constant 0 : i32
    return %c0_i32, %arg1 : i32, i32
  }
  func.func @transform_3(%arg0: i32, %arg1: i32) -> (i32, i32, i32, i32) {
    %c0_i32 = arith.constant 0 : i32
    %c0_i32_0 = arith.constant 0 : i32
    %c0_i32_1 = arith.constant 0 : i32
    return %arg0, %c0_i32, %c0_i32_0, %arg1 : i32, i32, i32, i32
  }
}

module attributes {stable_mosaic.version = 11 : i64} {
  func.func @_fused_pw_dw_kernel(%arg0: i32, %arg1: i32, %arg2: memref<1x18x24x32xf32, #tpu.memory_space<vmem>>, %arg3: memref<32x32xbf16, #tpu.memory_space<vmem>>, %arg4: memref<9x32xf32, #tpu.memory_space<vmem>>, %arg5: memref<1x16x16x32xf32, #tpu.memory_space<vmem>>) attributes {dimension_semantics = [#tpu.dimension_semantics<parallel>, #tpu.dimension_semantics<parallel>], iteration_bounds = array<i64: 2, 1>, scalar_prefetch = 0 : i64, scratch_operands = 0 : i64, tpu.core_type = #tpu.core_type<tc>, window_params = [{transform_indices = @transform_0, window_bounds = array<i64: 1, 18, 24, 32>}, {transform_indices = @transform_1, window_bounds = array<i64: 32, 32>}, {transform_indices = @transform_2, window_bounds = array<i64: 9, 32>}, {transform_indices = @transform_3, window_bounds = array<i64: 1, 16, 16, 32>}]} {
    %c0 = arith.constant 0 : index
    %c0_0 = arith.constant 0 : index
    %c0_1 = arith.constant 0 : index
    %c0_2 = arith.constant 0 : index
    %0 = vector.load %arg2[%c0, %c0_0, %c0_1, %c0_2] : memref<1x18x24x32xf32, #tpu.memory_space<vmem>>, vector<1x18x24x32xf32>
    %1 = vector.shape_cast %0 : vector<1x18x24x32xf32> to vector<432x32xf32>
    %2 = arith.truncf %1 : vector<432x32xf32> to vector<432x32xbf16>
    %c0_3 = arith.constant 0 : index
    %c0_4 = arith.constant 0 : index
    %3 = vector.load %arg3[%c0_3, %c0_4] : memref<32x32xbf16, #tpu.memory_space<vmem>>, vector<32x32xbf16>
    %cst = arith.constant dense<0.000000e+00> : vector<432x32xf32>
    %4 = tpu.matmul %2, %3, %cst {dimension_numbers = #tpu.dot_dimension_numbers<[1], [0], [0], [1], [0, 0, 1, 1], [], []>} : vector<432x32xbf16>, vector<32x32xbf16>, vector<432x32xf32> -> vector<432x32xf32>
    %5 = vector.shape_cast %4 : vector<432x32xf32> to vector<18x24x32xf32>
    %cst_5 = arith.constant 0.000000e+00 : f32
    %6 = vector.broadcast %cst_5 : f32 to vector<16x16x32xf32>
    %7 = vector.extract_strided_slice %5 {offsets = [0, 0, 0], sizes = [16, 16, 32], strides = [1, 1, 1]} : vector<18x24x32xf32> to vector<16x16x32xf32>
    %c0_6 = arith.constant 0 : index
    %c0_7 = arith.constant 0 : index
    %8 = vector.load %arg4[%c0_6, %c0_7] : memref<9x32xf32, #tpu.memory_space<vmem>>, vector<1x32xf32>
    %9 = vector.shape_cast %8 : vector<1x32xf32> to vector<32xf32>
    %10 = vector.shape_cast %9 : vector<32xf32> to vector<1x1x32xf32>
    %11 = vector.broadcast %10 : vector<1x1x32xf32> to vector<16x16x32xf32>
    %12 = arith.mulf %7, %11 : vector<16x16x32xf32>
    %13 = arith.addf %6, %12 : vector<16x16x32xf32>
    %14 = vector.extract_strided_slice %5 {offsets = [0, 1, 0], sizes = [16, 16, 32], strides = [1, 1, 1]} : vector<18x24x32xf32> to vector<16x16x32xf32>
    %c1 = arith.constant 1 : index
    %c0_8 = arith.constant 0 : index
    %15 = vector.load %arg4[%c1, %c0_8] : memref<9x32xf32, #tpu.memory_space<vmem>>, vector<1x32xf32>
    %16 = vector.shape_cast %15 : vector<1x32xf32> to vector<32xf32>
    %17 = vector.shape_cast %16 : vector<32xf32> to vector<1x1x32xf32>
    %18 = vector.broadcast %17 : vector<1x1x32xf32> to vector<16x16x32xf32>
    %19 = arith.mulf %14, %18 : vector<16x16x32xf32>
    %20 = arith.addf %13, %19 : vector<16x16x32xf32>
    %21 = vector.extract_strided_slice %5 {offsets = [0, 2, 0], sizes = [16, 16, 32], strides = [1, 1, 1]} : vector<18x24x32xf32> to vector<16x16x32xf32>
    %c2 = arith.constant 2 : index
    %c0_9 = arith.constant 0 : index
    %22 = vector.load %arg4[%c2, %c0_9] : memref<9x32xf32, #tpu.memory_space<vmem>>, vector<1x32xf32>
    %23 = vector.shape_cast %22 : vector<1x32xf32> to vector<32xf32>
    %24 = vector.shape_cast %23 : vector<32xf32> to vector<1x1x32xf32>
    %25 = vector.broadcast %24 : vector<1x1x32xf32> to vector<16x16x32xf32>
    %26 = arith.mulf %21, %25 : vector<16x16x32xf32>
    %27 = arith.addf %20, %26 : vector<16x16x32xf32>
    %28 = vector.extract_strided_slice %5 {offsets = [1, 0, 0], sizes = [16, 16, 32], strides = [1, 1, 1]} : vector<18x24x32xf32> to vector<16x16x32xf32>
    %c3 = arith.constant 3 : index
    %c0_10 = arith.constant 0 : index
    %29 = vector.load %arg4[%c3, %c0_10] : memref<9x32xf32, #tpu.memory_space<vmem>>, vector<1x32xf32>
    %30 = vector.shape_cast %29 : vector<1x32xf32> to vector<32xf32>
    %31 = vector.shape_cast %30 : vector<32xf32> to vector<1x1x32xf32>
    %32 = vector.broadcast %31 : vector<1x1x32xf32> to vector<16x16x32xf32>
    %33 = arith.mulf %28, %32 : vector<16x16x32xf32>
    %34 = arith.addf %27, %33 : vector<16x16x32xf32>
    %35 = vector.extract_strided_slice %5 {offsets = [1, 1, 0], sizes = [16, 16, 32], strides = [1, 1, 1]} : vector<18x24x32xf32> to vector<16x16x32xf32>
    %c4 = arith.constant 4 : index
    %c0_11 = arith.constant 0 : index
    %36 = vector.load %arg4[%c4, %c0_11] : memref<9x32xf32, #tpu.memory_space<vmem>>, vector<1x32xf32>
    %37 = vector.shape_cast %36 : vector<1x32xf32> to vector<32xf32>
    %38 = vector.shape_cast %37 : vector<32xf32> to vector<1x1x32xf32>
    %39 = vector.broadcast %38 : vector<1x1x32xf32> to vector<16x16x32xf32>
    %40 = arith.mulf %35, %39 : vector<16x16x32xf32>
    %41 = arith.addf %34, %40 : vector<16x16x32xf32>
    %42 = vector.extract_strided_slice %5 {offsets = [1, 2, 0], sizes = [16, 16, 32], strides = [1, 1, 1]} : vector<18x24x32xf32> to vector<16x16x32xf32>
    %c5 = arith.constant 5 : index
    %c0_12 = arith.constant 0 : index
    %43 = vector.load %arg4[%c5, %c0_12] : memref<9x32xf32, #tpu.memory_space<vmem>>, vector<1x32xf32>
    %44 = vector.shape_cast %43 : vector<1x32xf32> to vector<32xf32>
    %45 = vector.shape_cast %44 : vector<32xf32> to vector<1x1x32xf32>
    %46 = vector.broadcast %45 : vector<1x1x32xf32> to vector<16x16x32xf32>
    %47 = arith.mulf %42, %46 : vector<16x16x32xf32>
    %48 = arith.addf %41, %47 : vector<16x16x32xf32>
    %49 = vector.extract_strided_slice %5 {offsets = [2, 0, 0], sizes = [16, 16, 32], strides = [1, 1, 1]} : vector<18x24x32xf32> to vector<16x16x32xf32>
    %c6 = arith.constant 6 : index
    %c0_13 = arith.constant 0 : index
    %50 = vector.load %arg4[%c6, %c0_13] : memref<9x32xf32, #tpu.memory_space<vmem>>, vector<1x32xf32>
    %51 = vector.shape_cast %50 : vector<1x32xf32> to vector<32xf32>
    %52 = vector.shape_cast %51 : vector<32xf32> to vector<1x1x32xf32>
    %53 = vector.broadcast %52 : vector<1x1x32xf32> to vector<16x16x32xf32>
    %54 = arith.mulf %49, %53 : vector<16x16x32xf32>
    %55 = arith.addf %48, %54 : vector<16x16x32xf32>
    %56 = vector.extract_strided_slice %5 {offsets = [2, 1, 0], sizes = [16, 16, 32], strides = [1, 1, 1]} : vector<18x24x32xf32> to vector<16x16x32xf32>
    %c7 = arith.constant 7 : index
    %c0_14 = arith.constant 0 : index
    %57 = vector.load %arg4[%c7, %c0_14] : memref<9x32xf32, #tpu.memory_space<vmem>>, vector<1x32xf32>
    %58 = vector.shape_cast %57 : vector<1x32xf32> to vector<32xf32>
    %59 = vector.shape_cast %58 : vector<32xf32> to vector<1x1x32xf32>
    %60 = vector.broadcast %59 : vector<1x1x32xf32> to vector<16x16x32xf32>
    %61 = arith.mulf %56, %60 : vector<16x16x32xf32>
    %62 = arith.addf %55, %61 : vector<16x16x32xf32>
    %63 = vector.extract_strided_slice %5 {offsets = [2, 2, 0], sizes = [16, 16, 32], strides = [1, 1, 1]} : vector<18x24x32xf32> to vector<16x16x32xf32>
    %c8 = arith.constant 8 : index
    %c0_15 = arith.constant 0 : index
    %64 = vector.load %arg4[%c8, %c0_15] : memref<9x32xf32, #tpu.memory_space<vmem>>, vector<1x32xf32>
    %65 = vector.shape_cast %64 : vector<1x32xf32> to vector<32xf32>
    %66 = vector.shape_cast %65 : vector<32xf32> to vector<1x1x32xf32>
    %67 = vector.broadcast %66 : vector<1x1x32xf32> to vector<16x16x32xf32>
    %68 = arith.mulf %63, %67 : vector<16x16x32xf32>
    %69 = arith.addf %62, %68 : vector<16x16x32xf32>
    %70 = vector.shape_cast %69 : vector<16x16x32xf32> to vector<1x16x16x32xf32>
    %c0_16 = arith.constant 0 : index
    %c0_17 = arith.constant 0 : index
    %c0_18 = arith.constant 0 : index
    %c0_19 = arith.constant 0 : index
    %71 = vector.load %arg5[%c0_16, %c0_17, %c0_18, %c0_19] : memref<1x16x16x32xf32, #tpu.memory_space<vmem>>, vector<1x16x16x32xf32>
    tpu.vector_store %arg5[%c0_16, %c0_17, %c0_18, %c0_19], %70 {strides = array<i32>} : memref<1x16x16x32xf32, #tpu.memory_space<vmem>>, vector<1x16x16x32xf32>,
    return
  }
  func.func @transform_0(%arg0: i32, %arg1: i32) -> (i32, i32, i32, i32) {
    %c0_i32 = arith.constant 0 : i32
    %c0_i32_0 = arith.constant 0 : i32
    %c0_i32_1 = arith.constant 0 : i32
    %c0_i32_2 = arith.constant 0 : i32
    return %arg0, %c0_i32, %c0_i32_0, %c0_i32_1 : i32, i32, i32, i32
  }
  func.func @transform_1(%arg0: i32, %arg1: i32) -> (i32, i32) {
    %c0_i32 = arith.constant 0 : i32
    %c0_i32_0 = arith.constant 0 : i32
    return %c0_i32, %arg1 : i32, i32
  }
  func.func @transform_2(%arg0: i32, %arg1: i32) -> (i32, i32) {
    %c0_i32 = arith.constant 0 : i32
    %c0_i32_0 = arith.constant 0 : i32
    return %c0_i32, %arg1 : i32, i32
  }
  func.func @transform_3(%arg0: i32, %arg1: i32) -> (i32, i32, i32, i32) {
    %c0_i32 = arith.constant 0 : i32
    %c0_i32_0 = arith.constant 0 : i32
    %c0_i32_1 = arith.constant 0 : i32
    return %arg0, %c0_i32, %c0_i32_0, %arg1 : i32, i32, i32, i32
  }
}

module attributes {stable_mosaic.version = 11 : i64} {
  func.func @_chan_attn_proj_kernel(%arg0: i32, %arg1: memref<4x1xf32, #tpu.memory_space<smem>>, %arg2: memref<1x256x32xf32, #tpu.memory_space<vmem>>, %arg3: memref<1x256x64xf32, #tpu.memory_space<vmem>>, %arg4: memref<32x32xbf16, #tpu.memory_space<vmem>>, %arg5: memref<1x256x32xf32, #tpu.memory_space<vmem>>, %arg6: memref<256x32xf32, #tpu.memory_space<vmem>>) attributes {dimension_semantics = [#tpu.dimension_semantics<parallel>], iteration_bounds = array<i64: 2>, scalar_prefetch = 0 : i64, scratch_operands = 1 : i64, tpu.core_type = #tpu.core_type<tc>, window_params = [{transform_indices = @transform_0, window_bounds = array<i64: 4, 1>}, {transform_indices = @transform_1, window_bounds = array<i64: 1, 256, 32>}, {transform_indices = @transform_2, window_bounds = array<i64: 1, 256, 64>}, {pipeline_mode = #tpu.pipeline_mode<synchronous>, transform_indices = @transform_3, window_bounds = array<i64: 32, 32>}, {transform_indices = @transform_4, window_bounds = array<i64: 1, 256, 32>}]} {
    %c0 = arith.constant 0 : index
    %c0_0 = arith.constant 0 : index
    %c0_1 = arith.constant 0 : index
    %0 = vector.load %arg2[%c0, %c0_0, %c0_1] : memref<1x256x32xf32, #tpu.memory_space<vmem>>, vector<1x256x32xf32>
    %1 = vector.shape_cast %0 : vector<1x256x32xf32> to vector<256x32xf32>
    %c0_2 = arith.constant 0 : index
    %c0_3 = arith.constant 0 : index
    %c0_4 = arith.constant 0 : index
    %2 = vector.load %arg3[%c0_2, %c0_3, %c0_4] : memref<1x256x64xf32, #tpu.memory_space<vmem>>, vector<1x256x32xf32>
    %3 = vector.shape_cast %2 : vector<1x256x32xf32> to vector<256x32xf32>
    %c0_5 = arith.constant 0 : index
    %c0_6 = arith.constant 0 : index
    %c32 = arith.constant 32 : index
    %4 = vector.load %arg3[%c0_5, %c0_6, %c32] : memref<1x256x64xf32, #tpu.memory_space<vmem>>, vector<1x256x32xf32>
    %5 = vector.shape_cast %4 : vector<1x256x32xf32> to vector<256x32xf32>
    %6 = arith.mulf %1, %1 : vector<256x32xf32>
    %cst = arith.constant dense<0.000000e+00> : vector<32xf32>
    %7 = vector.multi_reduction <add>, %6, %cst [0] : vector<256x32xf32> to vector<32xf32>
    %8 = vector.shape_cast %7 : vector<32xf32> to vector<1x32xf32>
    %cst_7 = arith.constant 1.000000e-24 : f32
    %9 = vector.broadcast %cst_7 : f32 to vector<1x32xf32>
    %10 = arith.maximumf %8, %9 : vector<1x32xf32>
    %11 = math.rsqrt %10 : vector<1x32xf32>
    %12 = vector.broadcast %11 : vector<1x32xf32> to vector<256x32xf32>
    %13 = arith.mulf %1, %12 : vector<256x32xf32>
    %14 = arith.mulf %3, %3 : vector<256x32xf32>
    %cst_8 = arith.constant dense<0.000000e+00> : vector<32xf32>
    %15 = vector.multi_reduction <add>, %14, %cst_8 [0] : vector<256x32xf32> to vector<32xf32>
    %16 = vector.shape_cast %15 : vector<32xf32> to vector<1x32xf32>
    %cst_9 = arith.constant 1.000000e-24 : f32
    %17 = vector.broadcast %cst_9 : f32 to vector<1x32xf32>
    %18 = arith.maximumf %16, %17 : vector<1x32xf32>
    %19 = math.rsqrt %18 : vector<1x32xf32>
    %20 = vector.broadcast %19 : vector<1x32xf32> to vector<256x32xf32>
    %21 = arith.mulf %3, %20 : vector<256x32xf32>
    %22 = vector.extract_strided_slice %13 {offsets = [0, 0], sizes = [256, 8], strides = [1, 1]} : vector<256x32xf32> to vector<256x8xf32>
    %23 = vector.extract_strided_slice %21 {offsets = [0, 0], sizes = [256, 8], strides = [1, 1]} : vector<256x32xf32> to vector<256x8xf32>
    %24 = vector.extract_strided_slice %5 {offsets = [0, 0], sizes = [256, 8], strides = [1, 1]} : vector<256x32xf32> to vector<256x8xf32>
    %cst_10 = arith.constant dense<0.000000e+00> : vector<8x8xf32>
    %25 = tpu.matmul %22, %23, %cst_10 {dimension_numbers = #tpu.dot_dimension_numbers<[0], [0], [1], [1], [0, 1, 1, 1], [], []>} : vector<256x8xf32>, vector<256x8xf32>, vector<8x8xf32> -> vector<8x8xf32>
    %c0_11 = arith.constant 0 : index
    %c0_12 = arith.constant 0 : index
    %26 = memref.load %arg1[%c0_11, %c0_12] : memref<4x1xf32, #tpu.memory_space<smem>>
    %27 = vector.broadcast %26 : f32 to vector<8x8xf32>
    %28 = arith.mulf %25, %27 : vector<8x8xf32>
    %cst_13 = arith.constant dense<0xFF800000> : vector<8xf32>
    %29 = vector.multi_reduction <maximumf>, %28, %cst_13 [1] : vector<8x8xf32> to vector<8xf32>
    %30 = vector.shape_cast %29 : vector<8xf32> to vector<8x1xf32>
    %31 = vector.broadcast %30 : vector<8x1xf32> to vector<8x8xf32>
    %32 = arith.subf %28, %31 : vector<8x8xf32>
    %33 = math.exp %32 : vector<8x8xf32>
    %cst_14 = arith.constant dense<0.000000e+00> : vector<8xf32>
    %34 = vector.multi_reduction <add>, %33, %cst_14 [1] : vector<8x8xf32> to vector<8xf32>
    %35 = vector.shape_cast %34 : vector<8xf32> to vector<8x1xf32>
    %36 = tpu.reciprocal %35 {approx = true} : vector<8x1xf32> -> vector<8x1xf32>
    %37 = vector.broadcast %36 : vector<8x1xf32> to vector<8x8xf32>
    %38 = arith.mulf %33, %37 : vector<8x8xf32>
    %cst_15 = arith.constant dense<0.000000e+00> : vector<256x8xf32>
    %39 = tpu.matmul %24, %38, %cst_15 {dimension_numbers = #tpu.dot_dimension_numbers<[1], [1], [0], [0], [0, 0, 1, 0], [], []>} : vector<256x8xf32>, vector<8x8xf32>, vector<256x8xf32> -> vector<256x8xf32>
    %c0_16 = arith.constant 0 : index
    %c0_17 = arith.constant 0 : index
    %40 = vector.load %arg6[%c0_16, %c0_17] : memref<256x32xf32, #tpu.memory_space<vmem>>, vector<256x8xf32>
    tpu.vector_store %arg6[%c0_16, %c0_17], %39 {strides = array<i32>} : memref<256x32xf32, #tpu.memory_space<vmem>>, vector<256x8xf32>,
    %41 = vector.extract_strided_slice %13 {offsets = [0, 8], sizes = [256, 8], strides = [1, 1]} : vector<256x32xf32> to vector<256x8xf32>
    %42 = vector.extract_strided_slice %21 {offsets = [0, 8], sizes = [256, 8], strides = [1, 1]} : vector<256x32xf32> to vector<256x8xf32>
    %43 = vector.extract_strided_slice %5 {offsets = [0, 8], sizes = [256, 8], strides = [1, 1]} : vector<256x32xf32> to vector<256x8xf32>
    %cst_18 = arith.constant dense<0.000000e+00> : vector<8x8xf32>
    %44 = tpu.matmul %41, %42, %cst_18 {dimension_numbers = #tpu.dot_dimension_numbers<[0], [0], [1], [1], [0, 1, 1, 1], [], []>} : vector<256x8xf32>, vector<256x8xf32>, vector<8x8xf32> -> vector<8x8xf32>
    %c1 = arith.constant 1 : index
    %c0_19 = arith.constant 0 : index
    %45 = memref.load %arg1[%c1, %c0_19] : memref<4x1xf32, #tpu.memory_space<smem>>
    %46 = vector.broadcast %45 : f32 to vector<8x8xf32>
    %47 = arith.mulf %44, %46 : vector<8x8xf32>
    %cst_20 = arith.constant dense<0xFF800000> : vector<8xf32>
    %48 = vector.multi_reduction <maximumf>, %47, %cst_20 [1] : vector<8x8xf32> to vector<8xf32>
    %49 = vector.shape_cast %48 : vector<8xf32> to vector<8x1xf32>
    %50 = vector.broadcast %49 : vector<8x1xf32> to vector<8x8xf32>
    %51 = arith.subf %47, %50 : vector<8x8xf32>
    %52 = math.exp %51 : vector<8x8xf32>
    %cst_21 = arith.constant dense<0.000000e+00> : vector<8xf32>
    %53 = vector.multi_reduction <add>, %52, %cst_21 [1] : vector<8x8xf32> to vector<8xf32>
    %54 = vector.shape_cast %53 : vector<8xf32> to vector<8x1xf32>
    %55 = tpu.reciprocal %54 {approx = true} : vector<8x1xf32> -> vector<8x1xf32>
    %56 = vector.broadcast %55 : vector<8x1xf32> to vector<8x8xf32>
    %57 = arith.mulf %52, %56 : vector<8x8xf32>
    %cst_22 = arith.constant dense<0.000000e+00> : vector<256x8xf32>
    %58 = tpu.matmul %43, %57, %cst_22 {dimension_numbers = #tpu.dot_dimension_numbers<[1], [1], [0], [0], [0, 0, 1, 0], [], []>} : vector<256x8xf32>, vector<8x8xf32>, vector<256x8xf32> -> vector<256x8xf32>
    %c0_23 = arith.constant 0 : index
    %c8 = arith.constant 8 : index
    %59 = vector.load %arg6[%c0_23, %c8] : memref<256x32xf32, #tpu.memory_space<vmem>>, vector<256x8xf32>
    tpu.vector_store %arg6[%c0_23, %c8], %58 {strides = array<i32>} : memref<256x32xf32, #tpu.memory_space<vmem>>, vector<256x8xf32>,
    %60 = vector.extract_strided_slice %13 {offsets = [0, 16], sizes = [256, 8], strides = [1, 1]} : vector<256x32xf32> to vector<256x8xf32>
    %61 = vector.extract_strided_slice %21 {offsets = [0, 16], sizes = [256, 8], strides = [1, 1]} : vector<256x32xf32> to vector<256x8xf32>
    %62 = vector.extract_strided_slice %5 {offsets = [0, 16], sizes = [256, 8], strides = [1, 1]} : vector<256x32xf32> to vector<256x8xf32>
    %cst_24 = arith.constant dense<0.000000e+00> : vector<8x8xf32>
    %63 = tpu.matmul %60, %61, %cst_24 {dimension_numbers = #tpu.dot_dimension_numbers<[0], [0], [1], [1], [0, 1, 1, 1], [], []>} : vector<256x8xf32>, vector<256x8xf32>, vector<8x8xf32> -> vector<8x8xf32>
    %c2 = arith.constant 2 : index
    %c0_25 = arith.constant 0 : index
    %64 = memref.load %arg1[%c2, %c0_25] : memref<4x1xf32, #tpu.memory_space<smem>>
    %65 = vector.broadcast %64 : f32 to vector<8x8xf32>
    %66 = arith.mulf %63, %65 : vector<8x8xf32>
    %cst_26 = arith.constant dense<0xFF800000> : vector<8xf32>
    %67 = vector.multi_reduction <maximumf>, %66, %cst_26 [1] : vector<8x8xf32> to vector<8xf32>
    %68 = vector.shape_cast %67 : vector<8xf32> to vector<8x1xf32>
    %69 = vector.broadcast %68 : vector<8x1xf32> to vector<8x8xf32>
    %70 = arith.subf %66, %69 : vector<8x8xf32>
    %71 = math.exp %70 : vector<8x8xf32>
    %cst_27 = arith.constant dense<0.000000e+00> : vector<8xf32>
    %72 = vector.multi_reduction <add>, %71, %cst_27 [1] : vector<8x8xf32> to vector<8xf32>
    %73 = vector.shape_cast %72 : vector<8xf32> to vector<8x1xf32>
    %74 = tpu.reciprocal %73 {approx = true} : vector<8x1xf32> -> vector<8x1xf32>
    %75 = vector.broadcast %74 : vector<8x1xf32> to vector<8x8xf32>
    %76 = arith.mulf %71, %75 : vector<8x8xf32>
    %cst_28 = arith.constant dense<0.000000e+00> : vector<256x8xf32>
    %77 = tpu.matmul %62, %76, %cst_28 {dimension_numbers = #tpu.dot_dimension_numbers<[1], [1], [0], [0], [0, 0, 1, 0], [], []>} : vector<256x8xf32>, vector<8x8xf32>, vector<256x8xf32> -> vector<256x8xf32>
    %c0_29 = arith.constant 0 : index
    %c16 = arith.constant 16 : index
    %78 = vector.load %arg6[%c0_29, %c16] : memref<256x32xf32, #tpu.memory_space<vmem>>, vector<256x8xf32>
    tpu.vector_store %arg6[%c0_29, %c16], %77 {strides = array<i32>} : memref<256x32xf32, #tpu.memory_space<vmem>>, vector<256x8xf32>,
    %79 = vector.extract_strided_slice %13 {offsets = [0, 24], sizes = [256, 8], strides = [1, 1]} : vector<256x32xf32> to vector<256x8xf32>
    %80 = vector.extract_strided_slice %21 {offsets = [0, 24], sizes = [256, 8], strides = [1, 1]} : vector<256x32xf32> to vector<256x8xf32>
    %81 = vector.extract_strided_slice %5 {offsets = [0, 24], sizes = [256, 8], strides = [1, 1]} : vector<256x32xf32> to vector<256x8xf32>
    %cst_30 = arith.constant dense<0.000000e+00> : vector<8x8xf32>
    %82 = tpu.matmul %79, %80, %cst_30 {dimension_numbers = #tpu.dot_dimension_numbers<[0], [0], [1], [1], [0, 1, 1, 1], [], []>} : vector<256x8xf32>, vector<256x8xf32>, vector<8x8xf32> -> vector<8x8xf32>
    %c3 = arith.constant 3 : index
    %c0_31 = arith.constant 0 : index
    %83 = memref.load %arg1[%c3, %c0_31] : memref<4x1xf32, #tpu.memory_space<smem>>
    %84 = vector.broadcast %83 : f32 to vector<8x8xf32>
    %85 = arith.mulf %82, %84 : vector<8x8xf32>
    %cst_32 = arith.constant dense<0xFF800000> : vector<8xf32>
    %86 = vector.multi_reduction <maximumf>, %85, %cst_32 [1] : vector<8x8xf32> to vector<8xf32>
    %87 = vector.shape_cast %86 : vector<8xf32> to vector<8x1xf32>
    %88 = vector.broadcast %87 : vector<8x1xf32> to vector<8x8xf32>
    %89 = arith.subf %85, %88 : vector<8x8xf32>
    %90 = math.exp %89 : vector<8x8xf32>
    %cst_33 = arith.constant dense<0.000000e+00> : vector<8xf32>
    %91 = vector.multi_reduction <add>, %90, %cst_33 [1] : vector<8x8xf32> to vector<8xf32>
    %92 = vector.shape_cast %91 : vector<8xf32> to vector<8x1xf32>
    %93 = tpu.reciprocal %92 {approx = true} : vector<8x1xf32> -> vector<8x1xf32>
    %94 = vector.broadcast %93 : vector<8x1xf32> to vector<8x8xf32>
    %95 = arith.mulf %90, %94 : vector<8x8xf32>
    %cst_34 = arith.constant dense<0.000000e+00> : vector<256x8xf32>
    %96 = tpu.matmul %81, %95, %cst_34 {dimension_numbers = #tpu.dot_dimension_numbers<[1], [1], [0], [0], [0, 0, 1, 0], [], []>} : vector<256x8xf32>, vector<8x8xf32>, vector<256x8xf32> -> vector<256x8xf32>
    %c0_35 = arith.constant 0 : index
    %c24 = arith.constant 24 : index
    %97 = vector.load %arg6[%c0_35, %c24] : memref<256x32xf32, #tpu.memory_space<vmem>>, vector<256x8xf32>
    tpu.vector_store %arg6[%c0_35, %c24], %96 {strides = array<i32>} : memref<256x32xf32, #tpu.memory_space<vmem>>, vector<256x8xf32>,
    %c0_36 = arith.constant 0 : index
    %c0_37 = arith.constant 0 : index
    %98 = vector.load %arg6[%c0_36, %c0_37] : memref<256x32xf32, #tpu.memory_space<vmem>>, vector<256x32xf32>
    %99 = arith.truncf %98 : vector<256x32xf32> to vector<256x32xbf16>
    %c0_38 = arith.constant 0 : index
    %c0_39 = arith.constant 0 : index
    %100 = vector.load %arg4[%c0_38, %c0_39] : memref<32x32xbf16, #tpu.memory_space<vmem>>, vector<32x32xbf16>
    %cst_40 = arith.constant dense<0.000000e+00> : vector<256x32xf32>
    %101 = tpu.matmul %99, %100, %cst_40 {dimension_numbers = #tpu.dot_dimension_numbers<[1], [0], [0], [1], [0, 0, 1, 1], [], []>} : vector<256x32xbf16>, vector<32x32xbf16>, vector<256x32xf32> -> vector<256x32xf32>
    %c0_41 = arith.constant 0 : index
    %c0_42 = arith.constant 0 : index
    %c0_43 = arith.constant 0 : index
    %102 = vector.load %arg5[%c0_41, %c0_42, %c0_43] : memref<1x256x32xf32, #tpu.memory_space<vmem>>, vector<1x256x32xf32>
    %103 = vector.shape_cast %102 : vector<1x256x32xf32> to vector<256x32xf32>
    %104 = vector.shape_cast %101 : vector<256x32xf32> to vector<1x256x32xf32>
    tpu.vector_store %arg5[%c0_41, %c0_42, %c0_43], %104 {strides = array<i32>} : memref<1x256x32xf32, #tpu.memory_space<vmem>>, vector<1x256x32xf32>,
    return
  }
  func.func @transform_0(%arg0: i32) -> (i32, i32) {
    %c0_i32 = arith.constant 0 : i32
    %c0_i32_0 = arith.constant 0 : i32
    %c0_i32_1 = arith.constant 0 : i32
    return %c0_i32, %c0_i32_0 : i32, i32
  }
  func.func @transform_1(%arg0: i32) -> (i32, i32, i32) {
    %c0_i32 = arith.constant 0 : i32
    %c0_i32_0 = arith.constant 0 : i32
    %c0_i32_1 = arith.constant 0 : i32
    return %arg0, %c0_i32, %c0_i32_0 : i32, i32, i32
  }
  func.func @transform_2(%arg0: i32) -> (i32, i32, i32) {
    %c0_i32 = arith.constant 0 : i32
    %c0_i32_0 = arith.constant 0 : i32
    %c0_i32_1 = arith.constant 0 : i32
    return %arg0, %c0_i32, %c0_i32_0 : i32, i32, i32
  }
  func.func @transform_3(%arg0: i32) -> (i32, i32) {
    %c0_i32 = arith.constant 0 : i32
    %c0_i32_0 = arith.constant 0 : i32
    %c0_i32_1 = arith.constant 0 : i32
    return %c0_i32, %c0_i32_0 : i32, i32
  }
  func.func @transform_4(%arg0: i32) -> (i32, i32, i32) {
    %c0_i32 = arith.constant 0 : i32
    %c0_i32_0 = arith.constant 0 : i32
    %c0_i32_1 = arith.constant 0 : i32
    return %arg0, %c0_i32, %c0_i32_0 : i32, i32, i32
  }
}

</mosaic_0001>

<llo_original>
// kernel: attention_forward.4
$region0: #{attention_forward.4}
  #allocation0 [shape = 'u32[]', space=smem, size = 0x4, offset = 0x4, fixed_abs, tag = 'smem constant byte address 0x4 - core index']
  #allocation1 [shape = 'u32[144,128]{1,0:T(1,128)}', space=vmem, size = 0x12000, scoped, tag = 'internal scratch']
  %s0 = inlined_call_operand.vmem [shape: f32[2,18,24,32], index: 0, kind: input, shape index: {}]
  %s1 = inlined_call_operand.vmem [shape: bf16[32,32], index: 1, kind: input, shape index: {}]
  %s2 = inlined_call_operand.vmem [shape: f32[9,32], index: 2, kind: input, shape index: {}]
  %s3 = inlined_call_operand.vmem [shape: f32[2,16,16,32], index: 3, kind: output, shape index: {}]
  %s4 = sld [smem:[#allocation0]]
  $region45: #{attention_forward.4} parent=0
    _
  %s6 = ssub.s32 1, %s4
  %s7 = scalar_select 0, %s6, %s4
  loop: start=0, step=1, limit=4
  $region2: #{attention_forward.4} parent=0 // loop_pre_header
    _
  $region3: #{attention_forward.4} parent=0 // loop_header
    %s9 = sphi 0, %s13
    %p10 = scmp.ge.s32.totalorder %s9, 4
    %s16 = sphi 0, %s28
    %s17 = sphi 0, %s24
    %s18 = sphi 0, %s16
    %s19 = sphi 0, %s17
    %s20 = sphi 0, %s18
    %s21 = sphi 0, %s19
    %s31 = sphi 0, %s33
    %s34 = sphi 0, %s31
    %s35 = sphi 0, %s34
    %s51 = sphi 0, %s35
    %s57 = sphi 0, %s59
    %s60 = sphi 0, %s57
    %s61 = sphi 0, %s60
    %s77 = sphi 0, %s61
    %s83 = sphi 0, %s85
    %s86 = sphi 0, %s83
    %s87 = sphi 0, %s86
    %s103 = sphi 0, %s87
    %s111 = sphi 0, %s113
    %s114 = sphi 0, %s111
    %s115 = sphi 0, %s114
    %s131 = sphi 0, %s115
  $region4: #{attention_forward.4} parent=0 // loop_header_branch
    %12 = sbr.rel (%p10) target = $region8
  $region5: #{attention_forward.4} parent=0 // loop_body
    %s14 = ssub.s32 %s9, 1
    %s15 = ssub.s32 %s9, 2
    %s22 = sadd.s32 1, %s17
    %p23 = scmp.ge.s32.totalorder %s22, 1
    %s24 = scalar_select %p23, 0, %s22
    %s25 = sadd.s32 1, %s16
    %s26 = scalar_select %p23, %s25, %s16
    %p27 = scmp.ge.s32.totalorder %s26, 2
    %s28 = scalar_select %p27, 0, %s26
    %s29 = ssub.s32 %s16, %s28
    %p30 = scmp.eq.s32.totalorder %s29, 0
    %s32 = sadd.s32 %s31, 1
    %s33 = scalar_select %p30, %s31, %s32
    %p36 = pneg %p30
    %p37 = scmp.eq.s32.totalorder %s9, 1
    %p38 = por %p36, %p37
    %p39 = scmp.ne.s32.totalorder %s31, %s34
    %p40 = scmp.eq.s32.totalorder %s9, 0
    %p41 = por %p39, %p40
    %p42 = scmp.ne.s32.totalorder %s31, %s34
    %p43 = scmp.eq.s32.totalorder %s14, 1
    %p44 = por %p42, %p43
    %p45 = scmp.ne.s32.totalorder %s34, %s35
    %p46 = scmp.eq.s32.totalorder %s14, 0
    %p47 = por %p45, %p46
    %p48 = scmp.ne.s32.totalorder %s34, %s35
    %p49 = scmp.eq.s32.totalorder %s15, 1
    %p50 = por %p48, %p49
    %p52 = scmp.ne.s32.totalorder %s35, %s51
    %p53 = scmp.eq.s32.totalorder %s15, 0
    %p54 = por %p52, %p53
    %s55 = ssub.s32 %s17, %s24
    %p56 = scmp.eq.s32.totalorder %s55, 0
    %s58 = sadd.s32 %s57, 1
    %s59 = scalar_select %p56, %s57, %s58
    %p62 = pneg %p56
    %p63 = scmp.eq.s32.totalorder %s9, 1
    %p64 = por %p62, %p63
    %p65 = scmp.ne.s32.totalorder %s57, %s60
    %p66 = scmp.eq.s32.totalorder %s9, 0
    %p67 = por %p65, %p66
    %p68 = scmp.ne.s32.totalorder %s57, %s60
    %p69 = scmp.eq.s32.totalorder %s14, 1
    %p70 = por %p68, %p69
    %p71 = scmp.ne.s32.totalorder %s60, %s61
    %p72 = scmp.eq.s32.totalorder %s14, 0
    %p73 = por %p71, %p72
    %p74 = scmp.ne.s32.totalorder %s60, %s61
    %p75 = scmp.eq.s32.totalorder %s15, 1
    %p76 = por %p74, %p75
    %p78 = scmp.ne.s32.totalorder %s61, %s77
    %p79 = scmp.eq.s32.totalorder %s15, 0
    %p80 = por %p78, %p79
    %s81 = ssub.s32 %s17, %s24
    %p82 = scmp.eq.s32.totalorder %s81, 0
    %s84 = sadd.s32 %s83, 1
    %s85 = scalar_select %p82, %s83, %s84
    %p88 = pneg %p82
    %p89 = scmp.eq.s32.totalorder %s9, 1
    %p90 = por %p88, %p89
    %p91 = scmp.ne.s32.totalorder %s83, %s86
    %p92 = scmp.eq.s32.totalorder %s9, 0
    %p93 = por %p91, %p92
    %p94 = scmp.ne.s32.totalorder %s83, %s86
    %p95 = scmp.eq.s32.totalorder %s14, 1
    %p96 = por %p94, %p95
    %p97 = scmp.ne.s32.totalorder %s86, %s87
    %p98 = scmp.eq.s32.totalorder %s14, 0
    %p99 = por %p97, %p98
    %p100 = scmp.ne.s32.totalorder %s86, %s87
    %p101 = scmp.eq.s32.totalorder %s15, 1
    %p102 = por %p100, %p101
    %p104 = scmp.ne.s32.totalorder %s87, %s103
    %p105 = scmp.eq.s32.totalorder %s15, 0
    %p106 = por %p104, %p105
    %s107 = ssub.s32 %s16, %s28
    %s108 = ssub.s32 %s17, %s24
    %s109 = sor.u32 %s107, %s108
    %p110 = scmp.eq.s32.totalorder %s109, 0
    %s112 = sadd.s32 %s111, 1
    %s113 = scalar_select %p110, %s111, %s112
    %p116 = pneg %p110
    %p117 = scmp.eq.s32.totalorder %s9, 1
    %p118 = por %p116, %p117
    %p119 = scmp.ne.s32.totalorder %s111, %s114
    %p120 = scmp.eq.s32.totalorder %s9, 0
    %p121 = por %p119, %p120
    %p122 = scmp.ne.s32.totalorder %s111, %s114
    %p123 = scmp.eq.s32.totalorder %s14, 1
    %p124 = por %p122, %p123
    %p125 = scmp.ne.s32.totalorder %s114, %s115
    %p126 = scmp.eq.s32.totalorder %s14, 0
    %p127 = por %p125, %p126
    %p128 = scmp.ne.s32.totalorder %s114, %s115
    %p129 = scmp.eq.s32.totalorder %s15, 1
    %p130 = por %p128, %p129
    %p132 = scmp.ne.s32.totalorder %s115, %s131
    %p133 = scmp.eq.s32.totalorder %s15, 0
    %p134 = por %p132, %p133
    %p135 = scmp.le.s32.totalorder 1, %s9
    %p136 = scmp.lt.s32.totalorder %s9, 3
    %p137 = pnand %p135, %p136
    %p138 = pneg %p137
    // Predicated region
    $region9: #{attention_forward.4} parent=5 // pred_check
      _
    $region10: #{attention_forward.4} parent=5 // pred_check_branch
      %140 = sbr.rel (%p137) target = $region12
    $region11: #{attention_forward.4} parent=5 // pred_region
      %s141 = ssub.s32 %s9, 1
      // Predicated region
      $region13: #{attention_forward.4} parent=11 // pred_check
        %p142 = pneg %p73
      $region14: #{attention_forward.4} parent=11 // pred_check_branch
        %144 = sbr.rel (%p142) target = $region16
      $region15: #{attention_forward.4} parent=11 // pred_region
        %p145 = scmp.lt.s32.totalorder %s19, 0
        %s146 = scalar_select %p145, %s19, 0
        %s147 = smul.addr %s146, 4
        %s148 = scalar_lea.vmem %s1, %s147
      $region16: #{attention_forward.4} parent=11 // pred_fallthru
        _
      // Predicated region
      $region17: #{attention_forward.4} parent=11 // pred_check
        %p149 = pneg %p99
      $region18: #{attention_forward.4} parent=11 // pred_check_branch
        %151 = sbr.rel (%p149) target = $region20
      $region19: #{attention_forward.4} parent=11 // pred_region
        %p152 = scmp.lt.s32.totalorder %s19, 0
        %s153 = scalar_select %p152, %s19, 0
        %s154 = smul.addr %s153, 8
        %s155 = scalar_lea.vmem %s2, %s154
      $region20: #{attention_forward.4} parent=11 // pred_fallthru
        _
    $region12: #{attention_forward.4} parent=5 // pred_fallthru
      _
    %p156 = scmp.lt.s32.totalorder %s9, 2
    // Predicated region
    $region21: #{attention_forward.4} parent=5 // pred_check
      %p157 = pneg %p156
    $region22: #{attention_forward.4} parent=5 // pred_check_branch
      %159 = sbr.rel (%p157) target = $region24
    $region23: #{attention_forward.4} parent=5 // pred_region
      // Predicated region
      $region25: #{attention_forward.4} parent=23 // pred_check
        %p160 = pneg %p41
      $region26: #{attention_forward.4} parent=23 // pred_check_branch
        %162 = sbr.rel (%p160) target = $region28
      $region27: #{attention_forward.4} parent=23 // pred_region
        %p163 = scmp.lt.s32.totalorder %s16, 1
        %s164 = scalar_select %p163, %s16, 1
        %s165 = smul.addr %s164, 54
        %s166 = smul.addr %s165, 8
        %s167 = scalar_lea.vmem %s0, %s166
      $region28: #{attention_forward.4} parent=23 // pred_fallthru
        _
    $region24: #{attention_forward.4} parent=5 // pred_fallthru
      _
    %p168 = scmp.le.s32.totalorder 1, %s9
    %p169 = scmp.lt.s32.totalorder %s9, 3
    %p170 = pnand %p168, %p169
    %p171 = pneg %p170
    // Predicated region
    $region29: #{attention_forward.4} parent=5 // pred_check
      _
    $region30: #{attention_forward.4} parent=5 // pred_check_branch
      %173 = sbr.rel (%p170) target = $region32
    $region31: #{attention_forward.4} parent=5 // pred_region
      %s174 = ssub.s32 %s9, 1
      %p175 = scmp.lt.s32.totalorder %s18, 1
      %s176 = scalar_select %p175, %s18, 1
      %s177 = smul.addr %s176, 54
      %s178 = smul.addr %s177, 8
      %s179 = scalar_lea.vmem %s0, %s178
      %p180 = pneg %p47
      %p181 = pneg %p44
      %p182 = scmp.lt.s32.totalorder %s19, 0
      %s183 = scalar_select %p182, %s19, 0
      %s184 = smul.addr %s183, 4
      %s185 = scalar_lea.vmem %s1, %s184
      %p186 = pneg %p73
      %p187 = pneg %p70
      %p188 = scmp.lt.s32.totalorder %s19, 0
      %s189 = scalar_select %p188, %s19, 0
      %s190 = smul.addr %s189, 8
      %s191 = scalar_lea.vmem %s2, %s190
      %p192 = pneg %p99
      %p193 = pneg %p96
      %p194 = pneg %p127
      %p195 = pneg %p124
      %p196 = scmp.lt.s32.totalorder %s18, 1
      %s197 = scalar_select %p196, %s18, 1
      %p198 = scmp.lt.s32.totalorder %s19, 0
      %s199 = scalar_select %p198, %s19, 0
      %s200 = smul.addr %s197, 32
      %s201 = sadd.s32 %s199, %s200
      %s202 = smul.addr %s201, 8
      %s203 = scalar_lea.vmem %s3, %s202
      %p204 = scmp.lt.s32.totalorder %s18, 1
      %s205 = scalar_select %p204, %s18, 1
      %s206 = smul.addr %s205, 54
      %s207 = smul.addr %s206, 8
      %s208 = scalar_lea.vmem %s0, %s207
      %p209 = scmp.lt.s32.totalorder %s19, 0
      %s210 = scalar_select %p209, %s19, 0
      %s211 = smul.addr %s210, 4
      %s212 = scalar_lea.vmem %s1, %s211
      %p213 = scmp.lt.s32.totalorder %s19, 0
      %s214 = scalar_select %p213, %s19, 0
      %s215 = smul.addr %s214, 8
      %s216 = scalar_lea.vmem %s2, %s215
      %p217 = scmp.lt.s32.totalorder %s18, 1
      %s218 = scalar_select %p217, %s18, 1
      %p219 = scmp.lt.s32.totalorder %s19, 0
      %s220 = scalar_select %p219, %s19, 0
      %s221 = smul.addr %s218, 32
      %s222 = sadd.s32 %s220, %s221
      %s223 = smul.addr %s222, 8
      %s224 = scalar_lea.vmem %s3, %s223
      %v226 = vld [vmem:[%s208] sm:$0xff]
      %v227 = vld [vmem:[%s208 + $0x8] sm:$0xff]
      %v228 = vld [vmem:[%s208 + $0x10] sm:$0xff]
      %v229 = vld [vmem:[%s208 + $0x18] sm:$0xff]
      %v230 = vld [vmem:[%s208 + $0x20] sm:$0xff]
      %v231 = vld [vmem:[%s208 + $0x28] sm:$0xff]
      %v232 = vld [vmem:[%s208 + $0x30] sm:$0xff]
      %v233 = vld [vmem:[%s208 + $0x38] sm:$0xff]
      %v234 = vld [vmem:[%s208 + $0x40] sm:$0xff]
      %v235 = vld [vmem:[%s208 + $0x48] sm:$0xff]
      %v236 = vld [vmem:[%s208 + $0x50] sm:$0xff]
      %v237 = vld [vmem:[%s208 + $0x58] sm:$0xff]
      %v238 = vld [vmem:[%s208 + $0x60] sm:$0xff]
      %v239 = vld [vmem:[%s208 + $0x68] sm:$0xff]
      %v240 = vld [vmem:[%s208 + $0x70] sm:$0xff]
      %v241 = vld [vmem:[%s208 + $0x78] sm:$0xff]
      %v242 = vld [vmem:[%s208 + $0x80] sm:$0xff]
      %v243 = vld [vmem:[%s208 + $0x88] sm:$0xff]
      %v244 = vld [vmem:[%s208 + $0x90] sm:$0xff]
      %v245 = vld [vmem:[%s208 + $0x98] sm:$0xff]
      %v246 = vld [vmem:[%s208 + $0xa0] sm:$0xff]
      %v247 = vld [vmem:[%s208 + $0xa8] sm:$0xff]
      %v248 = vld [vmem:[%s208 + $0xb0] sm:$0xff]
      %v249 = vld [vmem:[%s208 + $0xb8] sm:$0xff]
      %v250 = vld [vmem:[%s208 + $0xc0] sm:$0xff]
      %v251 = vld [vmem:[%s208 + $0xc8] sm:$0xff]
      %v252 = vld [vmem:[%s208 + $0xd0] sm:$0xff]
      %v253 = vld [vmem:[%s208 + $0xd8] sm:$0xff]
      %v254 = vld [vmem:[%s208 + $0xe0] sm:$0xff]
      %v255 = vld [vmem:[%s208 + $0xe8] sm:$0xff]
      %v256 = vld [vmem:[%s208 + $0xf0] sm:$0xff]
      %v257 = vld [vmem:[%s208 + $0xf8] sm:$0xff]
      %v258 = vld [vmem:[%s208 + $0x100] sm:$0xff]
      %v259 = vld [vmem:[%s208 + $0x108] sm:$0xff]
      %v260 = vld [vmem:[%s208 + $0x110] sm:$0xff]
      %v261 = vld [vmem:[%s208 + $0x118] sm:$0xff]
      %v262 = vld [vmem:[%s208 + $0x120] sm:$0xff]
      %v263 = vld [vmem:[%s208 + $0x128] sm:$0xff]
      %v264 = vld [vmem:[%s208 + $0x130] sm:$0xff]
      %v265 = vld [vmem:[%s208 + $0x138] sm:$0xff]
      %v266 = vld [vmem:[%s208 + $0x140] sm:$0xff]
      %v267 = vld [vmem:[%s208 + $0x148] sm:$0xff]
      %v268 = vld [vmem:[%s208 + $0x150] sm:$0xff]
      %v269 = vld [vmem:[%s208 + $0x158] sm:$0xff]
      %v270 = vld [vmem:[%s208 + $0x160] sm:$0xff]
      %v271 = vld [vmem:[%s208 + $0x168] sm:$0xff]
      %v272 = vld [vmem:[%s208 + $0x170] sm:$0xff]
      %v273 = vld [vmem:[%s208 + $0x178] sm:$0xff]
      %v274 = vld [vmem:[%s208 + $0x180] sm:$0xff]
      %v275 = vld [vmem:[%s208 + $0x188] sm:$0xff]
      %v276 = vld [vmem:[%s208 + $0x190] sm:$0xff]
      %v277 = vld [vmem:[%s208 + $0x198] sm:$0xff]
      %v278 = vld [vmem:[%s208 + $0x1a0] sm:$0xff]
      %v279 = vld [vmem:[%s208 + $0x1a8] sm:$0xff]
      %v280 = vpack.c.bf16 %v227, %v226
      %v281 = vpack.c.bf16 %v229, %v228
      %v282 = vpack.c.bf16 %v231, %v230
      %v283 = vpack.c.bf16 %v233, %v232
      %v284 = vpack.c.bf16 %v235, %v234
      %v285 = vpack.c.bf16 %v237, %v236
      %v286 = vpack.c.bf16 %v239, %v238
      %v287 = vpack.c.bf16 %v241, %v240
      %v288 = vpack.c.bf16 %v243, %v242
      %v289 = vpack.c.bf16 %v245, %v244
      %v290 = vpack.c.bf16 %v247, %v246
      %v291 = vpack.c.bf16 %v249, %v248
      %v292 = vpack.c.bf16 %v251, %v250
      %v293 = vpack.c.bf16 %v253, %v252
      %v294 = vpack.c.bf16 %v255, %v254
      %v295 = vpack.c.bf16 %v257, %v256
      %v296 = vpack.c.bf16 %v259, %v258
      %v297 = vpack.c.bf16 %v261, %v260
      %v298 = vpack.c.bf16 %v263, %v262
      %v299 = vpack.c.bf16 %v265, %v264
      %v300 = vpack.c.bf16 %v267, %v266
      %v301 = vpack.c.bf16 %v269, %v268
      %v302 = vpack.c.bf16 %v271, %v270
      %v303 = vpack.c.bf16 %v273, %v272
      %v304 = vpack.c.bf16 %v275, %v274
      %v305 = vpack.c.bf16 %v277, %v276
      %v306 = vpack.c.bf16 %v279, %v278
      %v307 = vld [vmem:[%s212] sm:$0xf]
      %v308 = vld [vmem:[%s212 + $0x4] sm:$0xf]
      %v309 = vld [vmem:[%s212 + $0x8] sm:$0xf]
      %v310 = vld [vmem:[%s212 + $0xc] sm:$0xf]
      %v315 = vunpack.c.l.b16 %v307
      %v316 = vunpack.c.l.b16 %v308
      %v317 = vunpack.c.l.b16 %v309
      %v318 = vunpack.c.l.b16 %v310
      %v319 = vpack.c.b16 %v316, %v315
      %v320 = vpack.c.b16 %v318, %v317
      %vm323 = vcmask 261120
      %v325 = vsel %vm323, %v280, 0
      %v328 = vsel %vm323, %v281, 0
      %v331 = vsel %vm323, %v282, 0
      %v334 = vsel %vm323, %v283, 0
      %v337 = vsel %vm323, %v284, 0
      %v340 = vsel %vm323, %v285, 0
      %v343 = vsel %vm323, %v286, 0
      %v346 = vsel %vm323, %v287, 0
      %v349 = vsel %vm323, %v288, 0
      %v352 = vsel %vm323, %v289, 0
      %v355 = vsel %vm323, %v290, 0
      %v358 = vsel %vm323, %v291, 0
      %v361 = vsel %vm323, %v292, 0
      %v364 = vsel %vm323, %v293, 0
      %v367 = vsel %vm323, %v294, 0
      %v370 = vsel %vm323, %v295, 0
      %v373 = vsel %vm323, %v296, 0
      %v376 = vsel %vm323, %v297, 0
      %v379 = vsel %vm323, %v298, 0
      %v382 = vsel %vm323, %v299, 0
      %v385 = vsel %vm323, %v300, 0
      %v388 = vsel %vm323, %v301, 0
      %v391 = vsel %vm323, %v302, 0
      %v394 = vsel %vm323, %v303, 0
      %v397 = vsel %vm323, %v304, 0
      %v400 = vsel %vm323, %v305, 0
      %v403 = vsel %vm323, %v306, 0
      %405 = vmatprep.subr.bf16.mxu0 0
      %406 = vmatpush1.bf16.msra.mxu0 %v319
      %407 = vmatprep.subr.bf16.mxu0 0
      %408 = vmatpush1.bf16.msra.mxu0 %v320
      %409 = vmatprep.subr.bf16.mxu0 0
      %410 = vmatpush1.bf16.msra.mxu0 0
      %411 = vmatprep.subr.bf16.mxu0 0
      %412 = vmatpush1.bf16.msra.mxu0 0
      %413 = vmatprep.subr.bf16.mxu0 0
      %414 = vmatpush1.bf16.msra.mxu0 0
      %415 = vmatprep.subr.bf16.mxu0 0
      %416 = vmatpush1.bf16.msra.mxu0 0
      %417 = vmatprep.subr.bf16.mxu0 0
      %418 = vmatpush1.bf16.msra.mxu0 0
      %419 = vmatprep.subr.bf16.mxu0 0
      %420 = vmatpush1.bf16.msra.mxu0 0
      %421 = vmatprep.subr.bf16.mxu0 0
      %422 = vmatpush1.bf16.msra.mxu0 0
      %423 = vmatprep.subr.bf16.mxu0 0
      %424 = vmatpush1.bf16.msra.mxu0 0
      %425 = vmatprep.subr.bf16.mxu0 0
      %426 = vmatpush1.bf16.msra.mxu0 0
      %427 = vmatprep.subr.bf16.mxu0 0
      %428 = vmatpush1.bf16.msra.mxu0 0
      %429 = vmatprep.subr.bf16.mxu0 0
      %430 = vmatpush1.bf16.msra.mxu0 0
      %431 = vmatprep.subr.bf16.mxu0 0
      %432 = vmatpush1.bf16.msra.mxu0 0
      %433 = vmatprep.subr.bf16.mxu0 0
      %434 = vmatpush1.bf16.msra.mxu0 0
      %435 = vmatprep.subr.bf16.mxu0 0
      %436 = vmatpush1.bf16.msra.mxu0 0
      %437 = vmatprep.mubr.bf16.mxu0 0
      %438 = vmatmul.mubr.bf16.gmra.mrb[0].mxu0 %v325
      %v439 = vpop.f32.mrb[0].mxu0
      %v440 = vadd.f32 0.0, %v439
      %v441 = vpop.f32.mrb[0].mxu0
      %v442 = vpop.f32.mrb[0].mxu0
      %v443 = vadd.f32 0.0, %v442
      %v444 = vpop.f32.mrb[0].mxu0
      %445 = vmatprep.mubr.bf16.mxu0 0
      %446 = vmatmul.mubr.bf16.gmra.mrb[0].mxu0 %v328
      %v447 = vpop.f32.mrb[0].mxu0
      %v448 = vadd.f32 0.0, %v447
      %v449 = vpop.f32.mrb[0].mxu0
      %v450 = vpop.f32.mrb[0].mxu0
      %v451 = vadd.f32 0.0, %v450
      %v452 = vpop.f32.mrb[0].mxu0
      %453 = vmatprep.mubr.bf16.mxu0 0
      %454 = vmatmul.mubr.bf16.gmra.mrb[0].mxu0 %v331
      %v455 = vpop.f32.mrb[0].mxu0
      %v456 = vadd.f32 0.0, %v455
      %v457 = vpop.f32.mrb[0].mxu0
      %v458 = vpop.f32.mrb[0].mxu0
      %v459 = vadd.f32 0.0, %v458
      %v460 = vpop.f32.mrb[0].mxu0
      %461 = vmatprep.mubr.bf16.mxu0 0
      %462 = vmatmul.mubr.bf16.gmra.mrb[0].mxu0 %v334
      %v463 = vpop.f32.mrb[0].mxu0
      %v464 = vadd.f32 0.0, %v463
      %v465 = vpop.f32.mrb[0].mxu0
      %v466 = vpop.f32.mrb[0].mxu0
      %v467 = vadd.f32 0.0, %v466
      %v468 = vpop.f32.mrb[0].mxu0
      %469 = vmatprep.mubr.bf16.mxu0 0
      %470 = vmatmul.mubr.bf16.gmra.mrb[0].mxu0 %v337
      %v471 = vpop.f32.mrb[0].mxu0
      %v472 = vadd.f32 0.0, %v471
      %v473 = vpop.f32.mrb[0].mxu0
      %v474 = vpop.f32.mrb[0].mxu0
      %v475 = vadd.f32 0.0, %v474
      %v476 = vpop.f32.mrb[0].mxu0
      %477 = vmatprep.mubr.bf16.mxu0 0
      %478 = vmatmul.mubr.bf16.gmra.mrb[0].mxu0 %v340
      %v479 = vpop.f32.mrb[0].mxu0
      %v480 = vadd.f32 0.0, %v479
      %v481 = vpop.f32.mrb[0].mxu0
      %v482 = vpop.f32.mrb[0].mxu0
      %v483 = vadd.f32 0.0, %v482
      %v484 = vpop.f32.mrb[0].mxu0
      %485 = vmatprep.mubr.bf16.mxu0 0
      %486 = vmatmul.mubr.bf16.gmra.mrb[0].mxu0 %v343
      %v487 = vpop.f32.mrb[0].mxu0
      %v488 = vadd.f32 0.0, %v487
      %v489 = vpop.f32.mrb[0].mxu0
      %v490 = vpop.f32.mrb[0].mxu0
      %v491 = vadd.f32 0.0, %v490
      %v492 = vpop.f32.mrb[0].mxu0
      %493 = vmatprep.mubr.bf16.mxu0 0
      %494 = vmatmul.mubr.bf16.gmra.mrb[0].mxu0 %v346
      %v495 = vpop.f32.mrb[0].mxu0
      %v496 = vadd.f32 0.0, %v495
      %v497 = vpop.f32.mrb[0].mxu0
      %v498 = vpop.f32.mrb[0].mxu0
      %v499 = vadd.f32 0.0, %v498
      %v500 = vpop.f32.mrb[0].mxu0
      %501 = vmatprep.mubr.bf16.mxu0 0
      %502 = vmatmul.mubr.bf16.gmra.mrb[0].mxu0 %v349
      %v503 = vpop.f32.mrb[0].mxu0
      %v504 = vadd.f32 0.0, %v503
      %v505 = vpop.f32.mrb[0].mxu0
      %v506 = vpop.f32.mrb[0].mxu0
      %v507 = vadd.f32 0.0, %v506
      %v508 = vpop.f32.mrb[0].mxu0
      %509 = vmatprep.mubr.bf16.mxu0 0
      %510 = vmatmul.mubr.bf16.gmra.mrb[0].mxu0 %v352
      %v511 = vpop.f32.mrb[0].mxu0
      %v512 = vadd.f32 0.0, %v511
      %v513 = vpop.f32.mrb[0].mxu0
      %v514 = vpop.f32.mrb[0].mxu0
      %v515 = vadd.f32 0.0, %v514
      %v516 = vpop.f32.mrb[0].mxu0
      %517 = vmatprep.mubr.bf16.mxu0 0
      %518 = vmatmul.mubr.bf16.gmra.mrb[0].mxu0 %v355
      %v519 = vpop.f32.mrb[0].mxu0
      %v520 = vadd.f32 0.0, %v519
      %v521 = vpop.f32.mrb[0].mxu0
      %v522 = vpop.f32.mrb[0].mxu0
      %v523 = vadd.f32 0.0, %v522
      %v524 = vpop.f32.mrb[0].mxu0
      %525 = vmatprep.mubr.bf16.mxu0 0
      %526 = vmatmul.mubr.bf16.gmra.mrb[0].mxu0 %v358
      %v527 = vpop.f32.mrb[0].mxu0
      %v528 = vadd.f32 0.0, %v527
      %v529 = vpop.f32.mrb[0].mxu0
      %v530 = vpop.f32.mrb[0].mxu0
      %v531 = vadd.f32 0.0, %v530
      %v532 = vpop.f32.mrb[0].mxu0
      %533 = vmatprep.mubr.bf16.mxu0 0
      %534 = vmatmul.mubr.bf16.gmra.mrb[0].mxu0 %v361
      %v535 = vpop.f32.mrb[0].mxu0
      %v536 = vadd.f32 0.0, %v535
      %v537 = vpop.f32.mrb[0].mxu0
      %v538 = vpop.f32.mrb[0].mxu0
      %v539 = vadd.f32 0.0, %v538
      %v540 = vpop.f32.mrb[0].mxu0
      %541 = vmatprep.mubr.bf16.mxu0 0
      %542 = vmatmul.mubr.bf16.gmra.mrb[0].mxu0 %v364
      %v543 = vpop.f32.mrb[0].mxu0
      %v544 = vadd.f32 0.0, %v543
      %v545 = vpop.f32.mrb[0].mxu0
      %v546 = vpop.f32.mrb[0].mxu0
      %v547 = vadd.f32 0.0, %v546
      %v548 = vpop.f32.mrb[0].mxu0
      %549 = vmatprep.mubr.bf16.mxu0 0
      %550 = vmatmul.mubr.bf16.gmra.mrb[0].mxu0 %v367
      %v551 = vpop.f32.mrb[0].mxu0
      %v552 = vadd.f32 0.0, %v551
      %v553 = vpop.f32.mrb[0].mxu0
      %v554 = vpop.f32.mrb[0].mxu0
      %v555 = vadd.f32 0.0, %v554
      %v556 = vpop.f32.mrb[0].mxu0
      %557 = vmatprep.mubr.bf16.mxu0 0
      %558 = vmatmul.mubr.bf16.gmra.mrb[0].mxu0 %v370
      %v559 = vpop.f32.mrb[0].mxu0
      %v560 = vadd.f32 0.0, %v559
      %v561 = vpop.f32.mrb[0].mxu0
      %v562 = vpop.f32.mrb[0].mxu0
      %v563 = vadd.f32 0.0, %v562
      %v564 = vpop.f32.mrb[0].mxu0
      %565 = vmatprep.mubr.bf16.mxu0 0
      %566 = vmatmul.mubr.bf16.gmra.mrb[0].mxu0 %v373
      %v567 = vpop.f32.mrb[0].mxu0
      %v568 = vadd.f32 0.0, %v567
      %v569 = vpop.f32.mrb[0].mxu0
      %v570 = vpop.f32.mrb[0].mxu0
      %v571 = vadd.f32 0.0, %v570
      %v572 = vpop.f32.mrb[0].mxu0
      %573 = vmatprep.mubr.bf16.mxu0 0
      %574 = vmatmul.mubr.bf16.gmra.mrb[0].mxu0 %v376
      %v575 = vpop.f32.mrb[0].mxu0
      %v576 = vadd.f32 0.0, %v575
      %v577 = vpop.f32.mrb[0].mxu0
      %v578 = vpop.f32.mrb[0].mxu0
      %v579 = vadd.f32 0.0, %v578
      %v580 = vpop.f32.mrb[0].mxu0
      %581 = vmatprep.mubr.bf16.mxu0 0
      %582 = vmatmul.mubr.bf16.gmra.mrb[0].mxu0 %v379
      %v583 = vpop.f32.mrb[0].mxu0
      %v584 = vadd.f32 0.0, %v583
      %v585 = vpop.f32.mrb[0].mxu0
      %v586 = vpop.f32.mrb[0].mxu0
      %v587 = vadd.f32 0.0, %v586
      %v588 = vpop.f32.mrb[0].mxu0
      %589 = vmatprep.mubr.bf16.mxu0 0
      %590 = vmatmul.mubr.bf16.gmra.mrb[0].mxu0 %v382
      %v591 = vpop.f32.mrb[0].mxu0
      %v592 = vadd.f32 0.0, %v591
      %v593 = vpop.f32.mrb[0].mxu0
      %v594 = vpop.f32.mrb[0].mxu0
      %v595 = vadd.f32 0.0, %v594
      %v596 = vpop.f32.mrb[0].mxu0
      %597 = vmatprep.mubr.bf16.mxu0 0
      %598 = vmatmul.mubr.bf16.gmra.mrb[0].mxu0 %v385
      %v599 = vpop.f32.mrb[0].mxu0
      %v600 = vadd.f32 0.0, %v599
      %v601 = vpop.f32.mrb[0].mxu0
      %v602 = vpop.f32.mrb[0].mxu0
      %v603 = vadd.f32 0.0, %v602
      %v604 = vpop.f32.mrb[0].mxu0
      %605 = vmatprep.mubr.bf16.mxu0 0
      %606 = vmatmul.mubr.bf16.gmra.mrb[0].mxu0 %v388
      %v607 = vpop.f32.mrb[0].mxu0
      %v608 = vadd.f32 0.0, %v607
      %v609 = vpop.f32.mrb[0].mxu0
      %v610 = vpop.f32.mrb[0].mxu0
      %v611 = vadd.f32 0.0, %v610
      %v612 = vpop.f32.mrb[0].mxu0
      %613 = vmatprep.mubr.bf16.mxu0 0
      %614 = vmatmul.mubr.bf16.gmra.mrb[0].mxu0 %v391
      %v615 = vpop.f32.mrb[0].mxu0
      %v616 = vadd.f32 0.0, %v615
      %v617 = vpop.f32.mrb[0].mxu0
      %v618 = vpop.f32.mrb[0].mxu0
      %v619 = vadd.f32 0.0, %v618
      %v620 = vpop.f32.mrb[0].mxu0
      %621 = vmatprep.mubr.bf16.mxu0 0
      %622 = vmatmul.mubr.bf16.gmra.mrb[0].mxu0 %v394
      %v623 = vpop.f32.mrb[0].mxu0
      %v624 = vadd.f32 0.0, %v623
      %v625 = vpop.f32.mrb[0].mxu0
      %v626 = vpop.f32.mrb[0].mxu0
      %v627 = vadd.f32 0.0, %v626
      %v628 = vpop.f32.mrb[0].mxu0
      %629 = vmatprep.mubr.bf16.mxu0 0
      %630 = vmatmul.mubr.bf16.gmra.mrb[0].mxu0 %v397
      %v631 = vpop.f32.mrb[0].mxu0
      %v632 = vadd.f32 0.0, %v631
      %v633 = vpop.f32.mrb[0].mxu0
      %v634 = vpop.f32.mrb[0].mxu0
      %v635 = vadd.f32 0.0, %v634
      %v636 = vpop.f32.mrb[0].mxu0
      %637 = vmatprep.mubr.bf16.mxu0 0
      %638 = vmatmul.mubr.bf16.gmra.mrb[0].mxu0 %v400
      %v639 = vpop.f32.mrb[0].mxu0
      %v640 = vadd.f32 0.0, %v639
      %v641 = vpop.f32.mrb[0].mxu0
      %v642 = vpop.f32.mrb[0].mxu0
      %v643 = vadd.f32 0.0, %v642
      %v644 = vpop.f32.mrb[0].mxu0
      %645 = vmatprep.mubr.bf16.mxu0 0
      %646 = vmatmul.mubr.bf16.gmra.mrb[0].mxu0 %v403
      %v647 = vpop.f32.mrb[0].mxu0
      %v648 = vadd.f32 0.0, %v647
      %v649 = vpop.f32.mrb[0].mxu0
      %v650 = vpop.f32.mrb[0].mxu0
      %v651 = vadd.f32 0.0, %v650
      %v652 = vpop.f32.mrb[0].mxu0
      %653 = vdwg.mxu0
      %v654 = vld [vmem:[%s216] sm:$0x1]
      %v655 = vlaneseq
      %v656 = vshrl.u32 %v655, 7
      %v657 = vsub.s32 0, %v656
      %v658 = vrot.slane %v654, %v657
      %v659 = vmul.f32 %v440, %v658
      %v660 = vmul.f32 %v443, %v658
      %v661 = vmul.f32 %v451, %v658
      %v662 = vmul.f32 %v456, %v658
      %v663 = vmul.f32 %v464, %v658
      %v664 = vmul.f32 %v467, %v658
      %v665 = vmul.f32 %v475, %v658
      %v666 = vmul.f32 %v480, %v658
      %v667 = vmul.f32 %v488, %v658
      %v668 = vmul.f32 %v491, %v658
      %v669 = vmul.f32 %v499, %v658
      %v670 = vmul.f32 %v504, %v658
      %v671 = vmul.f32 %v512, %v658
      %v672 = vmul.f32 %v515, %v658
      %v673 = vmul.f32 %v523, %v658
      %v674 = vmul.f32 %v528, %v658
      %v675 = vmul.f32 %v536, %v658
      %v676 = vmul.f32 %v539, %v658
      %v677 = vmul.f32 %v547, %v658
      %v678 = vmul.f32 %v552, %v658
      %v679 = vmul.f32 %v560, %v658
      %v680 = vmul.f32 %v563, %v658
      %v681 = vmul.f32 %v571, %v658
      %v682 = vmul.f32 %v576, %v658
      %v683 = vmul.f32 %v584, %v658
      %v684 = vmul.f32 %v587, %v658
      %v685 = vmul.f32 %v595, %v658
      %v686 = vmul.f32 %v600, %v658
      %v687 = vmul.f32 %v608, %v658
      %v688 = vmul.f32 %v611, %v658
      %v689 = vmul.f32 %v619, %v658
      %v690 = vmul.f32 %v624, %v658
      %v691 = vadd.f32 %v659, 0.0
      %v692 = vadd.f32 %v660, 0.0
      %v693 = vadd.f32 %v661, 0.0
      %v694 = vadd.f32 %v662, 0.0
      %v695 = vadd.f32 %v663, 0.0
      %v696 = vadd.f32 %v664, 0.0
      %v697 = vadd.f32 %v665, 0.0
      %v698 = vadd.f32 %v666, 0.0
      %v699 = vadd.f32 %v667, 0.0
      %v700 = vadd.f32 %v668, 0.0
      %v701 = vadd.f32 %v669, 0.0
      %v702 = vadd.f32 %v670, 0.0
      %v703 = vadd.f32 %v671, 0.0
      %v704 = vadd.f32 %v672, 0.0
      %v705 = vadd.f32 %v673, 0.0
      %v706 = vadd.f32 %v674, 0.0
      %v707 = vadd.f32 %v675, 0.0
      %v708 = vadd.f32 %v676, 0.0
      %v709 = vadd.f32 %v677, 0.0
      %v710 = vadd.f32 %v678, 0.0
      %v711 = vadd.f32 %v679, 0.0
      %v712 = vadd.f32 %v680, 0.0
      %v713 = vadd.f32 %v681, 0.0
      %v714 = vadd.f32 %v682, 0.0
      %v715 = vadd.f32 %v683, 0.0
      %v716 = vadd.f32 %v684, 0.0
      %v717 = vadd.f32 %v685, 0.0
      %v718 = vadd.f32 %v686, 0.0
      %v719 = vadd.f32 %v687, 0.0
      %v720 = vadd.f32 %v688, 0.0
      %v721 = vadd.f32 %v689, 0.0
      %v722 = vadd.f32 %v690, 0.0
      %v723 = vld [vmem:[%s216 + $0x1] sm:$0x1]
      %v724 = vlaneseq
      %v725 = vshrl.u32 %v724, 7
      %v726 = vsub.s32 0, %v725
      %v727 = vrot.slane %v723, %v726
      %v728 = vmul.f32 %v440, %v727
      %v729 = vmul.f32 %v443, %v727
      %v730 = vmul.f32 %v448, %v727
      %v731 = vmul.f32 %v451, %v727
      %v732 = vmul.f32 %v456, %v727
      %v733 = vmul.f32 %v459, %v727
      %v734 = vmul.f32 %v464, %v727
      %v735 = vmul.f32 %v467, %v727
      %v736 = vmul.f32 %v472, %v727
      %v737 = vmul.f32 %v475, %v727
      %v738 = vmul.f32 %v480, %v727
      %v739 = vmul.f32 %v483, %v727
      %v740 = vmul.f32 %v488, %v727
      %v741 = vmul.f32 %v491, %v727
      %v742 = vmul.f32 %v496, %v727
      %v743 = vmul.f32 %v499, %v727
      %v744 = vmul.f32 %v504, %v727
      %v745 = vmul.f32 %v507, %v727
      %v746 = vmul.f32 %v512, %v727
      %v747 = vmul.f32 %v515, %v727
      %v748 = vmul.f32 %v520, %v727
      %v749 = vmul.f32 %v523, %v727
      %v750 = vmul.f32 %v528, %v727
      %v751 = vmul.f32 %v531, %v727
      %v752 = vmul.f32 %v536, %v727
      %v753 = vmul.f32 %v539, %v727
      %v754 = vmul.f32 %v544, %v727
      %v755 = vmul.f32 %v547, %v727
      %v756 = vmul.f32 %v552, %v727
      %v757 = vmul.f32 %v555, %v727
      %v758 = vmul.f32 %v560, %v727
      %v759 = vmul.f32 %v563, %v727
      %v760 = vmul.f32 %v568, %v727
      %v761 = vmul.f32 %v571, %v727
      %v762 = vmul.f32 %v576, %v727
      %v763 = vmul.f32 %v579, %v727
      %v764 = vmul.f32 %v584, %v727
      %v765 = vmul.f32 %v587, %v727
      %v766 = vmul.f32 %v592, %v727
      %v767 = vmul.f32 %v595, %v727
      %v768 = vmul.f32 %v600, %v727
      %v769 = vmul.f32 %v603, %v727
      %v770 = vmul.f32 %v608, %v727
      %v771 = vmul.f32 %v611, %v727
      %v772 = vmul.f32 %v616, %v727
      %v773 = vmul.f32 %v619, %v727
      %v774 = vmul.f32 %v624, %v727
      %v775 = vmul.f32 %v627, %v727
      %vm824 = vcmask 1046528
      %v825 = vrot.slane %v728, 1
      %v826 = vrot.slane %v729, 1
      %v827 = vsel %vm824, %v825, %v826
      %v828 = vrot.slane %v730, 1
      %v829 = vsel %vm824, %v826, %v828
      %v830 = vrot.slane %v731, 1
      %v831 = vrot.slane %v732, 1
      %v832 = vsel %vm824, %v830, %v831
      %v833 = vrot.slane %v733, 1
      %v834 = vsel %vm824, %v831, %v833
      %v835 = vrot.slane %v734, 1
      %v836 = vrot.slane %v735, 1
      %v837 = vsel %vm824, %v835, %v836
      %v838 = vrot.slane %v736, 1
      %v839 = vsel %vm824, %v836, %v838
      %v840 = vrot.slane %v737, 1
      %v841 = vrot.slane %v738, 1
      %v842 = vsel %vm824, %v840, %v841
      %v843 = vrot.slane %v739, 1
      %v844 = vsel %vm824, %v841, %v843
      %v845 = vrot.slane %v740, 1
      %v846 = vrot.slane %v741, 1
      %v847 = vsel %vm824, %v845, %v846
      %v848 = vrot.slane %v742, 1
      %v849 = vsel %vm824, %v846, %v848
      %v850 = vrot.slane %v743, 1
      %v851 = vrot.slane %v744, 1
      %v852 = vsel %vm824, %v850, %v851
      %v853 = vrot.slane %v745, 1
      %v854 = vsel %vm824, %v851, %v853
      %v855 = vrot.slane %v746, 1
      %v856 = vrot.slane %v747, 1
      %v857 = vsel %vm824, %v855, %v856
      %v858 = vrot.slane %v748, 1
      %v859 = vsel %vm824, %v856, %v858
      %v860 = vrot.slane %v749, 1
      %v861 = vrot.slane %v750, 1
      %v862 = vsel %vm824, %v860, %v861
      %v863 = vrot.slane %v751, 1
      %v864 = vsel %vm824, %v861, %v863
      %v865 = vrot.slane %v752, 1
      %v866 = vrot.slane %v753, 1
      %v867 = vsel %vm824, %v865, %v866
      %v868 = vrot.slane %v754, 1
      %v869 = vsel %vm824, %v866, %v868
      %v870 = vrot.slane %v755, 1
      %v871 = vrot.slane %v756, 1
      %v872 = vsel %vm824, %v870, %v871
      %v873 = vrot.slane %v757, 1
      %v874 = vsel %vm824, %v871, %v873
      %v875 = vrot.slane %v758, 1
      %v876 = vrot.slane %v759, 1
      %v877 = vsel %vm824, %v875, %v876
      %v878 = vrot.slane %v760, 1
      %v879 = vsel %vm824, %v876, %v878
      %v880 = vrot.slane %v761, 1
      %v881 = vrot.slane %v762, 1
      %v882 = vsel %vm824, %v880, %v881
      %v883 = vrot.slane %v763, 1
      %v884 = vsel %vm824, %v881, %v883
      %v885 = vrot.slane %v764, 1
      %v886 = vrot.slane %v765, 1
      %v887 = vsel %vm824, %v885, %v886
      %v888 = vrot.slane %v766, 1
      %v889 = vsel %vm824, %v886, %v888
      %v890 = vrot.slane %v767, 1
      %v891 = vrot.slane %v768, 1
      %v892 = vsel %vm824, %v890, %v891
      %v893 = vrot.slane %v769, 1
      %v894 = vsel %vm824, %v891, %v893
      %v895 = vrot.slane %v770, 1
      %v896 = vrot.slane %v771, 1
      %v897 = vsel %vm824, %v895, %v896
      %v898 = vrot.slane %v772, 1
      %v899 = vsel %vm824, %v896, %v898
      %v900 = vrot.slane %v773, 1
      %v901 = vrot.slane %v774, 1
      %v902 = vsel %vm824, %v900, %v901
      %v903 = vrot.slane %v775, 1
      %v904 = vsel %vm824, %v901, %v903
      %v937 = vadd.f32 %v691, %v827
      %v938 = vadd.f32 %v692, %v829
      %v939 = vadd.f32 %v693, %v832
      %v940 = vadd.f32 %v694, %v834
      %v941 = vadd.f32 %v695, %v837
      %v942 = vadd.f32 %v696, %v839
      %v943 = vadd.f32 %v697, %v842
      %v944 = vadd.f32 %v698, %v844
      %v945 = vadd.f32 %v699, %v847
      %v946 = vadd.f32 %v700, %v849
      %v947 = vadd.f32 %v701, %v852
      %v948 = vadd.f32 %v702, %v854
      %v949 = vadd.f32 %v703, %v857
      %v950 = vadd.f32 %v704, %v859
      %v951 = vadd.f32 %v705, %v862
      %v952 = vadd.f32 %v706, %v864
      %v953 = vadd.f32 %v707, %v867
      %v954 = vadd.f32 %v708, %v869
      %v955 = vadd.f32 %v709, %v872
      %v956 = vadd.f32 %v710, %v874
      %v957 = vadd.f32 %v711, %v877
      %v958 = vadd.f32 %v712, %v879
      %v959 = vadd.f32 %v713, %v882
      %v960 = vadd.f32 %v714, %v884
      %v961 = vadd.f32 %v715, %v887
      %v962 = vadd.f32 %v716, %v889
      %v963 = vadd.f32 %v717, %v892
      %v964 = vadd.f32 %v718, %v894
      %v965 = vadd.f32 %v719, %v897
      %v966 = vadd.f32 %v720, %v899
      %v967 = vadd.f32 %v721, %v902
      %v968 = vadd.f32 %v722, %v904
      %v969 = vld [vmem:[%s216 + $0x2] sm:$0x1]
      %v970 = vlaneseq
      %v971 = vshrl.u32 %v970, 7
      %v972 = vsub.s32 0, %v971
      %v973 = vrot.slane %v969, %v972
      %v974 = vmul.f32 %v440, %v973
      %v975 = vmul.f32 %v443, %v973
      %v976 = vmul.f32 %v448, %v973
      %v977 = vmul.f32 %v451, %v973
      %v978 = vmul.f32 %v456, %v973
      %v979 = vmul.f32 %v459, %v973
      %v980 = vmul.f32 %v464, %v973
      %v981 = vmul.f32 %v467, %v973
      %v982 = vmul.f32 %v472, %v973
      %v983 = vmul.f32 %v475, %v973
      %v984 = vmul.f32 %v480, %v973
      %v985 = vmul.f32 %v483, %v973
      %v986 = vmul.f32 %v488, %v973
      %v987 = vmul.f32 %v491, %v973
      %v988 = vmul.f32 %v496, %v973
      %v989 = vmul.f32 %v499, %v973
      %v990 = vmul.f32 %v504, %v973
      %v991 = vmul.f32 %v507, %v973
      %v992 = vmul.f32 %v512, %v973
      %v993 = vmul.f32 %v515, %v973
      %v994 = vmul.f32 %v520, %v973
      %v995 = vmul.f32 %v523, %v973
      %v996 = vmul.f32 %v528, %v973
      %v997 = vmul.f32 %v531, %v973
      %v998 = vmul.f32 %v536, %v973
      %v999 = vmul.f32 %v539, %v973
      %v1000 = vmul.f32 %v544, %v973
      %v1001 = vmul.f32 %v547, %v973
      %v1002 = vmul.f32 %v552, %v973
      %v1003 = vmul.f32 %v555, %v973
      %v1004 = vmul.f32 %v560, %v973
      %v1005 = vmul.f32 %v563, %v973
      %v1006 = vmul.f32 %v568, %v973
      %v1007 = vmul.f32 %v571, %v973
      %v1008 = vmul.f32 %v576, %v973
      %v1009 = vmul.f32 %v579, %v973
      %v1010 = vmul.f32 %v584, %v973
      %v1011 = vmul.f32 %v587, %v973
      %v1012 = vmul.f32 %v592, %v973
      %v1013 = vmul.f32 %v595, %v973
      %v1014 = vmul.f32 %v600, %v973
      %v1015 = vmul.f32 %v603, %v973
      %v1016 = vmul.f32 %v608, %v973
      %v1017 = vmul.f32 %v611, %v973
      %v1018 = vmul.f32 %v616, %v973
      %v1019 = vmul.f32 %v619, %v973
      %v1020 = vmul.f32 %v624, %v973
      %v1021 = vmul.f32 %v627, %v973
      %vm1070 = vcmask 1045504
      %v1071 = vrot.slane %v974, 2
      %v1072 = vrot.slane %v975, 2
      %v1073 = vsel %vm1070, %v1071, %v1072
      %v1074 = vrot.slane %v976, 2
      %v1075 = vsel %vm1070, %v1072, %v1074
      %v1076 = vrot.slane %v977, 2
      %v1077 = vrot.slane %v978, 2
      %v1078 = vsel %vm1070, %v1076, %v1077
      %v1079 = vrot.slane %v979, 2
      %v1080 = vsel %vm1070, %v1077, %v1079
      %v1081 = vrot.slane %v980, 2
      %v1082 = vrot.slane %v981, 2
      %v1083 = vsel %vm1070, %v1081, %v1082
      %v1084 = vrot.slane %v982, 2
      %v1085 = vsel %vm1070, %v1082, %v1084
      %v1086 = vrot.slane %v983, 2
      %v1087 = vrot.slane %v984, 2
      %v1088 = vsel %vm1070, %v1086, %v1087
      %v1089 = vrot.slane %v985, 2
      %v1090 = vsel %vm1070, %v1087, %v1089
      %v1091 = vrot.slane %v986, 2
      %v1092 = vrot.slane %v987, 2
      %v1093 = vsel %vm1070, %v1091, %v1092
      %v1094 = vrot.slane %v988, 2
      %v1095 = vsel %vm1070, %v1092, %v1094
      %v1096 = vrot.slane %v989, 2
      %v1097 = vrot.slane %v990, 2
      %v1098 = vsel %vm1070, %v1096, %v1097
      %v1099 = vrot.slane %v991, 2
      %v1100 = vsel %vm1070, %v1097, %v1099
      %v1101 = vrot.slane %v992, 2
      %v1102 = vrot.slane %v993, 2
      %v1103 = vsel %vm1070, %v1101, %v1102
      %v1104 = vrot.slane %v994, 2
      %v1105 = vsel %vm1070, %v1102, %v1104
      %v1106 = vrot.slane %v995, 2
      %v1107 = vrot.slane %v996, 2
      %v1108 = vsel %vm1070, %v1106, %v1107
      %v1109 = vrot.slane %v997, 2
      %v1110 = vsel %vm1070, %v1107, %v1109
      %v1111 = vrot.slane %v998, 2
      %v1112 = vrot.slane %v999, 2
      %v1113 = vsel %vm1070, %v1111, %v1112
      %v1114 = vrot.slane %v1000, 2
      %v1115 = vsel %vm1070, %v1112, %v1114
      %v1116 = vrot.slane %v1001, 2
      %v1117 = vrot.slane %v1002, 2
      %v1118 = vsel %vm1070, %v1116, %v1117
      %v1119 = vrot.slane %v1003, 2
      %v1120 = vsel %vm1070, %v1117, %v1119
      %v1121 = vrot.slane %v1004, 2
      %v1122 = vrot.slane %v1005, 2
      %v1123 = vsel %vm1070, %v1121, %v1122
      %v1124 = vrot.slane %v1006, 2
      %v1125 = vsel %vm1070, %v1122, %v1124
      %v1126 = vrot.slane %v1007, 2
      %v1127 = vrot.slane %v1008, 2
      %v1128 = vsel %vm1070, %v1126, %v1127
      %v1129 = vrot.slane %v1009, 2
      %v1130 = vsel %vm1070, %v1127, %v1129
      %v1131 = vrot.slane %v1010, 2
      %v1132 = vrot.slane %v1011, 2
      %v1133 = vsel %vm1070, %v1131, %v1132
      %v1134 = vrot.slane %v1012, 2
      %v1135 = vsel %vm1070, %v1132, %v1134
      %v1136 = vrot.slane %v1013, 2
      %v1137 = vrot.slane %v1014, 2
      %v1138 = vsel %vm1070, %v1136, %v1137
      %v1139 = vrot.slane %v1015, 2
      %v1140 = vsel %vm1070, %v1137, %v1139
      %v1141 = vrot.slane %v1016, 2
      %v1142 = vrot.slane %v1017, 2
      %v1143 = vsel %vm1070, %v1141, %v1142
      %v1144 = vrot.slane %v1018, 2
      %v1145 = vsel %vm1070, %v1142, %v1144
      %v1146 = vrot.slane %v1019, 2
      %v1147 = vrot.slane %v1020, 2
      %v1148 = vsel %vm1070, %v1146, %v1147
      %v1149 = vrot.slane %v1021, 2
      %v1150 = vsel %vm1070, %v1147, %v1149
      %v1183 = vadd.f32 %v937, %v1073
      %v1184 = vadd.f32 %v938, %v1075
      %v1185 = vadd.f32 %v939, %v1078
      %v1186 = vadd.f32 %v940, %v1080
      %v1187 = vadd.f32 %v941, %v1083
      %v1188 = vadd.f32 %v942, %v1085
      %v1189 = vadd.f32 %v943, %v1088
      %v1190 = vadd.f32 %v944, %v1090
      %v1191 = vadd.f32 %v945, %v1093
      %v1192 = vadd.f32 %v946, %v1095
      %v1193 = vadd.f32 %v947, %v1098
      %v1194 = vadd.f32 %v948, %v1100
      %v1195 = vadd.f32 %v949, %v1103
      %v1196 = vadd.f32 %v950, %v1105
      %v1197 = vadd.f32 %v951, %v1108
      %v1198 = vadd.f32 %v952, %v1110
      %v1199 = vadd.f32 %v953, %v1113
      %v1200 = vadd.f32 %v954, %v1115
      %v1201 = vadd.f32 %v955, %v1118
      %v1202 = vadd.f32 %v956, %v1120
      %v1203 = vadd.f32 %v957, %v1123
      %v1204 = vadd.f32 %v958, %v1125
      %v1205 = vadd.f32 %v959, %v1128
      %v1206 = vadd.f32 %v960, %v1130
      %v1207 = vadd.f32 %v961, %v1133
      %v1208 = vadd.f32 %v962, %v1135
      %v1209 = vadd.f32 %v963, %v1138
      %v1210 = vadd.f32 %v964, %v1140
      %v1211 = vadd.f32 %v965, %v1143
      %v1212 = vadd.f32 %v966, %v1145
      %v1213 = vadd.f32 %v967, %v1148
      %v1214 = vadd.f32 %v968, %v1150
      %v1215 = vld [vmem:[%s216 + $0x3] sm:$0x1]
      %v1216 = vlaneseq
      %v1217 = vshrl.u32 %v1216, 7
      %v1218 = vsub.s32 0, %v1217
      %v1219 = vrot.slane %v1215, %v1218
      %v1220 = vmul.f32 %v451, %v1219
      %v1221 = vmul.f32 %v456, %v1219
      %v1222 = vmul.f32 %v464, %v1219
      %v1223 = vmul.f32 %v467, %v1219
      %v1224 = vmul.f32 %v475, %v1219
      %v1225 = vmul.f32 %v480, %v1219
      %v1226 = vmul.f32 %v488, %v1219
      %v1227 = vmul.f32 %v491, %v1219
      %v1228 = vmul.f32 %v499, %v1219
      %v1229 = vmul.f32 %v504, %v1219
      %v1230 = vmul.f32 %v512, %v1219
      %v1231 = vmul.f32 %v515, %v1219
      %v1232 = vmul.f32 %v523, %v1219
      %v1233 = vmul.f32 %v528, %v1219
      %v1234 = vmul.f32 %v536, %v1219
      %v1235 = vmul.f32 %v539, %v1219
      %v1236 = vmul.f32 %v547, %v1219
      %v1237 = vmul.f32 %v552, %v1219
      %v1238 = vmul.f32 %v560, %v1219
      %v1239 = vmul.f32 %v563, %v1219
      %v1240 = vmul.f32 %v571, %v1219
      %v1241 = vmul.f32 %v576, %v1219
      %v1242 = vmul.f32 %v584, %v1219
      %v1243 = vmul.f32 %v587, %v1219
      %v1244 = vmul.f32 %v595, %v1219
      %v1245 = vmul.f32 %v600, %v1219
      %v1246 = vmul.f32 %v608, %v1219
      %v1247 = vmul.f32 %v611, %v1219
      %v1248 = vmul.f32 %v619, %v1219
      %v1249 = vmul.f32 %v624, %v1219
      %v1250 = vmul.f32 %v632, %v1219
      %v1251 = vmul.f32 %v635, %v1219
      %v1252 = vadd.f32 %v1183, %v1220
      %v1253 = vadd.f32 %v1184, %v1221
      %v1254 = vadd.f32 %v1185, %v1222
      %v1255 = vadd.f32 %v1186, %v1223
      %v1256 = vadd.f32 %v1187, %v1224
      %v1257 = vadd.f32 %v1188, %v1225
      %v1258 = vadd.f32 %v1189, %v1226
      %v1259 = vadd.f32 %v1190, %v1227
      %v1260 = vadd.f32 %v1191, %v1228
      %v1261 = vadd.f32 %v1192, %v1229
      %v1262 = vadd.f32 %v1193, %v1230
      %v1263 = vadd.f32 %v1194, %v1231
      %v1264 = vadd.f32 %v1195, %v1232
      %v1265 = vadd.f32 %v1196, %v1233
      %v1266 = vadd.f32 %v1197, %v1234
      %v1267 = vadd.f32 %v1198, %v1235
      %v1268 = vadd.f32 %v1199, %v1236
      %v1269 = vadd.f32 %v1200, %v1237
      %v1270 = vadd.f32 %v1201, %v1238
      %v1271 = vadd.f32 %v1202, %v1239
      %v1272 = vadd.f32 %v1203, %v1240
      %v1273 = vadd.f32 %v1204, %v1241
      %v1274 = vadd.f32 %v1205, %v1242
      %v1275 = vadd.f32 %v1206, %v1243
      %v1276 = vadd.f32 %v1207, %v1244
      %v1277 = vadd.f32 %v1208, %v1245
      %v1278 = vadd.f32 %v1209, %v1246
      %v1279 = vadd.f32 %v1210, %v1247
      %v1280 = vadd.f32 %v1211, %v1248
      %v1281 = vadd.f32 %v1212, %v1249
      %v1282 = vadd.f32 %v1213, %v1250
      %v1283 = vadd.f32 %v1214, %v1251
      %v1284 = vld [vmem:[%s216 + $0x4] sm:$0x1]
      %v1285 = vlaneseq
      %v1286 = vshrl.u32 %v1285, 7
      %v1287 = vsub.s32 0, %v1286
      %v1288 = vrot.slane %v1284, %v1287
      %v1289 = vmul.f32 %v451, %v1288
      %v1290 = vmul.f32 %v456, %v1288
      %v1291 = vmul.f32 %v459, %v1288
      %v1292 = vmul.f32 %v464, %v1288
      %v1293 = vmul.f32 %v467, %v1288
      %v1294 = vmul.f32 %v472, %v1288
      %v1295 = vmul.f32 %v475, %v1288
      %v1296 = vmul.f32 %v480, %v1288
      %v1297 = vmul.f32 %v483, %v1288
      %v1298 = vmul.f32 %v488, %v1288
      %v1299 = vmul.f32 %v491, %v1288
      %v1300 = vmul.f32 %v496, %v1288
      %v1301 = vmul.f32 %v499, %v1288
      %v1302 = vmul.f32 %v504, %v1288
      %v1303 = vmul.f32 %v507, %v1288
      %v1304 = vmul.f32 %v512, %v1288
      %v1305 = vmul.f32 %v515, %v1288
      %v1306 = vmul.f32 %v520, %v1288
      %v1307 = vmul.f32 %v523, %v1288
      %v1308 = vmul.f32 %v528, %v1288
      %v1309 = vmul.f32 %v531, %v1288
      %v1310 = vmul.f32 %v536, %v1288
      %v1311 = vmul.f32 %v539, %v1288
      %v1312 = vmul.f32 %v544, %v1288
      %v1313 = vmul.f32 %v547, %v1288
      %v1314 = vmul.f32 %v552, %v1288
      %v1315 = vmul.f32 %v555, %v1288
      %v1316 = vmul.f32 %v560, %v1288
      %v1317 = vmul.f32 %v563, %v1288
      %v1318 = vmul.f32 %v568, %v1288
      %v1319 = vmul.f32 %v571, %v1288
      %v1320 = vmul.f32 %v576, %v1288
      %v1321 = vmul.f32 %v579, %v1288
      %v1322 = vmul.f32 %v584, %v1288
      %v1323 = vmul.f32 %v587, %v1288
      %v1324 = vmul.f32 %v592, %v1288
      %v1325 = vmul.f32 %v595, %v1288
      %v1326 = vmul.f32 %v600, %v1288
      %v1327 = vmul.f32 %v603, %v1288
      %v1328 = vmul.f32 %v608, %v1288
      %v1329 = vmul.f32 %v611, %v1288
      %v1330 = vmul.f32 %v616, %v1288
      %v1331 = vmul.f32 %v619, %v1288
      %v1332 = vmul.f32 %v624, %v1288
      %v1333 = vmul.f32 %v627, %v1288
      %v1334 = vmul.f32 %v632, %v1288
      %v1335 = vmul.f32 %v635, %v1288
      %v1336 = vmul.f32 %v640, %v1288
      %v1385 = vrot.slane %v1289, 1
      %v1386 = vrot.slane %v1290, 1
      %v1387 = vsel %vm824, %v1385, %v1386
      %v1388 = vrot.slane %v1291, 1
      %v1389 = vsel %vm824, %v1386, %v1388
      %v1390 = vrot.slane %v1292, 1
      %v1391 = vrot.slane %v1293, 1
      %v1392 = vsel %vm824, %v1390, %v1391
      %v1393 = vrot.slane %v1294, 1
      %v1394 = vsel %vm824, %v1391, %v1393
      %v1395 = vrot.slane %v1295, 1
      %v1396 = vrot.slane %v1296, 1
      %v1397 = vsel %vm824, %v1395, %v1396
      %v1398 = vrot.slane %v1297, 1
      %v1399 = vsel %vm824, %v1396, %v1398
      %v1400 = vrot.slane %v1298, 1
      %v1401 = vrot.slane %v1299, 1
      %v1402 = vsel %vm824, %v1400, %v1401
      %v1403 = vrot.slane %v1300, 1
      %v1404 = vsel %vm824, %v1401, %v1403
      %v1405 = vrot.slane %v1301, 1
      %v1406 = vrot.slane %v1302, 1
      %v1407 = vsel %vm824, %v1405, %v1406
      %v1408 = vrot.slane %v1303, 1
      %v1409 = vsel %vm824, %v1406, %v1408
      %v1410 = vrot.slane %v1304, 1
      %v1411 = vrot.slane %v1305, 1
      %v1412 = vsel %vm824, %v1410, %v1411
      %v1413 = vrot.slane %v1306, 1
      %v1414 = vsel %vm824, %v1411, %v1413
      %v1415 = vrot.slane %v1307, 1
      %v1416 = vrot.slane %v1308, 1
      %v1417 = vsel %vm824, %v1415, %v1416
      %v1418 = vrot.slane %v1309, 1
      %v1419 = vsel %vm824, %v1416, %v1418
      %v1420 = vrot.slane %v1310, 1
      %v1421 = vrot.slane %v1311, 1
      %v1422 = vsel %vm824, %v1420, %v1421
      %v1423 = vrot.slane %v1312, 1
      %v1424 = vsel %vm824, %v1421, %v1423
      %v1425 = vrot.slane %v1313, 1
      %v1426 = vrot.slane %v1314, 1
      %v1427 = vsel %vm824, %v1425, %v1426
      %v1428 = vrot.slane %v1315, 1
      %v1429 = vsel %vm824, %v1426, %v1428
      %v1430 = vrot.slane %v1316, 1
      %v1431 = vrot.slane %v1317, 1
      %v1432 = vsel %vm824, %v1430, %v1431
      %v1433 = vrot.slane %v1318, 1
      %v1434 = vsel %vm824, %v1431, %v1433
      %v1435 = vrot.slane %v1319, 1
      %v1436 = vrot.slane %v1320, 1
      %v1437 = vsel %vm824, %v1435, %v1436
      %v1438 = vrot.slane %v1321, 1
      %v1439 = vsel %vm824, %v1436, %v1438
      %v1440 = vrot.slane %v1322, 1
      %v1441 = vrot.slane %v1323, 1
      %v1442 = vsel %vm824, %v1440, %v1441
      %v1443 = vrot.slane %v1324, 1
      %v1444 = vsel %vm824, %v1441, %v1443
      %v1445 = vrot.slane %v1325, 1
      %v1446 = vrot.slane %v1326, 1
      %v1447 = vsel %vm824, %v1445, %v1446
      %v1448 = vrot.slane %v1327, 1
      %v1449 = vsel %vm824, %v1446, %v1448
      %v1450 = vrot.slane %v1328, 1
      %v1451 = vrot.slane %v1329, 1
      %v1452 = vsel %vm824, %v1450, %v1451
      %v1453 = vrot.slane %v1330, 1
      %v1454 = vsel %vm824, %v1451, %v1453
      %v1455 = vrot.slane %v1331, 1
      %v1456 = vrot.slane %v1332, 1
      %v1457 = vsel %vm824, %v1455, %v1456
      %v1458 = vrot.slane %v1333, 1
      %v1459 = vsel %vm824, %v1456, %v1458
      %v1460 = vrot.slane %v1334, 1
      %v1461 = vrot.slane %v1335, 1
      %v1462 = vsel %vm824, %v1460, %v1461
      %v1463 = vrot.slane %v1336, 1
      %v1464 = vsel %vm824, %v1461, %v1463
      %v1497 = vadd.f32 %v1252, %v1387
      %v1498 = vadd.f32 %v1253, %v1389
      %v1499 = vadd.f32 %v1254, %v1392
      %v1500 = vadd.f32 %v1255, %v1394
      %v1501 = vadd.f32 %v1256, %v1397
      %v1502 = vadd.f32 %v1257, %v1399
      %v1503 = vadd.f32 %v1258, %v1402
      %v1504 = vadd.f32 %v1259, %v1404
      %v1505 = vadd.f32 %v1260, %v1407
      %v1506 = vadd.f32 %v1261, %v1409
      %v1507 = vadd.f32 %v1262, %v1412
      %v1508 = vadd.f32 %v1263, %v1414
      %v1509 = vadd.f32 %v1264, %v1417
      %v1510 = vadd.f32 %v1265, %v1419
      %v1511 = vadd.f32 %v1266, %v1422
      %v1512 = vadd.f32 %v1267, %v1424
      %v1513 = vadd.f32 %v1268, %v1427
      %v1514 = vadd.f32 %v1269, %v1429
      %v1515 = vadd.f32 %v1270, %v1432
      %v1516 = vadd.f32 %v1271, %v1434
      %v1517 = vadd.f32 %v1272, %v1437
      %v1518 = vadd.f32 %v1273, %v1439
      %v1519 = vadd.f32 %v1274, %v1442
      %v1520 = vadd.f32 %v1275, %v1444
      %v1521 = vadd.f32 %v1276, %v1447
      %v1522 = vadd.f32 %v1277, %v1449
      %v1523 = vadd.f32 %v1278, %v1452
      %v1524 = vadd.f32 %v1279, %v1454
      %v1525 = vadd.f32 %v1280, %v1457
      %v1526 = vadd.f32 %v1281, %v1459
      %v1527 = vadd.f32 %v1282, %v1462
      %v1528 = vadd.f32 %v1283, %v1464
      %v1529 = vld [vmem:[%s216 + $0x5] sm:$0x1]
      %v1530 = vlaneseq
      %v1531 = vshrl.u32 %v1530, 7
      %v1532 = vsub.s32 0, %v1531
      %v1533 = vrot.slane %v1529, %v1532
      %v1534 = vmul.f32 %v451, %v1533
      %v1535 = vmul.f32 %v456, %v1533
      %v1536 = vmul.f32 %v459, %v1533
      %v1537 = vmul.f32 %v464, %v1533
      %v1538 = vmul.f32 %v467, %v1533
      %v1539 = vmul.f32 %v472, %v1533
      %v1540 = vmul.f32 %v475, %v1533
      %v1541 = vmul.f32 %v480, %v1533
      %v1542 = vmul.f32 %v483, %v1533
      %v1543 = vmul.f32 %v488, %v1533
      %v1544 = vmul.f32 %v491, %v1533
      %v1545 = vmul.f32 %v496, %v1533
      %v1546 = vmul.f32 %v499, %v1533
      %v1547 = vmul.f32 %v504, %v1533
      %v1548 = vmul.f32 %v507, %v1533
      %v1549 = vmul.f32 %v512, %v1533
      %v1550 = vmul.f32 %v515, %v1533
      %v1551 = vmul.f32 %v520, %v1533
      %v1552 = vmul.f32 %v523, %v1533
      %v1553 = vmul.f32 %v528, %v1533
      %v1554 = vmul.f32 %v531, %v1533
      %v1555 = vmul.f32 %v536, %v1533
      %v1556 = vmul.f32 %v539, %v1533
      %v1557 = vmul.f32 %v544, %v1533
      %v1558 = vmul.f32 %v547, %v1533
      %v1559 = vmul.f32 %v552, %v1533
      %v1560 = vmul.f32 %v555, %v1533
      %v1561 = vmul.f32 %v560, %v1533
      %v1562 = vmul.f32 %v563, %v1533
      %v1563 = vmul.f32 %v568, %v1533
      %v1564 = vmul.f32 %v571, %v1533
      %v1565 = vmul.f32 %v576, %v1533
      %v1566 = vmul.f32 %v579, %v1533
      %v1567 = vmul.f32 %v584, %v1533
      %v1568 = vmul.f32 %v587, %v1533
      %v1569 = vmul.f32 %v592, %v1533
      %v1570 = vmul.f32 %v595, %v1533
      %v1571 = vmul.f32 %v600, %v1533
      %v1572 = vmul.f32 %v603, %v1533
      %v1573 = vmul.f32 %v608, %v1533
      %v1574 = vmul.f32 %v611, %v1533
      %v1575 = vmul.f32 %v616, %v1533
      %v1576 = vmul.f32 %v619, %v1533
      %v1577 = vmul.f32 %v624, %v1533
      %v1578 = vmul.f32 %v627, %v1533
      %v1579 = vmul.f32 %v632, %v1533
      %v1580 = vmul.f32 %v635, %v1533
      %v1581 = vmul.f32 %v640, %v1533
      %v1630 = vrot.slane %v1534, 2
      %v1631 = vrot.slane %v1535, 2
      %v1632 = vsel %vm1070, %v1630, %v1631
      %v1633 = vrot.slane %v1536, 2
      %v1634 = vsel %vm1070, %v1631, %v1633
      %v1635 = vrot.slane %v1537, 2
      %v1636 = vrot.slane %v1538, 2
      %v1637 = vsel %vm1070, %v1635, %v1636
      %v1638 = vrot.slane %v1539, 2
      %v1639 = vsel %vm1070, %v1636, %v1638
      %v1640 = vrot.slane %v1540, 2
      %v1641 = vrot.slane %v1541, 2
      %v1642 = vsel %vm1070, %v1640, %v1641
      %v1643 = vrot.slane %v1542, 2
      %v1644 = vsel %vm1070, %v1641, %v1643
      %v1645 = vrot.slane %v1543, 2
      %v1646 = vrot.slane %v1544, 2
      %v1647 = vsel %vm1070, %v1645, %v1646
      %v1648 = vrot.slane %v1545, 2
      %v1649 = vsel %vm1070, %v1646, %v1648
      %v1650 = vrot.slane %v1546, 2
      %v1651 = vrot.slane %v1547, 2
      %v1652 = vsel %vm1070, %v1650, %v1651
      %v1653 = vrot.slane %v1548, 2
      %v1654 = vsel %vm1070, %v1651, %v1653
      %v1655 = vrot.slane %v1549, 2
      %v1656 = vrot.slane %v1550, 2
      %v1657 = vsel %vm1070, %v1655, %v1656
      %v1658 = vrot.slane %v1551, 2
      %v1659 = vsel %vm1070, %v1656, %v1658
      %v1660 = vrot.slane %v1552, 2
      %v1661 = vrot.slane %v1553, 2
      %v1662 = vsel %vm1070, %v1660, %v1661
      %v1663 = vrot.slane %v1554, 2
      %v1664 = vsel %vm1070, %v1661, %v1663
      %v1665 = vrot.slane %v1555, 2
      %v1666 = vrot.slane %v1556, 2
      %v1667 = vsel %vm1070, %v1665, %v1666
      %v1668 = vrot.slane %v1557, 2
      %v1669 = vsel %vm1070, %v1666, %v1668
      %v1670 = vrot.slane %v1558, 2
      %v1671 = vrot.slane %v1559, 2
      %v1672 = vsel %vm1070, %v1670, %v1671
      %v1673 = vrot.slane %v1560, 2
      %v1674 = vsel %vm1070, %v1671, %v1673
      %v1675 = vrot.slane %v1561, 2
      %v1676 = vrot.slane %v1562, 2
      %v1677 = vsel %vm1070, %v1675, %v1676
      %v1678 = vrot.slane %v1563, 2
      %v1679 = vsel %vm1070, %v1676, %v1678
      %v1680 = vrot.slane %v1564, 2
      %v1681 = vrot.slane %v1565, 2
      %v1682 = vsel %vm1070, %v1680, %v1681
      %v1683 = vrot.slane %v1566, 2
      %v1684 = vsel %vm1070, %v1681, %v1683
      %v1685 = vrot.slane %v1567, 2
      %v1686 = vrot.slane %v1568, 2
      %v1687 = vsel %vm1070, %v1685, %v1686
      %v1688 = vrot.slane %v1569, 2
      %v1689 = vsel %vm1070, %v1686, %v1688
      %v1690 = vrot.slane %v1570, 2
      %v1691 = vrot.slane %v1571, 2
      %v1692 = vsel %vm1070, %v1690, %v1691
      %v1693 = vrot.slane %v1572, 2
      %v1694 = vsel %vm1070, %v1691, %v1693
      %v1695 = vrot.slane %v1573, 2
      %v1696 = vrot.slane %v1574, 2
      %v1697 = vsel %vm1070, %v1695, %v1696
      %v1698 = vrot.slane %v1575, 2
      %v1699 = vsel %vm1070, %v1696, %v1698
      %v1700 = vrot.slane %v1576, 2
      %v1701 = vrot.slane %v1577, 2
      %v1702 = vsel %vm1070, %v1700, %v1701
      %v1703 = vrot.slane %v1578, 2
      %v1704 = vsel %vm1070, %v1701, %v1703
      %v1705 = vrot.slane %v1579, 2
      %v1706 = vrot.slane %v1580, 2
      %v1707 = vsel %vm1070, %v1705, %v1706
      %v1708 = vrot.slane %v1581, 2
      %v1709 = vsel %vm1070, %v1706, %v1708
      %v1742 = vadd.f32 %v1497, %v1632
      %v1743 = vadd.f32 %v1498, %v1634
      %v1744 = vadd.f32 %v1499, %v1637
      %v1745 = vadd.f32 %v1500, %v1639
      %v1746 = vadd.f32 %v1501, %v1642
      %v1747 = vadd.f32 %v1502, %v1644
      %v1748 = vadd.f32 %v1503, %v1647
      %v1749 = vadd.f32 %v1504, %v1649
      %v1750 = vadd.f32 %v1505, %v1652
      %v1751 = vadd.f32 %v1506, %v1654
      %v1752 = vadd.f32 %v1507, %v1657
      %v1753 = vadd.f32 %v1508, %v1659
      %v1754 = vadd.f32 %v1509, %v1662
      %v1755 = vadd.f32 %v1510, %v1664
      %v1756 = vadd.f32 %v1511, %v1667
      %v1757 = vadd.f32 %v1512, %v1669
      %v1758 = vadd.f32 %v1513, %v1672
      %v1759 = vadd.f32 %v1514, %v1674
      %v1760 = vadd.f32 %v1515, %v1677
      %v1761 = vadd.f32 %v1516, %v1679
      %v1762 = vadd.f32 %v1517, %v1682
      %v1763 = vadd.f32 %v1518, %v1684
      %v1764 = vadd.f32 %v1519, %v1687
      %v1765 = vadd.f32 %v1520, %v1689
      %v1766 = vadd.f32 %v1521, %v1692
      %v1767 = vadd.f32 %v1522, %v1694
      %v1768 = vadd.f32 %v1523, %v1697
      %v1769 = vadd.f32 %v1524, %v1699
      %v1770 = vadd.f32 %v1525, %v1702
      %v1771 = vadd.f32 %v1526, %v1704
      %v1772 = vadd.f32 %v1527, %v1707
      %v1773 = vadd.f32 %v1528, %v1709
      %v1774 = vld [vmem:[%s216 + $0x6] sm:$0x1]
      %v1775 = vlaneseq
      %v1776 = vshrl.u32 %v1775, 7
      %v1777 = vsub.s32 0, %v1776
      %v1778 = vrot.slane %v1774, %v1777
      %v1779 = vmul.f32 %v464, %v1778
      %v1780 = vmul.f32 %v467, %v1778
      %v1781 = vmul.f32 %v475, %v1778
      %v1782 = vmul.f32 %v480, %v1778
      %v1783 = vmul.f32 %v488, %v1778
      %v1784 = vmul.f32 %v491, %v1778
      %v1785 = vmul.f32 %v499, %v1778
      %v1786 = vmul.f32 %v504, %v1778
      %v1787 = vmul.f32 %v512, %v1778
      %v1788 = vmul.f32 %v515, %v1778
      %v1789 = vmul.f32 %v523, %v1778
      %v1790 = vmul.f32 %v528, %v1778
      %v1791 = vmul.f32 %v536, %v1778
      %v1792 = vmul.f32 %v539, %v1778
      %v1793 = vmul.f32 %v547, %v1778
      %v1794 = vmul.f32 %v552, %v1778
      %v1795 = vmul.f32 %v560, %v1778
      %v1796 = vmul.f32 %v563, %v1778
      %v1797 = vmul.f32 %v571, %v1778
      %v1798 = vmul.f32 %v576, %v1778
      %v1799 = vmul.f32 %v584, %v1778
      %v1800 = vmul.f32 %v587, %v1778
      %v1801 = vmul.f32 %v595, %v1778
      %v1802 = vmul.f32 %v600, %v1778
      %v1803 = vmul.f32 %v608, %v1778
      %v1804 = vmul.f32 %v611, %v1778
      %v1805 = vmul.f32 %v619, %v1778
      %v1806 = vmul.f32 %v624, %v1778
      %v1807 = vmul.f32 %v632, %v1778
      %v1808 = vmul.f32 %v635, %v1778
      %v1809 = vmul.f32 %v643, %v1778
      %v1810 = vmul.f32 %v648, %v1778
      %v1811 = vadd.f32 %v1742, %v1779
      %v1812 = vadd.f32 %v1743, %v1780
      %v1813 = vadd.f32 %v1744, %v1781
      %v1814 = vadd.f32 %v1745, %v1782
      %v1815 = vadd.f32 %v1746, %v1783
      %v1816 = vadd.f32 %v1747, %v1784
      %v1817 = vadd.f32 %v1748, %v1785
      %v1818 = vadd.f32 %v1749, %v1786
      %v1819 = vadd.f32 %v1750, %v1787
      %v1820 = vadd.f32 %v1751, %v1788
      %v1821 = vadd.f32 %v1752, %v1789
      %v1822 = vadd.f32 %v1753, %v1790
      %v1823 = vadd.f32 %v1754, %v1791
      %v1824 = vadd.f32 %v1755, %v1792
      %v1825 = vadd.f32 %v1756, %v1793
      %v1826 = vadd.f32 %v1757, %v1794
      %v1827 = vadd.f32 %v1758, %v1795
      %v1828 = vadd.f32 %v1759, %v1796
      %v1829 = vadd.f32 %v1760, %v1797
      %v1830 = vadd.f32 %v1761, %v1798
      %v1831 = vadd.f32 %v1762, %v1799
      %v1832 = vadd.f32 %v1763, %v1800
      %v1833 = vadd.f32 %v1764, %v1801
      %v1834 = vadd.f32 %v1765, %v1802
      %v1835 = vadd.f32 %v1766, %v1803
      %v1836 = vadd.f32 %v1767, %v1804
      %v1837 = vadd.f32 %v1768, %v1805
      %v1838 = vadd.f32 %v1769, %v1806
      %v1839 = vadd.f32 %v1770, %v1807
      %v1840 = vadd.f32 %v1771, %v1808
      %v1841 = vadd.f32 %v1772, %v1809
      %v1842 = vadd.f32 %v1773, %v1810
      %v1843 = vld [vmem:[%s216 + $0x7] sm:$0x1]
      %v1844 = vlaneseq
      %v1845 = vshrl.u32 %v1844, 7
      %v1846 = vsub.s32 0, %v1845
      %v1847 = vrot.slane %v1843, %v1846
      %v1848 = vmul.f32 %v464, %v1847
      %v1849 = vmul.f32 %v467, %v1847
      %v1850 = vmul.f32 %v472, %v1847
      %v1851 = vmul.f32 %v475, %v1847
      %v1852 = vmul.f32 %v480, %v1847
      %v1853 = vmul.f32 %v483, %v1847
      %v1854 = vmul.f32 %v488, %v1847
      %v1855 = vmul.f32 %v491, %v1847
      %v1856 = vmul.f32 %v496, %v1847
      %v1857 = vmul.f32 %v499, %v1847
      %v1858 = vmul.f32 %v504, %v1847
      %v1859 = vmul.f32 %v507, %v1847
      %v1860 = vmul.f32 %v512, %v1847
      %v1861 = vmul.f32 %v515, %v1847
      %v1862 = vmul.f32 %v520, %v1847
      %v1863 = vmul.f32 %v523, %v1847
      %v1864 = vmul.f32 %v528, %v1847
      %v1865 = vmul.f32 %v531, %v1847
      %v1866 = vmul.f32 %v536, %v1847
      %v1867 = vmul.f32 %v539, %v1847
      %v1868 = vmul.f32 %v544, %v1847
      %v1869 = vmul.f32 %v547, %v1847
      %v1870 = vmul.f32 %v552, %v1847
      %v1871 = vmul.f32 %v555, %v1847
      %v1872 = vmul.f32 %v560, %v1847
      %v1873 = vmul.f32 %v563, %v1847
      %v1874 = vmul.f32 %v568, %v1847
      %v1875 = vmul.f32 %v571, %v1847
      %v1876 = vmul.f32 %v576, %v1847
      %v1877 = vmul.f32 %v579, %v1847
      %v1878 = vmul.f32 %v584, %v1847
      %v1879 = vmul.f32 %v587, %v1847
      %v1880 = vmul.f32 %v592, %v1847
      %v1881 = vmul.f32 %v595, %v1847
      %v1882 = vmul.f32 %v600, %v1847
      %v1883 = vmul.f32 %v603, %v1847
      %v1884 = vmul.f32 %v608, %v1847
      %v1885 = vmul.f32 %v611, %v1847
      %v1886 = vmul.f32 %v616, %v1847
      %v1887 = vmul.f32 %v619, %v1847
      %v1888 = vmul.f32 %v624, %v1847
      %v1889 = vmul.f32 %v627, %v1847
      %v1890 = vmul.f32 %v632, %v1847
      %v1891 = vmul.f32 %v635, %v1847
      %v1892 = vmul.f32 %v640, %v1847
      %v1893 = vmul.f32 %v643, %v1847
      %v1894 = vmul.f32 %v648, %v1847
      %v1895 = vmul.f32 %v651, %v1847
      %v1944 = vrot.slane %v1848, 1
      %v1945 = vrot.slane %v1849, 1
      %v1946 = vsel %vm824, %v1944, %v1945
      %v1947 = vrot.slane %v1850, 1
      %v1948 = vsel %vm824, %v1945, %v1947
      %v1949 = vrot.slane %v1851, 1
      %v1950 = vrot.slane %v1852, 1
      %v1951 = vsel %vm824, %v1949, %v1950
      %v1952 = vrot.slane %v1853, 1
      %v1953 = vsel %vm824, %v1950, %v1952
      %v1954 = vrot.slane %v1854, 1
      %v1955 = vrot.slane %v1855, 1
      %v1956 = vsel %vm824, %v1954, %v1955
      %v1957 = vrot.slane %v1856, 1
      %v1958 = vsel %vm824, %v1955, %v1957
      %v1959 = vrot.slane %v1857, 1
      %v1960 = vrot.slane %v1858, 1
      %v1961 = vsel %vm824, %v1959, %v1960
      %v1962 = vrot.slane %v1859, 1
      %v1963 = vsel %vm824, %v1960, %v1962
      %v1964 = vrot.slane %v1860, 1
      %v1965 = vrot.slane %v1861, 1
      %v1966 = vsel %vm824, %v1964, %v1965
      %v1967 = vrot.slane %v1862, 1
      %v1968 = vsel %vm824, %v1965, %v1967
      %v1969 = vrot.slane %v1863, 1
      %v1970 = vrot.slane %v1864, 1
      %v1971 = vsel %vm824, %v1969, %v1970
      %v1972 = vrot.slane %v1865, 1
      %v1973 = vsel %vm824, %v1970, %v1972
      %v1974 = vrot.slane %v1866, 1
      %v1975 = vrot.slane %v1867, 1
      %v1976 = vsel %vm824, %v1974, %v1975
      %v1977 = vrot.slane %v1868, 1
      %v1978 = vsel %vm824, %v1975, %v1977
      %v1979 = vrot.slane %v1869, 1
      %v1980 = vrot.slane %v1870, 1
      %v1981 = vsel %vm824, %v1979, %v1980
      %v1982 = vrot.slane %v1871, 1
      %v1983 = vsel %vm824, %v1980, %v1982
      %v1984 = vrot.slane %v1872, 1
      %v1985 = vrot.slane %v1873, 1
      %v1986 = vsel %vm824, %v1984, %v1985
      %v1987 = vrot.slane %v1874, 1
      %v1988 = vsel %vm824, %v1985, %v1987
      %v1989 = vrot.slane %v1875, 1
      %v1990 = vrot.slane %v1876, 1
      %v1991 = vsel %vm824, %v1989, %v1990
      %v1992 = vrot.slane %v1877, 1
      %v1993 = vsel %vm824, %v1990, %v1992
      %v1994 = vrot.slane %v1878, 1
      %v1995 = vrot.slane %v1879, 1
      %v1996 = vsel %vm824, %v1994, %v1995
      %v1997 = vrot.slane %v1880, 1
      %v1998 = vsel %vm824, %v1995, %v1997
      %v1999 = vrot.slane %v1881, 1
      %v2000 = vrot.slane %v1882, 1
      %v2001 = vsel %vm824, %v1999, %v2000
      %v2002 = vrot.slane %v1883, 1
      %v2003 = vsel %vm824, %v2000, %v2002
      %v2004 = vrot.slane %v1884, 1
      %v2005 = vrot.slane %v1885, 1
      %v2006 = vsel %vm824, %v2004, %v2005
      %v2007 = vrot.slane %v1886, 1
      %v2008 = vsel %vm824, %v2005, %v2007
      %v2009 = vrot.slane %v1887, 1
      %v2010 = vrot.slane %v1888, 1
      %v2011 = vsel %vm824, %v2009, %v2010
      %v2012 = vrot.slane %v1889, 1
      %v2013 = vsel %vm824, %v2010, %v2012
      %v2014 = vrot.slane %v1890, 1
      %v2015 = vrot.slane %v1891, 1
      %v2016 = vsel %vm824, %v2014, %v2015
      %v2017 = vrot.slane %v1892, 1
      %v2018 = vsel %vm824, %v2015, %v2017
      %v2019 = vrot.slane %v1893, 1
      %v2020 = vrot.slane %v1894, 1
      %v2021 = vsel %vm824, %v2019, %v2020
      %v2022 = vrot.slane %v1895, 1
      %v2023 = vsel %vm824, %v2020, %v2022
      %v2056 = vadd.f32 %v1811, %v1946
      %v2057 = vadd.f32 %v1812, %v1948
      %v2058 = vadd.f32 %v1813, %v1951
      %v2059 = vadd.f32 %v1814, %v1953
      %v2060 = vadd.f32 %v1815, %v1956
      %v2061 = vadd.f32 %v1816, %v1958
      %v2062 = vadd.f32 %v1817, %v1961
      %v2063 = vadd.f32 %v1818, %v1963
      %v2064 = vadd.f32 %v1819, %v1966
      %v2065 = vadd.f32 %v1820, %v1968
      %v2066 = vadd.f32 %v1821, %v1971
      %v2067 = vadd.f32 %v1822, %v1973
      %v2068 = vadd.f32 %v1823, %v1976
      %v2069 = vadd.f32 %v1824, %v1978
      %v2070 = vadd.f32 %v1825, %v1981
      %v2071 = vadd.f32 %v1826, %v1983
      %v2072 = vadd.f32 %v1827, %v1986
      %v2073 = vadd.f32 %v1828, %v1988
      %v2074 = vadd.f32 %v1829, %v1991
      %v2075 = vadd.f32 %v1830, %v1993
      %v2076 = vadd.f32 %v1831, %v1996
      %v2077 = vadd.f32 %v1832, %v1998
      %v2078 = vadd.f32 %v1833, %v2001
      %v2079 = vadd.f32 %v1834, %v2003
      %v2080 = vadd.f32 %v1835, %v2006
      %v2081 = vadd.f32 %v1836, %v2008
      %v2082 = vadd.f32 %v1837, %v2011
      %v2083 = vadd.f32 %v1838, %v2013
      %v2084 = vadd.f32 %v1839, %v2016
      %v2085 = vadd.f32 %v1840, %v2018
      %v2086 = vadd.f32 %v1841, %v2021
      %v2087 = vadd.f32 %v1842, %v2023
      %v2088 = vld [vmem:[%s216 + $0x8] sm:$0x1]
      %v2089 = vlaneseq
      %v2090 = vshrl.u32 %v2089, 7
      %v2091 = vsub.s32 0, %v2090
      %v2092 = vrot.slane %v2088, %v2091
      %v2093 = vmul.f32 %v464, %v2092
      %v2094 = vmul.f32 %v467, %v2092
      %v2095 = vmul.f32 %v472, %v2092
      %v2096 = vmul.f32 %v475, %v2092
      %v2097 = vmul.f32 %v480, %v2092
      %v2098 = vmul.f32 %v483, %v2092
      %v2099 = vmul.f32 %v488, %v2092
      %v2100 = vmul.f32 %v491, %v2092
      %v2101 = vmul.f32 %v496, %v2092
      %v2102 = vmul.f32 %v499, %v2092
      %v2103 = vmul.f32 %v504, %v2092
      %v2104 = vmul.f32 %v507, %v2092
      %v2105 = vmul.f32 %v512, %v2092
      %v2106 = vmul.f32 %v515, %v2092
      %v2107 = vmul.f32 %v520, %v2092
      %v2108 = vmul.f32 %v523, %v2092
      %v2109 = vmul.f32 %v528, %v2092
      %v2110 = vmul.f32 %v531, %v2092
      %v2111 = vmul.f32 %v536, %v2092
      %v2112 = vmul.f32 %v539, %v2092
      %v2113 = vmul.f32 %v544, %v2092
      %v2114 = vmul.f32 %v547, %v2092
      %v2115 = vmul.f32 %v552, %v2092
      %v2116 = vmul.f32 %v555, %v2092
      %v2117 = vmul.f32 %v560, %v2092
      %v2118 = vmul.f32 %v563, %v2092
      %v2119 = vmul.f32 %v568, %v2092
      %v2120 = vmul.f32 %v571, %v2092
      %v2121 = vmul.f32 %v576, %v2092
      %v2122 = vmul.f32 %v579, %v2092
      %v2123 = vmul.f32 %v584, %v2092
      %v2124 = vmul.f32 %v587, %v2092
      %v2125 = vmul.f32 %v592, %v2092
      %v2126 = vmul.f32 %v595, %v2092
      %v2127 = vmul.f32 %v600, %v2092
      %v2128 = vmul.f32 %v603, %v2092
      %v2129 = vmul.f32 %v608, %v2092
      %v2130 = vmul.f32 %v611, %v2092
      %v2131 = vmul.f32 %v616, %v2092
      %v2132 = vmul.f32 %v619, %v2092
      %v2133 = vmul.f32 %v624, %v2092
      %v2134 = vmul.f32 %v627, %v2092
      %v2135 = vmul.f32 %v632, %v2092
      %v2136 = vmul.f32 %v635, %v2092
      %v2137 = vmul.f32 %v640, %v2092
      %v2138 = vmul.f32 %v643, %v2092
      %v2139 = vmul.f32 %v648, %v2092
      %v2140 = vmul.f32 %v651, %v2092
      %v2189 = vrot.slane %v2093, 2
      %v2190 = vrot.slane %v2094, 2
      %v2191 = vsel %vm1070, %v2189, %v2190
      %v2192 = vrot.slane %v2095, 2
      %v2193 = vsel %vm1070, %v2190, %v2192
      %v2194 = vrot.slane %v2096, 2
      %v2195 = vrot.slane %v2097, 2
      %v2196 = vsel %vm1070, %v2194, %v2195
      %v2197 = vrot.slane %v2098, 2
      %v2198 = vsel %vm1070, %v2195, %v2197
      %v2199 = vrot.slane %v2099, 2
      %v2200 = vrot.slane %v2100, 2
      %v2201 = vsel %vm1070, %v2199, %v2200
      %v2202 = vrot.slane %v2101, 2
      %v2203 = vsel %vm1070, %v2200, %v2202
      %v2204 = vrot.slane %v2102, 2
      %v2205 = vrot.slane %v2103, 2
      %v2206 = vsel %vm1070, %v2204, %v2205
      %v2207 = vrot.slane %v2104, 2
      %v2208 = vsel %vm1070, %v2205, %v2207
      %v2209 = vrot.slane %v2105, 2
      %v2210 = vrot.slane %v2106, 2
      %v2211 = vsel %vm1070, %v2209, %v2210
      %v2212 = vrot.slane %v2107, 2
      %v2213 = vsel %vm1070, %v2210, %v2212
      %v2214 = vrot.slane %v2108, 2
      %v2215 = vrot.slane %v2109, 2
      %v2216 = vsel %vm1070, %v2214, %v2215
      %v2217 = vrot.slane %v2110, 2
      %v2218 = vsel %vm1070, %v2215, %v2217
      %v2219 = vrot.slane %v2111, 2
      %v2220 = vrot.slane %v2112, 2
      %v2221 = vsel %vm1070, %v2219, %v2220
      %v2222 = vrot.slane %v2113, 2
      %v2223 = vsel %vm1070, %v2220, %v2222
      %v2224 = vrot.slane %v2114, 2
      %v2225 = vrot.slane %v2115, 2
      %v2226 = vsel %vm1070, %v2224, %v2225
      %v2227 = vrot.slane %v2116, 2
      %v2228 = vsel %vm1070, %v2225, %v2227
      %v2229 = vrot.slane %v2117, 2
      %v2230 = vrot.slane %v2118, 2
      %v2231 = vsel %vm1070, %v2229, %v2230
      %v2232 = vrot.slane %v2119, 2
      %v2233 = vsel %vm1070, %v2230, %v2232
      %v2234 = vrot.slane %v2120, 2
      %v2235 = vrot.slane %v2121, 2
      %v2236 = vsel %vm1070, %v2234, %v2235
      %v2237 = vrot.slane %v2122, 2
      %v2238 = vsel %vm1070, %v2235, %v2237
      %v2239 = vrot.slane %v2123, 2
      %v2240 = vrot.slane %v2124, 2
      %v2241 = vsel %vm1070, %v2239, %v2240
      %v2242 = vrot.slane %v2125, 2
      %v2243 = vsel %vm1070, %v2240, %v2242
      %v2244 = vrot.slane %v2126, 2
      %v2245 = vrot.slane %v2127, 2
      %v2246 = vsel %vm1070, %v2244, %v2245
      %v2247 = vrot.slane %v2128, 2
      %v2248 = vsel %vm1070, %v2245, %v2247
      %v2249 = vrot.slane %v2129, 2
      %v2250 = vrot.slane %v2130, 2
      %v2251 = vsel %vm1070, %v2249, %v2250
      %v2252 = vrot.slane %v2131, 2
      %v2253 = vsel %vm1070, %v2250, %v2252
      %v2254 = vrot.slane %v2132, 2
      %v2255 = vrot.slane %v2133, 2
      %v2256 = vsel %vm1070, %v2254, %v2255
      %v2257 = vrot.slane %v2134, 2
      %v2258 = vsel %vm1070, %v2255, %v2257
      %v2259 = vrot.slane %v2135, 2
      %v2260 = vrot.slane %v2136, 2
      %v2261 = vsel %vm1070, %v2259, %v2260
      %v2262 = vrot.slane %v2137, 2
      %v2263 = vsel %vm1070, %v2260, %v2262
      %v2264 = vrot.slane %v2138, 2
      %v2265 = vrot.slane %v2139, 2
      %v2266 = vsel %vm1070, %v2264, %v2265
      %v2267 = vrot.slane %v2140, 2
      %v2268 = vsel %vm1070, %v2265, %v2267
      %v2301 = vadd.f32 %v2056, %v2191
      %v2302 = vadd.f32 %v2057, %v2193
      %v2303 = vadd.f32 %v2058, %v2196
      %v2304 = vadd.f32 %v2059, %v2198
      %v2305 = vadd.f32 %v2060, %v2201
      %v2306 = vadd.f32 %v2061, %v2203
      %v2307 = vadd.f32 %v2062, %v2206
      %v2308 = vadd.f32 %v2063, %v2208
      %v2309 = vadd.f32 %v2064, %v2211
      %v2310 = vadd.f32 %v2065, %v2213
      %v2311 = vadd.f32 %v2066, %v2216
      %v2312 = vadd.f32 %v2067, %v2218
      %v2313 = vadd.f32 %v2068, %v2221
      %v2314 = vadd.f32 %v2069, %v2223
      %v2315 = vadd.f32 %v2070, %v2226
      %v2316 = vadd.f32 %v2071, %v2228
      %v2317 = vadd.f32 %v2072, %v2231
      %v2318 = vadd.f32 %v2073, %v2233
      %v2319 = vadd.f32 %v2074, %v2236
      %v2320 = vadd.f32 %v2075, %v2238
      %v2321 = vadd.f32 %v2076, %v2241
      %v2322 = vadd.f32 %v2077, %v2243
      %v2323 = vadd.f32 %v2078, %v2246
      %v2324 = vadd.f32 %v2079, %v2248
      %v2325 = vadd.f32 %v2080, %v2251
      %v2326 = vadd.f32 %v2081, %v2253
      %v2327 = vadd.f32 %v2082, %v2256
      %v2328 = vadd.f32 %v2083, %v2258
      %v2329 = vadd.f32 %v2084, %v2261
      %v2330 = vadd.f32 %v2085, %v2263
      %v2331 = vadd.f32 %v2086, %v2266
      %v2332 = vadd.f32 %v2087, %v2268
      %2333 = vst.msk [vmem:[%s224] sm:$0xff] %vm323, %v2301
      %2334 = vst.msk [vmem:[%s224 + $0x8] sm:$0xff] %vm323, %v2302
      %2335 = vst.msk [vmem:[%s224 + $0x10] sm:$0xff] %vm323, %v2303
      %2336 = vst.msk [vmem:[%s224 + $0x18] sm:$0xff] %vm323, %v2304
      %2337 = vst.msk [vmem:[%s224 + $0x20] sm:$0xff] %vm323, %v2305
      %2338 = vst.msk [vmem:[%s224 + $0x28] sm:$0xff] %vm323, %v2306
      %2339 = vst.msk [vmem:[%s224 + $0x30] sm:$0xff] %vm323, %v2307
      %2340 = vst.msk [vmem:[%s224 + $0x38] sm:$0xff] %vm323, %v2308
      %2341 = vst.msk [vmem:[%s224 + $0x40] sm:$0xff] %vm323, %v2309
      %2342 = vst.msk [vmem:[%s224 + $0x48] sm:$0xff] %vm323, %v2310
      %2343 = vst.msk [vmem:[%s224 + $0x50] sm:$0xff] %vm323, %v2311
      %2344 = vst.msk [vmem:[%s224 + $0x58] sm:$0xff] %vm323, %v2312
      %2345 = vst.msk [vmem:[%s224 + $0x60] sm:$0xff] %vm323, %v2313
      %2346 = vst.msk [vmem:[%s224 + $0x68] sm:$0xff] %vm323, %v2314
      %2347 = vst.msk [vmem:[%s224 + $0x70] sm:$0xff] %vm323, %v2315
      %2348 = vst.msk [vmem:[%s224 + $0x78] sm:$0xff] %vm323, %v2316
      %2349 = vst.msk [vmem:[%s224 + $0x80] sm:$0xff] %vm323, %v2317
      %2350 = vst.msk [vmem:[%s224 + $0x88] sm:$0xff] %vm323, %v2318
      %2351 = vst.msk [vmem:[%s224 + $0x90] sm:$0xff] %vm323, %v2319
      %2352 = vst.msk [vmem:[%s224 + $0x98] sm:$0xff] %vm323, %v2320
      %2353 = vst.msk [vmem:[%s224 + $0xa0] sm:$0xff] %vm323, %v2321
      %2354 = vst.msk [vmem:[%s224 + $0xa8] sm:$0xff] %vm323, %v2322
      %2355 = vst.msk [vmem:[%s224 + $0xb0] sm:$0xff] %vm323, %v2323
      %2356 = vst.msk [vmem:[%s224 + $0xb8] sm:$0xff] %vm323, %v2324
      %2357 = vst.msk [vmem:[%s224 + $0xc0] sm:$0xff] %vm323, %v2325
      %2358 = vst.msk [vmem:[%s224 + $0xc8] sm:$0xff] %vm323, %v2326
      %2359 = vst.msk [vmem:[%s224 + $0xd0] sm:$0xff] %vm323, %v2327
      %2360 = vst.msk [vmem:[%s224 + $0xd8] sm:$0xff] %vm323, %v2328
      %2361 = vst.msk [vmem:[%s224 + $0xe0] sm:$0xff] %vm323, %v2329
      %2362 = vst.msk [vmem:[%s224 + $0xe8] sm:$0xff] %vm323, %v2330
      %2363 = vst.msk [vmem:[%s224 + $0xf0] sm:$0xff] %vm323, %v2331
      %2364 = vst.msk [vmem:[%s224 + $0xf8] sm:$0xff] %vm323, %v2332
      %p2365 = scmp.lt.s32.totalorder %s18, 1
      %s2366 = scalar_select %p2365, %s18, 1
      %p2367 = scmp.lt.s32.totalorder %s19, 0
      %s2368 = scalar_select %p2367, %s19, 0
      %s2369 = smul.addr %s2366, 32
      %s2370 = sadd.s32 %s2368, %s2369
      %s2371 = smul.addr %s2370, 8
      %s2372 = scalar_lea.vmem %s3, %s2371
      // Predicated region
      $region33: #{attention_forward.4} parent=31 // pred_check
        %p2373 = pneg %p124
      $region34: #{attention_forward.4} parent=31 // pred_check_branch
        %2375 = sbr.rel (%p2373) target = $region36
      $region35: #{attention_forward.4} parent=31 // pred_region
        _
      $region36: #{attention_forward.4} parent=31 // pred_fallthru
        _
    $region32: #{attention_forward.4} parent=5 // pred_fallthru
      _
    %p2376 = scmp.le.s32.totalorder 2, %s9
    // Predicated region
    $region37: #{attention_forward.4} parent=5 // pred_check
      %p2377 = pneg %p2376
    $region38: #{attention_forward.4} parent=5 // pred_check_branch
      %2379 = sbr.rel (%p2377) target = $region40
    $region39: #{attention_forward.4} parent=5 // pred_region
      %s2380 = ssub.s32 %s9, 2
      // Predicated region
      $region41: #{attention_forward.4} parent=39 // pred_check
        %p2381 = pneg %p130
      $region42: #{attention_forward.4} parent=39 // pred_check_branch
        %2383 = sbr.rel (%p2381) target = $region44
      $region43: #{attention_forward.4} parent=39 // pred_region
        %p2384 = scmp.lt.s32.totalorder %s20, 1
        %s2385 = scalar_select %p2384, %s20, 1
        %p2386 = scmp.lt.s32.totalorder %s21, 0
        %s2387 = scalar_select %p2386, %s21, 0
        %s2388 = smul.addr %s2385, 32
        %s2389 = sadd.s32 %s2387, %s2388
        %s2390 = smul.addr %s2389, 8
        %s2391 = scalar_lea.vmem %s3, %s2390
      $region44: #{attention_forward.4} parent=39 // pred_fallthru
        _
    $region40: #{attention_forward.4} parent=5 // pred_fallthru
      _
  $region6: #{attention_forward.4} parent=0 // loop_footer
    %s13 = sadd.s32 1, %s9
  $region7: #{attention_forward.4} parent=0 // loop_footer_branch
    %8 = sbr.rel target = $region3
  $region8: #{attention_forward.4} parent=0 // loop_exit
    _

// kernel: attention_forward.3
$region0: #{attention_forward.3}
  #allocation0 [shape = 'u32[]', space=smem, size = 0x4, offset = 0x4, fixed_abs, tag = 'smem constant byte address 0x4 - core index']
  #allocation1 [shape = 'u32[144,128]{1,0:T(1,128)}', space=vmem, size = 0x12000, scoped, tag = 'internal scratch']
  %s0 = inlined_call_operand.vmem [shape: f32[2,18,24,32], index: 0, kind: input, shape index: {}]
  %s1 = inlined_call_operand.vmem [shape: bf16[32,64], index: 1, kind: input, shape index: {}]
  %s2 = inlined_call_operand.vmem [shape: f32[9,64], index: 2, kind: input, shape index: {}]
  %s3 = inlined_call_operand.vmem [shape: f32[2,16,16,64], index: 3, kind: output, shape index: {}]
  %s4 = sld [smem:[#allocation0]]
  $region45: #{attention_forward.3} parent=0
    _
  %s6 = ssub.s32 1, %s4
  %s7 = scalar_select 0, %s6, %s4
  loop: start=0, step=1, limit=4
  $region2: #{attention_forward.3} parent=0 // loop_pre_header
    _
  $region3: #{attention_forward.3} parent=0 // loop_header
    %s9 = sphi 0, %s13
    %p10 = scmp.ge.s32.totalorder %s9, 4
    %s16 = sphi 0, %s28
    %s17 = sphi 0, %s24
    %s18 = sphi 0, %s16
    %s19 = sphi 0, %s17
    %s20 = sphi 0, %s18
    %s21 = sphi 0, %s19
    %s31 = sphi 0, %s33
    %s34 = sphi 0, %s31
    %s35 = sphi 0, %s34
    %s51 = sphi 0, %s35
    %s57 = sphi 0, %s59
    %s60 = sphi 0, %s57
    %s61 = sphi 0, %s60
    %s77 = sphi 0, %s61
    %s83 = sphi 0, %s85
    %s86 = sphi 0, %s83
    %s87 = sphi 0, %s86
    %s103 = sphi 0, %s87
    %s111 = sphi 0, %s113
    %s114 = sphi 0, %s111
    %s115 = sphi 0, %s114
    %s131 = sphi 0, %s115
  $region4: #{attention_forward.3} parent=0 // loop_header_branch
    %12 = sbr.rel (%p10) target = $region8
  $region5: #{attention_forward.3} parent=0 // loop_body
    %s14 = ssub.s32 %s9, 1
    %s15 = ssub.s32 %s9, 2
    %s22 = sadd.s32 1, %s17
    %p23 = scmp.ge.s32.totalorder %s22, 1
    %s24 = scalar_select %p23, 0, %s22
    %s25 = sadd.s32 1, %s16
    %s26 = scalar_select %p23, %s25, %s16
    %p27 = scmp.ge.s32.totalorder %s26, 2
    %s28 = scalar_select %p27, 0, %s26
    %s29 = ssub.s32 %s16, %s28
    %p30 = scmp.eq.s32.totalorder %s29, 0
    %s32 = sadd.s32 %s31, 1
    %s33 = scalar_select %p30, %s31, %s32
    %p36 = pneg %p30
    %p37 = scmp.eq.s32.totalorder %s9, 1
    %p38 = por %p36, %p37
    %p39 = scmp.ne.s32.totalorder %s31, %s34
    %p40 = scmp.eq.s32.totalorder %s9, 0
    %p41 = por %p39, %p40
    %p42 = scmp.ne.s32.totalorder %s31, %s34
    %p43 = scmp.eq.s32.totalorder %s14, 1
    %p44 = por %p42, %p43
    %p45 = scmp.ne.s32.totalorder %s34, %s35
    %p46 = scmp.eq.s32.totalorder %s14, 0
    %p47 = por %p45, %p46
    %p48 = scmp.ne.s32.totalorder %s34, %s35
    %p49 = scmp.eq.s32.totalorder %s15, 1
    %p50 = por %p48, %p49
    %p52 = scmp.ne.s32.totalorder %s35, %s51
    %p53 = scmp.eq.s32.totalorder %s15, 0
    %p54 = por %p52, %p53
    %s55 = ssub.s32 %s17, %s24
    %p56 = scmp.eq.s32.totalorder %s55, 0
    %s58 = sadd.s32 %s57, 1
    %s59 = scalar_select %p56, %s57, %s58
    %p62 = pneg %p56
    %p63 = scmp.eq.s32.totalorder %s9, 1
    %p64 = por %p62, %p63
    %p65 = scmp.ne.s32.totalorder %s57, %s60
    %p66 = scmp.eq.s32.totalorder %s9, 0
    %p67 = por %p65, %p66
    %p68 = scmp.ne.s32.totalorder %s57, %s60
    %p69 = scmp.eq.s32.totalorder %s14, 1
    %p70 = por %p68, %p69
    %p71 = scmp.ne.s32.totalorder %s60, %s61
    %p72 = scmp.eq.s32.totalorder %s14, 0
    %p73 = por %p71, %p72
    %p74 = scmp.ne.s32.totalorder %s60, %s61
    %p75 = scmp.eq.s32.totalorder %s15, 1
    %p76 = por %p74, %p75
    %p78 = scmp.ne.s32.totalorder %s61, %s77
    %p79 = scmp.eq.s32.totalorder %s15, 0
    %p80 = por %p78, %p79
    %s81 = ssub.s32 %s17, %s24
    %p82 = scmp.eq.s32.totalorder %s81, 0
    %s84 = sadd.s32 %s83, 1
    %s85 = scalar_select %p82, %s83, %s84
    %p88 = pneg %p82
    %p89 = scmp.eq.s32.totalorder %s9, 1
    %p90 = por %p88, %p89
    %p91 = scmp.ne.s32.totalorder %s83, %s86
    %p92 = scmp.eq.s32.totalorder %s9, 0
    %p93 = por %p91, %p92
    %p94 = scmp.ne.s32.totalorder %s83, %s86
    %p95 = scmp.eq.s32.totalorder %s14, 1
    %p96 = por %p94, %p95
    %p97 = scmp.ne.s32.totalorder %s86, %s87
    %p98 = scmp.eq.s32.totalorder %s14, 0
    %p99 = por %p97, %p98
    %p100 = scmp.ne.s32.totalorder %s86, %s87
    %p101 = scmp.eq.s32.totalorder %s15, 1
    %p102 = por %p100, %p101
    %p104 = scmp.ne.s32.totalorder %s87, %s103
    %p105 = scmp.eq.s32.totalorder %s15, 0
    %p106 = por %p104, %p105
    %s107 = ssub.s32 %s16, %s28
    %s108 = ssub.s32 %s17, %s24
    %s109 = sor.u32 %s107, %s108
    %p110 = scmp.eq.s32.totalorder %s109, 0
    %s112 = sadd.s32 %s111, 1
    %s113 = scalar_select %p110, %s111, %s112
    %p116 = pneg %p110
    %p117 = scmp.eq.s32.totalorder %s9, 1
    %p118 = por %p116, %p117
    %p119 = scmp.ne.s32.totalorder %s111, %s114
    %p120 = scmp.eq.s32.totalorder %s9, 0
    %p121 = por %p119, %p120
    %p122 = scmp.ne.s32.totalorder %s111, %s114
    %p123 = scmp.eq.s32.totalorder %s14, 1
    %p124 = por %p122, %p123
    %p125 = scmp.ne.s32.totalorder %s114, %s115
    %p126 = scmp.eq.s32.totalorder %s14, 0
    %p127 = por %p125, %p126
    %p128 = scmp.ne.s32.totalorder %s114, %s115
    %p129 = scmp.eq.s32.totalorder %s15, 1
    %p130 = por %p128, %p129
    %p132 = scmp.ne.s32.totalorder %s115, %s131
    %p133 = scmp.eq.s32.totalorder %s15, 0
    %p134 = por %p132, %p133
    %p135 = scmp.le.s32.totalorder 1, %s9
    %p136 = scmp.lt.s32.totalorder %s9, 3
    %p137 = pnand %p135, %p136
    %p138 = pneg %p137
    // Predicated region
    $region9: #{attention_forward.3} parent=5 // pred_check
      _
    $region10: #{attention_forward.3} parent=5 // pred_check_branch
      %140 = sbr.rel (%p137) target = $region12
    $region11: #{attention_forward.3} parent=5 // pred_region
      %s141 = ssub.s32 %s9, 1
      // Predicated region
      $region13: #{attention_forward.3} parent=11 // pred_check
        %p142 = pneg %p73
      $region14: #{attention_forward.3} parent=11 // pred_check_branch
        %144 = sbr.rel (%p142) target = $region16
      $region15: #{attention_forward.3} parent=11 // pred_region
        %p145 = scmp.lt.s32.totalorder %s19, 0
        %s146 = scalar_select %p145, %s19, 0
        %s147 = smul.addr %s146, 4
        %s148 = scalar_lea.vmem %s1, %s147
      $region16: #{attention_forward.3} parent=11 // pred_fallthru
        _
      // Predicated region
      $region17: #{attention_forward.3} parent=11 // pred_check
        %p149 = pneg %p99
      $region18: #{attention_forward.3} parent=11 // pred_check_branch
        %151 = sbr.rel (%p149) target = $region20
      $region19: #{attention_forward.3} parent=11 // pred_region
        %p152 = scmp.lt.s32.totalorder %s19, 0
        %s153 = scalar_select %p152, %s19, 0
        %s154 = smul.addr %s153, 8
        %s155 = scalar_lea.vmem %s2, %s154
      $region20: #{attention_forward.3} parent=11 // pred_fallthru
        _
    $region12: #{attention_forward.3} parent=5 // pred_fallthru
      _
    %p156 = scmp.lt.s32.totalorder %s9, 2
    // Predicated region
    $region21: #{attention_forward.3} parent=5 // pred_check
      %p157 = pneg %p156
    $region22: #{attention_forward.3} parent=5 // pred_check_branch
      %159 = sbr.rel (%p157) target = $region24
    $region23: #{attention_forward.3} parent=5 // pred_region
      // Predicated region
      $region25: #{attention_forward.3} parent=23 // pred_check
        %p160 = pneg %p41
      $region26: #{attention_forward.3} parent=23 // pred_check_branch
        %162 = sbr.rel (%p160) target = $region28
      $region27: #{attention_forward.3} parent=23 // pred_region
        %p163 = scmp.lt.s32.totalorder %s16, 1
        %s164 = scalar_select %p163, %s16, 1
        %s165 = smul.addr %s164, 54
        %s166 = smul.addr %s165, 8
        %s167 = scalar_lea.vmem %s0, %s166
      $region28: #{attention_forward.3} parent=23 // pred_fallthru
        _
    $region24: #{attention_forward.3} parent=5 // pred_fallthru
      _
    %p168 = scmp.le.s32.totalorder 1, %s9
    %p169 = scmp.lt.s32.totalorder %s9, 3
    %p170 = pnand %p168, %p169
    %p171 = pneg %p170
    // Predicated region
    $region29: #{attention_forward.3} parent=5 // pred_check
      _
    $region30: #{attention_forward.3} parent=5 // pred_check_branch
      %173 = sbr.rel (%p170) target = $region32
    $region31: #{attention_forward.3} parent=5 // pred_region
      %s174 = ssub.s32 %s9, 1
      %p175 = scmp.lt.s32.totalorder %s18, 1
      %s176 = scalar_select %p175, %s18, 1
      %s177 = smul.addr %s176, 54
      %s178 = smul.addr %s177, 8
      %s179 = scalar_lea.vmem %s0, %s178
      %p180 = pneg %p47
      %p181 = pneg %p44
      %p182 = scmp.lt.s32.totalorder %s19, 0
      %s183 = scalar_select %p182, %s19, 0
      %s184 = smul.addr %s183, 4
      %s185 = scalar_lea.vmem %s1, %s184
      %p186 = pneg %p73
      %p187 = pneg %p70
      %p188 = scmp.lt.s32.totalorder %s19, 0
      %s189 = scalar_select %p188, %s19, 0
      %s190 = smul.addr %s189, 8
      %s191 = scalar_lea.vmem %s2, %s190
      %p192 = pneg %p99
      %p193 = pneg %p96
      %p194 = pneg %p127
      %p195 = pneg %p124
      %p196 = scmp.lt.s32.totalorder %s18, 1
      %s197 = scalar_select %p196, %s18, 1
      %p198 = scmp.lt.s32.totalorder %s19, 0
      %s199 = scalar_select %p198, %s19, 0
      %s200 = smul.addr %s197, 32
      %s201 = sadd.s32 %s199, %s200
      %s202 = smul.addr %s201, 8
      %s203 = scalar_lea.vmem %s3, %s202
      %p204 = scmp.lt.s32.totalorder %s18, 1
      %s205 = scalar_select %p204, %s18, 1
      %s206 = smul.addr %s205, 54
      %s207 = smul.addr %s206, 8
      %s208 = scalar_lea.vmem %s0, %s207
      %p209 = scmp.lt.s32.totalorder %s19, 0
      %s210 = scalar_select %p209, %s19, 0
      %s211 = smul.addr %s210, 4
      %s212 = scalar_lea.vmem %s1, %s211
      %p213 = scmp.lt.s32.totalorder %s19, 0
      %s214 = scalar_select %p213, %s19, 0
      %s215 = smul.addr %s214, 8
      %s216 = scalar_lea.vmem %s2, %s215
      %p217 = scmp.lt.s32.totalorder %s18, 1
      %s218 = scalar_select %p217, %s18, 1
      %p219 = scmp.lt.s32.totalorder %s19, 0
      %s220 = scalar_select %p219, %s19, 0
      %s221 = smul.addr %s218, 32
      %s222 = sadd.s32 %s220, %s221
      %s223 = smul.addr %s222, 8
      %s224 = scalar_lea.vmem %s3, %s223
      %v226 = vld [vmem:[%s208] sm:$0xff]
      %v227 = vld [vmem:[%s208 + $0x8] sm:$0xff]
      %v228 = vld [vmem:[%s208 + $0x10] sm:$0xff]
      %v229 = vld [vmem:[%s208 + $0x18] sm:$0xff]
      %v230 = vld [vmem:[%s208 + $0x20] sm:$0xff]
      %v231 = vld [vmem:[%s208 + $0x28] sm:$0xff]
      %v232 = vld [vmem:[%s208 + $0x30] sm:$0xff]
      %v233 = vld [vmem:[%s208 + $0x38] sm:$0xff]
      %v234 = vld [vmem:[%s208 + $0x40] sm:$0xff]
      %v235 = vld [vmem:[%s208 + $0x48] sm:$0xff]
      %v236 = vld [vmem:[%s208 + $0x50] sm:$0xff]
      %v237 = vld [vmem:[%s208 + $0x58] sm:$0xff]
      %v238 = vld [vmem:[%s208 + $0x60] sm:$0xff]
      %v239 = vld [vmem:[%s208 + $0x68] sm:$0xff]
      %v240 = vld [vmem:[%s208 + $0x70] sm:$0xff]
      %v241 = vld [vmem:[%s208 + $0x78] sm:$0xff]
      %v242 = vld [vmem:[%s208 + $0x80] sm:$0xff]
      %v243 = vld [vmem:[%s208 + $0x88] sm:$0xff]
      %v244 = vld [vmem:[%s208 + $0x90] sm:$0xff]
      %v245 = vld [vmem:[%s208 + $0x98] sm:$0xff]
      %v246 = vld [vmem:[%s208 + $0xa0] sm:$0xff]
      %v247 = vld [vmem:[%s208 + $0xa8] sm:$0xff]
      %v248 = vld [vmem:[%s208 + $0xb0] sm:$0xff]
      %v249 = vld [vmem:[%s208 + $0xb8] sm:$0xff]
      %v250 = vld [vmem:[%s208 + $0xc0] sm:$0xff]
      %v251 = vld [vmem:[%s208 + $0xc8] sm:$0xff]
      %v252 = vld [vmem:[%s208 + $0xd0] sm:$0xff]
      %v253 = vld [vmem:[%s208 + $0xd8] sm:$0xff]
      %v254 = vld [vmem:[%s208 + $0xe0] sm:$0xff]
      %v255 = vld [vmem:[%s208 + $0xe8] sm:$0xff]
      %v256 = vld [vmem:[%s208 + $0xf0] sm:$0xff]
      %v257 = vld [vmem:[%s208 + $0xf8] sm:$0xff]
      %v258 = vld [vmem:[%s208 + $0x100] sm:$0xff]
      %v259 = vld [vmem:[%s208 + $0x108] sm:$0xff]
      %v260 = vld [vmem:[%s208 + $0x110] sm:$0xff]
      %v261 = vld [vmem:[%s208 + $0x118] sm:$0xff]
      %v262 = vld [vmem:[%s208 + $0x120] sm:$0xff]
      %v263 = vld [vmem:[%s208 + $0x128] sm:$0xff]
      %v264 = vld [vmem:[%s208 + $0x130] sm:$0xff]
      %v265 = vld [vmem:[%s208 + $0x138] sm:$0xff]
      %v266 = vld [vmem:[%s208 + $0x140] sm:$0xff]
      %v267 = vld [vmem:[%s208 + $0x148] sm:$0xff]
      %v268 = vld [vmem:[%s208 + $0x150] sm:$0xff]
      %v269 = vld [vmem:[%s208 + $0x158] sm:$0xff]
      %v270 = vld [vmem:[%s208 + $0x160] sm:$0xff]
      %v271 = vld [vmem:[%s208 + $0x168] sm:$0xff]
      %v272 = vld [vmem:[%s208 + $0x170] sm:$0xff]
      %v273 = vld [vmem:[%s208 + $0x178] sm:$0xff]
      %v274 = vld [vmem:[%s208 + $0x180] sm:$0xff]
      %v275 = vld [vmem:[%s208 + $0x188] sm:$0xff]
      %v276 = vld [vmem:[%s208 + $0x190] sm:$0xff]
      %v277 = vld [vmem:[%s208 + $0x198] sm:$0xff]
      %v278 = vld [vmem:[%s208 + $0x1a0] sm:$0xff]
      %v279 = vld [vmem:[%s208 + $0x1a8] sm:$0xff]
      %v280 = vpack.c.bf16 %v227, %v226
      %v281 = vpack.c.bf16 %v229, %v228
      %v282 = vpack.c.bf16 %v231, %v230
      %v283 = vpack.c.bf16 %v233, %v232
      %v284 = vpack.c.bf16 %v235, %v234
      %v285 = vpack.c.bf16 %v237, %v236
      %v286 = vpack.c.bf16 %v239, %v238
      %v287 = vpack.c.bf16 %v241, %v240
      %v288 = vpack.c.bf16 %v243, %v242
      %v289 = vpack.c.bf16 %v245, %v244
      %v290 = vpack.c.bf16 %v247, %v246
      %v291 = vpack.c.bf16 %v249, %v248
      %v292 = vpack.c.bf16 %v251, %v250
      %v293 = vpack.c.bf16 %v253, %v252
      %v294 = vpack.c.bf16 %v255, %v254
      %v295 = vpack.c.bf16 %v257, %v256
      %v296 = vpack.c.bf16 %v259, %v258
      %v297 = vpack.c.bf16 %v261, %v260
      %v298 = vpack.c.bf16 %v263, %v262
      %v299 = vpack.c.bf16 %v265, %v264
      %v300 = vpack.c.bf16 %v267, %v266
      %v301 = vpack.c.bf16 %v269, %v268
      %v302 = vpack.c.bf16 %v271, %v270
      %v303 = vpack.c.bf16 %v273, %v272
      %v304 = vpack.c.bf16 %v275, %v274
      %v305 = vpack.c.bf16 %v277, %v276
      %v306 = vpack.c.bf16 %v279, %v278
      %v307 = vld [vmem:[%s212] sm:$0xf]
      %v308 = vld [vmem:[%s212 + $0x4] sm:$0xf]
      %v309 = vld [vmem:[%s212 + $0x8] sm:$0xf]
      %v310 = vld [vmem:[%s212 + $0xc] sm:$0xf]
      %v315 = vunpack.c.l.b16 %v307
      %v316 = vunpack.c.l.b16 %v308
      %v317 = vunpack.c.l.b16 %v309
      %v318 = vunpack.c.l.b16 %v310
      %v319 = vpack.c.b16 %v316, %v315
      %v320 = vpack.c.b16 %v318, %v317
      %vm323 = vcmask 261120
      %v325 = vsel %vm323, %v280, 0
      %v328 = vsel %vm323, %v281, 0
      %v331 = vsel %vm323, %v282, 0
      %v334 = vsel %vm323, %v283, 0
      %v337 = vsel %vm323, %v284, 0
      %v340 = vsel %vm323, %v285, 0
      %v343 = vsel %vm323, %v286, 0
      %v346 = vsel %vm323, %v287, 0
      %v349 = vsel %vm323, %v288, 0
      %v352 = vsel %vm323, %v289, 0
      %v355 = vsel %vm323, %v290, 0
      %v358 = vsel %vm323, %v291, 0
      %v361 = vsel %vm323, %v292, 0
      %v364 = vsel %vm323, %v293, 0
      %v367 = vsel %vm323, %v294, 0
      %v370 = vsel %vm323, %v295, 0
      %v373 = vsel %vm323, %v296, 0
      %v376 = vsel %vm323, %v297, 0
      %v379 = vsel %vm323, %v298, 0
      %v382 = vsel %vm323, %v299, 0
      %v385 = vsel %vm323, %v300, 0
      %v388 = vsel %vm323, %v301, 0
      %v391 = vsel %vm323, %v302, 0
      %v394 = vsel %vm323, %v303, 0
      %v397 = vsel %vm323, %v304, 0
      %v400 = vsel %vm323, %v305, 0
      %v403 = vsel %vm323, %v306, 0
      %405 = vmatprep.subr.bf16.mxu0 0
      %406 = vmatpush1.bf16.msra.mxu0 %v319
      %407 = vmatprep.subr.bf16.mxu0 0
      %408 = vmatpush1.bf16.msra.mxu0 %v320
      %409 = vmatprep.subr.bf16.mxu0 0
      %410 = vmatpush1.bf16.msra.mxu0 0
      %411 = vmatprep.subr.bf16.mxu0 0
      %412 = vmatpush1.bf16.msra.mxu0 0
      %413 = vmatprep.subr.bf16.mxu0 0
      %414 = vmatpush1.bf16.msra.mxu0 0
      %415 = vmatprep.subr.bf16.mxu0 0
      %416 = vmatpush1.bf16.msra.mxu0 0
      %417 = vmatprep.subr.bf16.mxu0 0
      %418 = vmatpush1.bf16.msra.mxu0 0
      %419 = vmatprep.subr.bf16.mxu0 0
      %420 = vmatpush1.bf16.msra.mxu0 0
      %421 = vmatprep.subr.bf16.mxu0 0
      %422 = vmatpush1.bf16.msra.mxu0 0
      %423 = vmatprep.subr.bf16.mxu0 0
      %424 = vmatpush1.bf16.msra.mxu0 0
      %425 = vmatprep.subr.bf16.mxu0 0
      %426 = vmatpush1.bf16.msra.mxu0 0
      %427 = vmatprep.subr.bf16.mxu0 0
      %428 = vmatpush1.bf16.msra.mxu0 0
      %429 = vmatprep.subr.bf16.mxu0 0
      %430 = vmatpush1.bf16.msra.mxu0 0
      %431 = vmatprep.subr.bf16.mxu0 0
      %432 = vmatpush1.bf16.msra.mxu0 0
      %433 = vmatprep.subr.bf16.mxu0 0
      %434 = vmatpush1.bf16.msra.mxu0 0
      %435 = vmatprep.subr.bf16.mxu0 0
      %436 = vmatpush1.bf16.msra.mxu0 0
      %437 = vmatprep.mubr.bf16.mxu0 0
      %438 = vmatmul.mubr.bf16.gmra.mrb[0].mxu0 %v325
      %v439 = vpop.f32.mrb[0].mxu0
      %v440 = vadd.f32 0.0, %v439
      %v441 = vpop.f32.mrb[0].mxu0
      %v442 = vpop.f32.mrb[0].mxu0
      %v443 = vadd.f32 0.0, %v442
      %v444 = vpop.f32.mrb[0].mxu0
      %445 = vmatprep.mubr.bf16.mxu0 0
      %446 = vmatmul.mubr.bf16.gmra.mrb[0].mxu0 %v328
      %v447 = vpop.f32.mrb[0].mxu0
      %v448 = vadd.f32 0.0, %v447
      %v449 = vpop.f32.mrb[0].mxu0
      %v450 = vpop.f32.mrb[0].mxu0
      %v451 = vadd.f32 0.0, %v450
      %v452 = vpop.f32.mrb[0].mxu0
      %453 = vmatprep.mubr.bf16.mxu0 0
      %454 = vmatmul.mubr.bf16.gmra.mrb[0].mxu0 %v331
      %v455 = vpop.f32.mrb[0].mxu0
      %v456 = vadd.f32 0.0, %v455
      %v457 = vpop.f32.mrb[0].mxu0
      %v458 = vpop.f32.mrb[0].mxu0
      %v459 = vadd.f32 0.0, %v458
      %v460 = vpop.f32.mrb[0].mxu0
      %461 = vmatprep.mubr.bf16.mxu0 0
      %462 = vmatmul.mubr.bf16.gmra.mrb[0].mxu0 %v334
      %v463 = vpop.f32.mrb[0].mxu0
      %v464 = vadd.f32 0.0, %v463
      %v465 = vpop.f32.mrb[0].mxu0
      %v466 = vpop.f32.mrb[0].mxu0
      %v467 = vadd.f32 0.0, %v466
      %v468 = vpop.f32.mrb[0].mxu0
      %469 = vmatprep.mubr.bf16.mxu0 0
      %470 = vmatmul.mubr.bf16.gmra.mrb[0].mxu0 %v337
      %v471 = vpop.f32.mrb[0].mxu0
      %v472 = vadd.f32 0.0, %v471
      %v473 = vpop.f32.mrb[0].mxu0
      %v474 = vpop.f32.mrb[0].mxu0
      %v475 = vadd.f32 0.0, %v474
      %v476 = vpop.f32.mrb[0].mxu0
      %477 = vmatprep.mubr.bf16.mxu0 0
      %478 = vmatmul.mubr.bf16.gmra.mrb[0].mxu0 %v340
      %v479 = vpop.f32.mrb[0].mxu0
      %v480 = vadd.f32 0.0, %v479
      %v481 = vpop.f32.mrb[0].mxu0
      %v482 = vpop.f32.mrb[0].mxu0
      %v483 = vadd.f32 0.0, %v482
      %v484 = vpop.f32.mrb[0].mxu0
      %485 = vmatprep.mubr.bf16.mxu0 0
      %486 = vmatmul.mubr.bf16.gmra.mrb[0].mxu0 %v343
      %v487 = vpop.f32.mrb[0].mxu0
      %v488 = vadd.f32 0.0, %v487
      %v489 = vpop.f32.mrb[0].mxu0
      %v490 = vpop.f32.mrb[0].mxu0
      %v491 = vadd.f32 0.0, %v490
      %v492 = vpop.f32.mrb[0].mxu0
      %493 = vmatprep.mubr.bf16.mxu0 0
      %494 = vmatmul.mubr.bf16.gmra.mrb[0].mxu0 %v346
      %v495 = vpop.f32.mrb[0].mxu0
      %v496 = vadd.f32 0.0, %v495
      %v497 = vpop.f32.mrb[0].mxu0
      %v498 = vpop.f32.mrb[0].mxu0
      %v499 = vadd.f32 0.0, %v498
      %v500 = vpop.f32.mrb[0].mxu0
      %501 = vmatprep.mubr.bf16.mxu0 0
      %502 = vmatmul.mubr.bf16.gmra.mrb[0].mxu0 %v349
      %v503 = vpop.f32.mrb[0].mxu0
      %v504 = vadd.f32 0.0, %v503
      %v505 = vpop.f32.mrb[0].mxu0
      %v506 = vpop.f32.mrb[0].mxu0
      %v507 = vadd.f32 0.0, %v506
      %v508 = vpop.f32.mrb[0].mxu0
      %509 = vmatprep.mubr.bf16.mxu0 0
      %510 = vmatmul.mubr.bf16.gmra.mrb[0].mxu0 %v352
      %v511 = vpop.f32.mrb[0].mxu0
      %v512 = vadd.f32 0.0, %v511
      %v513 = vpop.f32.mrb[0].mxu0
      %v514 = vpop.f32.mrb[0].mxu0
      %v515 = vadd.f32 0.0, %v514
      %v516 = vpop.f32.mrb[0].mxu0
      %517 = vmatprep.mubr.bf16.mxu0 0
      %518 = vmatmul.mubr.bf16.gmra.mrb[0].mxu0 %v355
      %v519 = vpop.f32.mrb[0].mxu0
      %v520 = vadd.f32 0.0, %v519
      %v521 = vpop.f32.mrb[0].mxu0
      %v522 = vpop.f32.mrb[0].mxu0
      %v523 = vadd.f32 0.0, %v522
      %v524 = vpop.f32.mrb[0].mxu0
      %525 = vmatprep.mubr.bf16.mxu0 0
      %526 = vmatmul.mubr.bf16.gmra.mrb[0].mxu0 %v358
      %v527 = vpop.f32.mrb[0].mxu0
      %v528 = vadd.f32 0.0, %v527
      %v529 = vpop.f32.mrb[0].mxu0
      %v530 = vpop.f32.mrb[0].mxu0
      %v531 = vadd.f32 0.0, %v530
      %v532 = vpop.f32.mrb[0].mxu0
      %533 = vmatprep.mubr.bf16.mxu0 0
      %534 = vmatmul.mubr.bf16.gmra.mrb[0].mxu0 %v361
      %v535 = vpop.f32.mrb[0].mxu0
      %v536 = vadd.f32 0.0, %v535
      %v537 = vpop.f32.mrb[0].mxu0
      %v538 = vpop.f32.mrb[0].mxu0
      %v539 = vadd.f32 0.0, %v538
      %v540 = vpop.f32.mrb[0].mxu0
      %541 = vmatprep.mubr.bf16.mxu0 0
      %542 = vmatmul.mubr.bf16.gmra.mrb[0].mxu0 %v364
      %v543 = vpop.f32.mrb[0].mxu0
      %v544 = vadd.f32 0.0, %v543
      %v545 = vpop.f32.mrb[0].mxu0
      %v546 = vpop.f32.mrb[0].mxu0
      %v547 = vadd.f32 0.0, %v546
      %v548 = vpop.f32.mrb[0].mxu0
      %549 = vmatprep.mubr.bf16.mxu0 0
      %550 = vmatmul.mubr.bf16.gmra.mrb[0].mxu0 %v367
      %v551 = vpop.f32.mrb[0].mxu0
      %v552 = vadd.f32 0.0, %v551
      %v553 = vpop.f32.mrb[0].mxu0
      %v554 = vpop.f32.mrb[0].mxu0
      %v555 = vadd.f32 0.0, %v554
      %v556 = vpop.f32.mrb[0].mxu0
      %557 = vmatprep.mubr.bf16.mxu0 0
      %558 = vmatmul.mubr.bf16.gmra.mrb[0].mxu0 %v370
      %v559 = vpop.f32.mrb[0].mxu0
      %v560 = vadd.f32 0.0, %v559
      %v561 = vpop.f32.mrb[0].mxu0
      %v562 = vpop.f32.mrb[0].mxu0
      %v563 = vadd.f32 0.0, %v562
      %v564 = vpop.f32.mrb[0].mxu0
      %565 = vmatprep.mubr.bf16.mxu0 0
      %566 = vmatmul.mubr.bf16.gmra.mrb[0].mxu0 %v373
      %v567 = vpop.f32.mrb[0].mxu0
      %v568 = vadd.f32 0.0, %v567
      %v569 = vpop.f32.mrb[0].mxu0
      %v570 = vpop.f32.mrb[0].mxu0
      %v571 = vadd.f32 0.0, %v570
      %v572 = vpop.f32.mrb[0].mxu0
      %573 = vmatprep.mubr.bf16.mxu0 0
      %574 = vmatmul.mubr.bf16.gmra.mrb[0].mxu0 %v376
      %v575 = vpop.f32.mrb[0].mxu0
      %v576 = vadd.f32 0.0, %v575
      %v577 = vpop.f32.mrb[0].mxu0
      %v578 = vpop.f32.mrb[0].mxu0
      %v579 = vadd.f32 0.0, %v578
      %v580 = vpop.f32.mrb[0].mxu0
      %581 = vmatprep.mubr.bf16.mxu0 0
      %582 = vmatmul.mubr.bf16.gmra.mrb[0].mxu0 %v379
      %v583 = vpop.f32.mrb[0].mxu0
      %v584 = vadd.f32 0.0, %v583
      %v585 = vpop.f32.mrb[0].mxu0
      %v586 = vpop.f32.mrb[0].mxu0
      %v587 = vadd.f32 0.0, %v586
      %v588 = vpop.f32.mrb[0].mxu0
      %589 = vmatprep.mubr.bf16.mxu0 0
      %590 = vmatmul.mubr.bf16.gmra.mrb[0].mxu0 %v382
      %v591 = vpop.f32.mrb[0].mxu0
      %v592 = vadd.f32 0.0, %v591
      %v593 = vpop.f32.mrb[0].mxu0
      %v594 = vpop.f32.mrb[0].mxu0
      %v595 = vadd.f32 0.0, %v594
      %v596 = vpop.f32.mrb[0].mxu0
      %597 = vmatprep.mubr.bf16.mxu0 0
      %598 = vmatmul.mubr.bf16.gmra.mrb[0].mxu0 %v385
      %v599 = vpop.f32.mrb[0].mxu0
      %v600 = vadd.f32 0.0, %v599
      %v601 = vpop.f32.mrb[0].mxu0
      %v602 = vpop.f32.mrb[0].mxu0
      %v603 = vadd.f32 0.0, %v602
      %v604 = vpop.f32.mrb[0].mxu0
      %605 = vmatprep.mubr.bf16.mxu0 0
      %606 = vmatmul.mubr.bf16.gmra.mrb[0].mxu0 %v388
      %v607 = vpop.f32.mrb[0].mxu0
      %v608 = vadd.f32 0.0, %v607
      %v609 = vpop.f32.mrb[0].mxu0
      %v610 = vpop.f32.mrb[0].mxu0
      %v611 = vadd.f32 0.0, %v610
      %v612 = vpop.f32.mrb[0].mxu0
      %613 = vmatprep.mubr.bf16.mxu0 0
      %614 = vmatmul.mubr.bf16.gmra.mrb[0].mxu0 %v391
      %v615 = vpop.f32.mrb[0].mxu0
      %v616 = vadd.f32 0.0, %v615
      %v617 = vpop.f32.mrb[0].mxu0
      %v618 = vpop.f32.mrb[0].mxu0
      %v619 = vadd.f32 0.0, %v618
      %v620 = vpop.f32.mrb[0].mxu0
      %621 = vmatprep.mubr.bf16.mxu0 0
      %622 = vmatmul.mubr.bf16.gmra.mrb[0].mxu0 %v394
      %v623 = vpop.f32.mrb[0].mxu0
      %v624 = vadd.f32 0.0, %v623
      %v625 = vpop.f32.mrb[0].mxu0
      %v626 = vpop.f32.mrb[0].mxu0
      %v627 = vadd.f32 0.0, %v626
      %v628 = vpop.f32.mrb[0].mxu0
      %629 = vmatprep.mubr.bf16.mxu0 0
      %630 = vmatmul.mubr.bf16.gmra.mrb[0].mxu0 %v397
      %v631 = vpop.f32.mrb[0].mxu0
      %v632 = vadd.f32 0.0, %v631
      %v633 = vpop.f32.mrb[0].mxu0
      %v634 = vpop.f32.mrb[0].mxu0
      %v635 = vadd.f32 0.0, %v634
      %v636 = vpop.f32.mrb[0].mxu0
      %637 = vmatprep.mubr.bf16.mxu0 0
      %638 = vmatmul.mubr.bf16.gmra.mrb[0].mxu0 %v400
      %v639 = vpop.f32.mrb[0].mxu0
      %v640 = vadd.f32 0.0, %v639
      %v641 = vpop.f32.mrb[0].mxu0
      %v642 = vpop.f32.mrb[0].mxu0
      %v643 = vadd.f32 0.0, %v642
      %v644 = vpop.f32.mrb[0].mxu0
      %645 = vmatprep.mubr.bf16.mxu0 0
      %646 = vmatmul.mubr.bf16.gmra.mrb[0].mxu0 %v403
      %v647 = vpop.f32.mrb[0].mxu0
      %v648 = vadd.f32 0.0, %v647
      %v649 = vpop.f32.mrb[0].mxu0
      %v650 = vpop.f32.mrb[0].mxu0
      %v651 = vadd.f32 0.0, %v650
      %v652 = vpop.f32.mrb[0].mxu0
      %653 = vdwg.mxu0
      %v654 = vld [vmem:[%s216] sm:$0x1]
      %v655 = vlaneseq
      %v656 = vshrl.u32 %v655, 7
      %v657 = vsub.s32 0, %v656
      %v658 = vrot.slane %v654, %v657
      %v659 = vmul.f32 %v440, %v658
      %v660 = vmul.f32 %v443, %v658
      %v661 = vmul.f32 %v451, %v658
      %v662 = vmul.f32 %v456, %v658
      %v663 = vmul.f32 %v464, %v658
      %v664 = vmul.f32 %v467, %v658
      %v665 = vmul.f32 %v475, %v658
      %v666 = vmul.f32 %v480, %v658
      %v667 = vmul.f32 %v488, %v658
      %v668 = vmul.f32 %v491, %v658
      %v669 = vmul.f32 %v499, %v658
      %v670 = vmul.f32 %v504, %v658
      %v671 = vmul.f32 %v512, %v658
      %v672 = vmul.f32 %v515, %v658
      %v673 = vmul.f32 %v523, %v658
      %v674 = vmul.f32 %v528, %v658
      %v675 = vmul.f32 %v536, %v658
      %v676 = vmul.f32 %v539, %v658
      %v677 = vmul.f32 %v547, %v658
      %v678 = vmul.f32 %v552, %v658
      %v679 = vmul.f32 %v560, %v658
      %v680 = vmul.f32 %v563, %v658
      %v681 = vmul.f32 %v571, %v658
      %v682 = vmul.f32 %v576, %v658
      %v683 = vmul.f32 %v584, %v658
      %v684 = vmul.f32 %v587, %v658
      %v685 = vmul.f32 %v595, %v658
      %v686 = vmul.f32 %v600, %v658
      %v687 = vmul.f32 %v608, %v658
      %v688 = vmul.f32 %v611, %v658
      %v689 = vmul.f32 %v619, %v658
      %v690 = vmul.f32 %v624, %v658
      %v691 = vadd.f32 %v659, 0.0
      %v692 = vadd.f32 %v660, 0.0
      %v693 = vadd.f32 %v661, 0.0
      %v694 = vadd.f32 %v662, 0.0
      %v695 = vadd.f32 %v663, 0.0
      %v696 = vadd.f32 %v664, 0.0
      %v697 = vadd.f32 %v665, 0.0
      %v698 = vadd.f32 %v666, 0.0
      %v699 = vadd.f32 %v667, 0.0
      %v700 = vadd.f32 %v668, 0.0
      %v701 = vadd.f32 %v669, 0.0
      %v702 = vadd.f32 %v670, 0.0
      %v703 = vadd.f32 %v671, 0.0
      %v704 = vadd.f32 %v672, 0.0
      %v705 = vadd.f32 %v673, 0.0
      %v706 = vadd.f32 %v674, 0.0
      %v707 = vadd.f32 %v675, 0.0
      %v708 = vadd.f32 %v676, 0.0
      %v709 = vadd.f32 %v677, 0.0
      %v710 = vadd.f32 %v678, 0.0
      %v711 = vadd.f32 %v679, 0.0
      %v712 = vadd.f32 %v680, 0.0
      %v713 = vadd.f32 %v681, 0.0
      %v714 = vadd.f32 %v682, 0.0
      %v715 = vadd.f32 %v683, 0.0
      %v716 = vadd.f32 %v684, 0.0
      %v717 = vadd.f32 %v685, 0.0
      %v718 = vadd.f32 %v686, 0.0
      %v719 = vadd.f32 %v687, 0.0
      %v720 = vadd.f32 %v688, 0.0
      %v721 = vadd.f32 %v689, 0.0
      %v722 = vadd.f32 %v690, 0.0
      %v723 = vld [vmem:[%s216 + $0x1] sm:$0x1]
      %v724 = vlaneseq
      %v725 = vshrl.u32 %v724, 7
      %v726 = vsub.s32 0, %v725
      %v727 = vrot.slane %v723, %v726
      %v728 = vmul.f32 %v440, %v727
      %v729 = vmul.f32 %v443, %v727
      %v730 = vmul.f32 %v448, %v727
      %v731 = vmul.f32 %v451, %v727
      %v732 = vmul.f32 %v456, %v727
      %v733 = vmul.f32 %v459, %v727
      %v734 = vmul.f32 %v464, %v727
      %v735 = vmul.f32 %v467, %v727
      %v736 = vmul.f32 %v472, %v727
      %v737 = vmul.f32 %v475, %v727
      %v738 = vmul.f32 %v480, %v727
      %v739 = vmul.f32 %v483, %v727
      %v740 = vmul.f32 %v488, %v727
      %v741 = vmul.f32 %v491, %v727
      %v742 = vmul.f32 %v496, %v727
      %v743 = vmul.f32 %v499, %v727
      %v744 = vmul.f32 %v504, %v727
      %v745 = vmul.f32 %v507, %v727
      %v746 = vmul.f32 %v512, %v727
      %v747 = vmul.f32 %v515, %v727
      %v748 = vmul.f32 %v520, %v727
      %v749 = vmul.f32 %v523, %v727
      %v750 = vmul.f32 %v528, %v727
      %v751 = vmul.f32 %v531, %v727
      %v752 = vmul.f32 %v536, %v727
      %v753 = vmul.f32 %v539, %v727
      %v754 = vmul.f32 %v544, %v727
      %v755 = vmul.f32 %v547, %v727
      %v756 = vmul.f32 %v552, %v727
      %v757 = vmul.f32 %v555, %v727
      %v758 = vmul.f32 %v560, %v727
      %v759 = vmul.f32 %v563, %v727
      %v760 = vmul.f32 %v568, %v727
      %v761 = vmul.f32 %v571, %v727
      %v762 = vmul.f32 %v576, %v727
      %v763 = vmul.f32 %v579, %v727
      %v764 = vmul.f32 %v584, %v727
      %v765 = vmul.f32 %v587, %v727
      %v766 = vmul.f32 %v592, %v727
      %v767 = vmul.f32 %v595, %v727
      %v768 = vmul.f32 %v600, %v727
      %v769 = vmul.f32 %v603, %v727
      %v770 = vmul.f32 %v608, %v727
      %v771 = vmul.f32 %v611, %v727
      %v772 = vmul.f32 %v616, %v727
      %v773 = vmul.f32 %v619, %v727
      %v774 = vmul.f32 %v624, %v727
      %v775 = vmul.f32 %v627, %v727
      %vm824 = vcmask 1046528
      %v825 = vrot.slane %v728, 1
      %v826 = vrot.slane %v729, 1
      %v827 = vsel %vm824, %v825, %v826
      %v828 = vrot.slane %v730, 1
      %v829 = vsel %vm824, %v826, %v828
      %v830 = vrot.slane %v731, 1
      %v831 = vrot.slane %v732, 1
      %v832 = vsel %vm824, %v830, %v831
      %v833 = vrot.slane %v733, 1
      %v834 = vsel %vm824, %v831, %v833
      %v835 = vrot.slane %v734, 1
      %v836 = vrot.slane %v735, 1
      %v837 = vsel %vm824, %v835, %v836
      %v838 = vrot.slane %v736, 1
      %v839 = vsel %vm824, %v836, %v838
      %v840 = vrot.slane %v737, 1
      %v841 = vrot.slane %v738, 1
      %v842 = vsel %vm824, %v840, %v841
      %v843 = vrot.slane %v739, 1
      %v844 = vsel %vm824, %v841, %v843
      %v845 = vrot.slane %v740, 1
      %v846 = vrot.slane %v741, 1
      %v847 = vsel %vm824, %v845, %v846
      %v848 = vrot.slane %v742, 1
      %v849 = vsel %vm824, %v846, %v848
      %v850 = vrot.slane %v743, 1
      %v851 = vrot.slane %v744, 1
      %v852 = vsel %vm824, %v850, %v851
      %v853 = vrot.slane %v745, 1
      %v854 = vsel %vm824, %v851, %v853
      %v855 = vrot.slane %v746, 1
      %v856 = vrot.slane %v747, 1
      %v857 = vsel %vm824, %v855, %v856
      %v858 = vrot.slane %v748, 1
      %v859 = vsel %vm824, %v856, %v858
      %v860 = vrot.slane %v749, 1
      %v861 = vrot.slane %v750, 1
      %v862 = vsel %vm824, %v860, %v861
      %v863 = vrot.slane %v751, 1
      %v864 = vsel %vm824, %v861, %v863
      %v865 = vrot.slane %v752, 1
      %v866 = vrot.slane %v753, 1
      %v867 = vsel %vm824, %v865, %v866
      %v868 = vrot.slane %v754, 1
      %v869 = vsel %vm824, %v866, %v868
      %v870 = vrot.slane %v755, 1
      %v871 = vrot.slane %v756, 1
      %v872 = vsel %vm824, %v870, %v871
      %v873 = vrot.slane %v757, 1
      %v874 = vsel %vm824, %v871, %v873
      %v875 = vrot.slane %v758, 1
      %v876 = vrot.slane %v759, 1
      %v877 = vsel %vm824, %v875, %v876
      %v878 = vrot.slane %v760, 1
      %v879 = vsel %vm824, %v876, %v878
      %v880 = vrot.slane %v761, 1
      %v881 = vrot.slane %v762, 1
      %v882 = vsel %vm824, %v880, %v881
      %v883 = vrot.slane %v763, 1
      %v884 = vsel %vm824, %v881, %v883
      %v885 = vrot.slane %v764, 1
      %v886 = vrot.slane %v765, 1
      %v887 = vsel %vm824, %v885, %v886
      %v888 = vrot.slane %v766, 1
      %v889 = vsel %vm824, %v886, %v888
      %v890 = vrot.slane %v767, 1
      %v891 = vrot.slane %v768, 1
      %v892 = vsel %vm824, %v890, %v891
      %v893 = vrot.slane %v769, 1
      %v894 = vsel %vm824, %v891, %v893
      %v895 = vrot.slane %v770, 1
      %v896 = vrot.slane %v771, 1
      %v897 = vsel %vm824, %v895, %v896
      %v898 = vrot.slane %v772, 1
      %v899 = vsel %vm824, %v896, %v898
      %v900 = vrot.slane %v773, 1
      %v901 = vrot.slane %v774, 1
      %v902 = vsel %vm824, %v900, %v901
      %v903 = vrot.slane %v775, 1
      %v904 = vsel %vm824, %v901, %v903
      %v937 = vadd.f32 %v691, %v827
      %v938 = vadd.f32 %v692, %v829
      %v939 = vadd.f32 %v693, %v832
      %v940 = vadd.f32 %v694, %v834
      %v941 = vadd.f32 %v695, %v837
      %v942 = vadd.f32 %v696, %v839
      %v943 = vadd.f32 %v697, %v842
      %v944 = vadd.f32 %v698, %v844
      %v945 = vadd.f32 %v699, %v847
      %v946 = vadd.f32 %v700, %v849
      %v947 = vadd.f32 %v701, %v852
      %v948 = vadd.f32 %v702, %v854
      %v949 = vadd.f32 %v703, %v857
      %v950 = vadd.f32 %v704, %v859
      %v951 = vadd.f32 %v705, %v862
      %v952 = vadd.f32 %v706, %v864
      %v953 = vadd.f32 %v707, %v867
      %v954 = vadd.f32 %v708, %v869
      %v955 = vadd.f32 %v709, %v872
      %v956 = vadd.f32 %v710, %v874
      %v957 = vadd.f32 %v711, %v877
      %v958 = vadd.f32 %v712, %v879
      %v959 = vadd.f32 %v713, %v882
      %v960 = vadd.f32 %v714, %v884
      %v961 = vadd.f32 %v715, %v887
      %v962 = vadd.f32 %v716, %v889
      %v963 = vadd.f32 %v717, %v892
      %v964 = vadd.f32 %v718, %v894
      %v965 = vadd.f32 %v719, %v897
      %v966 = vadd.f32 %v720, %v899
      %v967 = vadd.f32 %v721, %v902
      %v968 = vadd.f32 %v722, %v904
      %v969 = vld [vmem:[%s216 + $0x2] sm:$0x1]
      %v970 = vlaneseq
      %v971 = vshrl.u32 %v970, 7
      %v972 = vsub.s32 0, %v971
      %v973 = vrot.slane %v969, %v972
      %v974 = vmul.f32 %v440, %v973
      %v975 = vmul.f32 %v443, %v973
      %v976 = vmul.f32 %v448, %v973
      %v977 = vmul.f32 %v451, %v973
      %v978 = vmul.f32 %v456, %v973
      %v979 = vmul.f32 %v459, %v973
      %v980 = vmul.f32 %v464, %v973
      %v981 = vmul.f32 %v467, %v973
      %v982 = vmul.f32 %v472, %v973
      %v983 = vmul.f32 %v475, %v973
      %v984 = vmul.f32 %v480, %v973
      %v985 = vmul.f32 %v483, %v973
      %v986 = vmul.f32 %v488, %v973
      %v987 = vmul.f32 %v491, %v973
      %v988 = vmul.f32 %v496, %v973
      %v989 = vmul.f32 %v499, %v973
      %v990 = vmul.f32 %v504, %v973
      %v991 = vmul.f32 %v507, %v973
      %v992 = vmul.f32 %v512, %v973
      %v993 = vmul.f32 %v515, %v973
      %v994 = vmul.f32 %v520, %v973
      %v995 = vmul.f32 %v523, %v973
      %v996 = vmul.f32 %v528, %v973
      %v997 = vmul.f32 %v531, %v973
      %v998 = vmul.f32 %v536, %v973
      %v999 = vmul.f32 %v539, %v973
      %v1000 = vmul.f32 %v544, %v973
      %v1001 = vmul.f32 %v547, %v973
      %v1002 = vmul.f32 %v552, %v973
      %v1003 = vmul.f32 %v555, %v973
      %v1004 = vmul.f32 %v560, %v973
      %v1005 = vmul.f32 %v563, %v973
      %v1006 = vmul.f32 %v568, %v973
      %v1007 = vmul.f32 %v571, %v973
      %v1008 = vmul.f32 %v576, %v973
      %v1009 = vmul.f32 %v579, %v973
      %v1010 = vmul.f32 %v584, %v973
      %v1011 = vmul.f32 %v587, %v973
      %v1012 = vmul.f32 %v592, %v973
      %v1013 = vmul.f32 %v595, %v973
      %v1014 = vmul.f32 %v600, %v973
      %v1015 = vmul.f32 %v603, %v973
      %v1016 = vmul.f32 %v608, %v973
      %v1017 = vmul.f32 %v611, %v973
      %v1018 = vmul.f32 %v616, %v973
      %v1019 = vmul.f32 %v619, %v973
      %v1020 = vmul.f32 %v624, %v973
      %v1021 = vmul.f32 %v627, %v973
      %vm1070 = vcmask 1045504
      %v1071 = vrot.slane %v974, 2
      %v1072 = vrot.slane %v975, 2
      %v1073 = vsel %vm1070, %v1071, %v1072
      %v1074 = vrot.slane %v976, 2
      %v1075 = vsel %vm1070, %v1072, %v1074
      %v1076 = vrot.slane %v977, 2
      %v1077 = vrot.slane %v978, 2
      %v1078 = vsel %vm1070, %v1076, %v1077
      %v1079 = vrot.slane %v979, 2
      %v1080 = vsel %vm1070, %v1077, %v1079
      %v1081 = vrot.slane %v980, 2
      %v1082 = vrot.slane %v981, 2
      %v1083 = vsel %vm1070, %v1081, %v1082
      %v1084 = vrot.slane %v982, 2
      %v1085 = vsel %vm1070, %v1082, %v1084
      %v1086 = vrot.slane %v983, 2
      %v1087 = vrot.slane %v984, 2
      %v1088 = vsel %vm1070, %v1086, %v1087
      %v1089 = vrot.slane %v985, 2
      %v1090 = vsel %vm1070, %v1087, %v1089
      %v1091 = vrot.slane %v986, 2
      %v1092 = vrot.slane %v987, 2
      %v1093 = vsel %vm1070, %v1091, %v1092
      %v1094 = vrot.slane %v988, 2
      %v1095 = vsel %vm1070, %v1092, %v1094
      %v1096 = vrot.slane %v989, 2
      %v1097 = vrot.slane %v990, 2
      %v1098 = vsel %vm1070, %v1096, %v1097
      %v1099 = vrot.slane %v991, 2
      %v1100 = vsel %vm1070, %v1097, %v1099
      %v1101 = vrot.slane %v992, 2
      %v1102 = vrot.slane %v993, 2
      %v1103 = vsel %vm1070, %v1101, %v1102
      %v1104 = vrot.slane %v994, 2
      %v1105 = vsel %vm1070, %v1102, %v1104
      %v1106 = vrot.slane %v995, 2
      %v1107 = vrot.slane %v996, 2
      %v1108 = vsel %vm1070, %v1106, %v1107
      %v1109 = vrot.slane %v997, 2
      %v1110 = vsel %vm1070, %v1107, %v1109
      %v1111 = vrot.slane %v998, 2
      %v1112 = vrot.slane %v999, 2
      %v1113 = vsel %vm1070, %v1111, %v1112
      %v1114 = vrot.slane %v1000, 2
      %v1115 = vsel %vm1070, %v1112, %v1114
      %v1116 = vrot.slane %v1001, 2
      %v1117 = vrot.slane %v1002, 2
      %v1118 = vsel %vm1070, %v1116, %v1117
      %v1119 = vrot.slane %v1003, 2
      %v1120 = vsel %vm1070, %v1117, %v1119
      %v1121 = vrot.slane %v1004, 2
      %v1122 = vrot.slane %v1005, 2
      %v1123 = vsel %vm1070, %v1121, %v1122
      %v1124 = vrot.slane %v1006, 2
      %v1125 = vsel %vm1070, %v1122, %v1124
      %v1126 = vrot.slane %v1007, 2
      %v1127 = vrot.slane %v1008, 2
      %v1128 = vsel %vm1070, %v1126, %v1127
      %v1129 = vrot.slane %v1009, 2
      %v1130 = vsel %vm1070, %v1127, %v1129
      %v1131 = vrot.slane %v1010, 2
      %v1132 = vrot.slane %v1011, 2
      %v1133 = vsel %vm1070, %v1131, %v1132
      %v1134 = vrot.slane %v1012, 2
      %v1135 = vsel %vm1070, %v1132, %v1134
      %v1136 = vrot.slane %v1013, 2
      %v1137 = vrot.slane %v1014, 2
      %v1138 = vsel %vm1070, %v1136, %v1137
      %v1139 = vrot.slane %v1015, 2
      %v1140 = vsel %vm1070, %v1137, %v1139
      %v1141 = vrot.slane %v1016, 2
      %v1142 = vrot.slane %v1017, 2
      %v1143 = vsel %vm1070, %v1141, %v1142
      %v1144 = vrot.slane %v1018, 2
      %v1145 = vsel %vm1070, %v1142, %v1144
      %v1146 = vrot.slane %v1019, 2
      %v1147 = vrot.slane %v1020, 2
      %v1148 = vsel %vm1070, %v1146, %v1147
      %v1149 = vrot.slane %v1021, 2
      %v1150 = vsel %vm1070, %v1147, %v1149
      %v1183 = vadd.f32 %v937, %v1073
      %v1184 = vadd.f32 %v938, %v1075
      %v1185 = vadd.f32 %v939, %v1078
      %v1186 = vadd.f32 %v940, %v1080
      %v1187 = vadd.f32 %v941, %v1083
      %v1188 = vadd.f32 %v942, %v1085
      %v1189 = vadd.f32 %v943, %v1088
      %v1190 = vadd.f32 %v944, %v1090
      %v1191 = vadd.f32 %v945, %v1093
      %v1192 = vadd.f32 %v946, %v1095
      %v1193 = vadd.f32 %v947, %v1098
      %v1194 = vadd.f32 %v948, %v1100
      %v1195 = vadd.f32 %v949, %v1103
      %v1196 = vadd.f32 %v950, %v1105
      %v1197 = vadd.f32 %v951, %v1108
      %v1198 = vadd.f32 %v952, %v1110
      %v1199 = vadd.f32 %v953, %v1113
      %v1200 = vadd.f32 %v954, %v1115
      %v1201 = vadd.f32 %v955, %v1118
      %v1202 = vadd.f32 %v956, %v1120
      %v1203 = vadd.f32 %v957, %v1123
      %v1204 = vadd.f32 %v958, %v1125
      %v1205 = vadd.f32 %v959, %v1128
      %v1206 = vadd.f32 %v960, %v1130
      %v1207 = vadd.f32 %v961, %v1133
      %v1208 = vadd.f32 %v962, %v1135
      %v1209 = vadd.f32 %v963, %v1138
      %v1210 = vadd.f32 %v964, %v1140
      %v1211 = vadd.f32 %v965, %v1143
      %v1212 = vadd.f32 %v966, %v1145
      %v1213 = vadd.f32 %v967, %v1148
      %v1214 = vadd.f32 %v968, %v1150
      %v1215 = vld [vmem:[%s216 + $0x3] sm:$0x1]
      %v1216 = vlaneseq
      %v1217 = vshrl.u32 %v1216, 7
      %v1218 = vsub.s32 0, %v1217
      %v1219 = vrot.slane %v1215, %v1218
      %v1220 = vmul.f32 %v451, %v1219
      %v1221 = vmul.f32 %v456, %v1219
      %v1222 = vmul.f32 %v464, %v1219
      %v1223 = vmul.f32 %v467, %v1219
      %v1224 = vmul.f32 %v475, %v1219
      %v1225 = vmul.f32 %v480, %v1219
      %v1226 = vmul.f32 %v488, %v1219
      %v1227 = vmul.f32 %v491, %v1219
      %v1228 = vmul.f32 %v499, %v1219
      %v1229 = vmul.f32 %v504, %v1219
      %v1230 = vmul.f32 %v512, %v1219
      %v1231 = vmul.f32 %v515, %v1219
      %v1232 = vmul.f32 %v523, %v1219
      %v1233 = vmul.f32 %v528, %v1219
      %v1234 = vmul.f32 %v536, %v1219
      %v1235 = vmul.f32 %v539, %v1219
      %v1236 = vmul.f32 %v547, %v1219
      %v1237 = vmul.f32 %v552, %v1219
      %v1238 = vmul.f32 %v560, %v1219
      %v1239 = vmul.f32 %v563, %v1219
      %v1240 = vmul.f32 %v571, %v1219
      %v1241 = vmul.f32 %v576, %v1219
      %v1242 = vmul.f32 %v584, %v1219
      %v1243 = vmul.f32 %v587, %v1219
      %v1244 = vmul.f32 %v595, %v1219
      %v1245 = vmul.f32 %v600, %v1219
      %v1246 = vmul.f32 %v608, %v1219
      %v1247 = vmul.f32 %v611, %v1219
      %v1248 = vmul.f32 %v619, %v1219
      %v1249 = vmul.f32 %v624, %v1219
      %v1250 = vmul.f32 %v632, %v1219
      %v1251 = vmul.f32 %v635, %v1219
      %v1252 = vadd.f32 %v1183, %v1220
      %v1253 = vadd.f32 %v1184, %v1221
      %v1254 = vadd.f32 %v1185, %v1222
      %v1255 = vadd.f32 %v1186, %v1223
      %v1256 = vadd.f32 %v1187, %v1224
      %v1257 = vadd.f32 %v1188, %v1225
      %v1258 = vadd.f32 %v1189, %v1226
      %v1259 = vadd.f32 %v1190, %v1227
      %v1260 = vadd.f32 %v1191, %v1228
      %v1261 = vadd.f32 %v1192, %v1229
      %v1262 = vadd.f32 %v1193, %v1230
      %v1263 = vadd.f32 %v1194, %v1231
      %v1264 = vadd.f32 %v1195, %v1232
      %v1265 = vadd.f32 %v1196, %v1233
      %v1266 = vadd.f32 %v1197, %v1234
      %v1267 = vadd.f32 %v1198, %v1235
      %v1268 = vadd.f32 %v1199, %v1236
      %v1269 = vadd.f32 %v1200, %v1237
      %v1270 = vadd.f32 %v1201, %v1238
      %v1271 = vadd.f32 %v1202, %v1239
      %v1272 = vadd.f32 %v1203, %v1240
      %v1273 = vadd.f32 %v1204, %v1241
      %v1274 = vadd.f32 %v1205, %v1242
      %v1275 = vadd.f32 %v1206, %v1243
      %v1276 = vadd.f32 %v1207, %v1244
      %v1277 = vadd.f32 %v1208, %v1245
      %v1278 = vadd.f32 %v1209, %v1246
      %v1279 = vadd.f32 %v1210, %v1247
      %v1280 = vadd.f32 %v1211, %v1248
      %v1281 = vadd.f32 %v1212, %v1249
      %v1282 = vadd.f32 %v1213, %v1250
      %v1283 = vadd.f32 %v1214, %v1251
      %v1284 = vld [vmem:[%s216 + $0x4] sm:$0x1]
      %v1285 = vlaneseq
      %v1286 = vshrl.u32 %v1285, 7
      %v1287 = vsub.s32 0, %v1286
      %v1288 = vrot.slane %v1284, %v1287
      %v1289 = vmul.f32 %v451, %v1288
      %v1290 = vmul.f32 %v456, %v1288
      %v1291 = vmul.f32 %v459, %v1288
      %v1292 = vmul.f32 %v464, %v1288
      %v1293 = vmul.f32 %v467, %v1288
      %v1294 = vmul.f32 %v472, %v1288
      %v1295 = vmul.f32 %v475, %v1288
      %v1296 = vmul.f32 %v480, %v1288
      %v1297 = vmul.f32 %v483, %v1288
      %v1298 = vmul.f32 %v488, %v1288
      %v1299 = vmul.f32 %v491, %v1288
      %v1300 = vmul.f32 %v496, %v1288
      %v1301 = vmul.f32 %v499, %v1288
      %v1302 = vmul.f32 %v504, %v1288
      %v1303 = vmul.f32 %v507, %v1288
      %v1304 = vmul.f32 %v512, %v1288
      %v1305 = vmul.f32 %v515, %v1288
      %v1306 = vmul.f32 %v520, %v1288
      %v1307 = vmul.f32 %v523, %v1288
      %v1308 = vmul.f32 %v528, %v1288
      %v1309 = vmul.f32 %v531, %v1288
      %v1310 = vmul.f32 %v536, %v1288
      %v1311 = vmul.f32 %v539, %v1288
      %v1312 = vmul.f32 %v544, %v1288
      %v1313 = vmul.f32 %v547, %v1288
      %v1314 = vmul.f32 %v552, %v1288
      %v1315 = vmul.f32 %v555, %v1288
      %v1316 = vmul.f32 %v560, %v1288
      %v1317 = vmul.f32 %v563, %v1288
      %v1318 = vmul.f32 %v568, %v1288
      %v1319 = vmul.f32 %v571, %v1288
      %v1320 = vmul.f32 %v576, %v1288
      %v1321 = vmul.f32 %v579, %v1288
      %v1322 = vmul.f32 %v584, %v1288
      %v1323 = vmul.f32 %v587, %v1288
      %v1324 = vmul.f32 %v592, %v1288
      %v1325 = vmul.f32 %v595, %v1288
      %v1326 = vmul.f32 %v600, %v1288
      %v1327 = vmul.f32 %v603, %v1288
      %v1328 = vmul.f32 %v608, %v1288
      %v1329 = vmul.f32 %v611, %v1288
      %v1330 = vmul.f32 %v616, %v1288
      %v1331 = vmul.f32 %v619, %v1288
      %v1332 = vmul.f32 %v624, %v1288
      %v1333 = vmul.f32 %v627, %v1288
      %v1334 = vmul.f32 %v632, %v1288
      %v1335 = vmul.f32 %v635, %v1288
      %v1336 = vmul.f32 %v640, %v1288
      %v1385 = vrot.slane %v1289, 1
      %v1386 = vrot.slane %v1290, 1
      %v1387 = vsel %vm824, %v1385, %v1386
      %v1388 = vrot.slane %v1291, 1
      %v1389 = vsel %vm824, %v1386, %v1388
      %v1390 = vrot.slane %v1292, 1
      %v1391 = vrot.slane %v1293, 1
      %v1392 = vsel %vm824, %v1390, %v1391
      %v1393 = vrot.slane %v1294, 1
      %v1394 = vsel %vm824, %v1391, %v1393
      %v1395 = vrot.slane %v1295, 1
      %v1396 = vrot.slane %v1296, 1
      %v1397 = vsel %vm824, %v1395, %v1396
      %v1398 = vrot.slane %v1297, 1
      %v1399 = vsel %vm824, %v1396, %v1398
      %v1400 = vrot.slane %v1298, 1
      %v1401 = vrot.slane %v1299, 1
      %v1402 = vsel %vm824, %v1400, %v1401
      %v1403 = vrot.slane %v1300, 1
      %v1404 = vsel %vm824, %v1401, %v1403
      %v1405 = vrot.slane %v1301, 1
      %v1406 = vrot.slane %v1302, 1
      %v1407 = vsel %vm824, %v1405, %v1406
      %v1408 = vrot.slane %v1303, 1
      %v1409 = vsel %vm824, %v1406, %v1408
      %v1410 = vrot.slane %v1304, 1
      %v1411 = vrot.slane %v1305, 1
      %v1412 = vsel %vm824, %v1410, %v1411
      %v1413 = vrot.slane %v1306, 1
      %v1414 = vsel %vm824, %v1411, %v1413
      %v1415 = vrot.slane %v1307, 1
      %v1416 = vrot.slane %v1308, 1
      %v1417 = vsel %vm824, %v1415, %v1416
      %v1418 = vrot.slane %v1309, 1
      %v1419 = vsel %vm824, %v1416, %v1418
      %v1420 = vrot.slane %v1310, 1
      %v1421 = vrot.slane %v1311, 1
      %v1422 = vsel %vm824, %v1420, %v1421
      %v1423 = vrot.slane %v1312, 1
      %v1424 = vsel %vm824, %v1421, %v1423
      %v1425 = vrot.slane %v1313, 1
      %v1426 = vrot.slane %v1314, 1
      %v1427 = vsel %vm824, %v1425, %v1426
      %v1428 = vrot.slane %v1315, 1
      %v1429 = vsel %vm824, %v1426, %v1428
      %v1430 = vrot.slane %v1316, 1
      %v1431 = vrot.slane %v1317, 1
      %v1432 = vsel %vm824, %v1430, %v1431
      %v1433 = vrot.slane %v1318, 1
      %v1434 = vsel %vm824, %v1431, %v1433
      %v1435 = vrot.slane %v1319, 1
      %v1436 = vrot.slane %v1320, 1
      %v1437 = vsel %vm824, %v1435, %v1436
      %v1438 = vrot.slane %v1321, 1
      %v1439 = vsel %vm824, %v1436, %v1438
      %v1440 = vrot.slane %v1322, 1
      %v1441 = vrot.slane %v1323, 1
      %v1442 = vsel %vm824, %v1440, %v1441
      %v1443 = vrot.slane %v1324, 1
      %v1444 = vsel %vm824, %v1441, %v1443
      %v1445 = vrot.slane %v1325, 1
      %v1446 = vrot.slane %v1326, 1
      %v1447 = vsel %vm824, %v1445, %v1446
      %v1448 = vrot.slane %v1327, 1
      %v1449 = vsel %vm824, %v1446, %v1448
      %v1450 = vrot.slane %v1328, 1
      %v1451 = vrot.slane %v1329, 1
      %v1452 = vsel %vm824, %v1450, %v1451
      %v1453 = vrot.slane %v1330, 1
      %v1454 = vsel %vm824, %v1451, %v1453
      %v1455 = vrot.slane %v1331, 1
      %v1456 = vrot.slane %v1332, 1
      %v1457 = vsel %vm824, %v1455, %v1456
      %v1458 = vrot.slane %v1333, 1
      %v1459 = vsel %vm824, %v1456, %v1458
      %v1460 = vrot.slane %v1334, 1
      %v1461 = vrot.slane %v1335, 1
      %v1462 = vsel %vm824, %v1460, %v1461
      %v1463 = vrot.slane %v1336, 1
      %v1464 = vsel %vm824, %v1461, %v1463
      %v1497 = vadd.f32 %v1252, %v1387
      %v1498 = vadd.f32 %v1253, %v1389
      %v1499 = vadd.f32 %v1254, %v1392
      %v1500 = vadd.f32 %v1255, %v1394
      %v1501 = vadd.f32 %v1256, %v1397
      %v1502 = vadd.f32 %v1257, %v1399
      %v1503 = vadd.f32 %v1258, %v1402
      %v1504 = vadd.f32 %v1259, %v1404
      %v1505 = vadd.f32 %v1260, %v1407
      %v1506 = vadd.f32 %v1261, %v1409
      %v1507 = vadd.f32 %v1262, %v1412
      %v1508 = vadd.f32 %v1263, %v1414
      %v1509 = vadd.f32 %v1264, %v1417
      %v1510 = vadd.f32 %v1265, %v1419
      %v1511 = vadd.f32 %v1266, %v1422
      %v1512 = vadd.f32 %v1267, %v1424
      %v1513 = vadd.f32 %v1268, %v1427
      %v1514 = vadd.f32 %v1269, %v1429
      %v1515 = vadd.f32 %v1270, %v1432
      %v1516 = vadd.f32 %v1271, %v1434
      %v1517 = vadd.f32 %v1272, %v1437
      %v1518 = vadd.f32 %v1273, %v1439
      %v1519 = vadd.f32 %v1274, %v1442
      %v1520 = vadd.f32 %v1275, %v1444
      %v1521 = vadd.f32 %v1276, %v1447
      %v1522 = vadd.f32 %v1277, %v1449
      %v1523 = vadd.f32 %v1278, %v1452
      %v1524 = vadd.f32 %v1279, %v1454
      %v1525 = vadd.f32 %v1280, %v1457
      %v1526 = vadd.f32 %v1281, %v1459
      %v1527 = vadd.f32 %v1282, %v1462
      %v1528 = vadd.f32 %v1283, %v1464
      %v1529 = vld [vmem:[%s216 + $0x5] sm:$0x1]
      %v1530 = vlaneseq
      %v1531 = vshrl.u32 %v1530, 7
      %v1532 = vsub.s32 0, %v1531
      %v1533 = vrot.slane %v1529, %v1532
      %v1534 = vmul.f32 %v451, %v1533
      %v1535 = vmul.f32 %v456, %v1533
      %v1536 = vmul.f32 %v459, %v1533
      %v1537 = vmul.f32 %v464, %v1533
      %v1538 = vmul.f32 %v467, %v1533
      %v1539 = vmul.f32 %v472, %v1533
      %v1540 = vmul.f32 %v475, %v1533
      %v1541 = vmul.f32 %v480, %v1533
      %v1542 = vmul.f32 %v483, %v1533
      %v1543 = vmul.f32 %v488, %v1533
      %v1544 = vmul.f32 %v491, %v1533
      %v1545 = vmul.f32 %v496, %v1533
      %v1546 = vmul.f32 %v499, %v1533
      %v1547 = vmul.f32 %v504, %v1533
      %v1548 = vmul.f32 %v507, %v1533
      %v1549 = vmul.f32 %v512, %v1533
      %v1550 = vmul.f32 %v515, %v1533
      %v1551 = vmul.f32 %v520, %v1533
      %v1552 = vmul.f32 %v523, %v1533
      %v1553 = vmul.f32 %v528, %v1533
      %v1554 = vmul.f32 %v531, %v1533
      %v1555 = vmul.f32 %v536, %v1533
      %v1556 = vmul.f32 %v539, %v1533
      %v1557 = vmul.f32 %v544, %v1533
      %v1558 = vmul.f32 %v547, %v1533
      %v1559 = vmul.f32 %v552, %v1533
      %v1560 = vmul.f32 %v555, %v1533
      %v1561 = vmul.f32 %v560, %v1533
      %v1562 = vmul.f32 %v563, %v1533
      %v1563 = vmul.f32 %v568, %v1533
      %v1564 = vmul.f32 %v571, %v1533
      %v1565 = vmul.f32 %v576, %v1533
      %v1566 = vmul.f32 %v579, %v1533
      %v1567 = vmul.f32 %v584, %v1533
      %v1568 = vmul.f32 %v587, %v1533
      %v1569 = vmul.f32 %v592, %v1533
      %v1570 = vmul.f32 %v595, %v1533
      %v1571 = vmul.f32 %v600, %v1533
      %v1572 = vmul.f32 %v603, %v1533
      %v1573 = vmul.f32 %v608, %v1533
      %v1574 = vmul.f32 %v611, %v1533
      %v1575 = vmul.f32 %v616, %v1533
      %v1576 = vmul.f32 %v619, %v1533
      %v1577 = vmul.f32 %v624, %v1533
      %v1578 = vmul.f32 %v627, %v1533
      %v1579 = vmul.f32 %v632, %v1533
      %v1580 = vmul.f32 %v635, %v1533
      %v1581 = vmul.f32 %v640, %v1533
      %v1630 = vrot.slane %v1534, 2
      %v1631 = vrot.slane %v1535, 2
      %v1632 = vsel %vm1070, %v1630, %v1631
      %v1633 = vrot.slane %v1536, 2
      %v1634 = vsel %vm1070, %v1631, %v1633
      %v1635 = vrot.slane %v1537, 2
      %v1636 = vrot.slane %v1538, 2
      %v1637 = vsel %vm1070, %v1635, %v1636
      %v1638 = vrot.slane %v1539, 2
      %v1639 = vsel %vm1070, %v1636, %v1638
      %v1640 = vrot.slane %v1540, 2
      %v1641 = vrot.slane %v1541, 2
      %v1642 = vsel %vm1070, %v1640, %v1641
      %v1643 = vrot.slane %v1542, 2
      %v1644 = vsel %vm1070, %v1641, %v1643
      %v1645 = vrot.slane %v1543, 2
      %v1646 = vrot.slane %v1544, 2
      %v1647 = vsel %vm1070, %v1645, %v1646
      %v1648 = vrot.slane %v1545, 2
      %v1649 = vsel %vm1070, %v1646, %v1648
      %v1650 = vrot.slane %v1546, 2
      %v1651 = vrot.slane %v1547, 2
      %v1652 = vsel %vm1070, %v1650, %v1651
      %v1653 = vrot.slane %v1548, 2
      %v1654 = vsel %vm1070, %v1651, %v1653
      %v1655 = vrot.slane %v1549, 2
      %v1656 = vrot.slane %v1550, 2
      %v1657 = vsel %vm1070, %v1655, %v1656
      %v1658 = vrot.slane %v1551, 2
      %v1659 = vsel %vm1070, %v1656, %v1658
      %v1660 = vrot.slane %v1552, 2
      %v1661 = vrot.slane %v1553, 2
      %v1662 = vsel %vm1070, %v1660, %v1661
      %v1663 = vrot.slane %v1554, 2
      %v1664 = vsel %vm1070, %v1661, %v1663
      %v1665 = vrot.slane %v1555, 2
      %v1666 = vrot.slane %v1556, 2
      %v1667 = vsel %vm1070, %v1665, %v1666
      %v1668 = vrot.slane %v1557, 2
      %v1669 = vsel %vm1070, %v1666, %v1668
      %v1670 = vrot.slane %v1558, 2
      %v1671 = vrot.slane %v1559, 2
      %v1672 = vsel %vm1070, %v1670, %v1671
      %v1673 = vrot.slane %v1560, 2
      %v1674 = vsel %vm1070, %v1671, %v1673
      %v1675 = vrot.slane %v1561, 2
      %v1676 = vrot.slane %v1562, 2
      %v1677 = vsel %vm1070, %v1675, %v1676
      %v1678 = vrot.slane %v1563, 2
      %v1679 = vsel %vm1070, %v1676, %v1678
      %v1680 = vrot.slane %v1564, 2
      %v1681 = vrot.slane %v1565, 2
      %v1682 = vsel %vm1070, %v1680, %v1681
      %v1683 = vrot.slane %v1566, 2
      %v1684 = vsel %vm1070, %v1681, %v1683
      %v1685 = vrot.slane %v1567, 2
      %v1686 = vrot.slane %v1568, 2
      %v1687 = vsel %vm1070, %v1685, %v1686
      %v1688 = vrot.slane %v1569, 2
      %v1689 = vsel %vm1070, %v1686, %v1688
      %v1690 = vrot.slane %v1570, 2
      %v1691 = vrot.slane %v1571, 2
      %v1692 = vsel %vm1070, %v1690, %v1691
      %v1693 = vrot.slane %v1572, 2
      %v1694 = vsel %vm1070, %v1691, %v1693
      %v1695 = vrot.slane %v1573, 2
      %v1696 = vrot.slane %v1574, 2
      %v1697 = vsel %vm1070, %v1695, %v1696
      %v1698 = vrot.slane %v1575, 2
      %v1699 = vsel %vm1070, %v1696, %v1698
      %v1700 = vrot.slane %v1576, 2
      %v1701 = vrot.slane %v1577, 2
      %v1702 = vsel %vm1070, %v1700, %v1701
      %v1703 = vrot.slane %v1578, 2
      %v1704 = vsel %vm1070, %v1701, %v1703
      %v1705 = vrot.slane %v1579, 2
      %v1706 = vrot.slane %v1580, 2
      %v1707 = vsel %vm1070, %v1705, %v1706
      %v1708 = vrot.slane %v1581, 2
      %v1709 = vsel %vm1070, %v1706, %v1708
      %v1742 = vadd.f32 %v1497, %v1632
      %v1743 = vadd.f32 %v1498, %v1634
      %v1744 = vadd.f32 %v1499, %v1637
      %v1745 = vadd.f32 %v1500, %v1639
      %v1746 = vadd.f32 %v1501, %v1642
      %v1747 = vadd.f32 %v1502, %v1644
      %v1748 = vadd.f32 %v1503, %v1647
      %v1749 = vadd.f32 %v1504, %v1649
      %v1750 = vadd.f32 %v1505, %v1652
      %v1751 = vadd.f32 %v1506, %v1654
      %v1752 = vadd.f32 %v1507, %v1657
      %v1753 = vadd.f32 %v1508, %v1659
      %v1754 = vadd.f32 %v1509, %v1662
      %v1755 = vadd.f32 %v1510, %v1664
      %v1756 = vadd.f32 %v1511, %v1667
      %v1757 = vadd.f32 %v1512, %v1669
      %v1758 = vadd.f32 %v1513, %v1672
      %v1759 = vadd.f32 %v1514, %v1674
      %v1760 = vadd.f32 %v1515, %v1677
      %v1761 = vadd.f32 %v1516, %v1679
      %v1762 = vadd.f32 %v1517, %v1682
      %v1763 = vadd.f32 %v1518, %v1684
      %v1764 = vadd.f32 %v1519, %v1687
      %v1765 = vadd.f32 %v1520, %v1689
      %v1766 = vadd.f32 %v1521, %v1692
      %v1767 = vadd.f32 %v1522, %v1694
      %v1768 = vadd.f32 %v1523, %v1697
      %v1769 = vadd.f32 %v1524, %v1699
      %v1770 = vadd.f32 %v1525, %v1702
      %v1771 = vadd.f32 %v1526, %v1704
      %v1772 = vadd.f32 %v1527, %v1707
      %v1773 = vadd.f32 %v1528, %v1709
      %v1774 = vld [vmem:[%s216 + $0x6] sm:$0x1]
      %v1775 = vlaneseq
      %v1776 = vshrl.u32 %v1775, 7
      %v1777 = vsub.s32 0, %v1776
      %v1778 = vrot.slane %v1774, %v1777
      %v1779 = vmul.f32 %v464, %v1778
      %v1780 = vmul.f32 %v467, %v1778
      %v1781 = vmul.f32 %v475, %v1778
      %v1782 = vmul.f32 %v480, %v1778
      %v1783 = vmul.f32 %v488, %v1778
      %v1784 = vmul.f32 %v491, %v1778
      %v1785 = vmul.f32 %v499, %v1778
      %v1786 = vmul.f32 %v504, %v1778
      %v1787 = vmul.f32 %v512, %v1778
      %v1788 = vmul.f32 %v515, %v1778
      %v1789 = vmul.f32 %v523, %v1778
      %v1790 = vmul.f32 %v528, %v1778
      %v1791 = vmul.f32 %v536, %v1778
      %v1792 = vmul.f32 %v539, %v1778
      %v1793 = vmul.f32 %v547, %v1778
      %v1794 = vmul.f32 %v552, %v1778
      %v1795 = vmul.f32 %v560, %v1778
      %v1796 = vmul.f32 %v563, %v1778
      %v1797 = vmul.f32 %v571, %v1778
      %v1798 = vmul.f32 %v576, %v1778
      %v1799 = vmul.f32 %v584, %v1778
      %v1800 = vmul.f32 %v587, %v1778
      %v1801 = vmul.f32 %v595, %v1778
      %v1802 = vmul.f32 %v600, %v1778
      %v1803 = vmul.f32 %v608, %v1778
      %v1804 = vmul.f32 %v611, %v1778
      %v1805 = vmul.f32 %v619, %v1778
      %v1806 = vmul.f32 %v624, %v1778
      %v1807 = vmul.f32 %v632, %v1778
      %v1808 = vmul.f32 %v635, %v1778
      %v1809 = vmul.f32 %v643, %v1778
      %v1810 = vmul.f32 %v648, %v1778
      %v1811 = vadd.f32 %v1742, %v1779
      %v1812 = vadd.f32 %v1743, %v1780
      %v1813 = vadd.f32 %v1744, %v1781
      %v1814 = vadd.f32 %v1745, %v1782
      %v1815 = vadd.f32 %v1746, %v1783
      %v1816 = vadd.f32 %v1747, %v1784
      %v1817 = vadd.f32 %v1748, %v1785
      %v1818 = vadd.f32 %v1749, %v1786
      %v1819 = vadd.f32 %v1750, %v1787
      %v1820 = vadd.f32 %v1751, %v1788
      %v1821 = vadd.f32 %v1752, %v1789
      %v1822 = vadd.f32 %v1753, %v1790
      %v1823 = vadd.f32 %v1754, %v1791
      %v1824 = vadd.f32 %v1755, %v1792
      %v1825 = vadd.f32 %v1756, %v1793
      %v1826 = vadd.f32 %v1757, %v1794
      %v1827 = vadd.f32 %v1758, %v1795
      %v1828 = vadd.f32 %v1759, %v1796
      %v1829 = vadd.f32 %v1760, %v1797
      %v1830 = vadd.f32 %v1761, %v1798
      %v1831 = vadd.f32 %v1762, %v1799
      %v1832 = vadd.f32 %v1763, %v1800
      %v1833 = vadd.f32 %v1764, %v1801
      %v1834 = vadd.f32 %v1765, %v1802
      %v1835 = vadd.f32 %v1766, %v1803
      %v1836 = vadd.f32 %v1767, %v1804
      %v1837 = vadd.f32 %v1768, %v1805
      %v1838 = vadd.f32 %v1769, %v1806
      %v1839 = vadd.f32 %v1770, %v1807
      %v1840 = vadd.f32 %v1771, %v1808
      %v1841 = vadd.f32 %v1772, %v1809
      %v1842 = vadd.f32 %v1773, %v1810
      %v1843 = vld [vmem:[%s216 + $0x7] sm:$0x1]
      %v1844 = vlaneseq
      %v1845 = vshrl.u32 %v1844, 7
      %v1846 = vsub.s32 0, %v1845
      %v1847 = vrot.slane %v1843, %v1846
      %v1848 = vmul.f32 %v464, %v1847
      %v1849 = vmul.f32 %v467, %v1847
      %v1850 = vmul.f32 %v472, %v1847
      %v1851 = vmul.f32 %v475, %v1847
      %v1852 = vmul.f32 %v480, %v1847
      %v1853 = vmul.f32 %v483, %v1847
      %v1854 = vmul.f32 %v488, %v1847
      %v1855 = vmul.f32 %v491, %v1847
      %v1856 = vmul.f32 %v496, %v1847
      %v1857 = vmul.f32 %v499, %v1847
      %v1858 = vmul.f32 %v504, %v1847
      %v1859 = vmul.f32 %v507, %v1847
      %v1860 = vmul.f32 %v512, %v1847
      %v1861 = vmul.f32 %v515, %v1847
      %v1862 = vmul.f32 %v520, %v1847
      %v1863 = vmul.f32 %v523, %v1847
      %v1864 = vmul.f32 %v528, %v1847
      %v1865 = vmul.f32 %v531, %v1847
      %v1866 = vmul.f32 %v536, %v1847
      %v1867 = vmul.f32 %v539, %v1847
      %v1868 = vmul.f32 %v544, %v1847
      %v1869 = vmul.f32 %v547, %v1847
      %v1870 = vmul.f32 %v552, %v1847
      %v1871 = vmul.f32 %v555, %v1847
      %v1872 = vmul.f32 %v560, %v1847
      %v1873 = vmul.f32 %v563, %v1847
      %v1874 = vmul.f32 %v568, %v1847
      %v1875 = vmul.f32 %v571, %v1847
      %v1876 = vmul.f32 %v576, %v1847
      %v1877 = vmul.f32 %v579, %v1847
      %v1878 = vmul.f32 %v584, %v1847
      %v1879 = vmul.f32 %v587, %v1847
      %v1880 = vmul.f32 %v592, %v1847
      %v1881 = vmul.f32 %v595, %v1847
      %v1882 = vmul.f32 %v600, %v1847
      %v1883 = vmul.f32 %v603, %v1847
      %v1884 = vmul.f32 %v608, %v1847
      %v1885 = vmul.f32 %v611, %v1847
      %v1886 = vmul.f32 %v616, %v1847
      %v1887 = vmul.f32 %v619, %v1847
      %v1888 = vmul.f32 %v624, %v1847
      %v1889 = vmul.f32 %v627, %v1847
      %v1890 = vmul.f32 %v632, %v1847
      %v1891 = vmul.f32 %v635, %v1847
      %v1892 = vmul.f32 %v640, %v1847
      %v1893 = vmul.f32 %v643, %v1847
      %v1894 = vmul.f32 %v648, %v1847
      %v1895 = vmul.f32 %v651, %v1847
      %v1944 = vrot.slane %v1848, 1
      %v1945 = vrot.slane %v1849, 1
      %v1946 = vsel %vm824, %v1944, %v1945
      %v1947 = vrot.slane %v1850, 1
      %v1948 = vsel %vm824, %v1945, %v1947
      %v1949 = vrot.slane %v1851, 1
      %v1950 = vrot.slane %v1852, 1
      %v1951 = vsel %vm824, %v1949, %v1950
      %v1952 = vrot.slane %v1853, 1
      %v1953 = vsel %vm824, %v1950, %v1952
      %v1954 = vrot.slane %v1854, 1
      %v1955 = vrot.slane %v1855, 1
      %v1956 = vsel %vm824, %v1954, %v1955
      %v1957 = vrot.slane %v1856, 1
      %v1958 = vsel %vm824, %v1955, %v1957
      %v1959 = vrot.slane %v1857, 1
      %v1960 = vrot.slane %v1858, 1
      %v1961 = vsel %vm824, %v1959, %v1960
      %v1962 = vrot.slane %v1859, 1
      %v1963 = vsel %vm824, %v1960, %v1962
      %v1964 = vrot.slane %v1860, 1
      %v1965 = vrot.slane %v1861, 1
      %v1966 = vsel %vm824, %v1964, %v1965
      %v1967 = vrot.slane %v1862, 1
      %v1968 = vsel %vm824, %v1965, %v1967
      %v1969 = vrot.slane %v1863, 1
      %v1970 = vrot.slane %v1864, 1
      %v1971 = vsel %vm824, %v1969, %v1970
      %v1972 = vrot.slane %v1865, 1
      %v1973 = vsel %vm824, %v1970, %v1972
      %v1974 = vrot.slane %v1866, 1
      %v1975 = vrot.slane %v1867, 1
      %v1976 = vsel %vm824, %v1974, %v1975
      %v1977 = vrot.slane %v1868, 1
      %v1978 = vsel %vm824, %v1975, %v1977
      %v1979 = vrot.slane %v1869, 1
      %v1980 = vrot.slane %v1870, 1
      %v1981 = vsel %vm824, %v1979, %v1980
      %v1982 = vrot.slane %v1871, 1
      %v1983 = vsel %vm824, %v1980, %v1982
      %v1984 = vrot.slane %v1872, 1
      %v1985 = vrot.slane %v1873, 1
      %v1986 = vsel %vm824, %v1984, %v1985
      %v1987 = vrot.slane %v1874, 1
      %v1988 = vsel %vm824, %v1985, %v1987
      %v1989 = vrot.slane %v1875, 1
      %v1990 = vrot.slane %v1876, 1
      %v1991 = vsel %vm824, %v1989, %v1990
      %v1992 = vrot.slane %v1877, 1
      %v1993 = vsel %vm824, %v1990, %v1992
      %v1994 = vrot.slane %v1878, 1
      %v1995 = vrot.slane %v1879, 1
      %v1996 = vsel %vm824, %v1994, %v1995
      %v1997 = vrot.slane %v1880, 1
      %v1998 = vsel %vm824, %v1995, %v1997
      %v1999 = vrot.slane %v1881, 1
      %v2000 = vrot.slane %v1882, 1
      %v2001 = vsel %vm824, %v1999, %v2000
      %v2002 = vrot.slane %v1883, 1
      %v2003 = vsel %vm824, %v2000, %v2002
      %v2004 = vrot.slane %v1884, 1
      %v2005 = vrot.slane %v1885, 1
      %v2006 = vsel %vm824, %v2004, %v2005
      %v2007 = vrot.slane %v1886, 1
      %v2008 = vsel %vm824, %v2005, %v2007
      %v2009 = vrot.slane %v1887, 1
      %v2010 = vrot.slane %v1888, 1
      %v2011 = vsel %vm824, %v2009, %v2010
      %v2012 = vrot.slane %v1889, 1
      %v2013 = vsel %vm824, %v2010, %v2012
      %v2014 = vrot.slane %v1890, 1
      %v2015 = vrot.slane %v1891, 1
      %v2016 = vsel %vm824, %v2014, %v2015
      %v2017 = vrot.slane %v1892, 1
      %v2018 = vsel %vm824, %v2015, %v2017
      %v2019 = vrot.slane %v1893, 1
      %v2020 = vrot.slane %v1894, 1
      %v2021 = vsel %vm824, %v2019, %v2020
      %v2022 = vrot.slane %v1895, 1
      %v2023 = vsel %vm824, %v2020, %v2022
      %v2056 = vadd.f32 %v1811, %v1946
      %v2057 = vadd.f32 %v1812, %v1948
      %v2058 = vadd.f32 %v1813, %v1951
      %v2059 = vadd.f32 %v1814, %v1953
      %v2060 = vadd.f32 %v1815, %v1956
      %v2061 = vadd.f32 %v1816, %v1958
      %v2062 = vadd.f32 %v1817, %v1961
      %v2063 = vadd.f32 %v1818, %v1963
      %v2064 = vadd.f32 %v1819, %v1966
      %v2065 = vadd.f32 %v1820, %v1968
      %v2066 = vadd.f32 %v1821, %v1971
      %v2067 = vadd.f32 %v1822, %v1973
      %v2068 = vadd.f32 %v1823, %v1976
      %v2069 = vadd.f32 %v1824, %v1978
      %v2070 = vadd.f32 %v1825, %v1981
      %v2071 = vadd.f32 %v1826, %v1983
      %v2072 = vadd.f32 %v1827, %v1986
      %v2073 = vadd.f32 %v1828, %v1988
      %v2074 = vadd.f32 %v1829, %v1991
      %v2075 = vadd.f32 %v1830, %v1993
      %v2076 = vadd.f32 %v1831, %v1996
      %v2077 = vadd.f32 %v1832, %v1998
      %v2078 = vadd.f32 %v1833, %v2001
      %v2079 = vadd.f32 %v1834, %v2003
      %v2080 = vadd.f32 %v1835, %v2006
      %v2081 = vadd.f32 %v1836, %v2008
      %v2082 = vadd.f32 %v1837, %v2011
      %v2083 = vadd.f32 %v1838, %v2013
      %v2084 = vadd.f32 %v1839, %v2016
      %v2085 = vadd.f32 %v1840, %v2018
      %v2086 = vadd.f32 %v1841, %v2021
      %v2087 = vadd.f32 %v1842, %v2023
      %v2088 = vld [vmem:[%s216 + $0x8] sm:$0x1]
      %v2089 = vlaneseq
      %v2090 = vshrl.u32 %v2089, 7
      %v2091 = vsub.s32 0, %v2090
      %v2092 = vrot.slane %v2088, %v2091
      %v2093 = vmul.f32 %v464, %v2092
      %v2094 = vmul.f32 %v467, %v2092
      %v2095 = vmul.f32 %v472, %v2092
      %v2096 = vmul.f32 %v475, %v2092
      %v2097 = vmul.f32 %v480, %v2092
      %v2098 = vmul.f32 %v483, %v2092
      %v2099 = vmul.f32 %v488, %v2092
      %v2100 = vmul.f32 %v491, %v2092
      %v2101 = vmul.f32 %v496, %v2092
      %v2102 = vmul.f32 %v499, %v2092
      %v2103 = vmul.f32 %v504, %v2092
      %v2104 = vmul.f32 %v507, %v2092
      %v2105 = vmul.f32 %v512, %v2092
      %v2106 = vmul.f32 %v515, %v2092
      %v2107 = vmul.f32 %v520, %v2092
      %v2108 = vmul.f32 %v523, %v2092
      %v2109 = vmul.f32 %v528, %v2092
      %v2110 = vmul.f32 %v531, %v2092
      %v2111 = vmul.f32 %v536, %v2092
      %v2112 = vmul.f32 %v539, %v2092
      %v2113 = vmul.f32 %v544, %v2092
      %v2114 = vmul.f32 %v547, %v2092
      %v2115 = vmul.f32 %v552, %v2092
      %v2116 = vmul.f32 %v555, %v2092
      %v2117 = vmul.f32 %v560, %v2092
      %v2118 = vmul.f32 %v563, %v2092
      %v2119 = vmul.f32 %v568, %v2092
      %v2120 = vmul.f32 %v571, %v2092
      %v2121 = vmul.f32 %v576, %v2092
      %v2122 = vmul.f32 %v579, %v2092
      %v2123 = vmul.f32 %v584, %v2092
      %v2124 = vmul.f32 %v587, %v2092
      %v2125 = vmul.f32 %v592, %v2092
      %v2126 = vmul.f32 %v595, %v2092
      %v2127 = vmul.f32 %v600, %v2092
      %v2128 = vmul.f32 %v603, %v2092
      %v2129 = vmul.f32 %v608, %v2092
      %v2130 = vmul.f32 %v611, %v2092
      %v2131 = vmul.f32 %v616, %v2092
      %v2132 = vmul.f32 %v619, %v2092
      %v2133 = vmul.f32 %v624, %v2092
      %v2134 = vmul.f32 %v627, %v2092
      %v2135 = vmul.f32 %v632, %v2092
      %v2136 = vmul.f32 %v635, %v2092
      %v2137 = vmul.f32 %v640, %v2092
      %v2138 = vmul.f32 %v643, %v2092
      %v2139 = vmul.f32 %v648, %v2092
      %v2140 = vmul.f32 %v651, %v2092
      %v2189 = vrot.slane %v2093, 2
      %v2190 = vrot.slane %v2094, 2
      %v2191 = vsel %vm1070, %v2189, %v2190
      %v2192 = vrot.slane %v2095, 2
      %v2193 = vsel %vm1070, %v2190, %v2192
      %v2194 = vrot.slane %v2096, 2
      %v2195 = vrot.slane %v2097, 2
      %v2196 = vsel %vm1070, %v2194, %v2195
      %v2197 = vrot.slane %v2098, 2
      %v2198 = vsel %vm1070, %v2195, %v2197
      %v2199 = vrot.slane %v2099, 2
      %v2200 = vrot.slane %v2100, 2
      %v2201 = vsel %vm1070, %v2199, %v2200
      %v2202 = vrot.slane %v2101, 2
      %v2203 = vsel %vm1070, %v2200, %v2202
      %v2204 = vrot.slane %v2102, 2
      %v2205 = vrot.slane %v2103, 2
      %v2206 = vsel %vm1070, %v2204, %v2205
      %v2207 = vrot.slane %v2104, 2
      %v2208 = vsel %vm1070, %v2205, %v2207
      %v2209 = vrot.slane %v2105, 2
      %v2210 = vrot.slane %v2106, 2
      %v2211 = vsel %vm1070, %v2209, %v2210
      %v2212 = vrot.slane %v2107, 2
      %v2213 = vsel %vm1070, %v2210, %v2212
      %v2214 = vrot.slane %v2108, 2
      %v2215 = vrot.slane %v2109, 2
      %v2216 = vsel %vm1070, %v2214, %v2215
      %v2217 = vrot.slane %v2110, 2
      %v2218 = vsel %vm1070, %v2215, %v2217
      %v2219 = vrot.slane %v2111, 2
      %v2220 = vrot.slane %v2112, 2
      %v2221 = vsel %vm1070, %v2219, %v2220
      %v2222 = vrot.slane %v2113, 2
      %v2223 = vsel %vm1070, %v2220, %v2222
      %v2224 = vrot.slane %v2114, 2
      %v2225 = vrot.slane %v2115, 2
      %v2226 = vsel %vm1070, %v2224, %v2225
      %v2227 = vrot.slane %v2116, 2
      %v2228 = vsel %vm1070, %v2225, %v2227
      %v2229 = vrot.slane %v2117, 2
      %v2230 = vrot.slane %v2118, 2
      %v2231 = vsel %vm1070, %v2229, %v2230
      %v2232 = vrot.slane %v2119, 2
      %v2233 = vsel %vm1070, %v2230, %v2232
      %v2234 = vrot.slane %v2120, 2
      %v2235 = vrot.slane %v2121, 2
      %v2236 = vsel %vm1070, %v2234, %v2235
      %v2237 = vrot.slane %v2122, 2
      %v2238 = vsel %vm1070, %v2235, %v2237
      %v2239 = vrot.slane %v2123, 2
      %v2240 = vrot.slane %v2124, 2
      %v2241 = vsel %vm1070, %v2239, %v2240
      %v2242 = vrot.slane %v2125, 2
      %v2243 = vsel %vm1070, %v2240, %v2242
      %v2244 = vrot.slane %v2126, 2
      %v2245 = vrot.slane %v2127, 2
      %v2246 = vsel %vm1070, %v2244, %v2245
      %v2247 = vrot.slane %v2128, 2
      %v2248 = vsel %vm1070, %v2245, %v2247
      %v2249 = vrot.slane %v2129, 2
      %v2250 = vrot.slane %v2130, 2
      %v2251 = vsel %vm1070, %v2249, %v2250
      %v2252 = vrot.slane %v2131, 2
      %v2253 = vsel %vm1070, %v2250, %v2252
      %v2254 = vrot.slane %v2132, 2
      %v2255 = vrot.slane %v2133, 2
      %v2256 = vsel %vm1070, %v2254, %v2255
      %v2257 = vrot.slane %v2134, 2
      %v2258 = vsel %vm1070, %v2255, %v2257
      %v2259 = vrot.slane %v2135, 2
      %v2260 = vrot.slane %v2136, 2
      %v2261 = vsel %vm1070, %v2259, %v2260
      %v2262 = vrot.slane %v2137, 2
      %v2263 = vsel %vm1070, %v2260, %v2262
      %v2264 = vrot.slane %v2138, 2
      %v2265 = vrot.slane %v2139, 2
      %v2266 = vsel %vm1070, %v2264, %v2265
      %v2267 = vrot.slane %v2140, 2
      %v2268 = vsel %vm1070, %v2265, %v2267
      %v2301 = vadd.f32 %v2056, %v2191
      %v2302 = vadd.f32 %v2057, %v2193
      %v2303 = vadd.f32 %v2058, %v2196
      %v2304 = vadd.f32 %v2059, %v2198
      %v2305 = vadd.f32 %v2060, %v2201
      %v2306 = vadd.f32 %v2061, %v2203
      %v2307 = vadd.f32 %v2062, %v2206
      %v2308 = vadd.f32 %v2063, %v2208
      %v2309 = vadd.f32 %v2064, %v2211
      %v2310 = vadd.f32 %v2065, %v2213
      %v2311 = vadd.f32 %v2066, %v2216
      %v2312 = vadd.f32 %v2067, %v2218
      %v2313 = vadd.f32 %v2068, %v2221
      %v2314 = vadd.f32 %v2069, %v2223
      %v2315 = vadd.f32 %v2070, %v2226
      %v2316 = vadd.f32 %v2071, %v2228
      %v2317 = vadd.f32 %v2072, %v2231
      %v2318 = vadd.f32 %v2073, %v2233
      %v2319 = vadd.f32 %v2074, %v2236
      %v2320 = vadd.f32 %v2075, %v2238
      %v2321 = vadd.f32 %v2076, %v2241
      %v2322 = vadd.f32 %v2077, %v2243
      %v2323 = vadd.f32 %v2078, %v2246
      %v2324 = vadd.f32 %v2079, %v2248
      %v2325 = vadd.f32 %v2080, %v2251
      %v2326 = vadd.f32 %v2081, %v2253
      %v2327 = vadd.f32 %v2082, %v2256
      %v2328 = vadd.f32 %v2083, %v2258
      %v2329 = vadd.f32 %v2084, %v2261
      %v2330 = vadd.f32 %v2085, %v2263
      %v2331 = vadd.f32 %v2086, %v2266
      %v2332 = vadd.f32 %v2087, %v2268
      %vm2333 = vcmask 523264
      %2334 = vst.msk [vmem:[%s224] sm:$0xff] %vm2333, %v2301
      %2335 = vst.msk [vmem:[%s224 + $0x8] sm:$0xff] %vm2333, %v2302
      %2336 = vst.msk [vmem:[%s224 + $0x10] sm:$0xff] %vm2333, %v2303
      %2337 = vst.msk [vmem:[%s224 + $0x18] sm:$0xff] %vm2333, %v2304
      %2338 = vst.msk [vmem:[%s224 + $0x20] sm:$0xff] %vm2333, %v2305
      %2339 = vst.msk [vmem:[%s224 + $0x28] sm:$0xff] %vm2333, %v2306
      %2340 = vst.msk [vmem:[%s224 + $0x30] sm:$0xff] %vm2333, %v2307
      %2341 = vst.msk [vmem:[%s224 + $0x38] sm:$0xff] %vm2333, %v2308
      %2342 = vst.msk [vmem:[%s224 + $0x40] sm:$0xff] %vm2333, %v2309
      %2343 = vst.msk [vmem:[%s224 + $0x48] sm:$0xff] %vm2333, %v2310
      %2344 = vst.msk [vmem:[%s224 + $0x50] sm:$0xff] %vm2333, %v2311
      %2345 = vst.msk [vmem:[%s224 + $0x58] sm:$0xff] %vm2333, %v2312
      %2346 = vst.msk [vmem:[%s224 + $0x60] sm:$0xff] %vm2333, %v2313
      %2347 = vst.msk [vmem:[%s224 + $0x68] sm:$0xff] %vm2333, %v2314
      %2348 = vst.msk [vmem:[%s224 + $0x70] sm:$0xff] %vm2333, %v2315
      %2349 = vst.msk [vmem:[%s224 + $0x78] sm:$0xff] %vm2333, %v2316
      %2350 = vst.msk [vmem:[%s224 + $0x80] sm:$0xff] %vm2333, %v2317
      %2351 = vst.msk [vmem:[%s224 + $0x88] sm:$0xff] %vm2333, %v2318
      %2352 = vst.msk [vmem:[%s224 + $0x90] sm:$0xff] %vm2333, %v2319
      %2353 = vst.msk [vmem:[%s224 + $0x98] sm:$0xff] %vm2333, %v2320
      %2354 = vst.msk [vmem:[%s224 + $0xa0] sm:$0xff] %vm2333, %v2321
      %2355 = vst.msk [vmem:[%s224 + $0xa8] sm:$0xff] %vm2333, %v2322
      %2356 = vst.msk [vmem:[%s224 + $0xb0] sm:$0xff] %vm2333, %v2323
      %2357 = vst.msk [vmem:[%s224 + $0xb8] sm:$0xff] %vm2333, %v2324
      %2358 = vst.msk [vmem:[%s224 + $0xc0] sm:$0xff] %vm2333, %v2325
      %2359 = vst.msk [vmem:[%s224 + $0xc8] sm:$0xff] %vm2333, %v2326
      %2360 = vst.msk [vmem:[%s224 + $0xd0] sm:$0xff] %vm2333, %v2327
      %2361 = vst.msk [vmem:[%s224 + $0xd8] sm:$0xff] %vm2333, %v2328
      %2362 = vst.msk [vmem:[%s224 + $0xe0] sm:$0xff] %vm2333, %v2329
      %2363 = vst.msk [vmem:[%s224 + $0xe8] sm:$0xff] %vm2333, %v2330
      %2364 = vst.msk [vmem:[%s224 + $0xf0] sm:$0xff] %vm2333, %v2331
      %2365 = vst.msk [vmem:[%s224 + $0xf8] sm:$0xff] %vm2333, %v2332
      %p2366 = scmp.lt.s32.totalorder %s18, 1
      %s2367 = scalar_select %p2366, %s18, 1
      %p2368 = scmp.lt.s32.totalorder %s19, 0
      %s2369 = scalar_select %p2368, %s19, 0
      %s2370 = smul.addr %s2367, 32
      %s2371 = sadd.s32 %s2369, %s2370
      %s2372 = smul.addr %s2371, 8
      %s2373 = scalar_lea.vmem %s3, %s2372
      // Predicated region
      $region33: #{attention_forward.3} parent=31 // pred_check
        %p2374 = pneg %p124
      $region34: #{attention_forward.3} parent=31 // pred_check_branch
        %2376 = sbr.rel (%p2374) target = $region36
      $region35: #{attention_forward.3} parent=31 // pred_region
        _
      $region36: #{attention_forward.3} parent=31 // pred_fallthru
        _
    $region32: #{attention_forward.3} parent=5 // pred_fallthru
      _
    %p2377 = scmp.le.s32.totalorder 2, %s9
    // Predicated region
    $region37: #{attention_forward.3} parent=5 // pred_check
      %p2378 = pneg %p2377
    $region38: #{attention_forward.3} parent=5 // pred_check_branch
      %2380 = sbr.rel (%p2378) target = $region40
    $region39: #{attention_forward.3} parent=5 // pred_region
      %s2381 = ssub.s32 %s9, 2
      // Predicated region
      $region41: #{attention_forward.3} parent=39 // pred_check
        %p2382 = pneg %p130
      $region42: #{attention_forward.3} parent=39 // pred_check_branch
        %2384 = sbr.rel (%p2382) target = $region44
      $region43: #{attention_forward.3} parent=39 // pred_region
        %p2385 = scmp.lt.s32.totalorder %s20, 1
        %s2386 = scalar_select %p2385, %s20, 1
        %p2387 = scmp.lt.s32.totalorder %s21, 0
        %s2388 = scalar_select %p2387, %s21, 0
        %s2389 = smul.addr %s2386, 32
        %s2390 = sadd.s32 %s2388, %s2389
        %s2391 = smul.addr %s2390, 8
        %s2392 = scalar_lea.vmem %s3, %s2391
      $region44: #{attention_forward.3} parent=39 // pred_fallthru
        _
    $region40: #{attention_forward.3} parent=5 // pred_fallthru
      _
  $region6: #{attention_forward.3} parent=0 // loop_footer
    %s13 = sadd.s32 1, %s9
  $region7: #{attention_forward.3} parent=0 // loop_footer_branch
    %8 = sbr.rel target = $region3
  $region8: #{attention_forward.3} parent=0 // loop_exit
    _

// kernel: attention_forward.5
$region0: #{attention_forward.5}
  #allocation0 [shape = 'u32[]', space=smem, size = 0x4, offset = 0x4, fixed_abs, tag = 'smem constant byte address 0x4 - core index']
  #allocation1 [shape = 'u32[144,128]{1,0:T(1,128)}', space=vmem, size = 0x12000, scoped, tag = 'internal scratch']
  #allocation2 [shape = 'f32[256,32]{1,0:T(8,128)}', space=vmem, size = 0x20000, scoped, tag = 'scratch operand']
  %s0 = inlined_call_operand.vmem [shape: f32[4,1], index: 0, kind: input, shape index: {}]
  %s1 = inlined_call_operand.vmem [shape: f32[2,256,32], index: 1, kind: input, shape index: {}]
  %s2 = inlined_call_operand.vmem [shape: f32[2,256,64], index: 2, kind: input, shape index: {}]
  %s3 = inlined_call_operand.vmem [shape: bf16[32,32], index: 3, kind: input, shape index: {}]
  %s4 = inlined_call_operand.hbm [shape: f32[2,256,32], index: 4, kind: output, shape index: {}]
  %s5 = sld [smem:[#allocation0]]
  $region53: #{attention_forward.5} parent=0
    _
  %s7 = ssub.s32 1, %s5
  %s8 = scalar_select 0, %s7, %s5
  $region1: #{attention_forward.5} parent=0
    #allocation3 [shape = 'u8[2048]{0}', space=smem, size = 0x800, scoped, tag = 'input window, operand 0, single buffered']
    #allocation4 [shape = 's32[2]{0}', space=sflag, size = 0x8, scoped, tag = 'scoped memory for attention_forward.5']
    #allocation5 [shape = 's32[2]{0}', space=sflag, size = 0x8, scoped, tag = 'scoped memory for attention_forward.5']
    #allocation6 [shape = 'u8[262144]{0}', space=vmem, size = 0x40000, scoped, tag = 'output window, operand 0']
    %9 = vsyncpa [#allocation5], 0
    %10 = vsyncpa [#allocation4], 0
    %s11 = scalar_lea.sflag [#allocation4], 1
    %12 = vsyncpa %s11, 0
    loop: start=0, step=1, limit=4
    $region2: #{attention_forward.5} parent=1 // loop_pre_header
      _
    $region3: #{attention_forward.5} parent=1 // loop_header
      %s14 = sphi 0, %s18
      %p15 = scmp.ge.s32.totalorder %s14, 4
      %s22 = sphi 0, %s22
      %s24 = sphi 0, %s22
      %s25 = sphi 0, %s24
      %s39 = sphi 0, %s25
      %s45 = sphi 0, %s47
      %s48 = sphi 0, %s45
      %s49 = sphi 0, %s48
      %s65 = sphi 0, %s49
      %s71 = sphi 0, %s73
      %s74 = sphi 0, %s71
      %s75 = sphi 0, %s74
      %s91 = sphi 0, %s75
      %s95 = sphi 0, %s95
      %s97 = sphi 0, %s95
      %s98 = sphi 0, %s97
      %s112 = sphi 0, %s98
      %s118 = sphi 0, %s120
      %s121 = sphi 0, %s118
      %s122 = sphi 0, %s121
      %s138 = sphi 0, %s122
    $region4: #{attention_forward.5} parent=1 // loop_header_branch
      %17 = sbr.rel (%p15) target = $region8
    $region5: #{attention_forward.5} parent=1 // loop_body
      %s19 = ssub.s32 %s14, 1
      %s20 = ssub.s32 %s14, 2
      %s21 = sadd.s32 %s14, 1
      %s23 = sadd.s32 %s22, 1
      %p26 = scmp.eq.s32.totalorder %s14, 1
      %p27 = scmp.ne.s32.totalorder %s22, %s24
      %p28 = scmp.eq.s32.totalorder %s14, 0
      %p29 = por %p27, %p28
      %p30 = scmp.ne.s32.totalorder %s22, %s24
      %p31 = scmp.eq.s32.totalorder %s19, 1
      %p32 = por %p30, %p31
      %p33 = scmp.ne.s32.totalorder %s24, %s25
      %p34 = scmp.eq.s32.totalorder %s19, 0
      %p35 = por %p33, %p34
      %p36 = scmp.ne.s32.totalorder %s24, %s25
      %p37 = scmp.eq.s32.totalorder %s20, 1
      %p38 = por %p36, %p37
      %p40 = scmp.ne.s32.totalorder %s25, %s39
      %p41 = scmp.eq.s32.totalorder %s20, 0
      %p42 = por %p40, %p41
      %s43 = ssub.s32 %s14, %s21
      %p44 = scmp.eq.s32.totalorder %s43, 0
      %s46 = sadd.s32 %s45, 1
      %s47 = scalar_select %p44, %s45, %s46
      %p50 = pneg %p44
      %p51 = scmp.eq.s32.totalorder %s14, 1
      %p52 = por %p50, %p51
      %p53 = scmp.ne.s32.totalorder %s45, %s48
      %p54 = scmp.eq.s32.totalorder %s14, 0
      %p55 = por %p53, %p54
      %p56 = scmp.ne.s32.totalorder %s45, %s48
      %p57 = scmp.eq.s32.totalorder %s19, 1
      %p58 = por %p56, %p57
      %p59 = scmp.ne.s32.totalorder %s48, %s49
      %p60 = scmp.eq.s32.totalorder %s19, 0
      %p61 = por %p59, %p60
      %p62 = scmp.ne.s32.totalorder %s48, %s49
      %p63 = scmp.eq.s32.totalorder %s20, 1
      %p64 = por %p62, %p63
      %p66 = scmp.ne.s32.totalorder %s49, %s65
      %p67 = scmp.eq.s32.totalorder %s20, 0
      %p68 = por %p66, %p67
      %s69 = ssub.s32 %s14, %s21
      %p70 = scmp.eq.s32.totalorder %s69, 0
      %s72 = sadd.s32 %s71, 1
      %s73 = scalar_select %p70, %s71, %s72
      %p76 = pneg %p70
      %p77 = scmp.eq.s32.totalorder %s14, 1
      %p78 = por %p76, %p77
      %p79 = scmp.ne.s32.totalorder %s71, %s74
      %p80 = scmp.eq.s32.totalorder %s14, 0
      %p81 = por %p79, %p80
      %p82 = scmp.ne.s32.totalorder %s71, %s74
      %p83 = scmp.eq.s32.totalorder %s19, 1
      %p84 = por %p82, %p83
      %p85 = scmp.ne.s32.totalorder %s74, %s75
      %p86 = scmp.eq.s32.totalorder %s19, 0
      %p87 = por %p85, %p86
      %p88 = scmp.ne.s32.totalorder %s74, %s75
      %p89 = scmp.eq.s32.totalorder %s20, 1
      %p90 = por %p88, %p89
      %p92 = scmp.ne.s32.totalorder %s75, %s91
      %p93 = scmp.eq.s32.totalorder %s20, 0
      %p94 = por %p92, %p93
      %s96 = sadd.s32 %s95, 1
      %p99 = scmp.eq.s32.totalorder %s14, 1
      %p100 = scmp.ne.s32.totalorder %s95, %s97
      %p101 = scmp.eq.s32.totalorder %s14, 0
      %p102 = por %p100, %p101
      %p103 = scmp.ne.s32.totalorder %s95, %s97
      %p104 = scmp.eq.s32.totalorder %s19, 1
      %p105 = por %p103, %p104
      %p106 = scmp.ne.s32.totalorder %s97, %s98
      %p107 = scmp.eq.s32.totalorder %s19, 0
      %p108 = por %p106, %p107
      %p109 = scmp.ne.s32.totalorder %s97, %s98
      %p110 = scmp.eq.s32.totalorder %s20, 1
      %p111 = por %p109, %p110
      %p113 = scmp.ne.s32.totalorder %s98, %s112
      %p114 = scmp.eq.s32.totalorder %s20, 0
      %p115 = por %p113, %p114
      %s116 = ssub.s32 %s14, %s21
      %p117 = scmp.eq.s32.totalorder %s116, 0
      %s119 = sadd.s32 %s118, 1
      %s120 = scalar_select %p117, %s118, %s119
      %p123 = pneg %p117
      %p124 = scmp.eq.s32.totalorder %s14, 1
      %p125 = por %p123, %p124
      %p126 = scmp.ne.s32.totalorder %s118, %s121
      %p127 = scmp.eq.s32.totalorder %s14, 0
      %p128 = por %p126, %p127
      %p129 = scmp.ne.s32.totalorder %s118, %s121
      %p130 = scmp.eq.s32.totalorder %s19, 1
      %p131 = por %p129, %p130
      %p132 = scmp.ne.s32.totalorder %s121, %s122
      %p133 = scmp.eq.s32.totalorder %s19, 0
      %p134 = por %p132, %p133
      %p135 = scmp.ne.s32.totalorder %s121, %s122
      %p136 = scmp.eq.s32.totalorder %s20, 1
      %p137 = por %p135, %p136
      %p139 = scmp.ne.s32.totalorder %s122, %s138
      %p140 = scmp.eq.s32.totalorder %s20, 0
      %p141 = por %p139, %p140
      %p142 = scmp.le.s32.totalorder 1, %s14
      %p143 = scmp.lt.s32.totalorder %s14, 3
      %p144 = pnand %p142, %p143
      %p145 = pneg %p144
      // Predicated region
      $region9: #{attention_forward.5} parent=5 // pred_check
        _
      $region10: #{attention_forward.5} parent=5 // pred_check_branch
        %147 = sbr.rel (%p144) target = $region12
      $region11: #{attention_forward.5} parent=5 // pred_region
        %s148 = ssub.s32 %s14, 1
        // Predicated region
        $region13: #{attention_forward.5} parent=11 // pred_check
          %p149 = pneg %p35
        $region14: #{attention_forward.5} parent=11 // pred_check_branch
          %151 = sbr.rel (%p149) target = $region16
        $region15: #{attention_forward.5} parent=11 // pred_region
          %s153 = ssub.s32 64, 64
          %154 = vsyncadd [#allocation5], %s153
          %s156 = sshll.u32 %s0, 4
          %s157 = int_to_ptr.vmem [resolvable:$true] %s156
          %159 = dma.vmem_to_smem %s157, 64, [#allocation3], [#allocation5]
        $region16: #{attention_forward.5} parent=11 // pred_fallthru
          _
        // Predicated region
        $region17: #{attention_forward.5} parent=11 // pred_check
          %p160 = pneg %p108
        $region18: #{attention_forward.5} parent=11 // pred_check_branch
          %162 = sbr.rel (%p160) target = $region20
        $region19: #{attention_forward.5} parent=11 // pred_region
          _
        $region20: #{attention_forward.5} parent=11 // pred_fallthru
          _
      $region12: #{attention_forward.5} parent=5 // pred_fallthru
        _
      %p163 = scmp.lt.s32.totalorder %s14, 2
      // Predicated region
      $region21: #{attention_forward.5} parent=5 // pred_check
        %p164 = pneg %p163
      $region22: #{attention_forward.5} parent=5 // pred_check_branch
        %166 = sbr.rel (%p164) target = $region24
      $region23: #{attention_forward.5} parent=5 // pred_region
        // Predicated region
        $region25: #{attention_forward.5} parent=23 // pred_check
          %p167 = pneg %p55
        $region26: #{attention_forward.5} parent=23 // pred_check_branch
          %169 = sbr.rel (%p167) target = $region28
        $region27: #{attention_forward.5} parent=23 // pred_region
          %p170 = scmp.lt.s32.totalorder %s14, 1
          %s171 = scalar_select %p170, %s14, 1
          %s172 = smul.addr %s171, 32
          %s173 = smul.addr %s172, 8
          %s174 = scalar_lea.vmem %s1, %s173
        $region28: #{attention_forward.5} parent=23 // pred_fallthru
          _
        // Predicated region
        $region29: #{attention_forward.5} parent=23 // pred_check
          %p175 = pneg %p81
        $region30: #{attention_forward.5} parent=23 // pred_check_branch
          %177 = sbr.rel (%p175) target = $region32
        $region31: #{attention_forward.5} parent=23 // pred_region
          %p178 = scmp.lt.s32.totalorder %s14, 1
          %s179 = scalar_select %p178, %s14, 1
          %s180 = smul.addr %s179, 32
          %s181 = smul.addr %s180, 8
          %s182 = scalar_lea.vmem %s2, %s181
        $region32: #{attention_forward.5} parent=23 // pred_fallthru
          _
      $region24: #{attention_forward.5} parent=5 // pred_fallthru
        _
      %p183 = scmp.le.s32.totalorder 1, %s14
      %p184 = scmp.lt.s32.totalorder %s14, 3
      %p185 = pnand %p183, %p184
      %p186 = pneg %p185
      // Predicated region
      $region33: #{attention_forward.5} parent=5 // pred_check
        _
      $region34: #{attention_forward.5} parent=5 // pred_check_branch
        %188 = sbr.rel (%p185) target = $region36
      $region35: #{attention_forward.5} parent=5 // pred_region
        %s189 = ssub.s32 %s14, 1
        // Predicated region
        $region37: #{attention_forward.5} parent=35 // pred_check
          %p190 = pneg %p35
        $region38: #{attention_forward.5} parent=35 // pred_check_branch
          %192 = sbr.rel (%p190) target = $region40
        $region39: #{attention_forward.5} parent=35 // pred_region
          %193 = dma.done [#allocation5], 64
        $region40: #{attention_forward.5} parent=35 // pred_fallthru
          _
        %194 = sfence
        %p195 = pneg %p35
        %p196 = pneg %p32
        %p197 = scmp.lt.s32.totalorder %s19, 1
        %s198 = scalar_select %p197, %s19, 1
        %s199 = smul.addr %s198, 32
        %s200 = smul.addr %s199, 8
        %s201 = scalar_lea.vmem %s1, %s200
        %p202 = pneg %p61
        %p203 = pneg %p58
        %p204 = scmp.lt.s32.totalorder %s19, 1
        %s205 = scalar_select %p204, %s19, 1
        %s206 = smul.addr %s205, 32
        %s207 = smul.addr %s206, 8
        %s208 = scalar_lea.vmem %s2, %s207
        %p209 = pneg %p87
        %p210 = pneg %p84
        %p211 = pneg %p108
        %p212 = pneg %p105
        %p213 = pneg %p134
        %p214 = pneg %p131
        %s215 = sand.u32 %s121, 1
        %s216 = scalar_lea.sflag [#allocation4], %s215
        %s217 = sand.u32 %s121, 1
        %s218 = smul.addr %s217, 256
        %s219 = scalar_lea.vmem [#allocation6], %s218
        %p220 = scmp.lt.s32.totalorder %s19, 1
        %s221 = scalar_select %p220, %s19, 1
        %s222 = smul.addr %s221, 32
        %s223 = smul.addr %s222, 8
        %s224 = scalar_lea.vmem %s1, %s223
        %p225 = scmp.lt.s32.totalorder %s19, 1
        %s226 = scalar_select %p225, %s19, 1
        %s227 = smul.addr %s226, 32
        %s228 = smul.addr %s227, 8
        %s229 = scalar_lea.vmem %s2, %s228
        %v231 = vld [vmem:[%s224] sm:$0xff]
        %v232 = vld [vmem:[%s224 + $0x8] sm:$0xff]
        %v233 = vld [vmem:[%s224 + $0x10] sm:$0xff]
        %v234 = vld [vmem:[%s224 + $0x18] sm:$0xff]
        %v235 = vld [vmem:[%s224 + $0x20] sm:$0xff]
        %v236 = vld [vmem:[%s224 + $0x28] sm:$0xff]
        %v237 = vld [vmem:[%s224 + $0x30] sm:$0xff]
        %v238 = vld [vmem:[%s224 + $0x38] sm:$0xff]
        %v239 = vld [vmem:[%s224 + $0x40] sm:$0xff]
        %v240 = vld [vmem:[%s224 + $0x48] sm:$0xff]
        %v241 = vld [vmem:[%s224 + $0x50] sm:$0xff]
        %v242 = vld [vmem:[%s224 + $0x58] sm:$0xff]
        %v243 = vld [vmem:[%s224 + $0x60] sm:$0xff]
        %v244 = vld [vmem:[%s224 + $0x68] sm:$0xff]
        %v245 = vld [vmem:[%s224 + $0x70] sm:$0xff]
        %v246 = vld [vmem:[%s224 + $0x78] sm:$0xff]
        %v247 = vld [vmem:[%s224 + $0x80] sm:$0xff]
        %v248 = vld [vmem:[%s224 + $0x88] sm:$0xff]
        %v249 = vld [vmem:[%s224 + $0x90] sm:$0xff]
        %v250 = vld [vmem:[%s224 + $0x98] sm:$0xff]
        %v251 = vld [vmem:[%s224 + $0xa0] sm:$0xff]
        %v252 = vld [vmem:[%s224 + $0xa8] sm:$0xff]
        %v253 = vld [vmem:[%s224 + $0xb0] sm:$0xff]
        %v254 = vld [vmem:[%s224 + $0xb8] sm:$0xff]
        %v255 = vld [vmem:[%s224 + $0xc0] sm:$0xff]
        %v256 = vld [vmem:[%s224 + $0xc8] sm:$0xff]
        %v257 = vld [vmem:[%s224 + $0xd0] sm:$0xff]
        %v258 = vld [vmem:[%s224 + $0xd8] sm:$0xff]
        %v259 = vld [vmem:[%s224 + $0xe0] sm:$0xff]
        %v260 = vld [vmem:[%s224 + $0xe8] sm:$0xff]
        %v261 = vld [vmem:[%s224 + $0xf0] sm:$0xff]
        %v262 = vld [vmem:[%s224 + $0xf8] sm:$0xff]
        %v263 = vld [vmem:[%s229] sm:$0xff]
        %v264 = vld [vmem:[%s229 + $0x8] sm:$0xff]
        %v265 = vld [vmem:[%s229 + $0x10] sm:$0xff]
        %v266 = vld [vmem:[%s229 + $0x18] sm:$0xff]
        %v267 = vld [vmem:[%s229 + $0x20] sm:$0xff]
        %v268 = vld [vmem:[%s229 + $0x28] sm:$0xff]
        %v269 = vld [vmem:[%s229 + $0x30] sm:$0xff]
        %v270 = vld [vmem:[%s229 + $0x38] sm:$0xff]
        %v271 = vld [vmem:[%s229 + $0x40] sm:$0xff]
        %v272 = vld [vmem:[%s229 + $0x48] sm:$0xff]
        %v273 = vld [vmem:[%s229 + $0x50] sm:$0xff]
        %v274 = vld [vmem:[%s229 + $0x58] sm:$0xff]
        %v275 = vld [vmem:[%s229 + $0x60] sm:$0xff]
        %v276 = vld [vmem:[%s229 + $0x68] sm:$0xff]
        %v277 = vld [vmem:[%s229 + $0x70] sm:$0xff]
        %v278 = vld [vmem:[%s229 + $0x78] sm:$0xff]
        %v279 = vld [vmem:[%s229 + $0x80] sm:$0xff]
        %v280 = vld [vmem:[%s229 + $0x88] sm:$0xff]
        %v281 = vld [vmem:[%s229 + $0x90] sm:$0xff]
        %v282 = vld [vmem:[%s229 + $0x98] sm:$0xff]
        %v283 = vld [vmem:[%s229 + $0xa0] sm:$0xff]
        %v284 = vld [vmem:[%s229 + $0xa8] sm:$0xff]
        %v285 = vld [vmem:[%s229 + $0xb0] sm:$0xff]
        %v286 = vld [vmem:[%s229 + $0xb8] sm:$0xff]
        %v287 = vld [vmem:[%s229 + $0xc0] sm:$0xff]
        %v288 = vld [vmem:[%s229 + $0xc8] sm:$0xff]
        %v289 = vld [vmem:[%s229 + $0xd0] sm:$0xff]
        %v290 = vld [vmem:[%s229 + $0xd8] sm:$0xff]
        %v291 = vld [vmem:[%s229 + $0xe0] sm:$0xff]
        %v292 = vld [vmem:[%s229 + $0xe8] sm:$0xff]
        %v293 = vld [vmem:[%s229 + $0xf0] sm:$0xff]
        %v294 = vld [vmem:[%s229 + $0xf8] sm:$0xff]
        %v295 = vmul.f32 %v231, %v231
        %v296 = vmul.f32 %v232, %v232
        %v297 = vmul.f32 %v233, %v233
        %v298 = vmul.f32 %v234, %v234
        %v299 = vmul.f32 %v235, %v235
        %v300 = vmul.f32 %v236, %v236
        %v301 = vmul.f32 %v237, %v237
        %v302 = vmul.f32 %v238, %v238
        %v303 = vmul.f32 %v239, %v239
        %v304 = vmul.f32 %v240, %v240
        %v305 = vmul.f32 %v241, %v241
        %v306 = vmul.f32 %v242, %v242
        %v307 = vmul.f32 %v243, %v243
        %v308 = vmul.f32 %v244, %v244
        %v309 = vmul.f32 %v245, %v245
        %v310 = vmul.f32 %v246, %v246
        %v311 = vmul.f32 %v247, %v247
        %v312 = vmul.f32 %v248, %v248
        %v313 = vmul.f32 %v249, %v249
        %v314 = vmul.f32 %v250, %v250
        %v315 = vmul.f32 %v251, %v251
        %v316 = vmul.f32 %v252, %v252
        %v317 = vmul.f32 %v253, %v253
        %v318 = vmul.f32 %v254, %v254
        %v319 = vmul.f32 %v255, %v255
        %v320 = vmul.f32 %v256, %v256
        %v321 = vmul.f32 %v257, %v257
        %v322 = vmul.f32 %v258, %v258
        %v323 = vmul.f32 %v259, %v259
        %v324 = vmul.f32 %v260, %v260
        %v325 = vmul.f32 %v261, %v261
        %v326 = vmul.f32 %v262, %v262
        %vm327 = vcmask 261120
        %v328 = vsel %vm327, %v295, 0.0
        %v329 = vsel %vm327, %v296, 0.0
        %v330 = vadd.f32 %v328, %v329
        %v331 = vsel %vm327, %v297, 0.0
        %v332 = vadd.f32 %v330, %v331
        %v333 = vsel %vm327, %v298, 0.0
        %v334 = vadd.f32 %v332, %v333
        %v335 = vsel %vm327, %v299, 0.0
        %v336 = vadd.f32 %v334, %v335
        %v337 = vsel %vm327, %v300, 0.0
        %v338 = vadd.f32 %v336, %v337
        %v339 = vsel %vm327, %v301, 0.0
        %v340 = vadd.f32 %v338, %v339
        %v341 = vsel %vm327, %v302, 0.0
        %v342 = vadd.f32 %v340, %v341
        %v343 = vsel %vm327, %v303, 0.0
        %v344 = vadd.f32 %v342, %v343
        %v345 = vsel %vm327, %v304, 0.0
        %v346 = vadd.f32 %v344, %v345
        %v347 = vsel %vm327, %v305, 0.0
        %v348 = vadd.f32 %v346, %v347
        %v349 = vsel %vm327, %v306, 0.0
        %v350 = vadd.f32 %v348, %v349
        %v351 = vsel %vm327, %v307, 0.0
        %v352 = vadd.f32 %v350, %v351
        %v353 = vsel %vm327, %v308, 0.0
        %v354 = vadd.f32 %v352, %v353
        %v355 = vsel %vm327, %v309, 0.0
        %v356 = vadd.f32 %v354, %v355
        %v357 = vsel %vm327, %v310, 0.0
        %v358 = vadd.f32 %v356, %v357
        %v359 = vsel %vm327, %v311, 0.0
        %v360 = vadd.f32 %v358, %v359
        %v361 = vsel %vm327, %v312, 0.0
        %v362 = vadd.f32 %v360, %v361
        %v363 = vsel %vm327, %v313, 0.0
        %v364 = vadd.f32 %v362, %v363
        %v365 = vsel %vm327, %v314, 0.0
        %v366 = vadd.f32 %v364, %v365
        %v367 = vsel %vm327, %v315, 0.0
        %v368 = vadd.f32 %v366, %v367
        %v369 = vsel %vm327, %v316, 0.0
        %v370 = vadd.f32 %v368, %v369
        %v371 = vsel %vm327, %v317, 0.0
        %v372 = vadd.f32 %v370, %v371
        %v373 = vsel %vm327, %v318, 0.0
        %v374 = vadd.f32 %v372, %v373
        %v375 = vsel %vm327, %v319, 0.0
        %v376 = vadd.f32 %v374, %v375
        %v377 = vsel %vm327, %v320, 0.0
        %v378 = vadd.f32 %v376, %v377
        %v379 = vsel %vm327, %v321, 0.0
        %v380 = vadd.f32 %v378, %v379
        %v381 = vsel %vm327, %v322, 0.0
        %v382 = vadd.f32 %v380, %v381
        %v383 = vsel %vm327, %v323, 0.0
        %v384 = vadd.f32 %v382, %v383
        %v385 = vsel %vm327, %v324, 0.0
        %v386 = vadd.f32 %v384, %v385
        %v387 = vsel %vm327, %v325, 0.0
        %v388 = vadd.f32 %v386, %v387
        %v389 = vsel %vm327, %v326, 0.0
        %v390 = vadd.f32 %v388, %v389
        %v391 = vrot.slane %v390, 4
        %v392 = vadd.f32 %v390, %v391
        %v393 = vrot.slane %v392, 2
        %v394 = vadd.f32 %v392, %v393
        %v395 = vrot.slane %v394, 1
        %v396 = vadd.f32 %v394, %v395
        %v397 = vmax.f32 %v396, 1e-24
        %v398 = vrsqrt.pop %v397
        %v399 = vmul.f32 %v231, %v398
        %v400 = vmul.f32 %v232, %v398
        %v401 = vmul.f32 %v233, %v398
        %v402 = vmul.f32 %v234, %v398
        %v403 = vmul.f32 %v235, %v398
        %v404 = vmul.f32 %v236, %v398
        %v405 = vmul.f32 %v237, %v398
        %v406 = vmul.f32 %v238, %v398
        %v407 = vmul.f32 %v239, %v398
        %v408 = vmul.f32 %v240, %v398
        %v409 = vmul.f32 %v241, %v398
        %v410 = vmul.f32 %v242, %v398
        %v411 = vmul.f32 %v243, %v398
        %v412 = vmul.f32 %v244, %v398
        %v413 = vmul.f32 %v245, %v398
        %v414 = vmul.f32 %v246, %v398
        %v415 = vmul.f32 %v247, %v398
        %v416 = vmul.f32 %v248, %v398
        %v417 = vmul.f32 %v249, %v398
        %v418 = vmul.f32 %v250, %v398
        %v419 = vmul.f32 %v251, %v398
        %v420 = vmul.f32 %v252, %v398
        %v421 = vmul.f32 %v253, %v398
        %v422 = vmul.f32 %v254, %v398
        %v423 = vmul.f32 %v255, %v398
        %v424 = vmul.f32 %v256, %v398
        %v425 = vmul.f32 %v257, %v398
        %v426 = vmul.f32 %v258, %v398
        %v427 = vmul.f32 %v259, %v398
        %v428 = vmul.f32 %v260, %v398
        %v429 = vmul.f32 %v261, %v398
        %v430 = vmul.f32 %v262, %v398
        %v431 = vmul.f32 %v263, %v263
        %v432 = vmul.f32 %v264, %v264
        %v433 = vmul.f32 %v265, %v265
        %v434 = vmul.f32 %v266, %v266
        %v435 = vmul.f32 %v267, %v267
        %v436 = vmul.f32 %v268, %v268
        %v437 = vmul.f32 %v269, %v269
        %v438 = vmul.f32 %v270, %v270
        %v439 = vmul.f32 %v271, %v271
        %v440 = vmul.f32 %v272, %v272
        %v441 = vmul.f32 %v273, %v273
        %v442 = vmul.f32 %v274, %v274
        %v443 = vmul.f32 %v275, %v275
        %v444 = vmul.f32 %v276, %v276
        %v445 = vmul.f32 %v277, %v277
        %v446 = vmul.f32 %v278, %v278
        %v447 = vmul.f32 %v279, %v279
        %v448 = vmul.f32 %v280, %v280
        %v449 = vmul.f32 %v281, %v281
        %v450 = vmul.f32 %v282, %v282
        %v451 = vmul.f32 %v283, %v283
        %v452 = vmul.f32 %v284, %v284
        %v453 = vmul.f32 %v285, %v285
        %v454 = vmul.f32 %v286, %v286
        %v455 = vmul.f32 %v287, %v287
        %v456 = vmul.f32 %v288, %v288
        %v457 = vmul.f32 %v289, %v289
        %v458 = vmul.f32 %v290, %v290
        %v459 = vmul.f32 %v291, %v291
        %v460 = vmul.f32 %v292, %v292
        %v461 = vmul.f32 %v293, %v293
        %v462 = vmul.f32 %v294, %v294
        %v463 = vsel %vm327, %v431, 0.0
        %v464 = vsel %vm327, %v432, 0.0
        %v465 = vadd.f32 %v463, %v464
        %v466 = vsel %vm327, %v433, 0.0
        %v467 = vadd.f32 %v465, %v466
        %v468 = vsel %vm327, %v434, 0.0
        %v469 = vadd.f32 %v467, %v468
        %v470 = vsel %vm327, %v435, 0.0
        %v471 = vadd.f32 %v469, %v470
        %v472 = vsel %vm327, %v436, 0.0
        %v473 = vadd.f32 %v471, %v472
        %v474 = vsel %vm327, %v437, 0.0
        %v475 = vadd.f32 %v473, %v474
        %v476 = vsel %vm327, %v438, 0.0
        %v477 = vadd.f32 %v475, %v476
        %v478 = vsel %vm327, %v439, 0.0
        %v479 = vadd.f32 %v477, %v478
        %v480 = vsel %vm327, %v440, 0.0
        %v481 = vadd.f32 %v479, %v480
        %v482 = vsel %vm327, %v441, 0.0
        %v483 = vadd.f32 %v481, %v482
        %v484 = vsel %vm327, %v442, 0.0
        %v485 = vadd.f32 %v483, %v484
        %v486 = vsel %vm327, %v443, 0.0
        %v487 = vadd.f32 %v485, %v486
        %v488 = vsel %vm327, %v444, 0.0
        %v489 = vadd.f32 %v487, %v488
        %v490 = vsel %vm327, %v445, 0.0
        %v491 = vadd.f32 %v489, %v490
        %v492 = vsel %vm327, %v446, 0.0
        %v493 = vadd.f32 %v491, %v492
        %v494 = vsel %vm327, %v447, 0.0
        %v495 = vadd.f32 %v493, %v494
        %v496 = vsel %vm327, %v448, 0.0
        %v497 = vadd.f32 %v495, %v496
        %v498 = vsel %vm327, %v449, 0.0
        %v499 = vadd.f32 %v497, %v498
        %v500 = vsel %vm327, %v450, 0.0
        %v501 = vadd.f32 %v499, %v500
        %v502 = vsel %vm327, %v451, 0.0
        %v503 = vadd.f32 %v501, %v502
        %v504 = vsel %vm327, %v452, 0.0
        %v505 = vadd.f32 %v503, %v504
        %v506 = vsel %vm327, %v453, 0.0
        %v507 = vadd.f32 %v505, %v506
        %v508 = vsel %vm327, %v454, 0.0
        %v509 = vadd.f32 %v507, %v508
        %v510 = vsel %vm327, %v455, 0.0
        %v511 = vadd.f32 %v509, %v510
        %v512 = vsel %vm327, %v456, 0.0
        %v513 = vadd.f32 %v511, %v512
        %v514 = vsel %vm327, %v457, 0.0
        %v515 = vadd.f32 %v513, %v514
        %v516 = vsel %vm327, %v458, 0.0
        %v517 = vadd.f32 %v515, %v516
        %v518 = vsel %vm327, %v459, 0.0
        %v519 = vadd.f32 %v517, %v518
        %v520 = vsel %vm327, %v460, 0.0
        %v521 = vadd.f32 %v519, %v520
        %v522 = vsel %vm327, %v461, 0.0
        %v523 = vadd.f32 %v521, %v522
        %v524 = vsel %vm327, %v462, 0.0
        %v525 = vadd.f32 %v523, %v524
        %v526 = vrot.slane %v525, 4
        %v527 = vadd.f32 %v525, %v526
        %v528 = vrot.slane %v527, 2
        %v529 = vadd.f32 %v527, %v528
        %v530 = vrot.slane %v529, 1
        %v531 = vadd.f32 %v529, %v530
        %v532 = vmax.f32 %v531, 1e-24
        %v533 = vrsqrt.pop %v532
        %v534 = vmul.f32 %v263, %v533
        %v535 = vmul.f32 %v264, %v533
        %v536 = vmul.f32 %v265, %v533
        %v537 = vmul.f32 %v266, %v533
        %v538 = vmul.f32 %v267, %v533
        %v539 = vmul.f32 %v268, %v533
        %v540 = vmul.f32 %v269, %v533
        %v541 = vmul.f32 %v270, %v533
        %v542 = vmul.f32 %v271, %v533
        %v543 = vmul.f32 %v272, %v533
        %v544 = vmul.f32 %v273, %v533
        %v545 = vmul.f32 %v274, %v533
        %v546 = vmul.f32 %v275, %v533
        %v547 = vmul.f32 %v276, %v533
        %v548 = vmul.f32 %v277, %v533
        %v549 = vmul.f32 %v278, %v533
        %v550 = vmul.f32 %v279, %v533
        %v551 = vmul.f32 %v280, %v533
        %v552 = vmul.f32 %v281, %v533
        %v553 = vmul.f32 %v282, %v533
        %v554 = vmul.f32 %v283, %v533
        %v555 = vmul.f32 %v284, %v533
        %v556 = vmul.f32 %v285, %v533
        %v557 = vmul.f32 %v286, %v533
        %v558 = vmul.f32 %v287, %v533
        %v559 = vmul.f32 %v288, %v533
        %v560 = vmul.f32 %v289, %v533
        %v561 = vmul.f32 %v290, %v533
        %v562 = vmul.f32 %v291, %v533
        %v563 = vmul.f32 %v292, %v533
        %v564 = vmul.f32 %v293, %v533
        %v565 = vmul.f32 %v294, %v533
        %566 = vxpose.xlu0.b32.start [1/16] %v399, 128
        %567 = vxpose.xlu0.b32.cont [2/16] %v400, 128
        %568 = vxpose.xlu0.b32.cont [3/16] %v401, 128
        %569 = vxpose.xlu0.b32.cont [4/16] %v402, 128
        %570 = vxpose.xlu0.b32.cont [5/16] %v403, 128
        %571 = vxpose.xlu0.b32.cont [6/16] %v404, 128
        %572 = vxpose.xlu0.b32.cont [7/16] %v405, 128
        %573 = vxpose.xlu0.b32.cont [8/16] %v406, 128
        %574 = vxpose.xlu0.b32.cont [9/16] %v407, 128
        %575 = vxpose.xlu0.b32.cont [10/16] %v408, 128
        %576 = vxpose.xlu0.b32.cont [11/16] %v409, 128
        %577 = vxpose.xlu0.b32.cont [12/16] %v410, 128
        %578 = vxpose.xlu0.b32.cont [13/16] %v411, 128
        %579 = vxpose.xlu0.b32.cont [14/16] %v412, 128
        %580 = vxpose.xlu0.b32.cont [15/16] %v413, 128
        %581 = vxpose.xlu0.b32.end [16/16] %v414, 128
        %v582 = vpop.trf.xlu0
        %v583 = vpop.trf.xlu0
        %v584 = vpop.trf.xlu0
        %v585 = vpop.trf.xlu0
        %v586 = vpop.trf.xlu0
        %v587 = vpop.trf.xlu0
        %v588 = vpop.trf.xlu0
        %v589 = vpop.trf.xlu0
        %v590 = vpop.trf.xlu0
        %v591 = vpop.trf.xlu0
        %v592 = vpop.trf.xlu0
        %v593 = vpop.trf.xlu0
        %v594 = vpop.trf.xlu0
        %v595 = vpop.trf.xlu0
        %v596 = vpop.trf.xlu0
        %v597 = vpop.trf.xlu0
        %598 = vxpose.xlu0.b32.start [1/16] %v415, 128
        %599 = vxpose.xlu0.b32.cont [2/16] %v416, 128
        %600 = vxpose.xlu0.b32.cont [3/16] %v417, 128
        %601 = vxpose.xlu0.b32.cont [4/16] %v418, 128
        %602 = vxpose.xlu0.b32.cont [5/16] %v419, 128
        %603 = vxpose.xlu0.b32.cont [6/16] %v420, 128
        %604 = vxpose.xlu0.b32.cont [7/16] %v421, 128
        %605 = vxpose.xlu0.b32.cont [8/16] %v422, 128
        %606 = vxpose.xlu0.b32.cont [9/16] %v423, 128
        %607 = vxpose.xlu0.b32.cont [10/16] %v424, 128
        %608 = vxpose.xlu0.b32.cont [11/16] %v425, 128
        %609 = vxpose.xlu0.b32.cont [12/16] %v426, 128
        %610 = vxpose.xlu0.b32.cont [13/16] %v427, 128
        %611 = vxpose.xlu0.b32.cont [14/16] %v428, 128
        %612 = vxpose.xlu0.b32.cont [15/16] %v429, 128
        %613 = vxpose.xlu0.b32.end [16/16] %v430, 128
        %v614 = vpop.trf.xlu0
        %v615 = vpop.trf.xlu0
        %v616 = vpop.trf.xlu0
        %v617 = vpop.trf.xlu0
        %v618 = vpop.trf.xlu0
        %v619 = vpop.trf.xlu0
        %v620 = vpop.trf.xlu0
        %v621 = vpop.trf.xlu0
        %v622 = vpop.trf.xlu0
        %v623 = vpop.trf.xlu0
        %v624 = vpop.trf.xlu0
        %v625 = vpop.trf.xlu0
        %v626 = vpop.trf.xlu0
        %v627 = vpop.trf.xlu0
        %v628 = vpop.trf.xlu0
        %v629 = vpop.trf.xlu0
        %630 = vmatprep.subr.mxu0 0.0
        %631 = vmatpush1.msra.mxu0 %v534
        %632 = vmatprep.subr.mxu0 0.0
        %633 = vmatpush1.msra.mxu0 %v535
        %634 = vmatprep.subr.mxu0 0.0
        %635 = vmatpush1.msra.mxu0 %v536
        %636 = vmatprep.subr.mxu0 0.0
        %637 = vmatpush1.msra.mxu0 %v537
        %638 = vmatprep.subr.mxu0 0.0
        %639 = vmatpush1.msra.mxu0 %v538
        %640 = vmatprep.subr.mxu0 0.0
        %641 = vmatpush1.msra.mxu0 %v539
        %642 = vmatprep.subr.mxu0 0.0
        %643 = vmatpush1.msra.mxu0 %v540
        %644 = vmatprep.subr.mxu0 0.0
        %645 = vmatpush1.msra.mxu0 %v541
        %646 = vmatprep.subr.mxu0 0.0
        %647 = vmatpush1.msra.mxu0 %v542
        %648 = vmatprep.subr.mxu0 0.0
        %649 = vmatpush1.msra.mxu0 %v543
        %650 = vmatprep.subr.mxu0 0.0
        %651 = vmatpush1.msra.mxu0 %v544
        %652 = vmatprep.subr.mxu0 0.0
        %653 = vmatpush1.msra.mxu0 %v545
        %654 = vmatprep.subr.mxu0 0.0
        %655 = vmatpush1.msra.mxu0 %v546
        %656 = vmatprep.subr.mxu0 0.0
        %657 = vmatpush1.msra.mxu0 %v547
        %658 = vmatprep.subr.mxu0 0.0
        %659 = vmatpush1.msra.mxu0 %v548
        %660 = vmatprep.subr.mxu0 0.0
        %661 = vmatpush1.msra.mxu0 %v549
        %662 = vmatprep.subr.mxu0 0.0
        %663 = vmatpush1.msra.mxu0 %v550
        %664 = vmatprep.subr.mxu0 0.0
        %665 = vmatpush1.msra.mxu0 %v551
        %666 = vmatprep.subr.mxu0 0.0
        %667 = vmatpush1.msra.mxu0 %v552
        %668 = vmatprep.subr.mxu0 0.0
        %669 = vmatpush1.msra.mxu0 %v553
        %670 = vmatprep.subr.mxu0 0.0
        %671 = vmatpush1.msra.mxu0 %v554
        %672 = vmatprep.subr.mxu0 0.0
        %673 = vmatpush1.msra.mxu0 %v555
        %674 = vmatprep.subr.mxu0 0.0
        %675 = vmatpush1.msra.mxu0 %v556
        %676 = vmatprep.subr.mxu0 0.0
        %677 = vmatpush1.msra.mxu0 %v557
        %678 = vmatprep.subr.mxu0 0.0
        %679 = vmatpush1.msra.mxu0 %v558
        %680 = vmatprep.subr.mxu0 0.0
        %681 = vmatpush1.msra.mxu0 %v559
        %682 = vmatprep.subr.mxu0 0.0
        %683 = vmatpush1.msra.mxu0 %v560
        %684 = vmatprep.subr.mxu0 0.0
        %685 = vmatpush1.msra.mxu0 %v561
        %686 = vmatprep.subr.mxu0 0.0
        %687 = vmatpush1.msra.mxu0 %v562
        %688 = vmatprep.subr.mxu0 0.0
        %689 = vmatpush1.msra.mxu0 %v563
        %690 = vmatprep.subr.mxu0 0.0
        %691 = vmatpush1.msra.mxu0 %v564
        %692 = vmatprep.subr.mxu0 0.0
        %693 = vmatpush1.msra.mxu0 %v565
        %694 = vmatprep.mubr.f32.mxu0 %v614
        %695 = vmatmul.mubr.f32.gmra.mrb[0].mxu0 %v582
        %v696 = vpop.f32.mrb[0].mxu0
        %v697 = vadd.f32 0.0, %v696
        %v698 = vpop.f32.mrb[0].mxu0
        %699 = vdwg.mxu0
        %s700 = sld [smem:[#allocation3]]
        %v701 = vstv %s700
        %v702 = vmul.f32 %v697, %v701
        %vm703 = vcmask 64512
        %v704 = vsel %vm703, %v702, -inf
        %705 = vmax.xlane.f32.xlu0 %v704
        %v706 = vpop.xlane.xlu0 %705
        %v707 = vsub.f32 %v702, %v706
        %v708 = vmul.f32 %v707, 1.442695
        %v709 = vpow.pop %v708
        %v710 = vsel %vm703, %v709, 0.0
        %711 = vadd.xlane.f32.xlu0 %v710
        %v712 = vpop.xlane.xlu0 %711
        %v713 = vrcp.pop %v712
        %v714 = vmul.f32 %v709, %v713
        %747 = vrot.lane.b32.xlu0 %v263, 96
        %v748 = vpop.permute.xlu0 %747
        %749 = vrot.lane.b32.xlu0 %v264, 96
        %v750 = vpop.permute.xlu0 %749
        %751 = vrot.lane.b32.xlu0 %v265, 96
        %v752 = vpop.permute.xlu0 %751
        %753 = vrot.lane.b32.xlu0 %v266, 96
        %v754 = vpop.permute.xlu0 %753
        %755 = vrot.lane.b32.xlu0 %v267, 96
        %v756 = vpop.permute.xlu0 %755
        %757 = vrot.lane.b32.xlu0 %v268, 96
        %v758 = vpop.permute.xlu0 %757
        %759 = vrot.lane.b32.xlu0 %v269, 96
        %v760 = vpop.permute.xlu0 %759
        %761 = vrot.lane.b32.xlu0 %v270, 96
        %v762 = vpop.permute.xlu0 %761
        %763 = vrot.lane.b32.xlu0 %v271, 96
        %v764 = vpop.permute.xlu0 %763
        %765 = vrot.lane.b32.xlu0 %v272, 96
        %v766 = vpop.permute.xlu0 %765
        %767 = vrot.lane.b32.xlu0 %v273, 96
        %v768 = vpop.permute.xlu0 %767
        %769 = vrot.lane.b32.xlu0 %v274, 96
        %v770 = vpop.permute.xlu0 %769
        %771 = vrot.lane.b32.xlu0 %v275, 96
        %v772 = vpop.permute.xlu0 %771
        %773 = vrot.lane.b32.xlu0 %v276, 96
        %v774 = vpop.permute.xlu0 %773
        %775 = vrot.lane.b32.xlu0 %v277, 96
        %v776 = vpop.permute.xlu0 %775
        %777 = vrot.lane.b32.xlu0 %v278, 96
        %v778 = vpop.permute.xlu0 %777
        %779 = vrot.lane.b32.xlu0 %v279, 96
        %v780 = vpop.permute.xlu0 %779
        %781 = vrot.lane.b32.xlu0 %v280, 96
        %v782 = vpop.permute.xlu0 %781
        %783 = vrot.lane.b32.xlu0 %v281, 96
        %v784 = vpop.permute.xlu0 %783
        %785 = vrot.lane.b32.xlu0 %v282, 96
        %v786 = vpop.permute.xlu0 %785
        %787 = vrot.lane.b32.xlu0 %v283, 96
        %v788 = vpop.permute.xlu0 %787
        %789 = vrot.lane.b32.xlu0 %v284, 96
        %v790 = vpop.permute.xlu0 %789
        %791 = vrot.lane.b32.xlu0 %v285, 96
        %v792 = vpop.permute.xlu0 %791
        %793 = vrot.lane.b32.xlu0 %v286, 96
        %v794 = vpop.permute.xlu0 %793
        %795 = vrot.lane.b32.xlu0 %v287, 96
        %v796 = vpop.permute.xlu0 %795
        %797 = vrot.lane.b32.xlu0 %v288, 96
        %v798 = vpop.permute.xlu0 %797
        %799 = vrot.lane.b32.xlu0 %v289, 96
        %v800 = vpop.permute.xlu0 %799
        %801 = vrot.lane.b32.xlu0 %v290, 96
        %v802 = vpop.permute.xlu0 %801
        %803 = vrot.lane.b32.xlu0 %v291, 96
        %v804 = vpop.permute.xlu0 %803
        %805 = vrot.lane.b32.xlu0 %v292, 96
        %v806 = vpop.permute.xlu0 %805
        %807 = vrot.lane.b32.xlu0 %v293, 96
        %v808 = vpop.permute.xlu0 %807
        %809 = vrot.lane.b32.xlu0 %v294, 96
        %v810 = vpop.permute.xlu0 %809
        %v811 = vsel %vm703, %v748, 0
        %v813 = vsel %vm703, %v750, 0
        %v815 = vsel %vm703, %v752, 0
        %v817 = vsel %vm703, %v754, 0
        %v819 = vsel %vm703, %v756, 0
        %v821 = vsel %vm703, %v758, 0
        %v823 = vsel %vm703, %v760, 0
        %v825 = vsel %vm703, %v762, 0
        %v827 = vsel %vm703, %v764, 0
        %v829 = vsel %vm703, %v766, 0
        %v831 = vsel %vm703, %v768, 0
        %v833 = vsel %vm703, %v770, 0
        %v835 = vsel %vm703, %v772, 0
        %v837 = vsel %vm703, %v774, 0
        %v839 = vsel %vm703, %v776, 0
        %v841 = vsel %vm703, %v778, 0
        %v843 = vsel %vm703, %v780, 0
        %v845 = vsel %vm703, %v782, 0
        %v847 = vsel %vm703, %v784, 0
        %v849 = vsel %vm703, %v786, 0
        %v851 = vsel %vm703, %v788, 0
        %v853 = vsel %vm703, %v790, 0
        %v855 = vsel %vm703, %v792, 0
        %v857 = vsel %vm703, %v794, 0
        %v859 = vsel %vm703, %v796, 0
        %v861 = vsel %vm703, %v798, 0
        %v863 = vsel %vm703, %v800, 0
        %v865 = vsel %vm703, %v802, 0
        %v867 = vsel %vm703, %v804, 0
        %v869 = vsel %vm703, %v806, 0
        %v871 = vsel %vm703, %v808, 0
        %v873 = vsel %vm703, %v810, 0
        %v876 = vsel %vm703, %v714, 0
        %878 = vmatprep.subr.mxu0 0.0
        %879 = vmatpush1.xpose.msra.mxu0 %v876
        %880 = vmatprep.subr.mxu0 0.0
        %881 = vmatpush1.xpose.msra.mxu0 0.0
        %882 = vmatprep.subr.mxu0 0.0
        %883 = vmatpush1.xpose.msra.mxu0 0.0
        %884 = vmatprep.subr.mxu0 0.0
        %885 = vmatpush1.xpose.msra.mxu0 0.0
        %886 = vmatprep.subr.mxu0 0.0
        %887 = vmatpush1.xpose.msra.mxu0 0.0
        %888 = vmatprep.subr.mxu0 0.0
        %889 = vmatpush1.xpose.msra.mxu0 0.0
        %890 = vmatprep.subr.mxu0 0.0
        %891 = vmatpush1.xpose.msra.mxu0 0.0
        %892 = vmatprep.subr.mxu0 0.0
        %893 = vmatpush1.xpose.msra.mxu0 0.0
        %894 = vmatprep.subr.mxu0 0.0
        %895 = vmatpush1.xpose.msra.mxu0 0.0
        %896 = vmatprep.subr.mxu0 0.0
        %897 = vmatpush1.xpose.msra.mxu0 0.0
        %898 = vmatprep.subr.mxu0 0.0
        %899 = vmatpush1.xpose.msra.mxu0 0.0
        %900 = vmatprep.subr.mxu0 0.0
        %901 = vmatpush1.xpose.msra.mxu0 0.0
        %902 = vmatprep.subr.mxu0 0.0
        %903 = vmatpush1.xpose.msra.mxu0 0.0
        %904 = vmatprep.subr.mxu0 0.0
        %905 = vmatpush1.xpose.msra.mxu0 0.0
        %906 = vmatprep.subr.mxu0 0.0
        %907 = vmatpush1.xpose.msra.mxu0 0.0
        %908 = vmatprep.subr.mxu0 0.0
        %909 = vmatpush1.xpose.msra.mxu0 0.0
        %910 = vmatprep.subr.mxu0 0.0
        %911 = vmatpush1.xpose.msra.mxu0 0.0
        %912 = vmatprep.subr.mxu0 0.0
        %913 = vmatpush1.xpose.msra.mxu0 0.0
        %914 = vmatprep.subr.mxu0 0.0
        %915 = vmatpush1.xpose.msra.mxu0 0.0
        %916 = vmatprep.subr.mxu0 0.0
        %917 = vmatpush1.xpose.msra.mxu0 0.0
        %918 = vmatprep.subr.mxu0 0.0
        %919 = vmatpush1.xpose.msra.mxu0 0.0
        %920 = vmatprep.subr.mxu0 0.0
        %921 = vmatpush1.xpose.msra.mxu0 0.0
        %922 = vmatprep.subr.mxu0 0.0
        %923 = vmatpush1.xpose.msra.mxu0 0.0
        %924 = vmatprep.subr.mxu0 0.0
        %925 = vmatpush1.xpose.msra.mxu0 0.0
        %926 = vmatprep.subr.mxu0 0.0
        %927 = vmatpush1.xpose.msra.mxu0 0.0
        %928 = vmatprep.subr.mxu0 0.0
        %929 = vmatpush1.xpose.msra.mxu0 0.0
        %930 = vmatprep.subr.mxu0 0.0
        %931 = vmatpush1.xpose.msra.mxu0 0.0
        %932 = vmatprep.subr.mxu0 0.0
        %933 = vmatpush1.xpose.msra.mxu0 0.0
        %934 = vmatprep.subr.mxu0 0.0
        %935 = vmatpush1.xpose.msra.mxu0 0.0
        %936 = vmatprep.subr.mxu0 0.0
        %937 = vmatpush1.xpose.msra.mxu0 0.0
        %938 = vmatprep.subr.mxu0 0.0
        %939 = vmatpush1.xpose.msra.mxu0 0.0
        %940 = vmatprep.subr.mxu0 0.0
        %941 = vmatpush1.xpose.msra.mxu0 0.0
        %942 = vmatprep.mubr.f32.mxu0 0.0
        %943 = vmatmul.mubr.f32.gmra.mrb[0].mxu0 %v811
        %v944 = vpop.f32.mrb[0].mxu0
        %v945 = vadd.f32 0.0, %v944
        %v946 = vpop.f32.mrb[0].mxu0
        %947 = vmatprep.mubr.f32.mxu0 0.0
        %948 = vmatmul.mubr.f32.gmra.mrb[0].mxu0 %v813
        %v949 = vpop.f32.mrb[0].mxu0
        %v950 = vadd.f32 0.0, %v949
        %v951 = vpop.f32.mrb[0].mxu0
        %952 = vmatprep.mubr.f32.mxu0 0.0
        %953 = vmatmul.mubr.f32.gmra.mrb[0].mxu0 %v815
        %v954 = vpop.f32.mrb[0].mxu0
        %v955 = vadd.f32 0.0, %v954
        %v956 = vpop.f32.mrb[0].mxu0
        %957 = vmatprep.mubr.f32.mxu0 0.0
        %958 = vmatmul.mubr.f32.gmra.mrb[0].mxu0 %v817
        %v959 = vpop.f32.mrb[0].mxu0
        %v960 = vadd.f32 0.0, %v959
        %v961 = vpop.f32.mrb[0].mxu0
        %962 = vmatprep.mubr.f32.mxu0 0.0
        %963 = vmatmul.mubr.f32.gmra.mrb[0].mxu0 %v819
        %v964 = vpop.f32.mrb[0].mxu0
        %v965 = vadd.f32 0.0, %v964
        %v966 = vpop.f32.mrb[0].mxu0
        %967 = vmatprep.mubr.f32.mxu0 0.0
        %968 = vmatmul.mubr.f32.gmra.mrb[0].mxu0 %v821
        %v969 = vpop.f32.mrb[0].mxu0
        %v970 = vadd.f32 0.0, %v969
        %v971 = vpop.f32.mrb[0].mxu0
        %972 = vmatprep.mubr.f32.mxu0 0.0
        %973 = vmatmul.mubr.f32.gmra.mrb[0].mxu0 %v823
        %v974 = vpop.f32.mrb[0].mxu0
        %v975 = vadd.f32 0.0, %v974
        %v976 = vpop.f32.mrb[0].mxu0
        %977 = vmatprep.mubr.f32.mxu0 0.0
        %978 = vmatmul.mubr.f32.gmra.mrb[0].mxu0 %v825
        %v979 = vpop.f32.mrb[0].mxu0
        %v980 = vadd.f32 0.0, %v979
        %v981 = vpop.f32.mrb[0].mxu0
        %982 = vmatprep.mubr.f32.mxu0 0.0
        %983 = vmatmul.mubr.f32.gmra.mrb[0].mxu0 %v827
        %v984 = vpop.f32.mrb[0].mxu0
        %v985 = vadd.f32 0.0, %v984
        %v986 = vpop.f32.mrb[0].mxu0
        %987 = vmatprep.mubr.f32.mxu0 0.0
        %988 = vmatmul.mubr.f32.gmra.mrb[0].mxu0 %v829
        %v989 = vpop.f32.mrb[0].mxu0
        %v990 = vadd.f32 0.0, %v989
        %v991 = vpop.f32.mrb[0].mxu0
        %992 = vmatprep.mubr.f32.mxu0 0.0
        %993 = vmatmul.mubr.f32.gmra.mrb[0].mxu0 %v831
        %v994 = vpop.f32.mrb[0].mxu0
        %v995 = vadd.f32 0.0, %v994
        %v996 = vpop.f32.mrb[0].mxu0
        %997 = vmatprep.mubr.f32.mxu0 0.0
        %998 = vmatmul.mubr.f32.gmra.mrb[0].mxu0 %v833
        %v999 = vpop.f32.mrb[0].mxu0
        %v1000 = vadd.f32 0.0, %v999
        %v1001 = vpop.f32.mrb[0].mxu0
        %1002 = vmatprep.mubr.f32.mxu0 0.0
        %1003 = vmatmul.mubr.f32.gmra.mrb[0].mxu0 %v835
        %v1004 = vpop.f32.mrb[0].mxu0
        %v1005 = vadd.f32 0.0, %v1004
        %v1006 = vpop.f32.mrb[0].mxu0
        %1007 = vmatprep.mubr.f32.mxu0 0.0
        %1008 = vmatmul.mubr.f32.gmra.mrb[0].mxu0 %v837
        %v1009 = vpop.f32.mrb[0].mxu0
        %v1010 = vadd.f32 0.0, %v1009
        %v1011 = vpop.f32.mrb[0].mxu0
        %1012 = vmatprep.mubr.f32.mxu0 0.0
        %1013 = vmatmul.mubr.f32.gmra.mrb[0].mxu0 %v839
        %v1014 = vpop.f32.mrb[0].mxu0
        %v1015 = vadd.f32 0.0, %v1014
        %v1016 = vpop.f32.mrb[0].mxu0
        %1017 = vmatprep.mubr.f32.mxu0 0.0
        %1018 = vmatmul.mubr.f32.gmra.mrb[0].mxu0 %v841
        %v1019 = vpop.f32.mrb[0].mxu0
        %v1020 = vadd.f32 0.0, %v1019
        %v1021 = vpop.f32.mrb[0].mxu0
        %1022 = vmatprep.mubr.f32.mxu0 0.0
        %1023 = vmatmul.mubr.f32.gmra.mrb[0].mxu0 %v843
        %v1024 = vpop.f32.mrb[0].mxu0
        %v1025 = vadd.f32 0.0, %v1024
        %v1026 = vpop.f32.mrb[0].mxu0
        %1027 = vmatprep.mubr.f32.mxu0 0.0
        %1028 = vmatmul.mubr.f32.gmra.mrb[0].mxu0 %v845
        %v1029 = vpop.f32.mrb[0].mxu0
        %v1030 = vadd.f32 0.0, %v1029
        %v1031 = vpop.f32.mrb[0].mxu0
        %1032 = vmatprep.mubr.f32.mxu0 0.0
        %1033 = vmatmul.mubr.f32.gmra.mrb[0].mxu0 %v847
        %v1034 = vpop.f32.mrb[0].mxu0
        %v1035 = vadd.f32 0.0, %v1034
        %v1036 = vpop.f32.mrb[0].mxu0
        %1037 = vmatprep.mubr.f32.mxu0 0.0
        %1038 = vmatmul.mubr.f32.gmra.mrb[0].mxu0 %v849
        %v1039 = vpop.f32.mrb[0].mxu0
        %v1040 = vadd.f32 0.0, %v1039
        %v1041 = vpop.f32.mrb[0].mxu0
        %1042 = vmatprep.mubr.f32.mxu0 0.0
        %1043 = vmatmul.mubr.f32.gmra.mrb[0].mxu0 %v851
        %v1044 = vpop.f32.mrb[0].mxu0
        %v1045 = vadd.f32 0.0, %v1044
        %v1046 = vpop.f32.mrb[0].mxu0
        %1047 = vmatprep.mubr.f32.mxu0 0.0
        %1048 = vmatmul.mubr.f32.gmra.mrb[0].mxu0 %v853
        %v1049 = vpop.f32.mrb[0].mxu0
        %v1050 = vadd.f32 0.0, %v1049
        %v1051 = vpop.f32.mrb[0].mxu0
        %1052 = vmatprep.mubr.f32.mxu0 0.0
        %1053 = vmatmul.mubr.f32.gmra.mrb[0].mxu0 %v855
        %v1054 = vpop.f32.mrb[0].mxu0
        %v1055 = vadd.f32 0.0, %v1054
        %v1056 = vpop.f32.mrb[0].mxu0
        %1057 = vmatprep.mubr.f32.mxu0 0.0
        %1058 = vmatmul.mubr.f32.gmra.mrb[0].mxu0 %v857
        %v1059 = vpop.f32.mrb[0].mxu0
        %v1060 = vadd.f32 0.0, %v1059
        %v1061 = vpop.f32.mrb[0].mxu0
        %1062 = vmatprep.mubr.f32.mxu0 0.0
        %1063 = vmatmul.mubr.f32.gmra.mrb[0].mxu0 %v859
        %v1064 = vpop.f32.mrb[0].mxu0
        %v1065 = vadd.f32 0.0, %v1064
        %v1066 = vpop.f32.mrb[0].mxu0
        %1067 = vmatprep.mubr.f32.mxu0 0.0
        %1068 = vmatmul.mubr.f32.gmra.mrb[0].mxu0 %v861
        %v1069 = vpop.f32.mrb[0].mxu0
        %v1070 = vadd.f32 0.0, %v1069
        %v1071 = vpop.f32.mrb[0].mxu0
        %1072 = vmatprep.mubr.f32.mxu0 0.0
        %1073 = vmatmul.mubr.f32.gmra.mrb[0].mxu0 %v863
        %v1074 = vpop.f32.mrb[0].mxu0
        %v1075 = vadd.f32 0.0, %v1074
        %v1076 = vpop.f32.mrb[0].mxu0
        %1077 = vmatprep.mubr.f32.mxu0 0.0
        %1078 = vmatmul.mubr.f32.gmra.mrb[0].mxu0 %v865
        %v1079 = vpop.f32.mrb[0].mxu0
        %v1080 = vadd.f32 0.0, %v1079
        %v1081 = vpop.f32.mrb[0].mxu0
        %1082 = vmatprep.mubr.f32.mxu0 0.0
        %1083 = vmatmul.mubr.f32.gmra.mrb[0].mxu0 %v867
        %v1084 = vpop.f32.mrb[0].mxu0
        %v1085 = vadd.f32 0.0, %v1084
        %v1086 = vpop.f32.mrb[0].mxu0
        %1087 = vmatprep.mubr.f32.mxu0 0.0
        %1088 = vmatmul.mubr.f32.gmra.mrb[0].mxu0 %v869
        %v1089 = vpop.f32.mrb[0].mxu0
        %v1090 = vadd.f32 0.0, %v1089
        %v1091 = vpop.f32.mrb[0].mxu0
        %1092 = vmatprep.mubr.f32.mxu0 0.0
        %1093 = vmatmul.mubr.f32.gmra.mrb[0].mxu0 %v871
        %v1094 = vpop.f32.mrb[0].mxu0
        %v1095 = vadd.f32 0.0, %v1094
        %v1096 = vpop.f32.mrb[0].mxu0
        %1097 = vmatprep.mubr.f32.mxu0 0.0
        %1098 = vmatmul.mubr.f32.gmra.mrb[0].mxu0 %v873
        %v1099 = vpop.f32.mrb[0].mxu0
        %v1100 = vadd.f32 0.0, %v1099
        %v1101 = vpop.f32.mrb[0].mxu0
        %1102 = vdwg.mxu0
        %1103 = vst.msk [vmem:[#allocation2] sm:$0xff] %vm703, %v945
        %1104 = vst.msk [vmem:[#allocation2 + $0x8] sm:$0xff] %vm703, %v950
        %1105 = vst.msk [vmem:[#allocation2 + $0x10] sm:$0xff] %vm703, %v955
        %1106 = vst.msk [vmem:[#allocation2 + $0x18] sm:$0xff] %vm703, %v960
        %1107 = vst.msk [vmem:[#allocation2 + $0x20] sm:$0xff] %vm703, %v965
        %1108 = vst.msk [vmem:[#allocation2 + $0x28] sm:$0xff] %vm703, %v970
        %1109 = vst.msk [vmem:[#allocation2 + $0x30] sm:$0xff] %vm703, %v975
        %1110 = vst.msk [vmem:[#allocation2 + $0x38] sm:$0xff] %vm703, %v980
        %1111 = vst.msk [vmem:[#allocation2 + $0x40] sm:$0xff] %vm703, %v985
        %1112 = vst.msk [vmem:[#allocation2 + $0x48] sm:$0xff] %vm703, %v990
        %1113 = vst.msk [vmem:[#allocation2 + $0x50] sm:$0xff] %vm703, %v995
        %1114 = vst.msk [vmem:[#allocation2 + $0x58] sm:$0xff] %vm703, %v1000
        %1115 = vst.msk [vmem:[#allocation2 + $0x60] sm:$0xff] %vm703, %v1005
        %1116 = vst.msk [vmem:[#allocation2 + $0x68] sm:$0xff] %vm703, %v1010
        %1117 = vst.msk [vmem:[#allocation2 + $0x70] sm:$0xff] %vm703, %v1015
        %1118 = vst.msk [vmem:[#allocation2 + $0x78] sm:$0xff] %vm703, %v1020
        %1119 = vst.msk [vmem:[#allocation2 + $0x80] sm:$0xff] %vm703, %v1025
        %1120 = vst.msk [vmem:[#allocation2 + $0x88] sm:$0xff] %vm703, %v1030
        %1121 = vst.msk [vmem:[#allocation2 + $0x90] sm:$0xff] %vm703, %v1035
        %1122 = vst.msk [vmem:[#allocation2 + $0x98] sm:$0xff] %vm703, %v1040
        %1123 = vst.msk [vmem:[#allocation2 + $0xa0] sm:$0xff] %vm703, %v1045
        %1124 = vst.msk [vmem:[#allocation2 + $0xa8] sm:$0xff] %vm703, %v1050
        %1125 = vst.msk [vmem:[#allocation2 + $0xb0] sm:$0xff] %vm703, %v1055
        %1126 = vst.msk [vmem:[#allocation2 + $0xb8] sm:$0xff] %vm703, %v1060
        %1127 = vst.msk [vmem:[#allocation2 + $0xc0] sm:$0xff] %vm703, %v1065
        %1128 = vst.msk [vmem:[#allocation2 + $0xc8] sm:$0xff] %vm703, %v1070
        %1129 = vst.msk [vmem:[#allocation2 + $0xd0] sm:$0xff] %vm703, %v1075
        %1130 = vst.msk [vmem:[#allocation2 + $0xd8] sm:$0xff] %vm703, %v1080
        %1131 = vst.msk [vmem:[#allocation2 + $0xe0] sm:$0xff] %vm703, %v1085
        %1132 = vst.msk [vmem:[#allocation2 + $0xe8] sm:$0xff] %vm703, %v1090
        %1133 = vst.msk [vmem:[#allocation2 + $0xf0] sm:$0xff] %vm703, %v1095
        %1134 = vst.msk [vmem:[#allocation2 + $0xf8] sm:$0xff] %vm703, %v1100
        %1167 = vrot.lane.b32.xlu0 %v399, 120
        %v1168 = vpop.permute.xlu0 %1167
        %1169 = vrot.lane.b32.xlu0 %v400, 120
        %v1170 = vpop.permute.xlu0 %1169
        %1171 = vrot.lane.b32.xlu0 %v401, 120
        %v1172 = vpop.permute.xlu0 %1171
        %1173 = vrot.lane.b32.xlu0 %v402, 120
        %v1174 = vpop.permute.xlu0 %1173
        %1175 = vrot.lane.b32.xlu0 %v403, 120
        %v1176 = vpop.permute.xlu0 %1175
        %1177 = vrot.lane.b32.xlu0 %v404, 120
        %v1178 = vpop.permute.xlu0 %1177
        %1179 = vrot.lane.b32.xlu0 %v405, 120
        %v1180 = vpop.permute.xlu0 %1179
        %1181 = vrot.lane.b32.xlu0 %v406, 120
        %v1182 = vpop.permute.xlu0 %1181
        %1183 = vrot.lane.b32.xlu0 %v407, 120
        %v1184 = vpop.permute.xlu0 %1183
        %1185 = vrot.lane.b32.xlu0 %v408, 120
        %v1186 = vpop.permute.xlu0 %1185
        %1187 = vrot.lane.b32.xlu0 %v409, 120
        %v1188 = vpop.permute.xlu0 %1187
        %1189 = vrot.lane.b32.xlu0 %v410, 120
        %v1190 = vpop.permute.xlu0 %1189
        %1191 = vrot.lane.b32.xlu0 %v411, 120
        %v1192 = vpop.permute.xlu0 %1191
        %1193 = vrot.lane.b32.xlu0 %v412, 120
        %v1194 = vpop.permute.xlu0 %1193
        %1195 = vrot.lane.b32.xlu0 %v413, 120
        %v1196 = vpop.permute.xlu0 %1195
        %1197 = vrot.lane.b32.xlu0 %v414, 120
        %v1198 = vpop.permute.xlu0 %1197
        %1199 = vrot.lane.b32.xlu0 %v415, 120
        %v1200 = vpop.permute.xlu0 %1199
        %1201 = vrot.lane.b32.xlu0 %v416, 120
        %v1202 = vpop.permute.xlu0 %1201
        %1203 = vrot.lane.b32.xlu0 %v417, 120
        %v1204 = vpop.permute.xlu0 %1203
        %1205 = vrot.lane.b32.xlu0 %v418, 120
        %v1206 = vpop.permute.xlu0 %1205
        %1207 = vrot.lane.b32.xlu0 %v419, 120
        %v1208 = vpop.permute.xlu0 %1207
        %1209 = vrot.lane.b32.xlu0 %v420, 120
        %v1210 = vpop.permute.xlu0 %1209
        %1211 = vrot.lane.b32.xlu0 %v421, 120
        %v1212 = vpop.permute.xlu0 %1211
        %1213 = vrot.lane.b32.xlu0 %v422, 120
        %v1214 = vpop.permute.xlu0 %1213
        %1215 = vrot.lane.b32.xlu0 %v423, 120
        %v1216 = vpop.permute.xlu0 %1215
        %1217 = vrot.lane.b32.xlu0 %v424, 120
        %v1218 = vpop.permute.xlu0 %1217
        %1219 = vrot.lane.b32.xlu0 %v425, 120
        %v1220 = vpop.permute.xlu0 %1219
        %1221 = vrot.lane.b32.xlu0 %v426, 120
        %v1222 = vpop.permute.xlu0 %1221
        %1223 = vrot.lane.b32.xlu0 %v427, 120
        %v1224 = vpop.permute.xlu0 %1223
        %1225 = vrot.lane.b32.xlu0 %v428, 120
        %v1226 = vpop.permute.xlu0 %1225
        %1227 = vrot.lane.b32.xlu0 %v429, 120
        %v1228 = vpop.permute.xlu0 %1227
        %1229 = vrot.lane.b32.xlu0 %v430, 120
        %v1230 = vpop.permute.xlu0 %1229
        %1263 = vxpose.xlu0.b32.start [1/16] %v1168, 128
        %1264 = vxpose.xlu0.b32.cont [2/16] %v1170, 128
        %1265 = vxpose.xlu0.b32.cont [3/16] %v1172, 128
        %1266 = vxpose.xlu0.b32.cont [4/16] %v1174, 128
        %1267 = vxpose.xlu0.b32.cont [5/16] %v1176, 128
        %1268 = vxpose.xlu0.b32.cont [6/16] %v1178, 128
        %1269 = vxpose.xlu0.b32.cont [7/16] %v1180, 128
        %1270 = vxpose.xlu0.b32.cont [8/16] %v1182, 128
        %1271 = vxpose.xlu0.b32.cont [9/16] %v1184, 128
        %1272 = vxpose.xlu0.b32.cont [10/16] %v1186, 128
        %1273 = vxpose.xlu0.b32.cont [11/16] %v1188, 128
        %1274 = vxpose.xlu0.b32.cont [12/16] %v1190, 128
        %1275 = vxpose.xlu0.b32.cont [13/16] %v1192, 128
        %1276 = vxpose.xlu0.b32.cont [14/16] %v1194, 128
        %1277 = vxpose.xlu0.b32.cont [15/16] %v1196, 128
        %1278 = vxpose.xlu0.b32.end [16/16] %v1198, 128
        %v1279 = vpop.trf.xlu0
        %v1280 = vpop.trf.xlu0
        %v1281 = vpop.trf.xlu0
        %v1282 = vpop.trf.xlu0
        %v1283 = vpop.trf.xlu0
        %v1284 = vpop.trf.xlu0
        %v1285 = vpop.trf.xlu0
        %v1286 = vpop.trf.xlu0
        %v1287 = vpop.trf.xlu0
        %v1288 = vpop.trf.xlu0
        %v1289 = vpop.trf.xlu0
        %v1290 = vpop.trf.xlu0
        %v1291 = vpop.trf.xlu0
        %v1292 = vpop.trf.xlu0
        %v1293 = vpop.trf.xlu0
        %v1294 = vpop.trf.xlu0
        %1295 = vxpose.xlu0.b32.start [1/16] %v1200, 128
        %1296 = vxpose.xlu0.b32.cont [2/16] %v1202, 128
        %1297 = vxpose.xlu0.b32.cont [3/16] %v1204, 128
        %1298 = vxpose.xlu0.b32.cont [4/16] %v1206, 128
        %1299 = vxpose.xlu0.b32.cont [5/16] %v1208, 128
        %1300 = vxpose.xlu0.b32.cont [6/16] %v1210, 128
        %1301 = vxpose.xlu0.b32.cont [7/16] %v1212, 128
        %1302 = vxpose.xlu0.b32.cont [8/16] %v1214, 128
        %1303 = vxpose.xlu0.b32.cont [9/16] %v1216, 128
        %1304 = vxpose.xlu0.b32.cont [10/16] %v1218, 128
        %1305 = vxpose.xlu0.b32.cont [11/16] %v1220, 128
        %1306 = vxpose.xlu0.b32.cont [12/16] %v1222, 128
        %1307 = vxpose.xlu0.b32.cont [13/16] %v1224, 128
        %1308 = vxpose.xlu0.b32.cont [14/16] %v1226, 128
        %1309 = vxpose.xlu0.b32.cont [15/16] %v1228, 128
        %1310 = vxpose.xlu0.b32.end [16/16] %v1230, 128
        %v1311 = vpop.trf.xlu0
        %v1312 = vpop.trf.xlu0
        %v1313 = vpop.trf.xlu0
        %v1314 = vpop.trf.xlu0
        %v1315 = vpop.trf.xlu0
        %v1316 = vpop.trf.xlu0
        %v1317 = vpop.trf.xlu0
        %v1318 = vpop.trf.xlu0
        %v1319 = vpop.trf.xlu0
        %v1320 = vpop.trf.xlu0
        %v1321 = vpop.trf.xlu0
        %v1322 = vpop.trf.xlu0
        %v1323 = vpop.trf.xlu0
        %v1324 = vpop.trf.xlu0
        %v1325 = vpop.trf.xlu0
        %v1326 = vpop.trf.xlu0
        %1359 = vrot.lane.b32.xlu0 %v534, 120
        %v1360 = vpop.permute.xlu0 %1359
        %1361 = vrot.lane.b32.xlu0 %v535, 120
        %v1362 = vpop.permute.xlu0 %1361
        %1363 = vrot.lane.b32.xlu0 %v536, 120
        %v1364 = vpop.permute.xlu0 %1363
        %1365 = vrot.lane.b32.xlu0 %v537, 120
        %v1366 = vpop.permute.xlu0 %1365
        %1367 = vrot.lane.b32.xlu0 %v538, 120
        %v1368 = vpop.permute.xlu0 %1367
        %1369 = vrot.lane.b32.xlu0 %v539, 120
        %v1370 = vpop.permute.xlu0 %1369
        %1371 = vrot.lane.b32.xlu0 %v540, 120
        %v1372 = vpop.permute.xlu0 %1371
        %1373 = vrot.lane.b32.xlu0 %v541, 120
        %v1374 = vpop.permute.xlu0 %1373
        %1375 = vrot.lane.b32.xlu0 %v542, 120
        %v1376 = vpop.permute.xlu0 %1375
        %1377 = vrot.lane.b32.xlu0 %v543, 120
        %v1378 = vpop.permute.xlu0 %1377
        %1379 = vrot.lane.b32.xlu0 %v544, 120
        %v1380 = vpop.permute.xlu0 %1379
        %1381 = vrot.lane.b32.xlu0 %v545, 120
        %v1382 = vpop.permute.xlu0 %1381
        %1383 = vrot.lane.b32.xlu0 %v546, 120
        %v1384 = vpop.permute.xlu0 %1383
        %1385 = vrot.lane.b32.xlu0 %v547, 120
        %v1386 = vpop.permute.xlu0 %1385
        %1387 = vrot.lane.b32.xlu0 %v548, 120
        %v1388 = vpop.permute.xlu0 %1387
        %1389 = vrot.lane.b32.xlu0 %v549, 120
        %v1390 = vpop.permute.xlu0 %1389
        %1391 = vrot.lane.b32.xlu0 %v550, 120
        %v1392 = vpop.permute.xlu0 %1391
        %1393 = vrot.lane.b32.xlu0 %v551, 120
        %v1394 = vpop.permute.xlu0 %1393
        %1395 = vrot.lane.b32.xlu0 %v552, 120
        %v1396 = vpop.permute.xlu0 %1395
        %1397 = vrot.lane.b32.xlu0 %v553, 120
        %v1398 = vpop.permute.xlu0 %1397
        %1399 = vrot.lane.b32.xlu0 %v554, 120
        %v1400 = vpop.permute.xlu0 %1399
        %1401 = vrot.lane.b32.xlu0 %v555, 120
        %v1402 = vpop.permute.xlu0 %1401
        %1403 = vrot.lane.b32.xlu0 %v556, 120
        %v1404 = vpop.permute.xlu0 %1403
        %1405 = vrot.lane.b32.xlu0 %v557, 120
        %v1406 = vpop.permute.xlu0 %1405
        %1407 = vrot.lane.b32.xlu0 %v558, 120
        %v1408 = vpop.permute.xlu0 %1407
        %1409 = vrot.lane.b32.xlu0 %v559, 120
        %v1410 = vpop.permute.xlu0 %1409
        %1411 = vrot.lane.b32.xlu0 %v560, 120
        %v1412 = vpop.permute.xlu0 %1411
        %1413 = vrot.lane.b32.xlu0 %v561, 120
        %v1414 = vpop.permute.xlu0 %1413
        %1415 = vrot.lane.b32.xlu0 %v562, 120
        %v1416 = vpop.permute.xlu0 %1415
        %1417 = vrot.lane.b32.xlu0 %v563, 120
        %v1418 = vpop.permute.xlu0 %1417
        %1419 = vrot.lane.b32.xlu0 %v564, 120
        %v1420 = vpop.permute.xlu0 %1419
        %1421 = vrot.lane.b32.xlu0 %v565, 120
        %v1422 = vpop.permute.xlu0 %1421
        %1455 = vmatprep.subr.mxu0 0.0
        %1456 = vmatpush1.msra.mxu0 %v1360
        %1457 = vmatprep.subr.mxu0 0.0
        %1458 = vmatpush1.msra.mxu0 %v1362
        %1459 = vmatprep.subr.mxu0 0.0
        %1460 = vmatpush1.msra.mxu0 %v1364
        %1461 = vmatprep.subr.mxu0 0.0
        %1462 = vmatpush1.msra.mxu0 %v1366
        %1463 = vmatprep.subr.mxu0 0.0
        %1464 = vmatpush1.msra.mxu0 %v1368
        %1465 = vmatprep.subr.mxu0 0.0
        %1466 = vmatpush1.msra.mxu0 %v1370
        %1467 = vmatprep.subr.mxu0 0.0
        %1468 = vmatpush1.msra.mxu0 %v1372
        %1469 = vmatprep.subr.mxu0 0.0
        %1470 = vmatpush1.msra.mxu0 %v1374
        %1471 = vmatprep.subr.mxu0 0.0
        %1472 = vmatpush1.msra.mxu0 %v1376
        %1473 = vmatprep.subr.mxu0 0.0
        %1474 = vmatpush1.msra.mxu0 %v1378
        %1475 = vmatprep.subr.mxu0 0.0
        %1476 = vmatpush1.msra.mxu0 %v1380
        %1477 = vmatprep.subr.mxu0 0.0
        %1478 = vmatpush1.msra.mxu0 %v1382
        %1479 = vmatprep.subr.mxu0 0.0
        %1480 = vmatpush1.msra.mxu0 %v1384
        %1481 = vmatprep.subr.mxu0 0.0
        %1482 = vmatpush1.msra.mxu0 %v1386
        %1483 = vmatprep.subr.mxu0 0.0
        %1484 = vmatpush1.msra.mxu0 %v1388
        %1485 = vmatprep.subr.mxu0 0.0
        %1486 = vmatpush1.msra.mxu0 %v1390
        %1487 = vmatprep.subr.mxu0 0.0
        %1488 = vmatpush1.msra.mxu0 %v1392
        %1489 = vmatprep.subr.mxu0 0.0
        %1490 = vmatpush1.msra.mxu0 %v1394
        %1491 = vmatprep.subr.mxu0 0.0
        %1492 = vmatpush1.msra.mxu0 %v1396
        %1493 = vmatprep.subr.mxu0 0.0
        %1494 = vmatpush1.msra.mxu0 %v1398
        %1495 = vmatprep.subr.mxu0 0.0
        %1496 = vmatpush1.msra.mxu0 %v1400
        %1497 = vmatprep.subr.mxu0 0.0
        %1498 = vmatpush1.msra.mxu0 %v1402
        %1499 = vmatprep.subr.mxu0 0.0
        %1500 = vmatpush1.msra.mxu0 %v1404
        %1501 = vmatprep.subr.mxu0 0.0
        %1502 = vmatpush1.msra.mxu0 %v1406
        %1503 = vmatprep.subr.mxu0 0.0
        %1504 = vmatpush1.msra.mxu0 %v1408
        %1505 = vmatprep.subr.mxu0 0.0
        %1506 = vmatpush1.msra.mxu0 %v1410
        %1507 = vmatprep.subr.mxu0 0.0
        %1508 = vmatpush1.msra.mxu0 %v1412
        %1509 = vmatprep.subr.mxu0 0.0
        %1510 = vmatpush1.msra.mxu0 %v1414
        %1511 = vmatprep.subr.mxu0 0.0
        %1512 = vmatpush1.msra.mxu0 %v1416
        %1513 = vmatprep.subr.mxu0 0.0
        %1514 = vmatpush1.msra.mxu0 %v1418
        %1515 = vmatprep.subr.mxu0 0.0
        %1516 = vmatpush1.msra.mxu0 %v1420
        %1517 = vmatprep.subr.mxu0 0.0
        %1518 = vmatpush1.msra.mxu0 %v1422
        %1519 = vmatprep.mubr.f32.mxu0 %v1311
        %1520 = vmatmul.mubr.f32.gmra.mrb[0].mxu0 %v1279
        %v1521 = vpop.f32.mrb[0].mxu0
        %v1522 = vadd.f32 0.0, %v1521
        %v1523 = vpop.f32.mrb[0].mxu0
        %1524 = vdwg.mxu0
        %s1525 = sld [smem:[#allocation3 + $0x80]]
        %v1526 = vstv %s1525
        %v1527 = vmul.f32 %v1522, %v1526
        %v1528 = vsel %vm703, %v1527, -inf
        %1529 = vmax.xlane.f32.xlu0 %v1528
        %v1530 = vpop.xlane.xlu0 %1529
        %v1531 = vsub.f32 %v1527, %v1530
        %v1532 = vmul.f32 %v1531, 1.442695
        %v1533 = vpow.pop %v1532
        %v1534 = vsel %vm703, %v1533, 0.0
        %1535 = vadd.xlane.f32.xlu0 %v1534
        %v1536 = vpop.xlane.xlu0 %1535
        %v1537 = vrcp.pop %v1536
        %v1538 = vmul.f32 %v1533, %v1537
        %1539 = vrot.lane.b32.xlu0 %v263, 88
        %v1540 = vpop.permute.xlu0 %1539
        %1541 = vrot.lane.b32.xlu0 %v264, 88
        %v1542 = vpop.permute.xlu0 %1541
        %1543 = vrot.lane.b32.xlu0 %v265, 88
        %v1544 = vpop.permute.xlu0 %1543
        %1545 = vrot.lane.b32.xlu0 %v266, 88
        %v1546 = vpop.permute.xlu0 %1545
        %1547 = vrot.lane.b32.xlu0 %v267, 88
        %v1548 = vpop.permute.xlu0 %1547
        %1549 = vrot.lane.b32.xlu0 %v268, 88
        %v1550 = vpop.permute.xlu0 %1549
        %1551 = vrot.lane.b32.xlu0 %v269, 88
        %v1552 = vpop.permute.xlu0 %1551
        %1553 = vrot.lane.b32.xlu0 %v270, 88
        %v1554 = vpop.permute.xlu0 %1553
        %1555 = vrot.lane.b32.xlu0 %v271, 88
        %v1556 = vpop.permute.xlu0 %1555
        %1557 = vrot.lane.b32.xlu0 %v272, 88
        %v1558 = vpop.permute.xlu0 %1557
        %1559 = vrot.lane.b32.xlu0 %v273, 88
        %v1560 = vpop.permute.xlu0 %1559
        %1561 = vrot.lane.b32.xlu0 %v274, 88
        %v1562 = vpop.permute.xlu0 %1561
        %1563 = vrot.lane.b32.xlu0 %v275, 88
        %v1564 = vpop.permute.xlu0 %1563
        %1565 = vrot.lane.b32.xlu0 %v276, 88
        %v1566 = vpop.permute.xlu0 %1565
        %1567 = vrot.lane.b32.xlu0 %v277, 88
        %v1568 = vpop.permute.xlu0 %1567
        %1569 = vrot.lane.b32.xlu0 %v278, 88
        %v1570 = vpop.permute.xlu0 %1569
        %1571 = vrot.lane.b32.xlu0 %v279, 88
        %v1572 = vpop.permute.xlu0 %1571
        %1573 = vrot.lane.b32.xlu0 %v280, 88
        %v1574 = vpop.permute.xlu0 %1573
        %1575 = vrot.lane.b32.xlu0 %v281, 88
        %v1576 = vpop.permute.xlu0 %1575
        %1577 = vrot.lane.b32.xlu0 %v282, 88
        %v1578 = vpop.permute.xlu0 %1577
        %1579 = vrot.lane.b32.xlu0 %v283, 88
        %v1580 = vpop.permute.xlu0 %1579
        %1581 = vrot.lane.b32.xlu0 %v284, 88
        %v1582 = vpop.permute.xlu0 %1581
        %1583 = vrot.lane.b32.xlu0 %v285, 88
        %v1584 = vpop.permute.xlu0 %1583
        %1585 = vrot.lane.b32.xlu0 %v286, 88
        %v1586 = vpop.permute.xlu0 %1585
        %1587 = vrot.lane.b32.xlu0 %v287, 88
        %v1588 = vpop.permute.xlu0 %1587
        %1589 = vrot.lane.b32.xlu0 %v288, 88
        %v1590 = vpop.permute.xlu0 %1589
        %1591 = vrot.lane.b32.xlu0 %v289, 88
        %v1592 = vpop.permute.xlu0 %1591
        %1593 = vrot.lane.b32.xlu0 %v290, 88
        %v1594 = vpop.permute.xlu0 %1593
        %1595 = vrot.lane.b32.xlu0 %v291, 88
        %v1596 = vpop.permute.xlu0 %1595
        %1597 = vrot.lane.b32.xlu0 %v292, 88
        %v1598 = vpop.permute.xlu0 %1597
        %1599 = vrot.lane.b32.xlu0 %v293, 88
        %v1600 = vpop.permute.xlu0 %1599
        %1601 = vrot.lane.b32.xlu0 %v294, 88
        %v1602 = vpop.permute.xlu0 %1601
        %v1603 = vsel %vm703, %v1540, 0
        %v1605 = vsel %vm703, %v1542, 0
        %v1607 = vsel %vm703, %v1544, 0
        %v1609 = vsel %vm703, %v1546, 0
        %v1611 = vsel %vm703, %v1548, 0
        %v1613 = vsel %vm703, %v1550, 0
        %v1615 = vsel %vm703, %v1552, 0
        %v1617 = vsel %vm703, %v1554, 0
        %v1619 = vsel %vm703, %v1556, 0
        %v1621 = vsel %vm703, %v1558, 0
        %v1623 = vsel %vm703, %v1560, 0
        %v1625 = vsel %vm703, %v1562, 0
        %v1627 = vsel %vm703, %v1564, 0
        %v1629 = vsel %vm703, %v1566, 0
        %v1631 = vsel %vm703, %v1568, 0
        %v1633 = vsel %vm703, %v1570, 0
        %v1635 = vsel %vm703, %v1572, 0
        %v1637 = vsel %vm703, %v1574, 0
        %v1639 = vsel %vm703, %v1576, 0
        %v1641 = vsel %vm703, %v1578, 0
        %v1643 = vsel %vm703, %v1580, 0
        %v1645 = vsel %vm703, %v1582, 0
        %v1647 = vsel %vm703, %v1584, 0
        %v1649 = vsel %vm703, %v1586, 0
        %v1651 = vsel %vm703, %v1588, 0
        %v1653 = vsel %vm703, %v1590, 0
        %v1655 = vsel %vm703, %v1592, 0
        %v1657 = vsel %vm703, %v1594, 0
        %v1659 = vsel %vm703, %v1596, 0
        %v1661 = vsel %vm703, %v1598, 0
        %v1663 = vsel %vm703, %v1600, 0
        %v1665 = vsel %vm703, %v1602, 0
        %v1668 = vsel %vm703, %v1538, 0
        %1670 = vmatprep.subr.mxu0 0.0
        %1671 = vmatpush1.xpose.msra.mxu0 %v1668
        %1672 = vmatprep.subr.mxu0 0.0
        %1673 = vmatpush1.xpose.msra.mxu0 0.0
        %1674 = vmatprep.subr.mxu0 0.0
        %1675 = vmatpush1.xpose.msra.mxu0 0.0
        %1676 = vmatprep.subr.mxu0 0.0
        %1677 = vmatpush1.xpose.msra.mxu0 0.0
        %1678 = vmatprep.subr.mxu0 0.0
        %1679 = vmatpush1.xpose.msra.mxu0 0.0
        %1680 = vmatprep.subr.mxu0 0.0
        %1681 = vmatpush1.xpose.msra.mxu0 0.0
        %1682 = vmatprep.subr.mxu0 0.0
        %1683 = vmatpush1.xpose.msra.mxu0 0.0
        %1684 = vmatprep.subr.mxu0 0.0
        %1685 = vmatpush1.xpose.msra.mxu0 0.0
        %1686 = vmatprep.subr.mxu0 0.0
        %1687 = vmatpush1.xpose.msra.mxu0 0.0
        %1688 = vmatprep.subr.mxu0 0.0
        %1689 = vmatpush1.xpose.msra.mxu0 0.0
        %1690 = vmatprep.subr.mxu0 0.0
        %1691 = vmatpush1.xpose.msra.mxu0 0.0
        %1692 = vmatprep.subr.mxu0 0.0
        %1693 = vmatpush1.xpose.msra.mxu0 0.0
        %1694 = vmatprep.subr.mxu0 0.0
        %1695 = vmatpush1.xpose.msra.mxu0 0.0
        %1696 = vmatprep.subr.mxu0 0.0
        %1697 = vmatpush1.xpose.msra.mxu0 0.0
        %1698 = vmatprep.subr.mxu0 0.0
        %1699 = vmatpush1.xpose.msra.mxu0 0.0
        %1700 = vmatprep.subr.mxu0 0.0
        %1701 = vmatpush1.xpose.msra.mxu0 0.0
        %1702 = vmatprep.subr.mxu0 0.0
        %1703 = vmatpush1.xpose.msra.mxu0 0.0
        %1704 = vmatprep.subr.mxu0 0.0
        %1705 = vmatpush1.xpose.msra.mxu0 0.0
        %1706 = vmatprep.subr.mxu0 0.0
        %1707 = vmatpush1.xpose.msra.mxu0 0.0
        %1708 = vmatprep.subr.mxu0 0.0
        %1709 = vmatpush1.xpose.msra.mxu0 0.0
        %1710 = vmatprep.subr.mxu0 0.0
        %1711 = vmatpush1.xpose.msra.mxu0 0.0
        %1712 = vmatprep.subr.mxu0 0.0
        %1713 = vmatpush1.xpose.msra.mxu0 0.0
        %1714 = vmatprep.subr.mxu0 0.0
        %1715 = vmatpush1.xpose.msra.mxu0 0.0
        %1716 = vmatprep.subr.mxu0 0.0
        %1717 = vmatpush1.xpose.msra.mxu0 0.0
        %1718 = vmatprep.subr.mxu0 0.0
        %1719 = vmatpush1.xpose.msra.mxu0 0.0
        %1720 = vmatprep.subr.mxu0 0.0
        %1721 = vmatpush1.xpose.msra.mxu0 0.0
        %1722 = vmatprep.subr.mxu0 0.0
        %1723 = vmatpush1.xpose.msra.mxu0 0.0
        %1724 = vmatprep.subr.mxu0 0.0
        %1725 = vmatpush1.xpose.msra.mxu0 0.0
        %1726 = vmatprep.subr.mxu0 0.0
        %1727 = vmatpush1.xpose.msra.mxu0 0.0
        %1728 = vmatprep.subr.mxu0 0.0
        %1729 = vmatpush1.xpose.msra.mxu0 0.0
        %1730 = vmatprep.subr.mxu0 0.0
        %1731 = vmatpush1.xpose.msra.mxu0 0.0
        %1732 = vmatprep.subr.mxu0 0.0
        %1733 = vmatpush1.xpose.msra.mxu0 0.0
        %1734 = vmatprep.mubr.f32.mxu0 0.0
        %1735 = vmatmul.mubr.f32.gmra.mrb[0].mxu0 %v1603
        %v1736 = vpop.f32.mrb[0].mxu0
        %v1737 = vadd.f32 0.0, %v1736
        %v1738 = vpop.f32.mrb[0].mxu0
        %1739 = vmatprep.mubr.f32.mxu0 0.0
        %1740 = vmatmul.mubr.f32.gmra.mrb[0].mxu0 %v1605
        %v1741 = vpop.f32.mrb[0].mxu0
        %v1742 = vadd.f32 0.0, %v1741
        %v1743 = vpop.f32.mrb[0].mxu0
        %1744 = vmatprep.mubr.f32.mxu0 0.0
        %1745 = vmatmul.mubr.f32.gmra.mrb[0].mxu0 %v1607
        %v1746 = vpop.f32.mrb[0].mxu0
        %v1747 = vadd.f32 0.0, %v1746
        %v1748 = vpop.f32.mrb[0].mxu0
        %1749 = vmatprep.mubr.f32.mxu0 0.0
        %1750 = vmatmul.mubr.f32.gmra.mrb[0].mxu0 %v1609
        %v1751 = vpop.f32.mrb[0].mxu0
        %v1752 = vadd.f32 0.0, %v1751
        %v1753 = vpop.f32.mrb[0].mxu0
        %1754 = vmatprep.mubr.f32.mxu0 0.0
        %1755 = vmatmul.mubr.f32.gmra.mrb[0].mxu0 %v1611
        %v1756 = vpop.f32.mrb[0].mxu0
        %v1757 = vadd.f32 0.0, %v1756
        %v1758 = vpop.f32.mrb[0].mxu0
        %1759 = vmatprep.mubr.f32.mxu0 0.0
        %1760 = vmatmul.mubr.f32.gmra.mrb[0].mxu0 %v1613
        %v1761 = vpop.f32.mrb[0].mxu0
        %v1762 = vadd.f32 0.0, %v1761
        %v1763 = vpop.f32.mrb[0].mxu0
        %1764 = vmatprep.mubr.f32.mxu0 0.0
        %1765 = vmatmul.mubr.f32.gmra.mrb[0].mxu0 %v1615
        %v1766 = vpop.f32.mrb[0].mxu0
        %v1767 = vadd.f32 0.0, %v1766
        %v1768 = vpop.f32.mrb[0].mxu0
        %1769 = vmatprep.mubr.f32.mxu0 0.0
        %1770 = vmatmul.mubr.f32.gmra.mrb[0].mxu0 %v1617
        %v1771 = vpop.f32.mrb[0].mxu0
        %v1772 = vadd.f32 0.0, %v1771
        %v1773 = vpop.f32.mrb[0].mxu0
        %1774 = vmatprep.mubr.f32.mxu0 0.0
        %1775 = vmatmul.mubr.f32.gmra.mrb[0].mxu0 %v1619
        %v1776 = vpop.f32.mrb[0].mxu0
        %v1777 = vadd.f32 0.0, %v1776
        %v1778 = vpop.f32.mrb[0].mxu0
        %1779 = vmatprep.mubr.f32.mxu0 0.0
        %1780 = vmatmul.mubr.f32.gmra.mrb[0].mxu0 %v1621
        %v1781 = vpop.f32.mrb[0].mxu0
        %v1782 = vadd.f32 0.0, %v1781
        %v1783 = vpop.f32.mrb[0].mxu0
        %1784 = vmatprep.mubr.f32.mxu0 0.0
        %1785 = vmatmul.mubr.f32.gmra.mrb[0].mxu0 %v1623
        %v1786 = vpop.f32.mrb[0].mxu0
        %v1787 = vadd.f32 0.0, %v1786
        %v1788 = vpop.f32.mrb[0].mxu0
        %1789 = vmatprep.mubr.f32.mxu0 0.0
        %1790 = vmatmul.mubr.f32.gmra.mrb[0].mxu0 %v1625
        %v1791 = vpop.f32.mrb[0].mxu0
        %v1792 = vadd.f32 0.0, %v1791
        %v1793 = vpop.f32.mrb[0].mxu0
        %1794 = vmatprep.mubr.f32.mxu0 0.0
        %1795 = vmatmul.mubr.f32.gmra.mrb[0].mxu0 %v1627
        %v1796 = vpop.f32.mrb[0].mxu0
        %v1797 = vadd.f32 0.0, %v1796
        %v1798 = vpop.f32.mrb[0].mxu0
        %1799 = vmatprep.mubr.f32.mxu0 0.0
        %1800 = vmatmul.mubr.f32.gmra.mrb[0].mxu0 %v1629
        %v1801 = vpop.f32.mrb[0].mxu0
        %v1802 = vadd.f32 0.0, %v1801
        %v1803 = vpop.f32.mrb[0].mxu0
        %1804 = vmatprep.mubr.f32.mxu0 0.0
        %1805 = vmatmul.mubr.f32.gmra.mrb[0].mxu0 %v1631
        %v1806 = vpop.f32.mrb[0].mxu0
        %v1807 = vadd.f32 0.0, %v1806
        %v1808 = vpop.f32.mrb[0].mxu0
        %1809 = vmatprep.mubr.f32.mxu0 0.0
        %1810 = vmatmul.mubr.f32.gmra.mrb[0].mxu0 %v1633
        %v1811 = vpop.f32.mrb[0].mxu0
        %v1812 = vadd.f32 0.0, %v1811
        %v1813 = vpop.f32.mrb[0].mxu0
        %1814 = vmatprep.mubr.f32.mxu0 0.0
        %1815 = vmatmul.mubr.f32.gmra.mrb[0].mxu0 %v1635
        %v1816 = vpop.f32.mrb[0].mxu0
        %v1817 = vadd.f32 0.0, %v1816
        %v1818 = vpop.f32.mrb[0].mxu0
        %1819 = vmatprep.mubr.f32.mxu0 0.0
        %1820 = vmatmul.mubr.f32.gmra.mrb[0].mxu0 %v1637
        %v1821 = vpop.f32.mrb[0].mxu0
        %v1822 = vadd.f32 0.0, %v1821
        %v1823 = vpop.f32.mrb[0].mxu0
        %1824 = vmatprep.mubr.f32.mxu0 0.0
        %1825 = vmatmul.mubr.f32.gmra.mrb[0].mxu0 %v1639
        %v1826 = vpop.f32.mrb[0].mxu0
        %v1827 = vadd.f32 0.0, %v1826
        %v1828 = vpop.f32.mrb[0].mxu0
        %1829 = vmatprep.mubr.f32.mxu0 0.0
        %1830 = vmatmul.mubr.f32.gmra.mrb[0].mxu0 %v1641
        %v1831 = vpop.f32.mrb[0].mxu0
        %v1832 = vadd.f32 0.0, %v1831
        %v1833 = vpop.f32.mrb[0].mxu0
        %1834 = vmatprep.mubr.f32.mxu0 0.0
        %1835 = vmatmul.mubr.f32.gmra.mrb[0].mxu0 %v1643
        %v1836 = vpop.f32.mrb[0].mxu0
        %v1837 = vadd.f32 0.0, %v1836
        %v1838 = vpop.f32.mrb[0].mxu0
        %1839 = vmatprep.mubr.f32.mxu0 0.0
        %1840 = vmatmul.mubr.f32.gmra.mrb[0].mxu0 %v1645
        %v1841 = vpop.f32.mrb[0].mxu0
        %v1842 = vadd.f32 0.0, %v1841
        %v1843 = vpop.f32.mrb[0].mxu0
        %1844 = vmatprep.mubr.f32.mxu0 0.0
        %1845 = vmatmul.mubr.f32.gmra.mrb[0].mxu0 %v1647
        %v1846 = vpop.f32.mrb[0].mxu0
        %v1847 = vadd.f32 0.0, %v1846
        %v1848 = vpop.f32.mrb[0].mxu0
        %1849 = vmatprep.mubr.f32.mxu0 0.0
        %1850 = vmatmul.mubr.f32.gmra.mrb[0].mxu0 %v1649
        %v1851 = vpop.f32.mrb[0].mxu0
        %v1852 = vadd.f32 0.0, %v1851
        %v1853 = vpop.f32.mrb[0].mxu0
        %1854 = vmatprep.mubr.f32.mxu0 0.0
        %1855 = vmatmul.mubr.f32.gmra.mrb[0].mxu0 %v1651
        %v1856 = vpop.f32.mrb[0].mxu0
        %v1857 = vadd.f32 0.0, %v1856
        %v1858 = vpop.f32.mrb[0].mxu0
        %1859 = vmatprep.mubr.f32.mxu0 0.0
        %1860 = vmatmul.mubr.f32.gmra.mrb[0].mxu0 %v1653
        %v1861 = vpop.f32.mrb[0].mxu0
        %v1862 = vadd.f32 0.0, %v1861
        %v1863 = vpop.f32.mrb[0].mxu0
        %1864 = vmatprep.mubr.f32.mxu0 0.0
        %1865 = vmatmul.mubr.f32.gmra.mrb[0].mxu0 %v1655
        %v1866 = vpop.f32.mrb[0].mxu0
        %v1867 = vadd.f32 0.0, %v1866
        %v1868 = vpop.f32.mrb[0].mxu0
        %1869 = vmatprep.mubr.f32.mxu0 0.0
        %1870 = vmatmul.mubr.f32.gmra.mrb[0].mxu0 %v1657
        %v1871 = vpop.f32.mrb[0].mxu0
        %v1872 = vadd.f32 0.0, %v1871
        %v1873 = vpop.f32.mrb[0].mxu0
        %1874 = vmatprep.mubr.f32.mxu0 0.0
        %1875 = vmatmul.mubr.f32.gmra.mrb[0].mxu0 %v1659
        %v1876 = vpop.f32.mrb[0].mxu0
        %v1877 = vadd.f32 0.0, %v1876
        %v1878 = vpop.f32.mrb[0].mxu0
        %1879 = vmatprep.mubr.f32.mxu0 0.0
        %1880 = vmatmul.mubr.f32.gmra.mrb[0].mxu0 %v1661
        %v1881 = vpop.f32.mrb[0].mxu0
        %v1882 = vadd.f32 0.0, %v1881
        %v1883 = vpop.f32.mrb[0].mxu0
        %1884 = vmatprep.mubr.f32.mxu0 0.0
        %1885 = vmatmul.mubr.f32.gmra.mrb[0].mxu0 %v1663
        %v1886 = vpop.f32.mrb[0].mxu0
        %v1887 = vadd.f32 0.0, %v1886
        %v1888 = vpop.f32.mrb[0].mxu0
        %1889 = vmatprep.mubr.f32.mxu0 0.0
        %1890 = vmatmul.mubr.f32.gmra.mrb[0].mxu0 %v1665
        %v1891 = vpop.f32.mrb[0].mxu0
        %v1892 = vadd.f32 0.0, %v1891
        %v1893 = vpop.f32.mrb[0].mxu0
        %1894 = vdwg.mxu0
        %1927 = vrot.lane.b32.xlu0 %v1737, 8
        %v1928 = vpop.permute.xlu0 %1927
        %1929 = vrot.lane.b32.xlu0 %v1742, 8
        %v1930 = vpop.permute.xlu0 %1929
        %1931 = vrot.lane.b32.xlu0 %v1747, 8
        %v1932 = vpop.permute.xlu0 %1931
        %1933 = vrot.lane.b32.xlu0 %v1752, 8
        %v1934 = vpop.permute.xlu0 %1933
        %1935 = vrot.lane.b32.xlu0 %v1757, 8
        %v1936 = vpop.permute.xlu0 %1935
        %1937 = vrot.lane.b32.xlu0 %v1762, 8
        %v1938 = vpop.permute.xlu0 %1937
        %1939 = vrot.lane.b32.xlu0 %v1767, 8
        %v1940 = vpop.permute.xlu0 %1939
        %1941 = vrot.lane.b32.xlu0 %v1772, 8
        %v1942 = vpop.permute.xlu0 %1941
        %1943 = vrot.lane.b32.xlu0 %v1777, 8
        %v1944 = vpop.permute.xlu0 %1943
        %1945 = vrot.lane.b32.xlu0 %v1782, 8
        %v1946 = vpop.permute.xlu0 %1945
        %1947 = vrot.lane.b32.xlu0 %v1787, 8
        %v1948 = vpop.permute.xlu0 %1947
        %1949 = vrot.lane.b32.xlu0 %v1792, 8
        %v1950 = vpop.permute.xlu0 %1949
        %1951 = vrot.lane.b32.xlu0 %v1797, 8
        %v1952 = vpop.permute.xlu0 %1951
        %1953 = vrot.lane.b32.xlu0 %v1802, 8
        %v1954 = vpop.permute.xlu0 %1953
        %1955 = vrot.lane.b32.xlu0 %v1807, 8
        %v1956 = vpop.permute.xlu0 %1955
        %1957 = vrot.lane.b32.xlu0 %v1812, 8
        %v1958 = vpop.permute.xlu0 %1957
        %1959 = vrot.lane.b32.xlu0 %v1817, 8
        %v1960 = vpop.permute.xlu0 %1959
        %1961 = vrot.lane.b32.xlu0 %v1822, 8
        %v1962 = vpop.permute.xlu0 %1961
        %1963 = vrot.lane.b32.xlu0 %v1827, 8
        %v1964 = vpop.permute.xlu0 %1963
        %1965 = vrot.lane.b32.xlu0 %v1832, 8
        %v1966 = vpop.permute.xlu0 %1965
        %1967 = vrot.lane.b32.xlu0 %v1837, 8
        %v1968 = vpop.permute.xlu0 %1967
        %1969 = vrot.lane.b32.xlu0 %v1842, 8
        %v1970 = vpop.permute.xlu0 %1969
        %1971 = vrot.lane.b32.xlu0 %v1847, 8
        %v1972 = vpop.permute.xlu0 %1971
        %1973 = vrot.lane.b32.xlu0 %v1852, 8
        %v1974 = vpop.permute.xlu0 %1973
        %1975 = vrot.lane.b32.xlu0 %v1857, 8
        %v1976 = vpop.permute.xlu0 %1975
        %1977 = vrot.lane.b32.xlu0 %v1862, 8
        %v1978 = vpop.permute.xlu0 %1977
        %1979 = vrot.lane.b32.xlu0 %v1867, 8
        %v1980 = vpop.permute.xlu0 %1979
        %1981 = vrot.lane.b32.xlu0 %v1872, 8
        %v1982 = vpop.permute.xlu0 %1981
        %1983 = vrot.lane.b32.xlu0 %v1877, 8
        %v1984 = vpop.permute.xlu0 %1983
        %1985 = vrot.lane.b32.xlu0 %v1882, 8
        %v1986 = vpop.permute.xlu0 %1985
        %1987 = vrot.lane.b32.xlu0 %v1887, 8
        %v1988 = vpop.permute.xlu0 %1987
        %1989 = vrot.lane.b32.xlu0 %v1892, 8
        %v1990 = vpop.permute.xlu0 %1989
        %vm2023 = vcmask 130112
        %2024 = vst.msk [vmem:[#allocation2] sm:$0xff] %vm2023, %v1928
        %2025 = vst.msk [vmem:[#allocation2 + $0x8] sm:$0xff] %vm2023, %v1930
        %2026 = vst.msk [vmem:[#allocation2 + $0x10] sm:$0xff] %vm2023, %v1932
        %2027 = vst.msk [vmem:[#allocation2 + $0x18] sm:$0xff] %vm2023, %v1934
        %2028 = vst.msk [vmem:[#allocation2 + $0x20] sm:$0xff] %vm2023, %v1936
        %2029 = vst.msk [vmem:[#allocation2 + $0x28] sm:$0xff] %vm2023, %v1938
        %2030 = vst.msk [vmem:[#allocation2 + $0x30] sm:$0xff] %vm2023, %v1940
        %2031 = vst.msk [vmem:[#allocation2 + $0x38] sm:$0xff] %vm2023, %v1942
        %2032 = vst.msk [vmem:[#allocation2 + $0x40] sm:$0xff] %vm2023, %v1944
        %2033 = vst.msk [vmem:[#allocation2 + $0x48] sm:$0xff] %vm2023, %v1946
        %2034 = vst.msk [vmem:[#allocation2 + $0x50] sm:$0xff] %vm2023, %v1948
        %2035 = vst.msk [vmem:[#allocation2 + $0x58] sm:$0xff] %vm2023, %v1950
        %2036 = vst.msk [vmem:[#allocation2 + $0x60] sm:$0xff] %vm2023, %v1952
        %2037 = vst.msk [vmem:[#allocation2 + $0x68] sm:$0xff] %vm2023, %v1954
        %2038 = vst.msk [vmem:[#allocation2 + $0x70] sm:$0xff] %vm2023, %v1956
        %2039 = vst.msk [vmem:[#allocation2 + $0x78] sm:$0xff] %vm2023, %v1958
        %2040 = vst.msk [vmem:[#allocation2 + $0x80] sm:$0xff] %vm2023, %v1960
        %2041 = vst.msk [vmem:[#allocation2 + $0x88] sm:$0xff] %vm2023, %v1962
        %2042 = vst.msk [vmem:[#allocation2 + $0x90] sm:$0xff] %vm2023, %v1964
        %2043 = vst.msk [vmem:[#allocation2 + $0x98] sm:$0xff] %vm2023, %v1966
        %2044 = vst.msk [vmem:[#allocation2 + $0xa0] sm:$0xff] %vm2023, %v1968
        %2045 = vst.msk [vmem:[#allocation2 + $0xa8] sm:$0xff] %vm2023, %v1970
        %2046 = vst.msk [vmem:[#allocation2 + $0xb0] sm:$0xff] %vm2023, %v1972
        %2047 = vst.msk [vmem:[#allocation2 + $0xb8] sm:$0xff] %vm2023, %v1974
        %2048 = vst.msk [vmem:[#allocation2 + $0xc0] sm:$0xff] %vm2023, %v1976
        %2049 = vst.msk [vmem:[#allocation2 + $0xc8] sm:$0xff] %vm2023, %v1978
        %2050 = vst.msk [vmem:[#allocation2 + $0xd0] sm:$0xff] %vm2023, %v1980
        %2051 = vst.msk [vmem:[#allocation2 + $0xd8] sm:$0xff] %vm2023, %v1982
        %2052 = vst.msk [vmem:[#allocation2 + $0xe0] sm:$0xff] %vm2023, %v1984
        %2053 = vst.msk [vmem:[#allocation2 + $0xe8] sm:$0xff] %vm2023, %v1986
        %2054 = vst.msk [vmem:[#allocation2 + $0xf0] sm:$0xff] %vm2023, %v1988
        %2055 = vst.msk [vmem:[#allocation2 + $0xf8] sm:$0xff] %vm2023, %v1990
        %2056 = vrot.lane.b32.xlu0 %v399, 112
        %v2057 = vpop.permute.xlu0 %2056
        %2058 = vrot.lane.b32.xlu0 %v400, 112
        %v2059 = vpop.permute.xlu0 %2058
        %2060 = vrot.lane.b32.xlu0 %v401, 112
        %v2061 = vpop.permute.xlu0 %2060
        %2062 = vrot.lane.b32.xlu0 %v402, 112
        %v2063 = vpop.permute.xlu0 %2062
        %2064 = vrot.lane.b32.xlu0 %v403, 112
        %v2065 = vpop.permute.xlu0 %2064
        %2066 = vrot.lane.b32.xlu0 %v404, 112
        %v2067 = vpop.permute.xlu0 %2066
        %2068 = vrot.lane.b32.xlu0 %v405, 112
        %v2069 = vpop.permute.xlu0 %2068
        %2070 = vrot.lane.b32.xlu0 %v406, 112
        %v2071 = vpop.permute.xlu0 %2070
        %2072 = vrot.lane.b32.xlu0 %v407, 112
        %v2073 = vpop.permute.xlu0 %2072
        %2074 = vrot.lane.b32.xlu0 %v408, 112
        %v2075 = vpop.permute.xlu0 %2074
        %2076 = vrot.lane.b32.xlu0 %v409, 112
        %v2077 = vpop.permute.xlu0 %2076
        %2078 = vrot.lane.b32.xlu0 %v410, 112
        %v2079 = vpop.permute.xlu0 %2078
        %2080 = vrot.lane.b32.xlu0 %v411, 112
        %v2081 = vpop.permute.xlu0 %2080
        %2082 = vrot.lane.b32.xlu0 %v412, 112
        %v2083 = vpop.permute.xlu0 %2082
        %2084 = vrot.lane.b32.xlu0 %v413, 112
        %v2085 = vpop.permute.xlu0 %2084
        %2086 = vrot.lane.b32.xlu0 %v414, 112
        %v2087 = vpop.permute.xlu0 %2086
        %2088 = vrot.lane.b32.xlu0 %v415, 112
        %v2089 = vpop.permute.xlu0 %2088
        %2090 = vrot.lane.b32.xlu0 %v416, 112
        %v2091 = vpop.permute.xlu0 %2090
        %2092 = vrot.lane.b32.xlu0 %v417, 112
        %v2093 = vpop.permute.xlu0 %2092
        %2094 = vrot.lane.b32.xlu0 %v418, 112
        %v2095 = vpop.permute.xlu0 %2094
        %2096 = vrot.lane.b32.xlu0 %v419, 112
        %v2097 = vpop.permute.xlu0 %2096
        %2098 = vrot.lane.b32.xlu0 %v420, 112
        %v2099 = vpop.permute.xlu0 %2098
        %2100 = vrot.lane.b32.xlu0 %v421, 112
        %v2101 = vpop.permute.xlu0 %2100
        %2102 = vrot.lane.b32.xlu0 %v422, 112
        %v2103 = vpop.permute.xlu0 %2102
        %2104 = vrot.lane.b32.xlu0 %v423, 112
        %v2105 = vpop.permute.xlu0 %2104
        %2106 = vrot.lane.b32.xlu0 %v424, 112
        %v2107 = vpop.permute.xlu0 %2106
        %2108 = vrot.lane.b32.xlu0 %v425, 112
        %v2109 = vpop.permute.xlu0 %2108
        %2110 = vrot.lane.b32.xlu0 %v426, 112
        %v2111 = vpop.permute.xlu0 %2110
        %2112 = vrot.lane.b32.xlu0 %v427, 112
        %v2113 = vpop.permute.xlu0 %2112
        %2114 = vrot.lane.b32.xlu0 %v428, 112
        %v2115 = vpop.permute.xlu0 %2114
        %2116 = vrot.lane.b32.xlu0 %v429, 112
        %v2117 = vpop.permute.xlu0 %2116
        %2118 = vrot.lane.b32.xlu0 %v430, 112
        %v2119 = vpop.permute.xlu0 %2118
        %2152 = vxpose.xlu0.b32.start [1/16] %v2057, 128
        %2153 = vxpose.xlu0.b32.cont [2/16] %v2059, 128
        %2154 = vxpose.xlu0.b32.cont [3/16] %v2061, 128
        %2155 = vxpose.xlu0.b32.cont [4/16] %v2063, 128
        %2156 = vxpose.xlu0.b32.cont [5/16] %v2065, 128
        %2157 = vxpose.xlu0.b32.cont [6/16] %v2067, 128
        %2158 = vxpose.xlu0.b32.cont [7/16] %v2069, 128
        %2159 = vxpose.xlu0.b32.cont [8/16] %v2071, 128
        %2160 = vxpose.xlu0.b32.cont [9/16] %v2073, 128
        %2161 = vxpose.xlu0.b32.cont [10/16] %v2075, 128
        %2162 = vxpose.xlu0.b32.cont [11/16] %v2077, 128
        %2163 = vxpose.xlu0.b32.cont [12/16] %v2079, 128
        %2164 = vxpose.xlu0.b32.cont [13/16] %v2081, 128
        %2165 = vxpose.xlu0.b32.cont [14/16] %v2083, 128
        %2166 = vxpose.xlu0.b32.cont [15/16] %v2085, 128
        %2167 = vxpose.xlu0.b32.end [16/16] %v2087, 128
        %v2168 = vpop.trf.xlu0
        %v2169 = vpop.trf.xlu0
        %v2170 = vpop.trf.xlu0
        %v2171 = vpop.trf.xlu0
        %v2172 = vpop.trf.xlu0
        %v2173 = vpop.trf.xlu0
        %v2174 = vpop.trf.xlu0
        %v2175 = vpop.trf.xlu0
        %v2176 = vpop.trf.xlu0
        %v2177 = vpop.trf.xlu0
        %v2178 = vpop.trf.xlu0
        %v2179 = vpop.trf.xlu0
        %v2180 = vpop.trf.xlu0
        %v2181 = vpop.trf.xlu0
        %v2182 = vpop.trf.xlu0
        %v2183 = vpop.trf.xlu0
        %2184 = vxpose.xlu0.b32.start [1/16] %v2089, 128
        %2185 = vxpose.xlu0.b32.cont [2/16] %v2091, 128
        %2186 = vxpose.xlu0.b32.cont [3/16] %v2093, 128
        %2187 = vxpose.xlu0.b32.cont [4/16] %v2095, 128
        %2188 = vxpose.xlu0.b32.cont [5/16] %v2097, 128
        %2189 = vxpose.xlu0.b32.cont [6/16] %v2099, 128
        %2190 = vxpose.xlu0.b32.cont [7/16] %v2101, 128
        %2191 = vxpose.xlu0.b32.cont [8/16] %v2103, 128
        %2192 = vxpose.xlu0.b32.cont [9/16] %v2105, 128
        %2193 = vxpose.xlu0.b32.cont [10/16] %v2107, 128
        %2194 = vxpose.xlu0.b32.cont [11/16] %v2109, 128
        %2195 = vxpose.xlu0.b32.cont [12/16] %v2111, 128
        %2196 = vxpose.xlu0.b32.cont [13/16] %v2113, 128
        %2197 = vxpose.xlu0.b32.cont [14/16] %v2115, 128
        %2198 = vxpose.xlu0.b32.cont [15/16] %v2117, 128
        %2199 = vxpose.xlu0.b32.end [16/16] %v2119, 128
        %v2200 = vpop.trf.xlu0
        %v2201 = vpop.trf.xlu0
        %v2202 = vpop.trf.xlu0
        %v2203 = vpop.trf.xlu0
        %v2204 = vpop.trf.xlu0
        %v2205 = vpop.trf.xlu0
        %v2206 = vpop.trf.xlu0
        %v2207 = vpop.trf.xlu0
        %v2208 = vpop.trf.xlu0
        %v2209 = vpop.trf.xlu0
        %v2210 = vpop.trf.xlu0
        %v2211 = vpop.trf.xlu0
        %v2212 = vpop.trf.xlu0
        %v2213 = vpop.trf.xlu0
        %v2214 = vpop.trf.xlu0
        %v2215 = vpop.trf.xlu0
        %2216 = vrot.lane.b32.xlu0 %v534, 112
        %v2217 = vpop.permute.xlu0 %2216
        %2218 = vrot.lane.b32.xlu0 %v535, 112
        %v2219 = vpop.permute.xlu0 %2218
        %2220 = vrot.lane.b32.xlu0 %v536, 112
        %v2221 = vpop.permute.xlu0 %2220
        %2222 = vrot.lane.b32.xlu0 %v537, 112
        %v2223 = vpop.permute.xlu0 %2222
        %2224 = vrot.lane.b32.xlu0 %v538, 112
        %v2225 = vpop.permute.xlu0 %2224
        %2226 = vrot.lane.b32.xlu0 %v539, 112
        %v2227 = vpop.permute.xlu0 %2226
        %2228 = vrot.lane.b32.xlu0 %v540, 112
        %v2229 = vpop.permute.xlu0 %2228
        %2230 = vrot.lane.b32.xlu0 %v541, 112
        %v2231 = vpop.permute.xlu0 %2230
        %2232 = vrot.lane.b32.xlu0 %v542, 112
        %v2233 = vpop.permute.xlu0 %2232
        %2234 = vrot.lane.b32.xlu0 %v543, 112
        %v2235 = vpop.permute.xlu0 %2234
        %2236 = vrot.lane.b32.xlu0 %v544, 112
        %v2237 = vpop.permute.xlu0 %2236
        %2238 = vrot.lane.b32.xlu0 %v545, 112
        %v2239 = vpop.permute.xlu0 %2238
        %2240 = vrot.lane.b32.xlu0 %v546, 112
        %v2241 = vpop.permute.xlu0 %2240
        %2242 = vrot.lane.b32.xlu0 %v547, 112
        %v2243 = vpop.permute.xlu0 %2242
        %2244 = vrot.lane.b32.xlu0 %v548, 112
        %v2245 = vpop.permute.xlu0 %2244
        %2246 = vrot.lane.b32.xlu0 %v549, 112
        %v2247 = vpop.permute.xlu0 %2246
        %2248 = vrot.lane.b32.xlu0 %v550, 112
        %v2249 = vpop.permute.xlu0 %2248
        %2250 = vrot.lane.b32.xlu0 %v551, 112
        %v2251 = vpop.permute.xlu0 %2250
        %2252 = vrot.lane.b32.xlu0 %v552, 112
        %v2253 = vpop.permute.xlu0 %2252
        %2254 = vrot.lane.b32.xlu0 %v553, 112
        %v2255 = vpop.permute.xlu0 %2254
        %2256 = vrot.lane.b32.xlu0 %v554, 112
        %v2257 = vpop.permute.xlu0 %2256
        %2258 = vrot.lane.b32.xlu0 %v555, 112
        %v2259 = vpop.permute.xlu0 %2258
        %2260 = vrot.lane.b32.xlu0 %v556, 112
        %v2261 = vpop.permute.xlu0 %2260
        %2262 = vrot.lane.b32.xlu0 %v557, 112
        %v2263 = vpop.permute.xlu0 %2262
        %2264 = vrot.lane.b32.xlu0 %v558, 112
        %v2265 = vpop.permute.xlu0 %2264
        %2266 = vrot.lane.b32.xlu0 %v559, 112
        %v2267 = vpop.permute.xlu0 %2266
        %2268 = vrot.lane.b32.xlu0 %v560, 112
        %v2269 = vpop.permute.xlu0 %2268
        %2270 = vrot.lane.b32.xlu0 %v561, 112
        %v2271 = vpop.permute.xlu0 %2270
        %2272 = vrot.lane.b32.xlu0 %v562, 112
        %v2273 = vpop.permute.xlu0 %2272
        %2274 = vrot.lane.b32.xlu0 %v563, 112
        %v2275 = vpop.permute.xlu0 %2274
        %2276 = vrot.lane.b32.xlu0 %v564, 112
        %v2277 = vpop.permute.xlu0 %2276
        %2278 = vrot.lane.b32.xlu0 %v565, 112
        %v2279 = vpop.permute.xlu0 %2278
        %2312 = vmatprep.subr.mxu0 0.0
        %2313 = vmatpush1.msra.mxu0 %v2217
        %2314 = vmatprep.subr.mxu0 0.0
        %2315 = vmatpush1.msra.mxu0 %v2219
        %2316 = vmatprep.subr.mxu0 0.0
        %2317 = vmatpush1.msra.mxu0 %v2221
        %2318 = vmatprep.subr.mxu0 0.0
        %2319 = vmatpush1.msra.mxu0 %v2223
        %2320 = vmatprep.subr.mxu0 0.0
        %2321 = vmatpush1.msra.mxu0 %v2225
        %2322 = vmatprep.subr.mxu0 0.0
        %2323 = vmatpush1.msra.mxu0 %v2227
        %2324 = vmatprep.subr.mxu0 0.0
        %2325 = vmatpush1.msra.mxu0 %v2229
        %2326 = vmatprep.subr.mxu0 0.0
        %2327 = vmatpush1.msra.mxu0 %v2231
        %2328 = vmatprep.subr.mxu0 0.0
        %2329 = vmatpush1.msra.mxu0 %v2233
        %2330 = vmatprep.subr.mxu0 0.0
        %2331 = vmatpush1.msra.mxu0 %v2235
        %2332 = vmatprep.subr.mxu0 0.0
        %2333 = vmatpush1.msra.mxu0 %v2237
        %2334 = vmatprep.subr.mxu0 0.0
        %2335 = vmatpush1.msra.mxu0 %v2239
        %2336 = vmatprep.subr.mxu0 0.0
        %2337 = vmatpush1.msra.mxu0 %v2241
        %2338 = vmatprep.subr.mxu0 0.0
        %2339 = vmatpush1.msra.mxu0 %v2243
        %2340 = vmatprep.subr.mxu0 0.0
        %2341 = vmatpush1.msra.mxu0 %v2245
        %2342 = vmatprep.subr.mxu0 0.0
        %2343 = vmatpush1.msra.mxu0 %v2247
        %2344 = vmatprep.subr.mxu0 0.0
        %2345 = vmatpush1.msra.mxu0 %v2249
        %2346 = vmatprep.subr.mxu0 0.0
        %2347 = vmatpush1.msra.mxu0 %v2251
        %2348 = vmatprep.subr.mxu0 0.0
        %2349 = vmatpush1.msra.mxu0 %v2253
        %2350 = vmatprep.subr.mxu0 0.0
        %2351 = vmatpush1.msra.mxu0 %v2255
        %2352 = vmatprep.subr.mxu0 0.0
        %2353 = vmatpush1.msra.mxu0 %v2257
        %2354 = vmatprep.subr.mxu0 0.0
        %2355 = vmatpush1.msra.mxu0 %v2259
        %2356 = vmatprep.subr.mxu0 0.0
        %2357 = vmatpush1.msra.mxu0 %v2261
        %2358 = vmatprep.subr.mxu0 0.0
        %2359 = vmatpush1.msra.mxu0 %v2263
        %2360 = vmatprep.subr.mxu0 0.0
        %2361 = vmatpush1.msra.mxu0 %v2265
        %2362 = vmatprep.subr.mxu0 0.0
        %2363 = vmatpush1.msra.mxu0 %v2267
        %2364 = vmatprep.subr.mxu0 0.0
        %2365 = vmatpush1.msra.mxu0 %v2269
        %2366 = vmatprep.subr.mxu0 0.0
        %2367 = vmatpush1.msra.mxu0 %v2271
        %2368 = vmatprep.subr.mxu0 0.0
        %2369 = vmatpush1.msra.mxu0 %v2273
        %2370 = vmatprep.subr.mxu0 0.0
        %2371 = vmatpush1.msra.mxu0 %v2275
        %2372 = vmatprep.subr.mxu0 0.0
        %2373 = vmatpush1.msra.mxu0 %v2277
        %2374 = vmatprep.subr.mxu0 0.0
        %2375 = vmatpush1.msra.mxu0 %v2279
        %2376 = vmatprep.mubr.f32.mxu0 %v2200
        %2377 = vmatmul.mubr.f32.gmra.mrb[0].mxu0 %v2168
        %v2378 = vpop.f32.mrb[0].mxu0
        %v2379 = vadd.f32 0.0, %v2378
        %v2380 = vpop.f32.mrb[0].mxu0
        %2381 = vdwg.mxu0
        %s2382 = sld [smem:[#allocation3 + $0x100]]
        %v2383 = vstv %s2382
        %v2384 = vmul.f32 %v2379, %v2383
        %v2385 = vsel %vm703, %v2384, -inf
        %2386 = vmax.xlane.f32.xlu0 %v2385
        %v2387 = vpop.xlane.xlu0 %2386
        %v2388 = vsub.f32 %v2384, %v2387
        %v2389 = vmul.f32 %v2388, 1.442695
        %v2390 = vpow.pop %v2389
        %v2391 = vsel %vm703, %v2390, 0.0
        %2392 = vadd.xlane.f32.xlu0 %v2391
        %v2393 = vpop.xlane.xlu0 %2392
        %v2394 = vrcp.pop %v2393
        %v2395 = vmul.f32 %v2390, %v2394
        %2396 = vrot.lane.b32.xlu0 %v263, 80
        %v2397 = vpop.permute.xlu0 %2396
        %2398 = vrot.lane.b32.xlu0 %v264, 80
        %v2399 = vpop.permute.xlu0 %2398
        %2400 = vrot.lane.b32.xlu0 %v265, 80
        %v2401 = vpop.permute.xlu0 %2400
        %2402 = vrot.lane.b32.xlu0 %v266, 80
        %v2403 = vpop.permute.xlu0 %2402
        %2404 = vrot.lane.b32.xlu0 %v267, 80
        %v2405 = vpop.permute.xlu0 %2404
        %2406 = vrot.lane.b32.xlu0 %v268, 80
        %v2407 = vpop.permute.xlu0 %2406
        %2408 = vrot.lane.b32.xlu0 %v269, 80
        %v2409 = vpop.permute.xlu0 %2408
        %2410 = vrot.lane.b32.xlu0 %v270, 80
        %v2411 = vpop.permute.xlu0 %2410
        %2412 = vrot.lane.b32.xlu0 %v271, 80
        %v2413 = vpop.permute.xlu0 %2412
        %2414 = vrot.lane.b32.xlu0 %v272, 80
        %v2415 = vpop.permute.xlu0 %2414
        %2416 = vrot.lane.b32.xlu0 %v273, 80
        %v2417 = vpop.permute.xlu0 %2416
        %2418 = vrot.lane.b32.xlu0 %v274, 80
        %v2419 = vpop.permute.xlu0 %2418
        %2420 = vrot.lane.b32.xlu0 %v275, 80
        %v2421 = vpop.permute.xlu0 %2420
        %2422 = vrot.lane.b32.xlu0 %v276, 80
        %v2423 = vpop.permute.xlu0 %2422
        %2424 = vrot.lane.b32.xlu0 %v277, 80
        %v2425 = vpop.permute.xlu0 %2424
        %2426 = vrot.lane.b32.xlu0 %v278, 80
        %v2427 = vpop.permute.xlu0 %2426
        %2428 = vrot.lane.b32.xlu0 %v279, 80
        %v2429 = vpop.permute.xlu0 %2428
        %2430 = vrot.lane.b32.xlu0 %v280, 80
        %v2431 = vpop.permute.xlu0 %2430
        %2432 = vrot.lane.b32.xlu0 %v281, 80
        %v2433 = vpop.permute.xlu0 %2432
        %2434 = vrot.lane.b32.xlu0 %v282, 80
        %v2435 = vpop.permute.xlu0 %2434
        %2436 = vrot.lane.b32.xlu0 %v283, 80
        %v2437 = vpop.permute.xlu0 %2436
        %2438 = vrot.lane.b32.xlu0 %v284, 80
        %v2439 = vpop.permute.xlu0 %2438
        %2440 = vrot.lane.b32.xlu0 %v285, 80
        %v2441 = vpop.permute.xlu0 %2440
        %2442 = vrot.lane.b32.xlu0 %v286, 80
        %v2443 = vpop.permute.xlu0 %2442
        %2444 = vrot.lane.b32.xlu0 %v287, 80
        %v2445 = vpop.permute.xlu0 %2444
        %2446 = vrot.lane.b32.xlu0 %v288, 80
        %v2447 = vpop.permute.xlu0 %2446
        %2448 = vrot.lane.b32.xlu0 %v289, 80
        %v2449 = vpop.permute.xlu0 %2448
        %2450 = vrot.lane.b32.xlu0 %v290, 80
        %v2451 = vpop.permute.xlu0 %2450
        %2452 = vrot.lane.b32.xlu0 %v291, 80
        %v2453 = vpop.permute.xlu0 %2452
        %2454 = vrot.lane.b32.xlu0 %v292, 80
        %v2455 = vpop.permute.xlu0 %2454
        %2456 = vrot.lane.b32.xlu0 %v293, 80
        %v2457 = vpop.permute.xlu0 %2456
        %2458 = vrot.lane.b32.xlu0 %v294, 80
        %v2459 = vpop.permute.xlu0 %2458
        %v2460 = vsel %vm703, %v2397, 0
        %v2462 = vsel %vm703, %v2399, 0
        %v2464 = vsel %vm703, %v2401, 0
        %v2466 = vsel %vm703, %v2403, 0
        %v2468 = vsel %vm703, %v2405, 0
        %v2470 = vsel %vm703, %v2407, 0
        %v2472 = vsel %vm703, %v2409, 0
        %v2474 = vsel %vm703, %v2411, 0
        %v2476 = vsel %vm703, %v2413, 0
        %v2478 = vsel %vm703, %v2415, 0
        %v2480 = vsel %vm703, %v2417, 0
        %v2482 = vsel %vm703, %v2419, 0
        %v2484 = vsel %vm703, %v2421, 0
        %v2486 = vsel %vm703, %v2423, 0
        %v2488 = vsel %vm703, %v2425, 0
        %v2490 = vsel %vm703, %v2427, 0
        %v2492 = vsel %vm703, %v2429, 0
        %v2494 = vsel %vm703, %v2431, 0
        %v2496 = vsel %vm703, %v2433, 0
        %v2498 = vsel %vm703, %v2435, 0
        %v2500 = vsel %vm703, %v2437, 0
        %v2502 = vsel %vm703, %v2439, 0
        %v2504 = vsel %vm703, %v2441, 0
        %v2506 = vsel %vm703, %v2443, 0
        %v2508 = vsel %vm703, %v2445, 0
        %v2510 = vsel %vm703, %v2447, 0
        %v2512 = vsel %vm703, %v2449, 0
        %v2514 = vsel %vm703, %v2451, 0
        %v2516 = vsel %vm703, %v2453, 0
        %v2518 = vsel %vm703, %v2455, 0
        %v2520 = vsel %vm703, %v2457, 0
        %v2522 = vsel %vm703, %v2459, 0
        %v2525 = vsel %vm703, %v2395, 0
        %2527 = vmatprep.subr.mxu0 0.0
        %2528 = vmatpush1.xpose.msra.mxu0 %v2525
        %2529 = vmatprep.subr.mxu0 0.0
        %2530 = vmatpush1.xpose.msra.mxu0 0.0
        %2531 = vmatprep.subr.mxu0 0.0
        %2532 = vmatpush1.xpose.msra.mxu0 0.0
        %2533 = vmatprep.subr.mxu0 0.0
        %2534 = vmatpush1.xpose.msra.mxu0 0.0
        %2535 = vmatprep.subr.mxu0 0.0
        %2536 = vmatpush1.xpose.msra.mxu0 0.0
        %2537 = vmatprep.subr.mxu0 0.0
        %2538 = vmatpush1.xpose.msra.mxu0 0.0
        %2539 = vmatprep.subr.mxu0 0.0
        %2540 = vmatpush1.xpose.msra.mxu0 0.0
        %2541 = vmatprep.subr.mxu0 0.0
        %2542 = vmatpush1.xpose.msra.mxu0 0.0
        %2543 = vmatprep.subr.mxu0 0.0
        %2544 = vmatpush1.xpose.msra.mxu0 0.0
        %2545 = vmatprep.subr.mxu0 0.0
        %2546 = vmatpush1.xpose.msra.mxu0 0.0
        %2547 = vmatprep.subr.mxu0 0.0
        %2548 = vmatpush1.xpose.msra.mxu0 0.0
        %2549 = vmatprep.subr.mxu0 0.0
        %2550 = vmatpush1.xpose.msra.mxu0 0.0
        %2551 = vmatprep.subr.mxu0 0.0
        %2552 = vmatpush1.xpose.msra.mxu0 0.0
        %2553 = vmatprep.subr.mxu0 0.0
        %2554 = vmatpush1.xpose.msra.mxu0 0.0
        %2555 = vmatprep.subr.mxu0 0.0
        %2556 = vmatpush1.xpose.msra.mxu0 0.0
        %2557 = vmatprep.subr.mxu0 0.0
        %2558 = vmatpush1.xpose.msra.mxu0 0.0
        %2559 = vmatprep.subr.mxu0 0.0
        %2560 = vmatpush1.xpose.msra.mxu0 0.0
        %2561 = vmatprep.subr.mxu0 0.0
        %2562 = vmatpush1.xpose.msra.mxu0 0.0
        %2563 = vmatprep.subr.mxu0 0.0
        %2564 = vmatpush1.xpose.msra.mxu0 0.0
        %2565 = vmatprep.subr.mxu0 0.0
        %2566 = vmatpush1.xpose.msra.mxu0 0.0
        %2567 = vmatprep.subr.mxu0 0.0
        %2568 = vmatpush1.xpose.msra.mxu0 0.0
        %2569 = vmatprep.subr.mxu0 0.0
        %2570 = vmatpush1.xpose.msra.mxu0 0.0
        %2571 = vmatprep.subr.mxu0 0.0
        %2572 = vmatpush1.xpose.msra.mxu0 0.0
        %2573 = vmatprep.subr.mxu0 0.0
        %2574 = vmatpush1.xpose.msra.mxu0 0.0
        %2575 = vmatprep.subr.mxu0 0.0
        %2576 = vmatpush1.xpose.msra.mxu0 0.0
        %2577 = vmatprep.subr.mxu0 0.0
        %2578 = vmatpush1.xpose.msra.mxu0 0.0
        %2579 = vmatprep.subr.mxu0 0.0
        %2580 = vmatpush1.xpose.msra.mxu0 0.0
        %2581 = vmatprep.subr.mxu0 0.0
        %2582 = vmatpush1.xpose.msra.mxu0 0.0
        %2583 = vmatprep.subr.mxu0 0.0
        %2584 = vmatpush1.xpose.msra.mxu0 0.0
        %2585 = vmatprep.subr.mxu0 0.0
        %2586 = vmatpush1.xpose.msra.mxu0 0.0
        %2587 = vmatprep.subr.mxu0 0.0
        %2588 = vmatpush1.xpose.msra.mxu0 0.0
        %2589 = vmatprep.subr.mxu0 0.0
        %2590 = vmatpush1.xpose.msra.mxu0 0.0
        %2591 = vmatprep.mubr.f32.mxu0 0.0
        %2592 = vmatmul.mubr.f32.gmra.mrb[0].mxu0 %v2460
        %v2593 = vpop.f32.mrb[0].mxu0
        %v2594 = vadd.f32 0.0, %v2593
        %v2595 = vpop.f32.mrb[0].mxu0
        %2596 = vmatprep.mubr.f32.mxu0 0.0
        %2597 = vmatmul.mubr.f32.gmra.mrb[0].mxu0 %v2462
        %v2598 = vpop.f32.mrb[0].mxu0
        %v2599 = vadd.f32 0.0, %v2598
        %v2600 = vpop.f32.mrb[0].mxu0
        %2601 = vmatprep.mubr.f32.mxu0 0.0
        %2602 = vmatmul.mubr.f32.gmra.mrb[0].mxu0 %v2464
        %v2603 = vpop.f32.mrb[0].mxu0
        %v2604 = vadd.f32 0.0, %v2603
        %v2605 = vpop.f32.mrb[0].mxu0
        %2606 = vmatprep.mubr.f32.mxu0 0.0
        %2607 = vmatmul.mubr.f32.gmra.mrb[0].mxu0 %v2466
        %v2608 = vpop.f32.mrb[0].mxu0
        %v2609 = vadd.f32 0.0, %v2608
        %v2610 = vpop.f32.mrb[0].mxu0
        %2611 = vmatprep.mubr.f32.mxu0 0.0
        %2612 = vmatmul.mubr.f32.gmra.mrb[0].mxu0 %v2468
        %v2613 = vpop.f32.mrb[0].mxu0
        %v2614 = vadd.f32 0.0, %v2613
        %v2615 = vpop.f32.mrb[0].mxu0
        %2616 = vmatprep.mubr.f32.mxu0 0.0
        %2617 = vmatmul.mubr.f32.gmra.mrb[0].mxu0 %v2470
        %v2618 = vpop.f32.mrb[0].mxu0
        %v2619 = vadd.f32 0.0, %v2618
        %v2620 = vpop.f32.mrb[0].mxu0
        %2621 = vmatprep.mubr.f32.mxu0 0.0
        %2622 = vmatmul.mubr.f32.gmra.mrb[0].mxu0 %v2472
        %v2623 = vpop.f32.mrb[0].mxu0
        %v2624 = vadd.f32 0.0, %v2623
        %v2625 = vpop.f32.mrb[0].mxu0
        %2626 = vmatprep.mubr.f32.mxu0 0.0
        %2627 = vmatmul.mubr.f32.gmra.mrb[0].mxu0 %v2474
        %v2628 = vpop.f32.mrb[0].mxu0
        %v2629 = vadd.f32 0.0, %v2628
        %v2630 = vpop.f32.mrb[0].mxu0
        %2631 = vmatprep.mubr.f32.mxu0 0.0
        %2632 = vmatmul.mubr.f32.gmra.mrb[0].mxu0 %v2476
        %v2633 = vpop.f32.mrb[0].mxu0
        %v2634 = vadd.f32 0.0, %v2633
        %v2635 = vpop.f32.mrb[0].mxu0
        %2636 = vmatprep.mubr.f32.mxu0 0.0
        %2637 = vmatmul.mubr.f32.gmra.mrb[0].mxu0 %v2478
        %v2638 = vpop.f32.mrb[0].mxu0
        %v2639 = vadd.f32 0.0, %v2638
        %v2640 = vpop.f32.mrb[0].mxu0
        %2641 = vmatprep.mubr.f32.mxu0 0.0
        %2642 = vmatmul.mubr.f32.gmra.mrb[0].mxu0 %v2480
        %v2643 = vpop.f32.mrb[0].mxu0
        %v2644 = vadd.f32 0.0, %v2643
        %v2645 = vpop.f32.mrb[0].mxu0
        %2646 = vmatprep.mubr.f32.mxu0 0.0
        %2647 = vmatmul.mubr.f32.gmra.mrb[0].mxu0 %v2482
        %v2648 = vpop.f32.mrb[0].mxu0
        %v2649 = vadd.f32 0.0, %v2648
        %v2650 = vpop.f32.mrb[0].mxu0
        %2651 = vmatprep.mubr.f32.mxu0 0.0
        %2652 = vmatmul.mubr.f32.gmra.mrb[0].mxu0 %v2484
        %v2653 = vpop.f32.mrb[0].mxu0
        %v2654 = vadd.f32 0.0, %v2653
        %v2655 = vpop.f32.mrb[0].mxu0
        %2656 = vmatprep.mubr.f32.mxu0 0.0
        %2657 = vmatmul.mubr.f32.gmra.mrb[0].mxu0 %v2486
        %v2658 = vpop.f32.mrb[0].mxu0
        %v2659 = vadd.f32 0.0, %v2658
        %v2660 = vpop.f32.mrb[0].mxu0
        %2661 = vmatprep.mubr.f32.mxu0 0.0
        %2662 = vmatmul.mubr.f32.gmra.mrb[0].mxu0 %v2488
        %v2663 = vpop.f32.mrb[0].mxu0
        %v2664 = vadd.f32 0.0, %v2663
        %v2665 = vpop.f32.mrb[0].mxu0
        %2666 = vmatprep.mubr.f32.mxu0 0.0
        %2667 = vmatmul.mubr.f32.gmra.mrb[0].mxu0 %v2490
        %v2668 = vpop.f32.mrb[0].mxu0
        %v2669 = vadd.f32 0.0, %v2668
        %v2670 = vpop.f32.mrb[0].mxu0
        %2671 = vmatprep.mubr.f32.mxu0 0.0
        %2672 = vmatmul.mubr.f32.gmra.mrb[0].mxu0 %v2492
        %v2673 = vpop.f32.mrb[0].mxu0
        %v2674 = vadd.f32 0.0, %v2673
        %v2675 = vpop.f32.mrb[0].mxu0
        %2676 = vmatprep.mubr.f32.mxu0 0.0
        %2677 = vmatmul.mubr.f32.gmra.mrb[0].mxu0 %v2494
        %v2678 = vpop.f32.mrb[0].mxu0
        %v2679 = vadd.f32 0.0, %v2678
        %v2680 = vpop.f32.mrb[0].mxu0
        %2681 = vmatprep.mubr.f32.mxu0 0.0
        %2682 = vmatmul.mubr.f32.gmra.mrb[0].mxu0 %v2496
        %v2683 = vpop.f32.mrb[0].mxu0
        %v2684 = vadd.f32 0.0, %v2683
        %v2685 = vpop.f32.mrb[0].mxu0
        %2686 = vmatprep.mubr.f32.mxu0 0.0
        %2687 = vmatmul.mubr.f32.gmra.mrb[0].mxu0 %v2498
        %v2688 = vpop.f32.mrb[0].mxu0
        %v2689 = vadd.f32 0.0, %v2688
        %v2690 = vpop.f32.mrb[0].mxu0
        %2691 = vmatprep.mubr.f32.mxu0 0.0
        %2692 = vmatmul.mubr.f32.gmra.mrb[0].mxu0 %v2500
        %v2693 = vpop.f32.mrb[0].mxu0
        %v2694 = vadd.f32 0.0, %v2693
        %v2695 = vpop.f32.mrb[0].mxu0
        %2696 = vmatprep.mubr.f32.mxu0 0.0
        %2697 = vmatmul.mubr.f32.gmra.mrb[0].mxu0 %v2502
        %v2698 = vpop.f32.mrb[0].mxu0
        %v2699 = vadd.f32 0.0, %v2698
        %v2700 = vpop.f32.mrb[0].mxu0
        %2701 = vmatprep.mubr.f32.mxu0 0.0
        %2702 = vmatmul.mubr.f32.gmra.mrb[0].mxu0 %v2504
        %v2703 = vpop.f32.mrb[0].mxu0
        %v2704 = vadd.f32 0.0, %v2703
        %v2705 = vpop.f32.mrb[0].mxu0
        %2706 = vmatprep.mubr.f32.mxu0 0.0
        %2707 = vmatmul.mubr.f32.gmra.mrb[0].mxu0 %v2506
        %v2708 = vpop.f32.mrb[0].mxu0
        %v2709 = vadd.f32 0.0, %v2708
        %v2710 = vpop.f32.mrb[0].mxu0
        %2711 = vmatprep.mubr.f32.mxu0 0.0
        %2712 = vmatmul.mubr.f32.gmra.mrb[0].mxu0 %v2508
        %v2713 = vpop.f32.mrb[0].mxu0
        %v2714 = vadd.f32 0.0, %v2713
        %v2715 = vpop.f32.mrb[0].mxu0
        %2716 = vmatprep.mubr.f32.mxu0 0.0
        %2717 = vmatmul.mubr.f32.gmra.mrb[0].mxu0 %v2510
        %v2718 = vpop.f32.mrb[0].mxu0
        %v2719 = vadd.f32 0.0, %v2718
        %v2720 = vpop.f32.mrb[0].mxu0
        %2721 = vmatprep.mubr.f32.mxu0 0.0
        %2722 = vmatmul.mubr.f32.gmra.mrb[0].mxu0 %v2512
        %v2723 = vpop.f32.mrb[0].mxu0
        %v2724 = vadd.f32 0.0, %v2723
        %v2725 = vpop.f32.mrb[0].mxu0
        %2726 = vmatprep.mubr.f32.mxu0 0.0
        %2727 = vmatmul.mubr.f32.gmra.mrb[0].mxu0 %v2514
        %v2728 = vpop.f32.mrb[0].mxu0
        %v2729 = vadd.f32 0.0, %v2728
        %v2730 = vpop.f32.mrb[0].mxu0
        %2731 = vmatprep.mubr.f32.mxu0 0.0
        %2732 = vmatmul.mubr.f32.gmra.mrb[0].mxu0 %v2516
        %v2733 = vpop.f32.mrb[0].mxu0
        %v2734 = vadd.f32 0.0, %v2733
        %v2735 = vpop.f32.mrb[0].mxu0
        %2736 = vmatprep.mubr.f32.mxu0 0.0
        %2737 = vmatmul.mubr.f32.gmra.mrb[0].mxu0 %v2518
        %v2738 = vpop.f32.mrb[0].mxu0
        %v2739 = vadd.f32 0.0, %v2738
        %v2740 = vpop.f32.mrb[0].mxu0
        %2741 = vmatprep.mubr.f32.mxu0 0.0
        %2742 = vmatmul.mubr.f32.gmra.mrb[0].mxu0 %v2520
        %v2743 = vpop.f32.mrb[0].mxu0
        %v2744 = vadd.f32 0.0, %v2743
        %v2745 = vpop.f32.mrb[0].mxu0
        %2746 = vmatprep.mubr.f32.mxu0 0.0
        %2747 = vmatmul.mubr.f32.gmra.mrb[0].mxu0 %v2522
        %v2748 = vpop.f32.mrb[0].mxu0
        %v2749 = vadd.f32 0.0, %v2748
        %v2750 = vpop.f32.mrb[0].mxu0
        %2751 = vdwg.mxu0
        %2784 = vrot.lane.b32.xlu0 %v2594, 16
        %v2785 = vpop.permute.xlu0 %2784
        %2786 = vrot.lane.b32.xlu0 %v2599, 16
        %v2787 = vpop.permute.xlu0 %2786
        %2788 = vrot.lane.b32.xlu0 %v2604, 16
        %v2789 = vpop.permute.xlu0 %2788
        %2790 = vrot.lane.b32.xlu0 %v2609, 16
        %v2791 = vpop.permute.xlu0 %2790
        %2792 = vrot.lane.b32.xlu0 %v2614, 16
        %v2793 = vpop.permute.xlu0 %2792
        %2794 = vrot.lane.b32.xlu0 %v2619, 16
        %v2795 = vpop.permute.xlu0 %2794
        %2796 = vrot.lane.b32.xlu0 %v2624, 16
        %v2797 = vpop.permute.xlu0 %2796
        %2798 = vrot.lane.b32.xlu0 %v2629, 16
        %v2799 = vpop.permute.xlu0 %2798
        %2800 = vrot.lane.b32.xlu0 %v2634, 16
        %v2801 = vpop.permute.xlu0 %2800
        %2802 = vrot.lane.b32.xlu0 %v2639, 16
        %v2803 = vpop.permute.xlu0 %2802
        %2804 = vrot.lane.b32.xlu0 %v2644, 16
        %v2805 = vpop.permute.xlu0 %2804
        %2806 = vrot.lane.b32.xlu0 %v2649, 16
        %v2807 = vpop.permute.xlu0 %2806
        %2808 = vrot.lane.b32.xlu0 %v2654, 16
        %v2809 = vpop.permute.xlu0 %2808
        %2810 = vrot.lane.b32.xlu0 %v2659, 16
        %v2811 = vpop.permute.xlu0 %2810
        %2812 = vrot.lane.b32.xlu0 %v2664, 16
        %v2813 = vpop.permute.xlu0 %2812
        %2814 = vrot.lane.b32.xlu0 %v2669, 16
        %v2815 = vpop.permute.xlu0 %2814
        %2816 = vrot.lane.b32.xlu0 %v2674, 16
        %v2817 = vpop.permute.xlu0 %2816
        %2818 = vrot.lane.b32.xlu0 %v2679, 16
        %v2819 = vpop.permute.xlu0 %2818
        %2820 = vrot.lane.b32.xlu0 %v2684, 16
        %v2821 = vpop.permute.xlu0 %2820
        %2822 = vrot.lane.b32.xlu0 %v2689, 16
        %v2823 = vpop.permute.xlu0 %2822
        %2824 = vrot.lane.b32.xlu0 %v2694, 16
        %v2825 = vpop.permute.xlu0 %2824
        %2826 = vrot.lane.b32.xlu0 %v2699, 16
        %v2827 = vpop.permute.xlu0 %2826
        %2828 = vrot.lane.b32.xlu0 %v2704, 16
        %v2829 = vpop.permute.xlu0 %2828
        %2830 = vrot.lane.b32.xlu0 %v2709, 16
        %v2831 = vpop.permute.xlu0 %2830
        %2832 = vrot.lane.b32.xlu0 %v2714, 16
        %v2833 = vpop.permute.xlu0 %2832
        %2834 = vrot.lane.b32.xlu0 %v2719, 16
        %v2835 = vpop.permute.xlu0 %2834
        %2836 = vrot.lane.b32.xlu0 %v2724, 16
        %v2837 = vpop.permute.xlu0 %2836
        %2838 = vrot.lane.b32.xlu0 %v2729, 16
        %v2839 = vpop.permute.xlu0 %2838
        %2840 = vrot.lane.b32.xlu0 %v2734, 16
        %v2841 = vpop.permute.xlu0 %2840
        %2842 = vrot.lane.b32.xlu0 %v2739, 16
        %v2843 = vpop.permute.xlu0 %2842
        %2844 = vrot.lane.b32.xlu0 %v2744, 16
        %v2845 = vpop.permute.xlu0 %2844
        %2846 = vrot.lane.b32.xlu0 %v2749, 16
        %v2847 = vpop.permute.xlu0 %2846
        %vm2880 = vcmask 195712
        %2881 = vst.msk [vmem:[#allocation2] sm:$0xff] %vm2880, %v2785
        %2882 = vst.msk [vmem:[#allocation2 + $0x8] sm:$0xff] %vm2880, %v2787
        %2883 = vst.msk [vmem:[#allocation2 + $0x10] sm:$0xff] %vm2880, %v2789
        %2884 = vst.msk [vmem:[#allocation2 + $0x18] sm:$0xff] %vm2880, %v2791
        %2885 = vst.msk [vmem:[#allocation2 + $0x20] sm:$0xff] %vm2880, %v2793
        %2886 = vst.msk [vmem:[#allocation2 + $0x28] sm:$0xff] %vm2880, %v2795
        %2887 = vst.msk [vmem:[#allocation2 + $0x30] sm:$0xff] %vm2880, %v2797
        %2888 = vst.msk [vmem:[#allocation2 + $0x38] sm:$0xff] %vm2880, %v2799
        %2889 = vst.msk [vmem:[#allocation2 + $0x40] sm:$0xff] %vm2880, %v2801
        %2890 = vst.msk [vmem:[#allocation2 + $0x48] sm:$0xff] %vm2880, %v2803
        %2891 = vst.msk [vmem:[#allocation2 + $0x50] sm:$0xff] %vm2880, %v2805
        %2892 = vst.msk [vmem:[#allocation2 + $0x58] sm:$0xff] %vm2880, %v2807
        %2893 = vst.msk [vmem:[#allocation2 + $0x60] sm:$0xff] %vm2880, %v2809
        %2894 = vst.msk [vmem:[#allocation2 + $0x68] sm:$0xff] %vm2880, %v2811
        %2895 = vst.msk [vmem:[#allocation2 + $0x70] sm:$0xff] %vm2880, %v2813
        %2896 = vst.msk [vmem:[#allocation2 + $0x78] sm:$0xff] %vm2880, %v2815
        %2897 = vst.msk [vmem:[#allocation2 + $0x80] sm:$0xff] %vm2880, %v2817
        %2898 = vst.msk [vmem:[#allocation2 + $0x88] sm:$0xff] %vm2880, %v2819
        %2899 = vst.msk [vmem:[#allocation2 + $0x90] sm:$0xff] %vm2880, %v2821
        %2900 = vst.msk [vmem:[#allocation2 + $0x98] sm:$0xff] %vm2880, %v2823
        %2901 = vst.msk [vmem:[#allocation2 + $0xa0] sm:$0xff] %vm2880, %v2825
        %2902 = vst.msk [vmem:[#allocation2 + $0xa8] sm:$0xff] %vm2880, %v2827
        %2903 = vst.msk [vmem:[#allocation2 + $0xb0] sm:$0xff] %vm2880, %v2829
        %2904 = vst.msk [vmem:[#allocation2 + $0xb8] sm:$0xff] %vm2880, %v2831
        %2905 = vst.msk [vmem:[#allocation2 + $0xc0] sm:$0xff] %vm2880, %v2833
        %2906 = vst.msk [vmem:[#allocation2 + $0xc8] sm:$0xff] %vm2880, %v2835
        %2907 = vst.msk [vmem:[#allocation2 + $0xd0] sm:$0xff] %vm2880, %v2837
        %2908 = vst.msk [vmem:[#allocation2 + $0xd8] sm:$0xff] %vm2880, %v2839
        %2909 = vst.msk [vmem:[#allocation2 + $0xe0] sm:$0xff] %vm2880, %v2841
        %2910 = vst.msk [vmem:[#allocation2 + $0xe8] sm:$0xff] %vm2880, %v2843
        %2911 = vst.msk [vmem:[#allocation2 + $0xf0] sm:$0xff] %vm2880, %v2845
        %2912 = vst.msk [vmem:[#allocation2 + $0xf8] sm:$0xff] %vm2880, %v2847
        %2913 = vrot.lane.b32.xlu0 %v399, 104
        %v2914 = vpop.permute.xlu0 %2913
        %2915 = vrot.lane.b32.xlu0 %v400, 104
        %v2916 = vpop.permute.xlu0 %2915
        %2917 = vrot.lane.b32.xlu0 %v401, 104
        %v2918 = vpop.permute.xlu0 %2917
        %2919 = vrot.lane.b32.xlu0 %v402, 104
        %v2920 = vpop.permute.xlu0 %2919
        %2921 = vrot.lane.b32.xlu0 %v403, 104
        %v2922 = vpop.permute.xlu0 %2921
        %2923 = vrot.lane.b32.xlu0 %v404, 104
        %v2924 = vpop.permute.xlu0 %2923
        %2925 = vrot.lane.b32.xlu0 %v405, 104
        %v2926 = vpop.permute.xlu0 %2925
        %2927 = vrot.lane.b32.xlu0 %v406, 104
        %v2928 = vpop.permute.xlu0 %2927
        %2929 = vrot.lane.b32.xlu0 %v407, 104
        %v2930 = vpop.permute.xlu0 %2929
        %2931 = vrot.lane.b32.xlu0 %v408, 104
        %v2932 = vpop.permute.xlu0 %2931
        %2933 = vrot.lane.b32.xlu0 %v409, 104
        %v2934 = vpop.permute.xlu0 %2933
        %2935 = vrot.lane.b32.xlu0 %v410, 104
        %v2936 = vpop.permute.xlu0 %2935
        %2937 = vrot.lane.b32.xlu0 %v411, 104
        %v2938 = vpop.permute.xlu0 %2937
        %2939 = vrot.lane.b32.xlu0 %v412, 104
        %v2940 = vpop.permute.xlu0 %2939
        %2941 = vrot.lane.b32.xlu0 %v413, 104
        %v2942 = vpop.permute.xlu0 %2941
        %2943 = vrot.lane.b32.xlu0 %v414, 104
        %v2944 = vpop.permute.xlu0 %2943
        %2945 = vrot.lane.b32.xlu0 %v415, 104
        %v2946 = vpop.permute.xlu0 %2945
        %2947 = vrot.lane.b32.xlu0 %v416, 104
        %v2948 = vpop.permute.xlu0 %2947
        %2949 = vrot.lane.b32.xlu0 %v417, 104
        %v2950 = vpop.permute.xlu0 %2949
        %2951 = vrot.lane.b32.xlu0 %v418, 104
        %v2952 = vpop.permute.xlu0 %2951
        %2953 = vrot.lane.b32.xlu0 %v419, 104
        %v2954 = vpop.permute.xlu0 %2953
        %2955 = vrot.lane.b32.xlu0 %v420, 104
        %v2956 = vpop.permute.xlu0 %2955
        %2957 = vrot.lane.b32.xlu0 %v421, 104
        %v2958 = vpop.permute.xlu0 %2957
        %2959 = vrot.lane.b32.xlu0 %v422, 104
        %v2960 = vpop.permute.xlu0 %2959
        %2961 = vrot.lane.b32.xlu0 %v423, 104
        %v2962 = vpop.permute.xlu0 %2961
        %2963 = vrot.lane.b32.xlu0 %v424, 104
        %v2964 = vpop.permute.xlu0 %2963
        %2965 = vrot.lane.b32.xlu0 %v425, 104
        %v2966 = vpop.permute.xlu0 %2965
        %2967 = vrot.lane.b32.xlu0 %v426, 104
        %v2968 = vpop.permute.xlu0 %2967
        %2969 = vrot.lane.b32.xlu0 %v427, 104
        %v2970 = vpop.permute.xlu0 %2969
        %2971 = vrot.lane.b32.xlu0 %v428, 104
        %v2972 = vpop.permute.xlu0 %2971
        %2973 = vrot.lane.b32.xlu0 %v429, 104
        %v2974 = vpop.permute.xlu0 %2973
        %2975 = vrot.lane.b32.xlu0 %v430, 104
        %v2976 = vpop.permute.xlu0 %2975
        %3009 = vxpose.xlu0.b32.start [1/16] %v2914, 128
        %3010 = vxpose.xlu0.b32.cont [2/16] %v2916, 128
        %3011 = vxpose.xlu0.b32.cont [3/16] %v2918, 128
        %3012 = vxpose.xlu0.b32.cont [4/16] %v2920, 128
        %3013 = vxpose.xlu0.b32.cont [5/16] %v2922, 128
        %3014 = vxpose.xlu0.b32.cont [6/16] %v2924, 128
        %3015 = vxpose.xlu0.b32.cont [7/16] %v2926, 128
        %3016 = vxpose.xlu0.b32.cont [8/16] %v2928, 128
        %3017 = vxpose.xlu0.b32.cont [9/16] %v2930, 128
        %3018 = vxpose.xlu0.b32.cont [10/16] %v2932, 128
        %3019 = vxpose.xlu0.b32.cont [11/16] %v2934, 128
        %3020 = vxpose.xlu0.b32.cont [12/16] %v2936, 128
        %3021 = vxpose.xlu0.b32.cont [13/16] %v2938, 128
        %3022 = vxpose.xlu0.b32.cont [14/16] %v2940, 128
        %3023 = vxpose.xlu0.b32.cont [15/16] %v2942, 128
        %3024 = vxpose.xlu0.b32.end [16/16] %v2944, 128
        %v3025 = vpop.trf.xlu0
        %v3026 = vpop.trf.xlu0
        %v3027 = vpop.trf.xlu0
        %v3028 = vpop.trf.xlu0
        %v3029 = vpop.trf.xlu0
        %v3030 = vpop.trf.xlu0
        %v3031 = vpop.trf.xlu0
        %v3032 = vpop.trf.xlu0
        %v3033 = vpop.trf.xlu0
        %v3034 = vpop.trf.xlu0
        %v3035 = vpop.trf.xlu0
        %v3036 = vpop.trf.xlu0
        %v3037 = vpop.trf.xlu0
        %v3038 = vpop.trf.xlu0
        %v3039 = vpop.trf.xlu0
        %v3040 = vpop.trf.xlu0
        %3041 = vxpose.xlu0.b32.start [1/16] %v2946, 128
        %3042 = vxpose.xlu0.b32.cont [2/16] %v2948, 128
        %3043 = vxpose.xlu0.b32.cont [3/16] %v2950, 128
        %3044 = vxpose.xlu0.b32.cont [4/16] %v2952, 128
        %3045 = vxpose.xlu0.b32.cont [5/16] %v2954, 128
        %3046 = vxpose.xlu0.b32.cont [6/16] %v2956, 128
        %3047 = vxpose.xlu0.b32.cont [7/16] %v2958, 128
        %3048 = vxpose.xlu0.b32.cont [8/16] %v2960, 128
        %3049 = vxpose.xlu0.b32.cont [9/16] %v2962, 128
        %3050 = vxpose.xlu0.b32.cont [10/16] %v2964, 128
        %3051 = vxpose.xlu0.b32.cont [11/16] %v2966, 128
        %3052 = vxpose.xlu0.b32.cont [12/16] %v2968, 128
        %3053 = vxpose.xlu0.b32.cont [13/16] %v2970, 128
        %3054 = vxpose.xlu0.b32.cont [14/16] %v2972, 128
        %3055 = vxpose.xlu0.b32.cont [15/16] %v2974, 128
        %3056 = vxpose.xlu0.b32.end [16/16] %v2976, 128
        %v3057 = vpop.trf.xlu0
        %v3058 = vpop.trf.xlu0
        %v3059 = vpop.trf.xlu0
        %v3060 = vpop.trf.xlu0
        %v3061 = vpop.trf.xlu0
        %v3062 = vpop.trf.xlu0
        %v3063 = vpop.trf.xlu0
        %v3064 = vpop.trf.xlu0
        %v3065 = vpop.trf.xlu0
        %v3066 = vpop.trf.xlu0
        %v3067 = vpop.trf.xlu0
        %v3068 = vpop.trf.xlu0
        %v3069 = vpop.trf.xlu0
        %v3070 = vpop.trf.xlu0
        %v3071 = vpop.trf.xlu0
        %v3072 = vpop.trf.xlu0
        %3073 = vrot.lane.b32.xlu0 %v534, 104
        %v3074 = vpop.permute.xlu0 %3073
        %3075 = vrot.lane.b32.xlu0 %v535, 104
        %v3076 = vpop.permute.xlu0 %3075
        %3077 = vrot.lane.b32.xlu0 %v536, 104
        %v3078 = vpop.permute.xlu0 %3077
        %3079 = vrot.lane.b32.xlu0 %v537, 104
        %v3080 = vpop.permute.xlu0 %3079
        %3081 = vrot.lane.b32.xlu0 %v538, 104
        %v3082 = vpop.permute.xlu0 %3081
        %3083 = vrot.lane.b32.xlu0 %v539, 104
        %v3084 = vpop.permute.xlu0 %3083
        %3085 = vrot.lane.b32.xlu0 %v540, 104
        %v3086 = vpop.permute.xlu0 %3085
        %3087 = vrot.lane.b32.xlu0 %v541, 104
        %v3088 = vpop.permute.xlu0 %3087
        %3089 = vrot.lane.b32.xlu0 %v542, 104
        %v3090 = vpop.permute.xlu0 %3089
        %3091 = vrot.lane.b32.xlu0 %v543, 104
        %v3092 = vpop.permute.xlu0 %3091
        %3093 = vrot.lane.b32.xlu0 %v544, 104
        %v3094 = vpop.permute.xlu0 %3093
        %3095 = vrot.lane.b32.xlu0 %v545, 104
        %v3096 = vpop.permute.xlu0 %3095
        %3097 = vrot.lane.b32.xlu0 %v546, 104
        %v3098 = vpop.permute.xlu0 %3097
        %3099 = vrot.lane.b32.xlu0 %v547, 104
        %v3100 = vpop.permute.xlu0 %3099
        %3101 = vrot.lane.b32.xlu0 %v548, 104
        %v3102 = vpop.permute.xlu0 %3101
        %3103 = vrot.lane.b32.xlu0 %v549, 104
        %v3104 = vpop.permute.xlu0 %3103
        %3105 = vrot.lane.b32.xlu0 %v550, 104
        %v3106 = vpop.permute.xlu0 %3105
        %3107 = vrot.lane.b32.xlu0 %v551, 104
        %v3108 = vpop.permute.xlu0 %3107
        %3109 = vrot.lane.b32.xlu0 %v552, 104
        %v3110 = vpop.permute.xlu0 %3109
        %3111 = vrot.lane.b32.xlu0 %v553, 104
        %v3112 = vpop.permute.xlu0 %3111
        %3113 = vrot.lane.b32.xlu0 %v554, 104
        %v3114 = vpop.permute.xlu0 %3113
        %3115 = vrot.lane.b32.xlu0 %v555, 104
        %v3116 = vpop.permute.xlu0 %3115
        %3117 = vrot.lane.b32.xlu0 %v556, 104
        %v3118 = vpop.permute.xlu0 %3117
        %3119 = vrot.lane.b32.xlu0 %v557, 104
        %v3120 = vpop.permute.xlu0 %3119
        %3121 = vrot.lane.b32.xlu0 %v558, 104
        %v3122 = vpop.permute.xlu0 %3121
        %3123 = vrot.lane.b32.xlu0 %v559, 104
        %v3124 = vpop.permute.xlu0 %3123
        %3125 = vrot.lane.b32.xlu0 %v560, 104
        %v3126 = vpop.permute.xlu0 %3125
        %3127 = vrot.lane.b32.xlu0 %v561, 104
        %v3128 = vpop.permute.xlu0 %3127
        %3129 = vrot.lane.b32.xlu0 %v562, 104
        %v3130 = vpop.permute.xlu0 %3129
        %3131 = vrot.lane.b32.xlu0 %v563, 104
        %v3132 = vpop.permute.xlu0 %3131
        %3133 = vrot.lane.b32.xlu0 %v564, 104
        %v3134 = vpop.permute.xlu0 %3133
        %3135 = vrot.lane.b32.xlu0 %v565, 104
        %v3136 = vpop.permute.xlu0 %3135
        %3169 = vmatprep.subr.mxu0 0.0
        %3170 = vmatpush1.msra.mxu0 %v3074
        %3171 = vmatprep.subr.mxu0 0.0
        %3172 = vmatpush1.msra.mxu0 %v3076
        %3173 = vmatprep.subr.mxu0 0.0
        %3174 = vmatpush1.msra.mxu0 %v3078
        %3175 = vmatprep.subr.mxu0 0.0
        %3176 = vmatpush1.msra.mxu0 %v3080
        %3177 = vmatprep.subr.mxu0 0.0
        %3178 = vmatpush1.msra.mxu0 %v3082
        %3179 = vmatprep.subr.mxu0 0.0
        %3180 = vmatpush1.msra.mxu0 %v3084
        %3181 = vmatprep.subr.mxu0 0.0
        %3182 = vmatpush1.msra.mxu0 %v3086
        %3183 = vmatprep.subr.mxu0 0.0
        %3184 = vmatpush1.msra.mxu0 %v3088
        %3185 = vmatprep.subr.mxu0 0.0
        %3186 = vmatpush1.msra.mxu0 %v3090
        %3187 = vmatprep.subr.mxu0 0.0
        %3188 = vmatpush1.msra.mxu0 %v3092
        %3189 = vmatprep.subr.mxu0 0.0
        %3190 = vmatpush1.msra.mxu0 %v3094
        %3191 = vmatprep.subr.mxu0 0.0
        %3192 = vmatpush1.msra.mxu0 %v3096
        %3193 = vmatprep.subr.mxu0 0.0
        %3194 = vmatpush1.msra.mxu0 %v3098
        %3195 = vmatprep.subr.mxu0 0.0
        %3196 = vmatpush1.msra.mxu0 %v3100
        %3197 = vmatprep.subr.mxu0 0.0
        %3198 = vmatpush1.msra.mxu0 %v3102
        %3199 = vmatprep.subr.mxu0 0.0
        %3200 = vmatpush1.msra.mxu0 %v3104
        %3201 = vmatprep.subr.mxu0 0.0
        %3202 = vmatpush1.msra.mxu0 %v3106
        %3203 = vmatprep.subr.mxu0 0.0
        %3204 = vmatpush1.msra.mxu0 %v3108
        %3205 = vmatprep.subr.mxu0 0.0
        %3206 = vmatpush1.msra.mxu0 %v3110
        %3207 = vmatprep.subr.mxu0 0.0
        %3208 = vmatpush1.msra.mxu0 %v3112
        %3209 = vmatprep.subr.mxu0 0.0
        %3210 = vmatpush1.msra.mxu0 %v3114
        %3211 = vmatprep.subr.mxu0 0.0
        %3212 = vmatpush1.msra.mxu0 %v3116
        %3213 = vmatprep.subr.mxu0 0.0
        %3214 = vmatpush1.msra.mxu0 %v3118
        %3215 = vmatprep.subr.mxu0 0.0
        %3216 = vmatpush1.msra.mxu0 %v3120
        %3217 = vmatprep.subr.mxu0 0.0
        %3218 = vmatpush1.msra.mxu0 %v3122
        %3219 = vmatprep.subr.mxu0 0.0
        %3220 = vmatpush1.msra.mxu0 %v3124
        %3221 = vmatprep.subr.mxu0 0.0
        %3222 = vmatpush1.msra.mxu0 %v3126
        %3223 = vmatprep.subr.mxu0 0.0
        %3224 = vmatpush1.msra.mxu0 %v3128
        %3225 = vmatprep.subr.mxu0 0.0
        %3226 = vmatpush1.msra.mxu0 %v3130
        %3227 = vmatprep.subr.mxu0 0.0
        %3228 = vmatpush1.msra.mxu0 %v3132
        %3229 = vmatprep.subr.mxu0 0.0
        %3230 = vmatpush1.msra.mxu0 %v3134
        %3231 = vmatprep.subr.mxu0 0.0
        %3232 = vmatpush1.msra.mxu0 %v3136
        %3233 = vmatprep.mubr.f32.mxu0 %v3057
        %3234 = vmatmul.mubr.f32.gmra.mrb[0].mxu0 %v3025
        %v3235 = vpop.f32.mrb[0].mxu0
        %v3236 = vadd.f32 0.0, %v3235
        %v3237 = vpop.f32.mrb[0].mxu0
        %3238 = vdwg.mxu0
        %s3239 = sld [smem:[#allocation3 + $0x180]]
        %v3240 = vstv %s3239
        %v3241 = vmul.f32 %v3236, %v3240
        %v3242 = vsel %vm703, %v3241, -inf
        %3243 = vmax.xlane.f32.xlu0 %v3242
        %v3244 = vpop.xlane.xlu0 %3243
        %v3245 = vsub.f32 %v3241, %v3244
        %v3246 = vmul.f32 %v3245, 1.442695
        %v3247 = vpow.pop %v3246
        %v3248 = vsel %vm703, %v3247, 0.0
        %3249 = vadd.xlane.f32.xlu0 %v3248
        %v3250 = vpop.xlane.xlu0 %3249
        %v3251 = vrcp.pop %v3250
        %v3252 = vmul.f32 %v3247, %v3251
        %3253 = vrot.lane.b32.xlu0 %v263, 72
        %v3254 = vpop.permute.xlu0 %3253
        %3255 = vrot.lane.b32.xlu0 %v264, 72
        %v3256 = vpop.permute.xlu0 %3255
        %3257 = vrot.lane.b32.xlu0 %v265, 72
        %v3258 = vpop.permute.xlu0 %3257
        %3259 = vrot.lane.b32.xlu0 %v266, 72
        %v3260 = vpop.permute.xlu0 %3259
        %3261 = vrot.lane.b32.xlu0 %v267, 72
        %v3262 = vpop.permute.xlu0 %3261
        %3263 = vrot.lane.b32.xlu0 %v268, 72
        %v3264 = vpop.permute.xlu0 %3263
        %3265 = vrot.lane.b32.xlu0 %v269, 72
        %v3266 = vpop.permute.xlu0 %3265
        %3267 = vrot.lane.b32.xlu0 %v270, 72
        %v3268 = vpop.permute.xlu0 %3267
        %3269 = vrot.lane.b32.xlu0 %v271, 72
        %v3270 = vpop.permute.xlu0 %3269
        %3271 = vrot.lane.b32.xlu0 %v272, 72
        %v3272 = vpop.permute.xlu0 %3271
        %3273 = vrot.lane.b32.xlu0 %v273, 72
        %v3274 = vpop.permute.xlu0 %3273
        %3275 = vrot.lane.b32.xlu0 %v274, 72
        %v3276 = vpop.permute.xlu0 %3275
        %3277 = vrot.lane.b32.xlu0 %v275, 72
        %v3278 = vpop.permute.xlu0 %3277
        %3279 = vrot.lane.b32.xlu0 %v276, 72
        %v3280 = vpop.permute.xlu0 %3279
        %3281 = vrot.lane.b32.xlu0 %v277, 72
        %v3282 = vpop.permute.xlu0 %3281
        %3283 = vrot.lane.b32.xlu0 %v278, 72
        %v3284 = vpop.permute.xlu0 %3283
        %3285 = vrot.lane.b32.xlu0 %v279, 72
        %v3286 = vpop.permute.xlu0 %3285
        %3287 = vrot.lane.b32.xlu0 %v280, 72
        %v3288 = vpop.permute.xlu0 %3287
        %3289 = vrot.lane.b32.xlu0 %v281, 72
        %v3290 = vpop.permute.xlu0 %3289
        %3291 = vrot.lane.b32.xlu0 %v282, 72
        %v3292 = vpop.permute.xlu0 %3291
        %3293 = vrot.lane.b32.xlu0 %v283, 72
        %v3294 = vpop.permute.xlu0 %3293
        %3295 = vrot.lane.b32.xlu0 %v284, 72
        %v3296 = vpop.permute.xlu0 %3295
        %3297 = vrot.lane.b32.xlu0 %v285, 72
        %v3298 = vpop.permute.xlu0 %3297
        %3299 = vrot.lane.b32.xlu0 %v286, 72
        %v3300 = vpop.permute.xlu0 %3299
        %3301 = vrot.lane.b32.xlu0 %v287, 72
        %v3302 = vpop.permute.xlu0 %3301
        %3303 = vrot.lane.b32.xlu0 %v288, 72
        %v3304 = vpop.permute.xlu0 %3303
        %3305 = vrot.lane.b32.xlu0 %v289, 72
        %v3306 = vpop.permute.xlu0 %3305
        %3307 = vrot.lane.b32.xlu0 %v290, 72
        %v3308 = vpop.permute.xlu0 %3307
        %3309 = vrot.lane.b32.xlu0 %v291, 72
        %v3310 = vpop.permute.xlu0 %3309
        %3311 = vrot.lane.b32.xlu0 %v292, 72
        %v3312 = vpop.permute.xlu0 %3311
        %3313 = vrot.lane.b32.xlu0 %v293, 72
        %v3314 = vpop.permute.xlu0 %3313
        %3315 = vrot.lane.b32.xlu0 %v294, 72
        %v3316 = vpop.permute.xlu0 %3315
        %v3317 = vsel %vm703, %v3254, 0
        %v3319 = vsel %vm703, %v3256, 0
        %v3321 = vsel %vm703, %v3258, 0
        %v3323 = vsel %vm703, %v3260, 0
        %v3325 = vsel %vm703, %v3262, 0
        %v3327 = vsel %vm703, %v3264, 0
        %v3329 = vsel %vm703, %v3266, 0
        %v3331 = vsel %vm703, %v3268, 0
        %v3333 = vsel %vm703, %v3270, 0
        %v3335 = vsel %vm703, %v3272, 0
        %v3337 = vsel %vm703, %v3274, 0
        %v3339 = vsel %vm703, %v3276, 0
        %v3341 = vsel %vm703, %v3278, 0
        %v3343 = vsel %vm703, %v3280, 0
        %v3345 = vsel %vm703, %v3282, 0
        %v3347 = vsel %vm703, %v3284, 0
        %v3349 = vsel %vm703, %v3286, 0
        %v3351 = vsel %vm703, %v3288, 0
        %v3353 = vsel %vm703, %v3290, 0
        %v3355 = vsel %vm703, %v3292, 0
        %v3357 = vsel %vm703, %v3294, 0
        %v3359 = vsel %vm703, %v3296, 0
        %v3361 = vsel %vm703, %v3298, 0
        %v3363 = vsel %vm703, %v3300, 0
        %v3365 = vsel %vm703, %v3302, 0
        %v3367 = vsel %vm703, %v3304, 0
        %v3369 = vsel %vm703, %v3306, 0
        %v3371 = vsel %vm703, %v3308, 0
        %v3373 = vsel %vm703, %v3310, 0
        %v3375 = vsel %vm703, %v3312, 0
        %v3377 = vsel %vm703, %v3314, 0
        %v3379 = vsel %vm703, %v3316, 0
        %v3382 = vsel %vm703, %v3252, 0
        %3384 = vmatprep.subr.mxu0 0.0
        %3385 = vmatpush1.xpose.msra.mxu0 %v3382
        %3386 = vmatprep.subr.mxu0 0.0
        %3387 = vmatpush1.xpose.msra.mxu0 0.0
        %3388 = vmatprep.subr.mxu0 0.0
        %3389 = vmatpush1.xpose.msra.mxu0 0.0
        %3390 = vmatprep.subr.mxu0 0.0
        %3391 = vmatpush1.xpose.msra.mxu0 0.0
        %3392 = vmatprep.subr.mxu0 0.0
        %3393 = vmatpush1.xpose.msra.mxu0 0.0
        %3394 = vmatprep.subr.mxu0 0.0
        %3395 = vmatpush1.xpose.msra.mxu0 0.0
        %3396 = vmatprep.subr.mxu0 0.0
        %3397 = vmatpush1.xpose.msra.mxu0 0.0
        %3398 = vmatprep.subr.mxu0 0.0
        %3399 = vmatpush1.xpose.msra.mxu0 0.0
        %3400 = vmatprep.subr.mxu0 0.0
        %3401 = vmatpush1.xpose.msra.mxu0 0.0
        %3402 = vmatprep.subr.mxu0 0.0
        %3403 = vmatpush1.xpose.msra.mxu0 0.0
        %3404 = vmatprep.subr.mxu0 0.0
        %3405 = vmatpush1.xpose.msra.mxu0 0.0
        %3406 = vmatprep.subr.mxu0 0.0
        %3407 = vmatpush1.xpose.msra.mxu0 0.0
        %3408 = vmatprep.subr.mxu0 0.0
        %3409 = vmatpush1.xpose.msra.mxu0 0.0
        %3410 = vmatprep.subr.mxu0 0.0
        %3411 = vmatpush1.xpose.msra.mxu0 0.0
        %3412 = vmatprep.subr.mxu0 0.0
        %3413 = vmatpush1.xpose.msra.mxu0 0.0
        %3414 = vmatprep.subr.mxu0 0.0
        %3415 = vmatpush1.xpose.msra.mxu0 0.0
        %3416 = vmatprep.subr.mxu0 0.0
        %3417 = vmatpush1.xpose.msra.mxu0 0.0
        %3418 = vmatprep.subr.mxu0 0.0
        %3419 = vmatpush1.xpose.msra.mxu0 0.0
        %3420 = vmatprep.subr.mxu0 0.0
        %3421 = vmatpush1.xpose.msra.mxu0 0.0
        %3422 = vmatprep.subr.mxu0 0.0
        %3423 = vmatpush1.xpose.msra.mxu0 0.0
        %3424 = vmatprep.subr.mxu0 0.0
        %3425 = vmatpush1.xpose.msra.mxu0 0.0
        %3426 = vmatprep.subr.mxu0 0.0
        %3427 = vmatpush1.xpose.msra.mxu0 0.0
        %3428 = vmatprep.subr.mxu0 0.0
        %3429 = vmatpush1.xpose.msra.mxu0 0.0
        %3430 = vmatprep.subr.mxu0 0.0
        %3431 = vmatpush1.xpose.msra.mxu0 0.0
        %3432 = vmatprep.subr.mxu0 0.0
        %3433 = vmatpush1.xpose.msra.mxu0 0.0
        %3434 = vmatprep.subr.mxu0 0.0
        %3435 = vmatpush1.xpose.msra.mxu0 0.0
        %3436 = vmatprep.subr.mxu0 0.0
        %3437 = vmatpush1.xpose.msra.mxu0 0.0
        %3438 = vmatprep.subr.mxu0 0.0
        %3439 = vmatpush1.xpose.msra.mxu0 0.0
        %3440 = vmatprep.subr.mxu0 0.0
        %3441 = vmatpush1.xpose.msra.mxu0 0.0
        %3442 = vmatprep.subr.mxu0 0.0
        %3443 = vmatpush1.xpose.msra.mxu0 0.0
        %3444 = vmatprep.subr.mxu0 0.0
        %3445 = vmatpush1.xpose.msra.mxu0 0.0
        %3446 = vmatprep.subr.mxu0 0.0
        %3447 = vmatpush1.xpose.msra.mxu0 0.0
        %3448 = vmatprep.mubr.f32.mxu0 0.0
        %3449 = vmatmul.mubr.f32.gmra.mrb[0].mxu0 %v3317
        %v3450 = vpop.f32.mrb[0].mxu0
        %v3451 = vadd.f32 0.0, %v3450
        %v3452 = vpop.f32.mrb[0].mxu0
        %3453 = vmatprep.mubr.f32.mxu0 0.0
        %3454 = vmatmul.mubr.f32.gmra.mrb[0].mxu0 %v3319
        %v3455 = vpop.f32.mrb[0].mxu0
        %v3456 = vadd.f32 0.0, %v3455
        %v3457 = vpop.f32.mrb[0].mxu0
        %3458 = vmatprep.mubr.f32.mxu0 0.0
        %3459 = vmatmul.mubr.f32.gmra.mrb[0].mxu0 %v3321
        %v3460 = vpop.f32.mrb[0].mxu0
        %v3461 = vadd.f32 0.0, %v3460
        %v3462 = vpop.f32.mrb[0].mxu0
        %3463 = vmatprep.mubr.f32.mxu0 0.0
        %3464 = vmatmul.mubr.f32.gmra.mrb[0].mxu0 %v3323
        %v3465 = vpop.f32.mrb[0].mxu0
        %v3466 = vadd.f32 0.0, %v3465
        %v3467 = vpop.f32.mrb[0].mxu0
        %3468 = vmatprep.mubr.f32.mxu0 0.0
        %3469 = vmatmul.mubr.f32.gmra.mrb[0].mxu0 %v3325
        %v3470 = vpop.f32.mrb[0].mxu0
        %v3471 = vadd.f32 0.0, %v3470
        %v3472 = vpop.f32.mrb[0].mxu0
        %3473 = vmatprep.mubr.f32.mxu0 0.0
        %3474 = vmatmul.mubr.f32.gmra.mrb[0].mxu0 %v3327
        %v3475 = vpop.f32.mrb[0].mxu0
        %v3476 = vadd.f32 0.0, %v3475
        %v3477 = vpop.f32.mrb[0].mxu0
        %3478 = vmatprep.mubr.f32.mxu0 0.0
        %3479 = vmatmul.mubr.f32.gmra.mrb[0].mxu0 %v3329
        %v3480 = vpop.f32.mrb[0].mxu0
        %v3481 = vadd.f32 0.0, %v3480
        %v3482 = vpop.f32.mrb[0].mxu0
        %3483 = vmatprep.mubr.f32.mxu0 0.0
        %3484 = vmatmul.mubr.f32.gmra.mrb[0].mxu0 %v3331
        %v3485 = vpop.f32.mrb[0].mxu0
        %v3486 = vadd.f32 0.0, %v3485
        %v3487 = vpop.f32.mrb[0].mxu0
        %3488 = vmatprep.mubr.f32.mxu0 0.0
        %3489 = vmatmul.mubr.f32.gmra.mrb[0].mxu0 %v3333
        %v3490 = vpop.f32.mrb[0].mxu0
        %v3491 = vadd.f32 0.0, %v3490
        %v3492 = vpop.f32.mrb[0].mxu0
        %3493 = vmatprep.mubr.f32.mxu0 0.0
        %3494 = vmatmul.mubr.f32.gmra.mrb[0].mxu0 %v3335
        %v3495 = vpop.f32.mrb[0].mxu0
        %v3496 = vadd.f32 0.0, %v3495
        %v3497 = vpop.f32.mrb[0].mxu0
        %3498 = vmatprep.mubr.f32.mxu0 0.0
        %3499 = vmatmul.mubr.f32.gmra.mrb[0].mxu0 %v3337
        %v3500 = vpop.f32.mrb[0].mxu0
        %v3501 = vadd.f32 0.0, %v3500
        %v3502 = vpop.f32.mrb[0].mxu0
        %3503 = vmatprep.mubr.f32.mxu0 0.0
        %3504 = vmatmul.mubr.f32.gmra.mrb[0].mxu0 %v3339
        %v3505 = vpop.f32.mrb[0].mxu0
        %v3506 = vadd.f32 0.0, %v3505
        %v3507 = vpop.f32.mrb[0].mxu0
        %3508 = vmatprep.mubr.f32.mxu0 0.0
        %3509 = vmatmul.mubr.f32.gmra.mrb[0].mxu0 %v3341
        %v3510 = vpop.f32.mrb[0].mxu0
        %v3511 = vadd.f32 0.0, %v3510
        %v3512 = vpop.f32.mrb[0].mxu0
        %3513 = vmatprep.mubr.f32.mxu0 0.0
        %3514 = vmatmul.mubr.f32.gmra.mrb[0].mxu0 %v3343
        %v3515 = vpop.f32.mrb[0].mxu0
        %v3516 = vadd.f32 0.0, %v3515
        %v3517 = vpop.f32.mrb[0].mxu0
        %3518 = vmatprep.mubr.f32.mxu0 0.0
        %3519 = vmatmul.mubr.f32.gmra.mrb[0].mxu0 %v3345
        %v3520 = vpop.f32.mrb[0].mxu0
        %v3521 = vadd.f32 0.0, %v3520
        %v3522 = vpop.f32.mrb[0].mxu0
        %3523 = vmatprep.mubr.f32.mxu0 0.0
        %3524 = vmatmul.mubr.f32.gmra.mrb[0].mxu0 %v3347
        %v3525 = vpop.f32.mrb[0].mxu0
        %v3526 = vadd.f32 0.0, %v3525
        %v3527 = vpop.f32.mrb[0].mxu0
        %3528 = vmatprep.mubr.f32.mxu0 0.0
        %3529 = vmatmul.mubr.f32.gmra.mrb[0].mxu0 %v3349
        %v3530 = vpop.f32.mrb[0].mxu0
        %v3531 = vadd.f32 0.0, %v3530
        %v3532 = vpop.f32.mrb[0].mxu0
        %3533 = vmatprep.mubr.f32.mxu0 0.0
        %3534 = vmatmul.mubr.f32.gmra.mrb[0].mxu0 %v3351
        %v3535 = vpop.f32.mrb[0].mxu0
        %v3536 = vadd.f32 0.0, %v3535
        %v3537 = vpop.f32.mrb[0].mxu0
        %3538 = vmatprep.mubr.f32.mxu0 0.0
        %3539 = vmatmul.mubr.f32.gmra.mrb[0].mxu0 %v3353
        %v3540 = vpop.f32.mrb[0].mxu0
        %v3541 = vadd.f32 0.0, %v3540
        %v3542 = vpop.f32.mrb[0].mxu0
        %3543 = vmatprep.mubr.f32.mxu0 0.0
        %3544 = vmatmul.mubr.f32.gmra.mrb[0].mxu0 %v3355
        %v3545 = vpop.f32.mrb[0].mxu0
        %v3546 = vadd.f32 0.0, %v3545
        %v3547 = vpop.f32.mrb[0].mxu0
        %3548 = vmatprep.mubr.f32.mxu0 0.0
        %3549 = vmatmul.mubr.f32.gmra.mrb[0].mxu0 %v3357
        %v3550 = vpop.f32.mrb[0].mxu0
        %v3551 = vadd.f32 0.0, %v3550
        %v3552 = vpop.f32.mrb[0].mxu0
        %3553 = vmatprep.mubr.f32.mxu0 0.0
        %3554 = vmatmul.mubr.f32.gmra.mrb[0].mxu0 %v3359
        %v3555 = vpop.f32.mrb[0].mxu0
        %v3556 = vadd.f32 0.0, %v3555
        %v3557 = vpop.f32.mrb[0].mxu0
        %3558 = vmatprep.mubr.f32.mxu0 0.0
        %3559 = vmatmul.mubr.f32.gmra.mrb[0].mxu0 %v3361
        %v3560 = vpop.f32.mrb[0].mxu0
        %v3561 = vadd.f32 0.0, %v3560
        %v3562 = vpop.f32.mrb[0].mxu0
        %3563 = vmatprep.mubr.f32.mxu0 0.0
        %3564 = vmatmul.mubr.f32.gmra.mrb[0].mxu0 %v3363
        %v3565 = vpop.f32.mrb[0].mxu0
        %v3566 = vadd.f32 0.0, %v3565
        %v3567 = vpop.f32.mrb[0].mxu0
        %3568 = vmatprep.mubr.f32.mxu0 0.0
        %3569 = vmatmul.mubr.f32.gmra.mrb[0].mxu0 %v3365
        %v3570 = vpop.f32.mrb[0].mxu0
        %v3571 = vadd.f32 0.0, %v3570
        %v3572 = vpop.f32.mrb[0].mxu0
        %3573 = vmatprep.mubr.f32.mxu0 0.0
        %3574 = vmatmul.mubr.f32.gmra.mrb[0].mxu0 %v3367
        %v3575 = vpop.f32.mrb[0].mxu0
        %v3576 = vadd.f32 0.0, %v3575
        %v3577 = vpop.f32.mrb[0].mxu0
        %3578 = vmatprep.mubr.f32.mxu0 0.0
        %3579 = vmatmul.mubr.f32.gmra.mrb[0].mxu0 %v3369
        %v3580 = vpop.f32.mrb[0].mxu0
        %v3581 = vadd.f32 0.0, %v3580
        %v3582 = vpop.f32.mrb[0].mxu0
        %3583 = vmatprep.mubr.f32.mxu0 0.0
        %3584 = vmatmul.mubr.f32.gmra.mrb[0].mxu0 %v3371
        %v3585 = vpop.f32.mrb[0].mxu0
        %v3586 = vadd.f32 0.0, %v3585
        %v3587 = vpop.f32.mrb[0].mxu0
        %3588 = vmatprep.mubr.f32.mxu0 0.0
        %3589 = vmatmul.mubr.f32.gmra.mrb[0].mxu0 %v3373
        %v3590 = vpop.f32.mrb[0].mxu0
        %v3591 = vadd.f32 0.0, %v3590
        %v3592 = vpop.f32.mrb[0].mxu0
        %3593 = vmatprep.mubr.f32.mxu0 0.0
        %3594 = vmatmul.mubr.f32.gmra.mrb[0].mxu0 %v3375
        %v3595 = vpop.f32.mrb[0].mxu0
        %v3596 = vadd.f32 0.0, %v3595
        %v3597 = vpop.f32.mrb[0].mxu0
        %3598 = vmatprep.mubr.f32.mxu0 0.0
        %3599 = vmatmul.mubr.f32.gmra.mrb[0].mxu0 %v3377
        %v3600 = vpop.f32.mrb[0].mxu0
        %v3601 = vadd.f32 0.0, %v3600
        %v3602 = vpop.f32.mrb[0].mxu0
        %3603 = vmatprep.mubr.f32.mxu0 0.0
        %3604 = vmatmul.mubr.f32.gmra.mrb[0].mxu0 %v3379
        %v3605 = vpop.f32.mrb[0].mxu0
        %v3606 = vadd.f32 0.0, %v3605
        %v3607 = vpop.f32.mrb[0].mxu0
        %3608 = vdwg.mxu0
        %3641 = vrot.lane.b32.xlu0 %v3451, 24
        %v3642 = vpop.permute.xlu0 %3641
        %3643 = vrot.lane.b32.xlu0 %v3456, 24
        %v3644 = vpop.permute.xlu0 %3643
        %3645 = vrot.lane.b32.xlu0 %v3461, 24
        %v3646 = vpop.permute.xlu0 %3645
        %3647 = vrot.lane.b32.xlu0 %v3466, 24
        %v3648 = vpop.permute.xlu0 %3647
        %3649 = vrot.lane.b32.xlu0 %v3471, 24
        %v3650 = vpop.permute.xlu0 %3649
        %3651 = vrot.lane.b32.xlu0 %v3476, 24
        %v3652 = vpop.permute.xlu0 %3651
        %3653 = vrot.lane.b32.xlu0 %v3481, 24
        %v3654 = vpop.permute.xlu0 %3653
        %3655 = vrot.lane.b32.xlu0 %v3486, 24
        %v3656 = vpop.permute.xlu0 %3655
        %3657 = vrot.lane.b32.xlu0 %v3491, 24
        %v3658 = vpop.permute.xlu0 %3657
        %3659 = vrot.lane.b32.xlu0 %v3496, 24
        %v3660 = vpop.permute.xlu0 %3659
        %3661 = vrot.lane.b32.xlu0 %v3501, 24
        %v3662 = vpop.permute.xlu0 %3661
        %3663 = vrot.lane.b32.xlu0 %v3506, 24
        %v3664 = vpop.permute.xlu0 %3663
        %3665 = vrot.lane.b32.xlu0 %v3511, 24
        %v3666 = vpop.permute.xlu0 %3665
        %3667 = vrot.lane.b32.xlu0 %v3516, 24
        %v3668 = vpop.permute.xlu0 %3667
        %3669 = vrot.lane.b32.xlu0 %v3521, 24
        %v3670 = vpop.permute.xlu0 %3669
        %3671 = vrot.lane.b32.xlu0 %v3526, 24
        %v3672 = vpop.permute.xlu0 %3671
        %3673 = vrot.lane.b32.xlu0 %v3531, 24
        %v3674 = vpop.permute.xlu0 %3673
        %3675 = vrot.lane.b32.xlu0 %v3536, 24
        %v3676 = vpop.permute.xlu0 %3675
        %3677 = vrot.lane.b32.xlu0 %v3541, 24
        %v3678 = vpop.permute.xlu0 %3677
        %3679 = vrot.lane.b32.xlu0 %v3546, 24
        %v3680 = vpop.permute.xlu0 %3679
        %3681 = vrot.lane.b32.xlu0 %v3551, 24
        %v3682 = vpop.permute.xlu0 %3681
        %3683 = vrot.lane.b32.xlu0 %v3556, 24
        %v3684 = vpop.permute.xlu0 %3683
        %3685 = vrot.lane.b32.xlu0 %v3561, 24
        %v3686 = vpop.permute.xlu0 %3685
        %3687 = vrot.lane.b32.xlu0 %v3566, 24
        %v3688 = vpop.permute.xlu0 %3687
        %3689 = vrot.lane.b32.xlu0 %v3571, 24
        %v3690 = vpop.permute.xlu0 %3689
        %3691 = vrot.lane.b32.xlu0 %v3576, 24
        %v3692 = vpop.permute.xlu0 %3691
        %3693 = vrot.lane.b32.xlu0 %v3581, 24
        %v3694 = vpop.permute.xlu0 %3693
        %3695 = vrot.lane.b32.xlu0 %v3586, 24
        %v3696 = vpop.permute.xlu0 %3695
        %3697 = vrot.lane.b32.xlu0 %v3591, 24
        %v3698 = vpop.permute.xlu0 %3697
        %3699 = vrot.lane.b32.xlu0 %v3596, 24
        %v3700 = vpop.permute.xlu0 %3699
        %3701 = vrot.lane.b32.xlu0 %v3601, 24
        %v3702 = vpop.permute.xlu0 %3701
        %3703 = vrot.lane.b32.xlu0 %v3606, 24
        %v3704 = vpop.permute.xlu0 %3703
        %vm3737 = vcmask 261312
        %3738 = vst.msk [vmem:[#allocation2] sm:$0xff] %vm3737, %v3642
        %3739 = vst.msk [vmem:[#allocation2 + $0x8] sm:$0xff] %vm3737, %v3644
        %3740 = vst.msk [vmem:[#allocation2 + $0x10] sm:$0xff] %vm3737, %v3646
        %3741 = vst.msk [vmem:[#allocation2 + $0x18] sm:$0xff] %vm3737, %v3648
        %3742 = vst.msk [vmem:[#allocation2 + $0x20] sm:$0xff] %vm3737, %v3650
        %3743 = vst.msk [vmem:[#allocation2 + $0x28] sm:$0xff] %vm3737, %v3652
        %3744 = vst.msk [vmem:[#allocation2 + $0x30] sm:$0xff] %vm3737, %v3654
        %3745 = vst.msk [vmem:[#allocation2 + $0x38] sm:$0xff] %vm3737, %v3656
        %3746 = vst.msk [vmem:[#allocation2 + $0x40] sm:$0xff] %vm3737, %v3658
        %3747 = vst.msk [vmem:[#allocation2 + $0x48] sm:$0xff] %vm3737, %v3660
        %3748 = vst.msk [vmem:[#allocation2 + $0x50] sm:$0xff] %vm3737, %v3662
        %3749 = vst.msk [vmem:[#allocation2 + $0x58] sm:$0xff] %vm3737, %v3664
        %3750 = vst.msk [vmem:[#allocation2 + $0x60] sm:$0xff] %vm3737, %v3666
        %3751 = vst.msk [vmem:[#allocation2 + $0x68] sm:$0xff] %vm3737, %v3668
        %3752 = vst.msk [vmem:[#allocation2 + $0x70] sm:$0xff] %vm3737, %v3670
        %3753 = vst.msk [vmem:[#allocation2 + $0x78] sm:$0xff] %vm3737, %v3672
        %3754 = vst.msk [vmem:[#allocation2 + $0x80] sm:$0xff] %vm3737, %v3674
        %3755 = vst.msk [vmem:[#allocation2 + $0x88] sm:$0xff] %vm3737, %v3676
        %3756 = vst.msk [vmem:[#allocation2 + $0x90] sm:$0xff] %vm3737, %v3678
        %3757 = vst.msk [vmem:[#allocation2 + $0x98] sm:$0xff] %vm3737, %v3680
        %3758 = vst.msk [vmem:[#allocation2 + $0xa0] sm:$0xff] %vm3737, %v3682
        %3759 = vst.msk [vmem:[#allocation2 + $0xa8] sm:$0xff] %vm3737, %v3684
        %3760 = vst.msk [vmem:[#allocation2 + $0xb0] sm:$0xff] %vm3737, %v3686
        %3761 = vst.msk [vmem:[#allocation2 + $0xb8] sm:$0xff] %vm3737, %v3688
        %3762 = vst.msk [vmem:[#allocation2 + $0xc0] sm:$0xff] %vm3737, %v3690
        %3763 = vst.msk [vmem:[#allocation2 + $0xc8] sm:$0xff] %vm3737, %v3692
        %3764 = vst.msk [vmem:[#allocation2 + $0xd0] sm:$0xff] %vm3737, %v3694
        %3765 = vst.msk [vmem:[#allocation2 + $0xd8] sm:$0xff] %vm3737, %v3696
        %3766 = vst.msk [vmem:[#allocation2 + $0xe0] sm:$0xff] %vm3737, %v3698
        %3767 = vst.msk [vmem:[#allocation2 + $0xe8] sm:$0xff] %vm3737, %v3700
        %3768 = vst.msk [vmem:[#allocation2 + $0xf0] sm:$0xff] %vm3737, %v3702
        %3769 = vst.msk [vmem:[#allocation2 + $0xf8] sm:$0xff] %vm3737, %v3704
        %v3770 = vld [vmem:[#allocation2] sm:$0xff]
        %v3771 = vld [vmem:[#allocation2 + $0x8] sm:$0xff]
        %v3772 = vld [vmem:[#allocation2 + $0x10] sm:$0xff]
        %v3773 = vld [vmem:[#allocation2 + $0x18] sm:$0xff]
        %v3774 = vld [vmem:[#allocation2 + $0x20] sm:$0xff]
        %v3775 = vld [vmem:[#allocation2 + $0x28] sm:$0xff]
        %v3776 = vld [vmem:[#allocation2 + $0x30] sm:$0xff]
        %v3777 = vld [vmem:[#allocation2 + $0x38] sm:$0xff]
        %v3778 = vld [vmem:[#allocation2 + $0x40] sm:$0xff]
        %v3779 = vld [vmem:[#allocation2 + $0x48] sm:$0xff]
        %v3780 = vld [vmem:[#allocation2 + $0x50] sm:$0xff]
        %v3781 = vld [vmem:[#allocation2 + $0x58] sm:$0xff]
        %v3782 = vld [vmem:[#allocation2 + $0x60] sm:$0xff]
        %v3783 = vld [vmem:[#allocation2 + $0x68] sm:$0xff]
        %v3784 = vld [vmem:[#allocation2 + $0x70] sm:$0xff]
        %v3785 = vld [vmem:[#allocation2 + $0x78] sm:$0xff]
        %v3786 = vld [vmem:[#allocation2 + $0x80] sm:$0xff]
        %v3787 = vld [vmem:[#allocation2 + $0x88] sm:$0xff]
        %v3788 = vld [vmem:[#allocation2 + $0x90] sm:$0xff]
        %v3789 = vld [vmem:[#allocation2 + $0x98] sm:$0xff]
        %v3790 = vld [vmem:[#allocation2 + $0xa0] sm:$0xff]
        %v3791 = vld [vmem:[#allocation2 + $0xa8] sm:$0xff]
        %v3792 = vld [vmem:[#allocation2 + $0xb0] sm:$0xff]
        %v3793 = vld [vmem:[#allocation2 + $0xb8] sm:$0xff]
        %v3794 = vld [vmem:[#allocation2 + $0xc0] sm:$0xff]
        %v3795 = vld [vmem:[#allocation2 + $0xc8] sm:$0xff]
        %v3796 = vld [vmem:[#allocation2 + $0xd0] sm:$0xff]
        %v3797 = vld [vmem:[#allocation2 + $0xd8] sm:$0xff]
        %v3798 = vld [vmem:[#allocation2 + $0xe0] sm:$0xff]
        %v3799 = vld [vmem:[#allocation2 + $0xe8] sm:$0xff]
        %v3800 = vld [vmem:[#allocation2 + $0xf0] sm:$0xff]
        %v3801 = vld [vmem:[#allocation2 + $0xf8] sm:$0xff]
        %v3802 = vpack.c.bf16 %v3771, %v3770
        %v3803 = vpack.c.bf16 %v3773, %v3772
        %v3804 = vpack.c.bf16 %v3775, %v3774
        %v3805 = vpack.c.bf16 %v3777, %v3776
        %v3806 = vpack.c.bf16 %v3779, %v3778
        %v3807 = vpack.c.bf16 %v3781, %v3780
        %v3808 = vpack.c.bf16 %v3783, %v3782
        %v3809 = vpack.c.bf16 %v3785, %v3784
        %v3810 = vpack.c.bf16 %v3787, %v3786
        %v3811 = vpack.c.bf16 %v3789, %v3788
        %v3812 = vpack.c.bf16 %v3791, %v3790
        %v3813 = vpack.c.bf16 %v3793, %v3792
        %v3814 = vpack.c.bf16 %v3795, %v3794
        %v3815 = vpack.c.bf16 %v3797, %v3796
        %v3816 = vpack.c.bf16 %v3799, %v3798
        %v3817 = vpack.c.bf16 %v3801, %v3800
        %v3818 = vld [vmem:[%s3] sm:$0xf]
        %v3819 = vld [vmem:[%s3 + $0x4] sm:$0xf]
        %v3820 = vld [vmem:[%s3 + $0x8] sm:$0xf]
        %v3821 = vld [vmem:[%s3 + $0xc] sm:$0xf]
        %v3826 = vunpack.c.l.b16 %v3818
        %v3827 = vunpack.c.l.b16 %v3819
        %v3828 = vunpack.c.l.b16 %v3820
        %v3829 = vunpack.c.l.b16 %v3821
        %v3830 = vpack.c.b16 %v3827, %v3826
        %v3831 = vpack.c.b16 %v3829, %v3828
        %v3835 = vsel %vm327, %v3802, 0
        %v3838 = vsel %vm327, %v3803, 0
        %v3841 = vsel %vm327, %v3804, 0
        %v3844 = vsel %vm327, %v3805, 0
        %v3847 = vsel %vm327, %v3806, 0
        %v3850 = vsel %vm327, %v3807, 0
        %v3853 = vsel %vm327, %v3808, 0
        %v3856 = vsel %vm327, %v3809, 0
        %v3859 = vsel %vm327, %v3810, 0
        %v3862 = vsel %vm327, %v3811, 0
        %v3865 = vsel %vm327, %v3812, 0
        %v3868 = vsel %vm327, %v3813, 0
        %v3871 = vsel %vm327, %v3814, 0
        %v3874 = vsel %vm327, %v3815, 0
        %v3877 = vsel %vm327, %v3816, 0
        %v3880 = vsel %vm327, %v3817, 0
        %3882 = vmatprep.subr.bf16.mxu0 0
        %3883 = vmatpush1.bf16.msra.mxu0 %v3830
        %3884 = vmatprep.subr.bf16.mxu0 0
        %3885 = vmatpush1.bf16.msra.mxu0 %v3831
        %3886 = vmatprep.subr.bf16.mxu0 0
        %3887 = vmatpush1.bf16.msra.mxu0 0
        %3888 = vmatprep.subr.bf16.mxu0 0
        %3889 = vmatpush1.bf16.msra.mxu0 0
        %3890 = vmatprep.subr.bf16.mxu0 0
        %3891 = vmatpush1.bf16.msra.mxu0 0
        %3892 = vmatprep.subr.bf16.mxu0 0
        %3893 = vmatpush1.bf16.msra.mxu0 0
        %3894 = vmatprep.subr.bf16.mxu0 0
        %3895 = vmatpush1.bf16.msra.mxu0 0
        %3896 = vmatprep.subr.bf16.mxu0 0
        %3897 = vmatpush1.bf16.msra.mxu0 0
        %3898 = vmatprep.subr.bf16.mxu0 0
        %3899 = vmatpush1.bf16.msra.mxu0 0
        %3900 = vmatprep.subr.bf16.mxu0 0
        %3901 = vmatpush1.bf16.msra.mxu0 0
        %3902 = vmatprep.subr.bf16.mxu0 0
        %3903 = vmatpush1.bf16.msra.mxu0 0
        %3904 = vmatprep.subr.bf16.mxu0 0
        %3905 = vmatpush1.bf16.msra.mxu0 0
        %3906 = vmatprep.subr.bf16.mxu0 0
        %3907 = vmatpush1.bf16.msra.mxu0 0
        %3908 = vmatprep.subr.bf16.mxu0 0
        %3909 = vmatpush1.bf16.msra.mxu0 0
        %3910 = vmatprep.subr.bf16.mxu0 0
        %3911 = vmatpush1.bf16.msra.mxu0 0
        %3912 = vmatprep.subr.bf16.mxu0 0
        %3913 = vmatpush1.bf16.msra.mxu0 0
        %3914 = vmatprep.mubr.bf16.mxu0 0
        %3915 = vmatmul.mubr.bf16.gmra.mrb[0].mxu0 %v3835
        %v3916 = vpop.f32.mrb[0].mxu0
        %v3917 = vadd.f32 0.0, %v3916
        %v3918 = vpop.f32.mrb[0].mxu0
        %v3919 = vpop.f32.mrb[0].mxu0
        %v3920 = vadd.f32 0.0, %v3919
        %v3921 = vpop.f32.mrb[0].mxu0
        %3922 = vmatprep.mubr.bf16.mxu0 0
        %3923 = vmatmul.mubr.bf16.gmra.mrb[0].mxu0 %v3838
        %v3924 = vpop.f32.mrb[0].mxu0
        %v3925 = vadd.f32 0.0, %v3924
        %v3926 = vpop.f32.mrb[0].mxu0
        %v3927 = vpop.f32.mrb[0].mxu0
        %v3928 = vadd.f32 0.0, %v3927
        %v3929 = vpop.f32.mrb[0].mxu0
        %3930 = vmatprep.mubr.bf16.mxu0 0
        %3931 = vmatmul.mubr.bf16.gmra.mrb[0].mxu0 %v3841
        %v3932 = vpop.f32.mrb[0].mxu0
        %v3933 = vadd.f32 0.0, %v3932
        %v3934 = vpop.f32.mrb[0].mxu0
        %v3935 = vpop.f32.mrb[0].mxu0
        %v3936 = vadd.f32 0.0, %v3935
        %v3937 = vpop.f32.mrb[0].mxu0
        %3938 = vmatprep.mubr.bf16.mxu0 0
        %3939 = vmatmul.mubr.bf16.gmra.mrb[0].mxu0 %v3844
        %v3940 = vpop.f32.mrb[0].mxu0
        %v3941 = vadd.f32 0.0, %v3940
        %v3942 = vpop.f32.mrb[0].mxu0
        %v3943 = vpop.f32.mrb[0].mxu0
        %v3944 = vadd.f32 0.0, %v3943
        %v3945 = vpop.f32.mrb[0].mxu0
        %3946 = vmatprep.mubr.bf16.mxu0 0
        %3947 = vmatmul.mubr.bf16.gmra.mrb[0].mxu0 %v3847
        %v3948 = vpop.f32.mrb[0].mxu0
        %v3949 = vadd.f32 0.0, %v3948
        %v3950 = vpop.f32.mrb[0].mxu0
        %v3951 = vpop.f32.mrb[0].mxu0
        %v3952 = vadd.f32 0.0, %v3951
        %v3953 = vpop.f32.mrb[0].mxu0
        %3954 = vmatprep.mubr.bf16.mxu0 0
        %3955 = vmatmul.mubr.bf16.gmra.mrb[0].mxu0 %v3850
        %v3956 = vpop.f32.mrb[0].mxu0
        %v3957 = vadd.f32 0.0, %v3956
        %v3958 = vpop.f32.mrb[0].mxu0
        %v3959 = vpop.f32.mrb[0].mxu0
        %v3960 = vadd.f32 0.0, %v3959
        %v3961 = vpop.f32.mrb[0].mxu0
        %3962 = vmatprep.mubr.bf16.mxu0 0
        %3963 = vmatmul.mubr.bf16.gmra.mrb[0].mxu0 %v3853
        %v3964 = vpop.f32.mrb[0].mxu0
        %v3965 = vadd.f32 0.0, %v3964
        %v3966 = vpop.f32.mrb[0].mxu0
        %v3967 = vpop.f32.mrb[0].mxu0
        %v3968 = vadd.f32 0.0, %v3967
        %v3969 = vpop.f32.mrb[0].mxu0
        %3970 = vmatprep.mubr.bf16.mxu0 0
        %3971 = vmatmul.mubr.bf16.gmra.mrb[0].mxu0 %v3856
        %v3972 = vpop.f32.mrb[0].mxu0
        %v3973 = vadd.f32 0.0, %v3972
        %v3974 = vpop.f32.mrb[0].mxu0
        %v3975 = vpop.f32.mrb[0].mxu0
        %v3976 = vadd.f32 0.0, %v3975
        %v3977 = vpop.f32.mrb[0].mxu0
        %3978 = vmatprep.mubr.bf16.mxu0 0
        %3979 = vmatmul.mubr.bf16.gmra.mrb[0].mxu0 %v3859
        %v3980 = vpop.f32.mrb[0].mxu0
        %v3981 = vadd.f32 0.0, %v3980
        %v3982 = vpop.f32.mrb[0].mxu0
        %v3983 = vpop.f32.mrb[0].mxu0
        %v3984 = vadd.f32 0.0, %v3983
        %v3985 = vpop.f32.mrb[0].mxu0
        %3986 = vmatprep.mubr.bf16.mxu0 0
        %3987 = vmatmul.mubr.bf16.gmra.mrb[0].mxu0 %v3862
        %v3988 = vpop.f32.mrb[0].mxu0
        %v3989 = vadd.f32 0.0, %v3988
        %v3990 = vpop.f32.mrb[0].mxu0
        %v3991 = vpop.f32.mrb[0].mxu0
        %v3992 = vadd.f32 0.0, %v3991
        %v3993 = vpop.f32.mrb[0].mxu0
        %3994 = vmatprep.mubr.bf16.mxu0 0
        %3995 = vmatmul.mubr.bf16.gmra.mrb[0].mxu0 %v3865
        %v3996 = vpop.f32.mrb[0].mxu0
        %v3997 = vadd.f32 0.0, %v3996
        %v3998 = vpop.f32.mrb[0].mxu0
        %v3999 = vpop.f32.mrb[0].mxu0
        %v4000 = vadd.f32 0.0, %v3999
        %v4001 = vpop.f32.mrb[0].mxu0
        %4002 = vmatprep.mubr.bf16.mxu0 0
        %4003 = vmatmul.mubr.bf16.gmra.mrb[0].mxu0 %v3868
        %v4004 = vpop.f32.mrb[0].mxu0
        %v4005 = vadd.f32 0.0, %v4004
        %v4006 = vpop.f32.mrb[0].mxu0
        %v4007 = vpop.f32.mrb[0].mxu0
        %v4008 = vadd.f32 0.0, %v4007
        %v4009 = vpop.f32.mrb[0].mxu0
        %4010 = vmatprep.mubr.bf16.mxu0 0
        %4011 = vmatmul.mubr.bf16.gmra.mrb[0].mxu0 %v3871
        %v4012 = vpop.f32.mrb[0].mxu0
        %v4013 = vadd.f32 0.0, %v4012
        %v4014 = vpop.f32.mrb[0].mxu0
        %v4015 = vpop.f32.mrb[0].mxu0
        %v4016 = vadd.f32 0.0, %v4015
        %v4017 = vpop.f32.mrb[0].mxu0
        %4018 = vmatprep.mubr.bf16.mxu0 0
        %4019 = vmatmul.mubr.bf16.gmra.mrb[0].mxu0 %v3874
        %v4020 = vpop.f32.mrb[0].mxu0
        %v4021 = vadd.f32 0.0, %v4020
        %v4022 = vpop.f32.mrb[0].mxu0
        %v4023 = vpop.f32.mrb[0].mxu0
        %v4024 = vadd.f32 0.0, %v4023
        %v4025 = vpop.f32.mrb[0].mxu0
        %4026 = vmatprep.mubr.bf16.mxu0 0
        %4027 = vmatmul.mubr.bf16.gmra.mrb[0].mxu0 %v3877
        %v4028 = vpop.f32.mrb[0].mxu0
        %v4029 = vadd.f32 0.0, %v4028
        %v4030 = vpop.f32.mrb[0].mxu0
        %v4031 = vpop.f32.mrb[0].mxu0
        %v4032 = vadd.f32 0.0, %v4031
        %v4033 = vpop.f32.mrb[0].mxu0
        %4034 = vmatprep.mubr.bf16.mxu0 0
        %4035 = vmatmul.mubr.bf16.gmra.mrb[0].mxu0 %v3880
        %v4036 = vpop.f32.mrb[0].mxu0
        %v4037 = vadd.f32 0.0, %v4036
        %v4038 = vpop.f32.mrb[0].mxu0
        %v4039 = vpop.f32.mrb[0].mxu0
        %v4040 = vadd.f32 0.0, %v4039
        %v4041 = vpop.f32.mrb[0].mxu0
        %4042 = vdwg.mxu0
        %4043 = vst.msk [vmem:[%s219] sm:$0xff] %vm327, %v3917
        %4044 = vst.msk [vmem:[%s219 + $0x8] sm:$0xff] %vm327, %v3920
        %4045 = vst.msk [vmem:[%s219 + $0x10] sm:$0xff] %vm327, %v3925
        %4046 = vst.msk [vmem:[%s219 + $0x18] sm:$0xff] %vm327, %v3928
        %4047 = vst.msk [vmem:[%s219 + $0x20] sm:$0xff] %vm327, %v3933
        %4048 = vst.msk [vmem:[%s219 + $0x28] sm:$0xff] %vm327, %v3936
        %4049 = vst.msk [vmem:[%s219 + $0x30] sm:$0xff] %vm327, %v3941
        %4050 = vst.msk [vmem:[%s219 + $0x38] sm:$0xff] %vm327, %v3944
        %4051 = vst.msk [vmem:[%s219 + $0x40] sm:$0xff] %vm327, %v3949
        %4052 = vst.msk [vmem:[%s219 + $0x48] sm:$0xff] %vm327, %v3952
        %4053 = vst.msk [vmem:[%s219 + $0x50] sm:$0xff] %vm327, %v3957
        %4054 = vst.msk [vmem:[%s219 + $0x58] sm:$0xff] %vm327, %v3960
        %4055 = vst.msk [vmem:[%s219 + $0x60] sm:$0xff] %vm327, %v3965
        %4056 = vst.msk [vmem:[%s219 + $0x68] sm:$0xff] %vm327, %v3968
        %4057 = vst.msk [vmem:[%s219 + $0x70] sm:$0xff] %vm327, %v3973
        %4058 = vst.msk [vmem:[%s219 + $0x78] sm:$0xff] %vm327, %v3976
        %4059 = vst.msk [vmem:[%s219 + $0x80] sm:$0xff] %vm327, %v3981
        %4060 = vst.msk [vmem:[%s219 + $0x88] sm:$0xff] %vm327, %v3984
        %4061 = vst.msk [vmem:[%s219 + $0x90] sm:$0xff] %vm327, %v3989
        %4062 = vst.msk [vmem:[%s219 + $0x98] sm:$0xff] %vm327, %v3992
        %4063 = vst.msk [vmem:[%s219 + $0xa0] sm:$0xff] %vm327, %v3997
        %4064 = vst.msk [vmem:[%s219 + $0xa8] sm:$0xff] %vm327, %v4000
        %4065 = vst.msk [vmem:[%s219 + $0xb0] sm:$0xff] %vm327, %v4005
        %4066 = vst.msk [vmem:[%s219 + $0xb8] sm:$0xff] %vm327, %v4008
        %4067 = vst.msk [vmem:[%s219 + $0xc0] sm:$0xff] %vm327, %v4013
        %4068 = vst.msk [vmem:[%s219 + $0xc8] sm:$0xff] %vm327, %v4016
        %4069 = vst.msk [vmem:[%s219 + $0xd0] sm:$0xff] %vm327, %v4021
        %4070 = vst.msk [vmem:[%s219 + $0xd8] sm:$0xff] %vm327, %v4024
        %4071 = vst.msk [vmem:[%s219 + $0xe0] sm:$0xff] %vm327, %v4029
        %4072 = vst.msk [vmem:[%s219 + $0xe8] sm:$0xff] %vm327, %v4032
        %4073 = vst.msk [vmem:[%s219 + $0xf0] sm:$0xff] %vm327, %v4037
        %4074 = vst.msk [vmem:[%s219 + $0xf8] sm:$0xff] %vm327, %v4040
        %s4075 = sand.u32 %s121, 1
        %s4076 = scalar_lea.sflag [#allocation4], %s4075
        %s4077 = sand.u32 %s121, 1
        %s4078 = smul.addr %s4077, 256
        %s4079 = scalar_lea.vmem [#allocation6], %s4078
        // Predicated region
        $region41: #{attention_forward.5} parent=35 // pred_check
          %p4080 = pneg %p131
        $region42: #{attention_forward.5} parent=35 // pred_check_branch
          %4082 = sbr.rel (%p4080) target = $region44
        $region43: #{attention_forward.5} parent=35 // pred_region
          %s4084 = ssub.s32 4096, 4096
          %4085 = vsyncadd %s4076, %s4084
          %s4086 = smul.addr %s19, 32
          %s4087 = smul.addr %s4086, 128
          %s4088 = scalar_lea.hbm %s4, %s4087
          %s4089 = sshll.u32 %s4079, 4
          %s4090 = int_to_ptr.vmem [resolvable:$true] %s4089
          %4095 = dma.vmem_to_hbm [thread:$0]  %s4090, 4096, %s4088, %s4076, 128, 128, 8
        $region44: #{attention_forward.5} parent=35 // pred_fallthru
          _
      $region36: #{attention_forward.5} parent=5 // pred_fallthru
        _
      %p4096 = scmp.le.s32.totalorder 2, %s14
      // Predicated region
      $region45: #{attention_forward.5} parent=5 // pred_check
        %p4097 = pneg %p4096
      $region46: #{attention_forward.5} parent=5 // pred_check_branch
        %4099 = sbr.rel (%p4097) target = $region48
      $region47: #{attention_forward.5} parent=5 // pred_region
        %s4100 = ssub.s32 %s14, 2
        // Predicated region
        $region49: #{attention_forward.5} parent=47 // pred_check
          %p4101 = pneg %p137
        $region50: #{attention_forward.5} parent=47 // pred_check_branch
          %4103 = sbr.rel (%p4101) target = $region52
        $region51: #{attention_forward.5} parent=47 // pred_region
          %s4104 = sand.u32 %s122, 1
          %s4105 = scalar_lea.sflag [#allocation4], %s4104
          %s4106 = sand.u32 %s122, 1
          %s4107 = smul.addr %s4106, 256
          %s4108 = scalar_lea.vmem [#allocation6], %s4107
          %4109 = dma.done %s4105, 4096
        $region52: #{attention_forward.5} parent=47 // pred_fallthru
          _
      $region48: #{attention_forward.5} parent=5 // pred_fallthru
        _
    $region6: #{attention_forward.5} parent=1 // loop_footer
      %s18 = sadd.s32 1, %s14
    $region7: #{attention_forward.5} parent=1 // loop_footer_branch
      %13 = sbr.rel target = $region3
    $region8: #{attention_forward.5} parent=1 // loop_exit
      _
    %4110 = vsyncpa [#allocation4], 1
    %s4111 = scalar_lea.sflag [#allocation4], 1
    %4112 = vsyncpa %s4111, 1
    %4113 = vsyncpa [#allocation5], 1
    %s4114 = scalar_lea.sflag [#allocation5], 1
    %4115 = vsyncpa %s4114, 1

</llo_original>
